<compile_context>
chip_gen: v6e
topology: v6e:2x2x1
jax: 0.10.0
libtpu: 0.0.40
codegen_flags: <defaults>
</compile_context>

<pallas_src>
import jax
import jax.numpy as jnp
from jax import lax
from jax.experimental import pallas as pl
from jax.experimental.pallas import tpu as pltpu


# ----------------------------- Pallas kernels -----------------------------

def _conv_pool_kernel(x_ref, w1_ref, b1_ref, w2_ref, b2_ref, o_ref):
    # x_ref : (1, 28, 28, 1) one NHWC image (Cin = 1)
    # w1_ref: (9, 8)        conv1 weight, rows = kh*3+kw
    # w2_ref: (9, 8, 16)    conv2 weight, [kh*3+kw, cin, cout]
    # b*_ref: (1, C) biases
    # o_ref : (1, 192, 12)  pooled activations; rows = (h', c), lanes = w'
    n = x_ref.shape[0]                       # block batch (1)
    x = x_ref[...]                           # (n, 28, 28, 1)
    w1 = w1_ref[...]                         # (9, 8)

    # ---- conv1 + bias + ReLU: 9-tap broadcast multiply-accumulate (VPU) ----
    h1 = None
    for kh in range(3):
        for kw in range(3):
            t = kh * 3 + kw
            tap = x[:, kh:kh + 26, kw:kw + 26, :] * w1[t:t + 1, :]  # (n,26,26,8)
            h1 = tap if h1 is None else h1 + tap
    h1 = jnp.maximum(h1 + b1_ref[...], 0.0)                         # (n,26,26,8)

    # ---- conv2 + bias + ReLU: 9 shifted-window MXU matmuls, rows in M ----
    acc = None
    for kh in range(3):
        for kw in range(3):
            t = kh * 3 + kw
            win = h1[:, kh:kh + 24, kw:kw + 24, :].reshape(n * 576, 8)
            part = jnp.dot(win, w2_ref[t], preferred_element_type=jnp.float32)
            acc = part if acc is None else acc + part
    h2 = jnp.maximum(acc + b2_ref[...], 0.0)                        # (n*576, 16)

    # ---- 2x2 max-pool (all in VMEM) ----
    # Rows of h2 are ordered (n, h, w).  Pool H pairs via a free major split.
    h2 = h2.reshape(n, 12, 2, 24, 16)
    hh = jnp.maximum(h2[:, :, 0], h2[:, :, 1])                      # (n,12,24,16)
    # Pool W pairs: move W onto lanes, then pick even/odd columns with 0/1
    # selection matmuls (exact; avoids strided sublane slicing).
    hw = jnp.swapaxes(hh, 2, 3).reshape(n * 192, 24)                # rows=(h',c)
    w_idx = lax.broadcasted_iota(jnp.int32, (24, 12), 0)
    j_idx = lax.broadcasted_iota(jnp.int32, (24, 12), 1)
    s_even = (w_idx == 2 * j_idx).astype(jnp.float32)
    s_odd = (w_idx == 2 * j_idx + 1).astype(jnp.float32)
    pooled = jnp.maximum(
        jnp.dot(hw, s_even, preferred_element_type=jnp.float32),
        jnp.dot(hw, s_odd, preferred_element_type=jnp.float32))     # (n*192, 12)
    o_ref[...] = pooled.reshape(n, 192, 12).astype(o_ref.dtype)


def _mlp_kernel(x_ref, w1_ref, b1_ref, w2_ref, b2_ref, o_ref):
    # fc1 + ReLU + fc2 fused (dropout2 is identity at inference).
    h = jnp.dot(x_ref[...], w1_ref[...], preferred_element_type=jnp.float32)
    h = jnp.maximum(h + b1_ref[...], 0.0)
    o_ref[...] = (jnp.dot(h, w2_ref[...], preferred_element_type=jnp.float32)
                  + b2_ref[...]).astype(o_ref.dtype)


# ------------------------------ wrappers -----------------------------------

def net_forward(x_nchw, p):
    B = x_nchw.shape[0]
    x = jnp.transpose(x_nchw, (0, 2, 3, 1))          # NCHW -> NHWC (B,28,28,1)
    w1 = p["w_conv1"].reshape(9, 8)                  # (kh,kw,1,cout) -> (9,8)
    b1 = p["b_conv1"].reshape(1, 8)
    w2 = p["w_conv2"].reshape(9, 8, 16)              # (kh*3+kw, cin, cout)
    b2 = p["b_conv2"].reshape(1, 16)

    conv_cost = pl.CostEstimate(
        flops=2 * B * (26 * 26 * 9 * 8 + 24 * 24 * 72 * 16),
        transcendentals=0,
        bytes_accessed=4 * (x.size + w1.size + w2.size + B * 2304))

    pooled = pl.pallas_call(
        _conv_pool_kernel,
        out_shape=jax.ShapeDtypeStruct((B, 192, 12), x.dtype),
        grid=(B,),
        in_specs=[
            pl.BlockSpec((1, 28, 28, 1), lambda b: (b, 0, 0, 0)),
            pl.BlockSpec((9, 8), lambda b: (0, 0)),
            pl.BlockSpec((1, 8), lambda b: (0, 0)),
            pl.BlockSpec((9, 8, 16), lambda b: (0, 0, 0)),
            pl.BlockSpec((1, 16), lambda b: (0, 0)),
        ],
        out_specs=pl.BlockSpec((1, 192, 12), lambda b: (b, 0, 0)),
        compiler_params=pltpu.CompilerParams(
            dimension_semantics=("parallel",)),
        cost_estimate=conv_cost,
    )(x, w1, b1, w2, b2)

    feats = pooled.reshape(B, 2304)                  # per-image order (h, c, w)
    # Fold torch's (c, h, w) flatten order into the fc1 weight (host side).
    wf1 = (p["w_fc1"].reshape(16, 12, 12, 64)
           .transpose(1, 0, 2, 3).reshape(2304, 64))

    vmem = pl.BlockSpec(memory_space=pltpu.MemorySpace.VMEM)
    mlp_cost = pl.CostEstimate(
        flops=2 * B * (2304 * 64 + 64 * 10),
        transcendentals=0,
        bytes_accessed=4 * (B * 2304 + 2304 * 64 + 64 * 10 + B * 10))

    return pl.pallas_call(
        _mlp_kernel,
        out_shape=jax.ShapeDtypeStruct((B, 10), x.dtype),
        in_specs=[vmem, vmem, vmem, vmem, vmem],
        out_specs=vmem,
        cost_estimate=mlp_cost,
    )(feats, wf1, p["b_fc1"].reshape(1, 64), p["w_fc2"],
      p["b_fc2"].reshape(1, 10))


# --------------------------- params & reference -----------------------------

def init_params(key):
    ks = jax.random.split(key, 8)

    def randn(k, shape, scale):
        return (scale * jax.random.normal(k, shape)).astype(jnp.float32)

    return dict(
        w_conv1=randn(ks[0], (3, 3, 1, 8), 0.1),     # [KH,KW,Cin,Cout]
        b_conv1=randn(ks[1], (8,), 0.1),
        w_conv2=randn(ks[2], (3, 3, 8, 16), 0.1),
        b_conv2=randn(ks[3], (16,), 0.1),
        w_fc1=randn(ks[4], (2304, 64), 0.02),        # (in, out), in = (c,h,w)
        b_fc1=randn(ks[5], (64,), 0.02),
        w_fc2=randn(ks[6], (64, 10), 0.05),
        b_fc2=randn(ks[7], (10,), 0.05),
    )


def reference_forward(x_nchw, p):
    """Pure-JAX/XLA reference mirroring the PyTorch forward."""
    w1 = jnp.transpose(p["w_conv1"], (3, 2, 0, 1))   # -> OIHW
    w2 = jnp.transpose(p["w_conv2"], (3, 2, 0, 1))
    dn = ("NCHW", "OIHW", "NCHW")
    y = lax.conv_general_dilated(x_nchw, w1, (1, 1), "VALID",
                                 dimension_numbers=dn)
    y = jax.nn.relu(y + p["b_conv1"][None, :, None, None])
    y = lax.conv_general_dilated(y, w2, (1, 1), "VALID",
                                 dimension_numbers=dn)
    y = jax.nn.relu(y + p["b_conv2"][None, :, None, None])
    y = lax.reduce_window(y, -jnp.inf, lax.max,
                          (1, 1, 2, 2), (1, 1, 2, 2), "VALID")
    y = y.reshape(y.shape[0], -1)                    # torch.flatten(x, 1)
    y = jax.nn.relu(y @ p["w_fc1"] + p["b_fc1"])
    return y @ p["w_fc2"] + p["b_fc2"]


# --------------------------------- main -------------------------------------

if __name__ == "__main__":
    key = jax.random.PRNGKey(0)
    pkey, xkey = jax.random.split(key)
    params = init_params(pkey)
    # fc1 expects 2304 = 16 * 12 * 12  =>  28x28 single-channel images.
    x = jax.random.normal(xkey, (2, 1, 28, 28), dtype=jnp.float32)

    out = net_forward(x, params)
    out = jax.block_until_ready(out)
    assert out.shape == (2, 10), out.shape

    ref = reference_forward(x, params)
    if not jnp.allclose(out, ref, atol=2e-2, rtol=2e-2):
        raise AssertionError("Pallas output mismatch vs XLA reference")

    print("KERNEL_OK")
</pallas_src>

<mosaic_0001>
module attributes {stable_mosaic.version = 11 : i64} {
  func.func @_conv_pool_kernel(%arg0: i32, %arg1: memref<1x28x28x1xf32, #tpu.memory_space<vmem>>, %arg2: memref<9x8xf32, #tpu.memory_space<vmem>>, %arg3: memref<1x8xf32, #tpu.memory_space<vmem>>, %arg4: memref<9x8x16xf32, #tpu.memory_space<vmem>>, %arg5: memref<1x16xf32, #tpu.memory_space<vmem>>, %arg6: memref<1x192x12xf32, #tpu.memory_space<vmem>>) attributes {dimension_semantics = [#tpu.dimension_semantics<parallel>], iteration_bounds = array<i64: 2>, scalar_prefetch = 0 : i64, scratch_operands = 0 : i64, tpu.core_type = #tpu.core_type<tc>, window_params = [{transform_indices = @transform_0, window_bounds = array<i64: 1, 28, 28, 1>}, {pipeline_mode = #tpu.pipeline_mode<synchronous>, transform_indices = @transform_1, window_bounds = array<i64: 9, 8>}, {pipeline_mode = #tpu.pipeline_mode<synchronous>, transform_indices = @transform_2, window_bounds = array<i64: 1, 8>}, {pipeline_mode = #tpu.pipeline_mode<synchronous>, transform_indices = @transform_3, window_bounds = array<i64: 9, 8, 16>}, {pipeline_mode = #tpu.pipeline_mode<synchronous>, transform_indices = @transform_4, window_bounds = array<i64: 1, 16>}, {transform_indices = @transform_5, window_bounds = array<i64: 1, 192, 12>}]} {
    %c0 = arith.constant 0 : index
    %c0_0 = arith.constant 0 : index
    %c0_1 = arith.constant 0 : index
    %c0_2 = arith.constant 0 : index
    %0 = vector.load %arg1[%c0, %c0_0, %c0_1, %c0_2] : memref<1x28x28x1xf32, #tpu.memory_space<vmem>>, vector<1x28x28x1xf32>
    %c0_3 = arith.constant 0 : index
    %c0_4 = arith.constant 0 : index
    %1 = vector.load %arg2[%c0_3, %c0_4] : memref<9x8xf32, #tpu.memory_space<vmem>>, vector<9x8xf32>
    %2 = vector.extract_strided_slice %0 {offsets = [0, 0, 0, 0], sizes = [1, 26, 26, 1], strides = [1, 1, 1, 1]} : vector<1x28x28x1xf32> to vector<1x26x26x1xf32>
    %3 = vector.extract_strided_slice %1 {offsets = [0, 0], sizes = [1, 8], strides = [1, 1]} : vector<9x8xf32> to vector<1x8xf32>
    %4 = vector.shape_cast %3 : vector<1x8xf32> to vector<1x1x1x8xf32>
    %5 = vector.broadcast %2 : vector<1x26x26x1xf32> to vector<1x26x26x8xf32>
    %6 = vector.broadcast %4 : vector<1x1x1x8xf32> to vector<1x26x26x8xf32>
    %7 = arith.mulf %5, %6 : vector<1x26x26x8xf32>
    %8 = vector.extract_strided_slice %0 {offsets = [0, 0, 1, 0], sizes = [1, 26, 26, 1], strides = [1, 1, 1, 1]} : vector<1x28x28x1xf32> to vector<1x26x26x1xf32>
    %9 = vector.extract_strided_slice %1 {offsets = [1, 0], sizes = [1, 8], strides = [1, 1]} : vector<9x8xf32> to vector<1x8xf32>
    %10 = vector.shape_cast %9 : vector<1x8xf32> to vector<1x1x1x8xf32>
    %11 = vector.broadcast %8 : vector<1x26x26x1xf32> to vector<1x26x26x8xf32>
    %12 = vector.broadcast %10 : vector<1x1x1x8xf32> to vector<1x26x26x8xf32>
    %13 = arith.mulf %11, %12 : vector<1x26x26x8xf32>
    %14 = arith.addf %7, %13 : vector<1x26x26x8xf32>
    %15 = vector.extract_strided_slice %0 {offsets = [0, 0, 2, 0], sizes = [1, 26, 26, 1], strides = [1, 1, 1, 1]} : vector<1x28x28x1xf32> to vector<1x26x26x1xf32>
    %16 = vector.extract_strided_slice %1 {offsets = [2, 0], sizes = [1, 8], strides = [1, 1]} : vector<9x8xf32> to vector<1x8xf32>
    %17 = vector.shape_cast %16 : vector<1x8xf32> to vector<1x1x1x8xf32>
    %18 = vector.broadcast %15 : vector<1x26x26x1xf32> to vector<1x26x26x8xf32>
    %19 = vector.broadcast %17 : vector<1x1x1x8xf32> to vector<1x26x26x8xf32>
    %20 = arith.mulf %18, %19 : vector<1x26x26x8xf32>
    %21 = arith.addf %14, %20 : vector<1x26x26x8xf32>
    %22 = vector.extract_strided_slice %0 {offsets = [0, 1, 0, 0], sizes = [1, 26, 26, 1], strides = [1, 1, 1, 1]} : vector<1x28x28x1xf32> to vector<1x26x26x1xf32>
    %23 = vector.extract_strided_slice %1 {offsets = [3, 0], sizes = [1, 8], strides = [1, 1]} : vector<9x8xf32> to vector<1x8xf32>
    %24 = vector.shape_cast %23 : vector<1x8xf32> to vector<1x1x1x8xf32>
    %25 = vector.broadcast %22 : vector<1x26x26x1xf32> to vector<1x26x26x8xf32>
    %26 = vector.broadcast %24 : vector<1x1x1x8xf32> to vector<1x26x26x8xf32>
    %27 = arith.mulf %25, %26 : vector<1x26x26x8xf32>
    %28 = arith.addf %21, %27 : vector<1x26x26x8xf32>
    %29 = vector.extract_strided_slice %0 {offsets = [0, 1, 1, 0], sizes = [1, 26, 26, 1], strides = [1, 1, 1, 1]} : vector<1x28x28x1xf32> to vector<1x26x26x1xf32>
    %30 = vector.extract_strided_slice %1 {offsets = [4, 0], sizes = [1, 8], strides = [1, 1]} : vector<9x8xf32> to vector<1x8xf32>
    %31 = vector.shape_cast %30 : vector<1x8xf32> to vector<1x1x1x8xf32>
    %32 = vector.broadcast %29 : vector<1x26x26x1xf32> to vector<1x26x26x8xf32>
    %33 = vector.broadcast %31 : vector<1x1x1x8xf32> to vector<1x26x26x8xf32>
    %34 = arith.mulf %32, %33 : vector<1x26x26x8xf32>
    %35 = arith.addf %28, %34 : vector<1x26x26x8xf32>
    %36 = vector.extract_strided_slice %0 {offsets = [0, 1, 2, 0], sizes = [1, 26, 26, 1], strides = [1, 1, 1, 1]} : vector<1x28x28x1xf32> to vector<1x26x26x1xf32>
    %37 = vector.extract_strided_slice %1 {offsets = [5, 0], sizes = [1, 8], strides = [1, 1]} : vector<9x8xf32> to vector<1x8xf32>
    %38 = vector.shape_cast %37 : vector<1x8xf32> to vector<1x1x1x8xf32>
    %39 = vector.broadcast %36 : vector<1x26x26x1xf32> to vector<1x26x26x8xf32>
    %40 = vector.broadcast %38 : vector<1x1x1x8xf32> to vector<1x26x26x8xf32>
    %41 = arith.mulf %39, %40 : vector<1x26x26x8xf32>
    %42 = arith.addf %35, %41 : vector<1x26x26x8xf32>
    %43 = vector.extract_strided_slice %0 {offsets = [0, 2, 0, 0], sizes = [1, 26, 26, 1], strides = [1, 1, 1, 1]} : vector<1x28x28x1xf32> to vector<1x26x26x1xf32>
    %44 = vector.extract_strided_slice %1 {offsets = [6, 0], sizes = [1, 8], strides = [1, 1]} : vector<9x8xf32> to vector<1x8xf32>
    %45 = vector.shape_cast %44 : vector<1x8xf32> to vector<1x1x1x8xf32>
    %46 = vector.broadcast %43 : vector<1x26x26x1xf32> to vector<1x26x26x8xf32>
    %47 = vector.broadcast %45 : vector<1x1x1x8xf32> to vector<1x26x26x8xf32>
    %48 = arith.mulf %46, %47 : vector<1x26x26x8xf32>
    %49 = arith.addf %42, %48 : vector<1x26x26x8xf32>
    %50 = vector.extract_strided_slice %0 {offsets = [0, 2, 1, 0], sizes = [1, 26, 26, 1], strides = [1, 1, 1, 1]} : vector<1x28x28x1xf32> to vector<1x26x26x1xf32>
    %51 = vector.extract_strided_slice %1 {offsets = [7, 0], sizes = [1, 8], strides = [1, 1]} : vector<9x8xf32> to vector<1x8xf32>
    %52 = vector.shape_cast %51 : vector<1x8xf32> to vector<1x1x1x8xf32>
    %53 = vector.broadcast %50 : vector<1x26x26x1xf32> to vector<1x26x26x8xf32>
    %54 = vector.broadcast %52 : vector<1x1x1x8xf32> to vector<1x26x26x8xf32>
    %55 = arith.mulf %53, %54 : vector<1x26x26x8xf32>
    %56 = arith.addf %49, %55 : vector<1x26x26x8xf32>
    %57 = vector.extract_strided_slice %0 {offsets = [0, 2, 2, 0], sizes = [1, 26, 26, 1], strides = [1, 1, 1, 1]} : vector<1x28x28x1xf32> to vector<1x26x26x1xf32>
    %58 = vector.extract_strided_slice %1 {offsets = [8, 0], sizes = [1, 8], strides = [1, 1]} : vector<9x8xf32> to vector<1x8xf32>
    %59 = vector.shape_cast %58 : vector<1x8xf32> to vector<1x1x1x8xf32>
    %60 = vector.broadcast %57 : vector<1x26x26x1xf32> to vector<1x26x26x8xf32>
    %61 = vector.broadcast %59 : vector<1x1x1x8xf32> to vector<1x26x26x8xf32>
    %62 = arith.mulf %60, %61 : vector<1x26x26x8xf32>
    %63 = arith.addf %56, %62 : vector<1x26x26x8xf32>
    %c0_5 = arith.constant 0 : index
    %c0_6 = arith.constant 0 : index
    %64 = vector.load %arg3[%c0_5, %c0_6] : memref<1x8xf32, #tpu.memory_space<vmem>>, vector<1x8xf32>
    %65 = vector.shape_cast %64 : vector<1x8xf32> to vector<1x1x1x8xf32>
    %66 = vector.broadcast %65 : vector<1x1x1x8xf32> to vector<1x26x26x8xf32>
    %67 = arith.addf %63, %66 : vector<1x26x26x8xf32>
    %cst = arith.constant 0.000000e+00 : f32
    %68 = vector.broadcast %cst : f32 to vector<1x26x26x8xf32>
    %69 = arith.maximumf %67, %68 : vector<1x26x26x8xf32>
    %70 = vector.extract_strided_slice %69 {offsets = [0, 0, 0, 0], sizes = [1, 24, 24, 8], strides = [1, 1, 1, 1]} : vector<1x26x26x8xf32> to vector<1x24x24x8xf32>
    %71 = vector.shape_cast %70 : vector<1x24x24x8xf32> to vector<576x8xf32>
    %c0_7 = arith.constant 0 : index
    %c0_8 = arith.constant 0 : index
    %c0_9 = arith.constant 0 : index
    %72 = vector.load %arg4[%c0_7, %c0_8, %c0_9] : memref<9x8x16xf32, #tpu.memory_space<vmem>>, vector<1x8x16xf32>
    %73 = vector.shape_cast %72 : vector<1x8x16xf32> to vector<8x16xf32>
    %cst_10 = arith.constant dense<0.000000e+00> : vector<576x16xf32>
    %74 = tpu.matmul %71, %73, %cst_10 {dimension_numbers = #tpu.dot_dimension_numbers<[1], [0], [0], [1], [0, 0, 1, 1], [], []>} : vector<576x8xf32>, vector<8x16xf32>, vector<576x16xf32> -> vector<576x16xf32>
    %75 = vector.extract_strided_slice %69 {offsets = [0, 0, 1, 0], sizes = [1, 24, 24, 8], strides = [1, 1, 1, 1]} : vector<1x26x26x8xf32> to vector<1x24x24x8xf32>
    %76 = vector.shape_cast %75 : vector<1x24x24x8xf32> to vector<576x8xf32>
    %c1 = arith.constant 1 : index
    %c0_11 = arith.constant 0 : index
    %c0_12 = arith.constant 0 : index
    %77 = vector.load %arg4[%c1, %c0_11, %c0_12] : memref<9x8x16xf32, #tpu.memory_space<vmem>>, vector<1x8x16xf32>
    %78 = vector.shape_cast %77 : vector<1x8x16xf32> to vector<8x16xf32>
    %cst_13 = arith.constant dense<0.000000e+00> : vector<576x16xf32>
    %79 = tpu.matmul %76, %78, %cst_13 {dimension_numbers = #tpu.dot_dimension_numbers<[1], [0], [0], [1], [0, 0, 1, 1], [], []>} : vector<576x8xf32>, vector<8x16xf32>, vector<576x16xf32> -> vector<576x16xf32>
    %80 = arith.addf %74, %79 : vector<576x16xf32>
    %81 = vector.extract_strided_slice %69 {offsets = [0, 0, 2, 0], sizes = [1, 24, 24, 8], strides = [1, 1, 1, 1]} : vector<1x26x26x8xf32> to vector<1x24x24x8xf32>
    %82 = vector.shape_cast %81 : vector<1x24x24x8xf32> to vector<576x8xf32>
    %c2 = arith.constant 2 : index
    %c0_14 = arith.constant 0 : index
    %c0_15 = arith.constant 0 : index
    %83 = vector.load %arg4[%c2, %c0_14, %c0_15] : memref<9x8x16xf32, #tpu.memory_space<vmem>>, vector<1x8x16xf32>
    %84 = vector.shape_cast %83 : vector<1x8x16xf32> to vector<8x16xf32>
    %cst_16 = arith.constant dense<0.000000e+00> : vector<576x16xf32>
    %85 = tpu.matmul %82, %84, %cst_16 {dimension_numbers = #tpu.dot_dimension_numbers<[1], [0], [0], [1], [0, 0, 1, 1], [], []>} : vector<576x8xf32>, vector<8x16xf32>, vector<576x16xf32> -> vector<576x16xf32>
    %86 = arith.addf %80, %85 : vector<576x16xf32>
    %87 = vector.extract_strided_slice %69 {offsets = [0, 1, 0, 0], sizes = [1, 24, 24, 8], strides = [1, 1, 1, 1]} : vector<1x26x26x8xf32> to vector<1x24x24x8xf32>
    %88 = vector.shape_cast %87 : vector<1x24x24x8xf32> to vector<576x8xf32>
    %c3 = arith.constant 3 : index
    %c0_17 = arith.constant 0 : index
    %c0_18 = arith.constant 0 : index
    %89 = vector.load %arg4[%c3, %c0_17, %c0_18] : memref<9x8x16xf32, #tpu.memory_space<vmem>>, vector<1x8x16xf32>
    %90 = vector.shape_cast %89 : vector<1x8x16xf32> to vector<8x16xf32>
    %cst_19 = arith.constant dense<0.000000e+00> : vector<576x16xf32>
    %91 = tpu.matmul %88, %90, %cst_19 {dimension_numbers = #tpu.dot_dimension_numbers<[1], [0], [0], [1], [0, 0, 1, 1], [], []>} : vector<576x8xf32>, vector<8x16xf32>, vector<576x16xf32> -> vector<576x16xf32>
    %92 = arith.addf %86, %91 : vector<576x16xf32>
    %93 = vector.extract_strided_slice %69 {offsets = [0, 1, 1, 0], sizes = [1, 24, 24, 8], strides = [1, 1, 1, 1]} : vector<1x26x26x8xf32> to vector<1x24x24x8xf32>
    %94 = vector.shape_cast %93 : vector<1x24x24x8xf32> to vector<576x8xf32>
    %c4 = arith.constant 4 : index
    %c0_20 = arith.constant 0 : index
    %c0_21 = arith.constant 0 : index
    %95 = vector.load %arg4[%c4, %c0_20, %c0_21] : memref<9x8x16xf32, #tpu.memory_space<vmem>>, vector<1x8x16xf32>
    %96 = vector.shape_cast %95 : vector<1x8x16xf32> to vector<8x16xf32>
    %cst_22 = arith.constant dense<0.000000e+00> : vector<576x16xf32>
    %97 = tpu.matmul %94, %96, %cst_22 {dimension_numbers = #tpu.dot_dimension_numbers<[1], [0], [0], [1], [0, 0, 1, 1], [], []>} : vector<576x8xf32>, vector<8x16xf32>, vector<576x16xf32> -> vector<576x16xf32>
    %98 = arith.addf %92, %97 : vector<576x16xf32>
    %99 = vector.extract_strided_slice %69 {offsets = [0, 1, 2, 0], sizes = [1, 24, 24, 8], strides = [1, 1, 1, 1]} : vector<1x26x26x8xf32> to vector<1x24x24x8xf32>
    %100 = vector.shape_cast %99 : vector<1x24x24x8xf32> to vector<576x8xf32>
    %c5 = arith.constant 5 : index
    %c0_23 = arith.constant 0 : index
    %c0_24 = arith.constant 0 : index
    %101 = vector.load %arg4[%c5, %c0_23, %c0_24] : memref<9x8x16xf32, #tpu.memory_space<vmem>>, vector<1x8x16xf32>
    %102 = vector.shape_cast %101 : vector<1x8x16xf32> to vector<8x16xf32>
    %cst_25 = arith.constant dense<0.000000e+00> : vector<576x16xf32>
    %103 = tpu.matmul %100, %102, %cst_25 {dimension_numbers = #tpu.dot_dimension_numbers<[1], [0], [0], [1], [0, 0, 1, 1], [], []>} : vector<576x8xf32>, vector<8x16xf32>, vector<576x16xf32> -> vector<576x16xf32>
    %104 = arith.addf %98, %103 : vector<576x16xf32>
    %105 = vector.extract_strided_slice %69 {offsets = [0, 2, 0, 0], sizes = [1, 24, 24, 8], strides = [1, 1, 1, 1]} : vector<1x26x26x8xf32> to vector<1x24x24x8xf32>
    %106 = vector.shape_cast %105 : vector<1x24x24x8xf32> to vector<576x8xf32>
    %c6 = arith.constant 6 : index
    %c0_26 = arith.constant 0 : index
    %c0_27 = arith.constant 0 : index
    %107 = vector.load %arg4[%c6, %c0_26, %c0_27] : memref<9x8x16xf32, #tpu.memory_space<vmem>>, vector<1x8x16xf32>
    %108 = vector.shape_cast %107 : vector<1x8x16xf32> to vector<8x16xf32>
    %cst_28 = arith.constant dense<0.000000e+00> : vector<576x16xf32>
    %109 = tpu.matmul %106, %108, %cst_28 {dimension_numbers = #tpu.dot_dimension_numbers<[1], [0], [0], [1], [0, 0, 1, 1], [], []>} : vector<576x8xf32>, vector<8x16xf32>, vector<576x16xf32> -> vector<576x16xf32>
    %110 = arith.addf %104, %109 : vector<576x16xf32>
    %111 = vector.extract_strided_slice %69 {offsets = [0, 2, 1, 0], sizes = [1, 24, 24, 8], strides = [1, 1, 1, 1]} : vector<1x26x26x8xf32> to vector<1x24x24x8xf32>
    %112 = vector.shape_cast %111 : vector<1x24x24x8xf32> to vector<576x8xf32>
    %c7 = arith.constant 7 : index
    %c0_29 = arith.constant 0 : index
    %c0_30 = arith.constant 0 : index
    %113 = vector.load %arg4[%c7, %c0_29, %c0_30] : memref<9x8x16xf32, #tpu.memory_space<vmem>>, vector<1x8x16xf32>
    %114 = vector.shape_cast %113 : vector<1x8x16xf32> to vector<8x16xf32>
    %cst_31 = arith.constant dense<0.000000e+00> : vector<576x16xf32>
    %115 = tpu.matmul %112, %114, %cst_31 {dimension_numbers = #tpu.dot_dimension_numbers<[1], [0], [0], [1], [0, 0, 1, 1], [], []>} : vector<576x8xf32>, vector<8x16xf32>, vector<576x16xf32> -> vector<576x16xf32>
    %116 = arith.addf %110, %115 : vector<576x16xf32>
    %117 = vector.extract_strided_slice %69 {offsets = [0, 2, 2, 0], sizes = [1, 24, 24, 8], strides = [1, 1, 1, 1]} : vector<1x26x26x8xf32> to vector<1x24x24x8xf32>
    %118 = vector.shape_cast %117 : vector<1x24x24x8xf32> to vector<576x8xf32>
    %c8 = arith.constant 8 : index
    %c0_32 = arith.constant 0 : index
    %c0_33 = arith.constant 0 : index
    %119 = vector.load %arg4[%c8, %c0_32, %c0_33] : memref<9x8x16xf32, #tpu.memory_space<vmem>>, vector<1x8x16xf32>
    %120 = vector.shape_cast %119 : vector<1x8x16xf32> to vector<8x16xf32>
    %cst_34 = arith.constant dense<0.000000e+00> : vector<576x16xf32>
    %121 = tpu.matmul %118, %120, %cst_34 {dimension_numbers = #tpu.dot_dimension_numbers<[1], [0], [0], [1], [0, 0, 1, 1], [], []>} : vector<576x8xf32>, vector<8x16xf32>, vector<576x16xf32> -> vector<576x16xf32>
    %122 = arith.addf %116, %121 : vector<576x16xf32>
    %c0_35 = arith.constant 0 : index
    %c0_36 = arith.constant 0 : index
    %123 = vector.load %arg5[%c0_35, %c0_36] : memref<1x16xf32, #tpu.memory_space<vmem>>, vector<1x16xf32>
    %124 = vector.broadcast %123 : vector<1x16xf32> to vector<576x16xf32>
    %125 = arith.addf %122, %124 : vector<576x16xf32>
    %cst_37 = arith.constant 0.000000e+00 : f32
    %126 = vector.broadcast %cst_37 : f32 to vector<576x16xf32>
    %127 = arith.maximumf %125, %126 : vector<576x16xf32>
    %128 = vector.shape_cast %127 : vector<576x16xf32> to vector<1x12x2x24x16xf32>
    %129 = vector.extract_strided_slice %128 {offsets = [0, 0, 0, 0, 0], sizes = [1, 12, 1, 24, 16], strides = [1, 1, 1, 1, 1]} : vector<1x12x2x24x16xf32> to vector<1x12x1x24x16xf32>
    %130 = vector.shape_cast %129 : vector<1x12x1x24x16xf32> to vector<1x12x24x16xf32>
    %131 = vector.extract_strided_slice %128 {offsets = [0, 0, 1, 0, 0], sizes = [1, 12, 1, 24, 16], strides = [1, 1, 1, 1, 1]} : vector<1x12x2x24x16xf32> to vector<1x12x1x24x16xf32>
    %132 = vector.shape_cast %131 : vector<1x12x1x24x16xf32> to vector<1x12x24x16xf32>
    %133 = arith.maximumf %130, %132 : vector<1x12x24x16xf32>
    %134 = tpu.transpose %133, [0, 1, 3, 2] : vector<1x12x24x16xf32> -> vector<1x12x16x24xf32>
    %135 = vector.shape_cast %134 : vector<1x12x16x24xf32> to vector<192x24xf32>
    %136 = tpu.iota {dimensions = array<i32: 0>} : vector<24x12xi32>
    %137 = tpu.iota {dimensions = array<i32: 1>} : vector<24x12xi32>
    %c2_i32 = arith.constant 2 : i32
    %138 = vector.broadcast %c2_i32 : i32 to vector<24x12xi32>
    %139 = arith.muli %138, %137 : vector<24x12xi32>
    %140 = arith.cmpi eq, %136, %139 : vector<24x12xi32>
    %141 = arith.extui %140 : vector<24x12xi1> to vector<24x12xi32>
    %142 = arith.sitofp %141 : vector<24x12xi32> to vector<24x12xf32>
    %c2_i32_38 = arith.constant 2 : i32
    %143 = vector.broadcast %c2_i32_38 : i32 to vector<24x12xi32>
    %144 = arith.muli %143, %137 : vector<24x12xi32>
    %c1_i32 = arith.constant 1 : i32
    %145 = vector.broadcast %c1_i32 : i32 to vector<24x12xi32>
    %146 = arith.addi %144, %145 : vector<24x12xi32>
    %147 = arith.cmpi eq, %136, %146 : vector<24x12xi32>
    %148 = arith.extui %147 : vector<24x12xi1> to vector<24x12xi32>
    %149 = arith.sitofp %148 : vector<24x12xi32> to vector<24x12xf32>
    %cst_39 = arith.constant dense<0.000000e+00> : vector<192x12xf32>
    %150 = tpu.matmul %135, %142, %cst_39 {dimension_numbers = #tpu.dot_dimension_numbers<[1], [0], [0], [1], [0, 0, 1, 1], [], []>} : vector<192x24xf32>, vector<24x12xf32>, vector<192x12xf32> -> vector<192x12xf32>
    %cst_40 = arith.constant dense<0.000000e+00> : vector<192x12xf32>
    %151 = tpu.matmul %135, %149, %cst_40 {dimension_numbers = #tpu.dot_dimension_numbers<[1], [0], [0], [1], [0, 0, 1, 1], [], []>} : vector<192x24xf32>, vector<24x12xf32>, vector<192x12xf32> -> vector<192x12xf32>
    %152 = arith.maximumf %150, %151 : vector<192x12xf32>
    %153 = vector.shape_cast %152 : vector<192x12xf32> to vector<1x192x12xf32>
    %c0_41 = arith.constant 0 : index
    %c0_42 = arith.constant 0 : index
    %c0_43 = arith.constant 0 : index
    %154 = vector.load %arg6[%c0_41, %c0_42, %c0_43] : memref<1x192x12xf32, #tpu.memory_space<vmem>>, vector<1x192x12xf32>
    tpu.vector_store %arg6[%c0_41, %c0_42, %c0_43], %153 {strides = array<i32>} : memref<1x192x12xf32, #tpu.memory_space<vmem>>, vector<1x192x12xf32>,
    return
  }
  func.func @transform_0(%arg0: i32) -> (i32, i32, i32, i32) {
    %c0_i32 = arith.constant 0 : i32
    %c0_i32_0 = arith.constant 0 : i32
    %c0_i32_1 = arith.constant 0 : i32
    %c0_i32_2 = arith.constant 0 : i32
    return %arg0, %c0_i32, %c0_i32_0, %c0_i32_1 : i32, i32, i32, i32
  }
  func.func @transform_1(%arg0: i32) -> (i32, i32) {
    %c0_i32 = arith.constant 0 : i32
    %c0_i32_0 = arith.constant 0 : i32
    %c0_i32_1 = arith.constant 0 : i32
    return %c0_i32, %c0_i32_0 : i32, i32
  }
  func.func @transform_2(%arg0: i32) -> (i32, i32) {
    %c0_i32 = arith.constant 0 : i32
    %c0_i32_0 = arith.constant 0 : i32
    %c0_i32_1 = arith.constant 0 : i32
    return %c0_i32, %c0_i32_0 : i32, i32
  }
  func.func @transform_3(%arg0: i32) -> (i32, i32, i32) {
    %c0_i32 = arith.constant 0 : i32
    %c0_i32_0 = arith.constant 0 : i32
    %c0_i32_1 = arith.constant 0 : i32
    %c0_i32_2 = arith.constant 0 : i32
    return %c0_i32, %c0_i32_0, %c0_i32_1 : i32, i32, i32
  }
  func.func @transform_4(%arg0: i32) -> (i32, i32) {
    %c0_i32 = arith.constant 0 : i32
    %c0_i32_0 = arith.constant 0 : i32
    %c0_i32_1 = arith.constant 0 : i32
    return %c0_i32, %c0_i32_0 : i32, i32
  }
  func.func @transform_5(%arg0: i32) -> (i32, i32, i32) {
    %c0_i32 = arith.constant 0 : i32
    %c0_i32_0 = arith.constant 0 : i32
    %c0_i32_1 = arith.constant 0 : i32
    return %arg0, %c0_i32, %c0_i32_0 : i32, i32, i32
  }
}

</mosaic_0001>

<llo_original>
// kernel: tpu_custom_call.1
$region0: #{tpu_custom_call.1}
  #allocation0 [shape = 'u32[]', space=smem, size = 0x4, offset = 0x4, fixed_abs, tag = 'smem constant byte address 0x4 - core index']
  #allocation1 [shape = 'u32[144,128]{1,0:T(1,128)}', space=vmem, size = 0x12000, scoped, tag = 'internal scratch']
  %s0 = inlined_call_operand.vmem [shape: f32[2,28,28,1], index: 0, kind: input, shape index: {}]
  %s1 = inlined_call_operand.vmem [shape: f32[9,8], index: 1, kind: input, shape index: {}]
  %s2 = inlined_call_operand.vmem [shape: f32[1,8], index: 2, kind: input, shape index: {}]
  %s3 = inlined_call_operand.vmem [shape: f32[9,8,16], index: 3, kind: input, shape index: {}]
  %s4 = inlined_call_operand.vmem [shape: f32[1,16], index: 4, kind: input, shape index: {}]
  %s5 = inlined_call_operand.vmem [shape: f32[2,192,12], index: 5, kind: output, shape index: {}]
  %s6 = sld [smem:[#allocation0]]
  $region53: #{tpu_custom_call.1} parent=0
    _
  %s8 = ssub.s32 1, %s6
  %s9 = scalar_select 0, %s8, %s6
  loop: start=0, step=1, limit=4
  $region2: #{tpu_custom_call.1} parent=0 // loop_pre_header
    _
  $region3: #{tpu_custom_call.1} parent=0 // loop_header
    %s11 = sphi 0, %s15
    %p12 = scmp.ge.s32.totalorder %s11, 4
    %s21 = sphi 0, %s23
    %s24 = sphi 0, %s21
    %s25 = sphi 0, %s24
    %s41 = sphi 0, %s25
    %s45 = sphi 0, %s45
    %s47 = sphi 0, %s45
    %s48 = sphi 0, %s47
    %s62 = sphi 0, %s48
    %s66 = sphi 0, %s66
    %s68 = sphi 0, %s66
    %s69 = sphi 0, %s68
    %s83 = sphi 0, %s69
    %s87 = sphi 0, %s87
    %s89 = sphi 0, %s87
    %s90 = sphi 0, %s89
    %s104 = sphi 0, %s90
    %s108 = sphi 0, %s108
    %s110 = sphi 0, %s108
    %s111 = sphi 0, %s110
    %s125 = sphi 0, %s111
    %s131 = sphi 0, %s133
    %s134 = sphi 0, %s131
    %s135 = sphi 0, %s134
    %s151 = sphi 0, %s135
  $region4: #{tpu_custom_call.1} parent=0 // loop_header_branch
    %14 = sbr.rel (%p12) target = $region8
  $region5: #{tpu_custom_call.1} parent=0 // loop_body
    %s16 = ssub.s32 %s11, 1
    %s17 = ssub.s32 %s11, 2
    %s18 = sadd.s32 %s11, 1
    %s19 = ssub.s32 %s11, %s18
    %p20 = scmp.eq.s32.totalorder %s19, 0
    %s22 = sadd.s32 %s21, 1
    %s23 = scalar_select %p20, %s21, %s22
    %p26 = pneg %p20
    %p27 = scmp.eq.s32.totalorder %s11, 1
    %p28 = por %p26, %p27
    %p29 = scmp.ne.s32.totalorder %s21, %s24
    %p30 = scmp.eq.s32.totalorder %s11, 0
    %p31 = por %p29, %p30
    %p32 = scmp.ne.s32.totalorder %s21, %s24
    %p33 = scmp.eq.s32.totalorder %s16, 1
    %p34 = por %p32, %p33
    %p35 = scmp.ne.s32.totalorder %s24, %s25
    %p36 = scmp.eq.s32.totalorder %s16, 0
    %p37 = por %p35, %p36
    %p38 = scmp.ne.s32.totalorder %s24, %s25
    %p39 = scmp.eq.s32.totalorder %s17, 1
    %p40 = por %p38, %p39
    %p42 = scmp.ne.s32.totalorder %s25, %s41
    %p43 = scmp.eq.s32.totalorder %s17, 0
    %p44 = por %p42, %p43
    %s46 = sadd.s32 %s45, 1
    %p49 = scmp.eq.s32.totalorder %s11, 1
    %p50 = scmp.ne.s32.totalorder %s45, %s47
    %p51 = scmp.eq.s32.totalorder %s11, 0
    %p52 = por %p50, %p51
    %p53 = scmp.ne.s32.totalorder %s45, %s47
    %p54 = scmp.eq.s32.totalorder %s16, 1
    %p55 = por %p53, %p54
    %p56 = scmp.ne.s32.totalorder %s47, %s48
    %p57 = scmp.eq.s32.totalorder %s16, 0
    %p58 = por %p56, %p57
    %p59 = scmp.ne.s32.totalorder %s47, %s48
    %p60 = scmp.eq.s32.totalorder %s17, 1
    %p61 = por %p59, %p60
    %p63 = scmp.ne.s32.totalorder %s48, %s62
    %p64 = scmp.eq.s32.totalorder %s17, 0
    %p65 = por %p63, %p64
    %s67 = sadd.s32 %s66, 1
    %p70 = scmp.eq.s32.totalorder %s11, 1
    %p71 = scmp.ne.s32.totalorder %s66, %s68
    %p72 = scmp.eq.s32.totalorder %s11, 0
    %p73 = por %p71, %p72
    %p74 = scmp.ne.s32.totalorder %s66, %s68
    %p75 = scmp.eq.s32.totalorder %s16, 1
    %p76 = por %p74, %p75
    %p77 = scmp.ne.s32.totalorder %s68, %s69
    %p78 = scmp.eq.s32.totalorder %s16, 0
    %p79 = por %p77, %p78
    %p80 = scmp.ne.s32.totalorder %s68, %s69
    %p81 = scmp.eq.s32.totalorder %s17, 1
    %p82 = por %p80, %p81
    %p84 = scmp.ne.s32.totalorder %s69, %s83
    %p85 = scmp.eq.s32.totalorder %s17, 0
    %p86 = por %p84, %p85
    %s88 = sadd.s32 %s87, 1
    %p91 = scmp.eq.s32.totalorder %s11, 1
    %p92 = scmp.ne.s32.totalorder %s87, %s89
    %p93 = scmp.eq.s32.totalorder %s11, 0
    %p94 = por %p92, %p93
    %p95 = scmp.ne.s32.totalorder %s87, %s89
    %p96 = scmp.eq.s32.totalorder %s16, 1
    %p97 = por %p95, %p96
    %p98 = scmp.ne.s32.totalorder %s89, %s90
    %p99 = scmp.eq.s32.totalorder %s16, 0
    %p100 = por %p98, %p99
    %p101 = scmp.ne.s32.totalorder %s89, %s90
    %p102 = scmp.eq.s32.totalorder %s17, 1
    %p103 = por %p101, %p102
    %p105 = scmp.ne.s32.totalorder %s90, %s104
    %p106 = scmp.eq.s32.totalorder %s17, 0
    %p107 = por %p105, %p106
    %s109 = sadd.s32 %s108, 1
    %p112 = scmp.eq.s32.totalorder %s11, 1
    %p113 = scmp.ne.s32.totalorder %s108, %s110
    %p114 = scmp.eq.s32.totalorder %s11, 0
    %p115 = por %p113, %p114
    %p116 = scmp.ne.s32.totalorder %s108, %s110
    %p117 = scmp.eq.s32.totalorder %s16, 1
    %p118 = por %p116, %p117
    %p119 = scmp.ne.s32.totalorder %s110, %s111
    %p120 = scmp.eq.s32.totalorder %s16, 0
    %p121 = por %p119, %p120
    %p122 = scmp.ne.s32.totalorder %s110, %s111
    %p123 = scmp.eq.s32.totalorder %s17, 1
    %p124 = por %p122, %p123
    %p126 = scmp.ne.s32.totalorder %s111, %s125
    %p127 = scmp.eq.s32.totalorder %s17, 0
    %p128 = por %p126, %p127
    %s129 = ssub.s32 %s11, %s18
    %p130 = scmp.eq.s32.totalorder %s129, 0
    %s132 = sadd.s32 %s131, 1
    %s133 = scalar_select %p130, %s131, %s132
    %p136 = pneg %p130
    %p137 = scmp.eq.s32.totalorder %s11, 1
    %p138 = por %p136, %p137
    %p139 = scmp.ne.s32.totalorder %s131, %s134
    %p140 = scmp.eq.s32.totalorder %s11, 0
    %p141 = por %p139, %p140
    %p142 = scmp.ne.s32.totalorder %s131, %s134
    %p143 = scmp.eq.s32.totalorder %s16, 1
    %p144 = por %p142, %p143
    %p145 = scmp.ne.s32.totalorder %s134, %s135
    %p146 = scmp.eq.s32.totalorder %s16, 0
    %p147 = por %p145, %p146
    %p148 = scmp.ne.s32.totalorder %s134, %s135
    %p149 = scmp.eq.s32.totalorder %s17, 1
    %p150 = por %p148, %p149
    %p152 = scmp.ne.s32.totalorder %s135, %s151
    %p153 = scmp.eq.s32.totalorder %s17, 0
    %p154 = por %p152, %p153
    %p155 = scmp.le.s32.totalorder 1, %s11
    %p156 = scmp.lt.s32.totalorder %s11, 3
    %p157 = pnand %p155, %p156
    %p158 = pneg %p157
    // Predicated region
    $region9: #{tpu_custom_call.1} parent=5 // pred_check
      _
    $region10: #{tpu_custom_call.1} parent=5 // pred_check_branch
      %160 = sbr.rel (%p157) target = $region12
    $region11: #{tpu_custom_call.1} parent=5 // pred_region
      %s161 = ssub.s32 %s11, 1
      // Predicated region
      $region13: #{tpu_custom_call.1} parent=11 // pred_check
        %p162 = pneg %p58
      $region14: #{tpu_custom_call.1} parent=11 // pred_check_branch
        %164 = sbr.rel (%p162) target = $region16
      $region15: #{tpu_custom_call.1} parent=11 // pred_region
        _
      $region16: #{tpu_custom_call.1} parent=11 // pred_fallthru
        _
      // Predicated region
      $region17: #{tpu_custom_call.1} parent=11 // pred_check
        %p165 = pneg %p79
      $region18: #{tpu_custom_call.1} parent=11 // pred_check_branch
        %167 = sbr.rel (%p165) target = $region20
      $region19: #{tpu_custom_call.1} parent=11 // pred_region
        _
      $region20: #{tpu_custom_call.1} parent=11 // pred_fallthru
        _
      // Predicated region
      $region21: #{tpu_custom_call.1} parent=11 // pred_check
        %p168 = pneg %p100
      $region22: #{tpu_custom_call.1} parent=11 // pred_check_branch
        %170 = sbr.rel (%p168) target = $region24
      $region23: #{tpu_custom_call.1} parent=11 // pred_region
        _
      $region24: #{tpu_custom_call.1} parent=11 // pred_fallthru
        _
      // Predicated region
      $region25: #{tpu_custom_call.1} parent=11 // pred_check
        %p171 = pneg %p121
      $region26: #{tpu_custom_call.1} parent=11 // pred_check_branch
        %173 = sbr.rel (%p171) target = $region28
      $region27: #{tpu_custom_call.1} parent=11 // pred_region
        _
      $region28: #{tpu_custom_call.1} parent=11 // pred_fallthru
        _
    $region12: #{tpu_custom_call.1} parent=5 // pred_fallthru
      _
    %p174 = scmp.lt.s32.totalorder %s11, 2
    // Predicated region
    $region29: #{tpu_custom_call.1} parent=5 // pred_check
      %p175 = pneg %p174
    $region30: #{tpu_custom_call.1} parent=5 // pred_check_branch
      %177 = sbr.rel (%p175) target = $region32
    $region31: #{tpu_custom_call.1} parent=5 // pred_region
      // Predicated region
      $region33: #{tpu_custom_call.1} parent=31 // pred_check
        %p178 = pneg %p31
      $region34: #{tpu_custom_call.1} parent=31 // pred_check_branch
        %180 = sbr.rel (%p178) target = $region36
      $region35: #{tpu_custom_call.1} parent=31 // pred_region
        %p181 = scmp.lt.s32.totalorder %s11, 1
        %s182 = scalar_select %p181, %s11, 1
        %s183 = smul.addr %s182, 112
        %s184 = smul.addr %s183, 8
        %s185 = scalar_lea.vmem %s0, %s184
      $region36: #{tpu_custom_call.1} parent=31 // pred_fallthru
        _
    $region32: #{tpu_custom_call.1} parent=5 // pred_fallthru
      _
    %p186 = scmp.le.s32.totalorder 1, %s11
    %p187 = scmp.lt.s32.totalorder %s11, 3
    %p188 = pnand %p186, %p187
    %p189 = pneg %p188
    // Predicated region
    $region37: #{tpu_custom_call.1} parent=5 // pred_check
      _
    $region38: #{tpu_custom_call.1} parent=5 // pred_check_branch
      %191 = sbr.rel (%p188) target = $region40
    $region39: #{tpu_custom_call.1} parent=5 // pred_region
      %s192 = ssub.s32 %s11, 1
      %p193 = scmp.lt.s32.totalorder %s16, 1
      %s194 = scalar_select %p193, %s16, 1
      %s195 = smul.addr %s194, 112
      %s196 = smul.addr %s195, 8
      %s197 = scalar_lea.vmem %s0, %s196
      %p198 = pneg %p37
      %p199 = pneg %p34
      %p200 = pneg %p58
      %p201 = pneg %p55
      %p202 = pneg %p79
      %p203 = pneg %p76
      %p204 = pneg %p100
      %p205 = pneg %p97
      %p206 = pneg %p121
      %p207 = pneg %p118
      %p208 = pneg %p147
      %p209 = pneg %p144
      %p210 = scmp.lt.s32.totalorder %s16, 1
      %s211 = scalar_select %p210, %s16, 1
      %s212 = smul.addr %s211, 24
      %s213 = smul.addr %s212, 8
      %s214 = scalar_lea.vmem %s5, %s213
      %p215 = scmp.lt.s32.totalorder %s16, 1
      %s216 = scalar_select %p215, %s16, 1
      %s217 = smul.addr %s216, 112
      %s218 = smul.addr %s217, 8
      %s219 = scalar_lea.vmem %s0, %s218
      %p220 = scmp.lt.s32.totalorder %s16, 1
      %s221 = scalar_select %p220, %s16, 1
      %s222 = smul.addr %s221, 24
      %s223 = smul.addr %s222, 8
      %s224 = scalar_lea.vmem %s5, %s223
      %v225 = vld [vmem:[%s219] sm:$0xff]
      %v226 = vld [vmem:[%s219 + $0x8] sm:$0xff]
      %v227 = vld [vmem:[%s219 + $0x10] sm:$0xff]
      %v228 = vld [vmem:[%s219 + $0x18] sm:$0xf]
      %v229 = vld [vmem:[%s219 + $0x20] sm:$0xff]
      %v230 = vld [vmem:[%s219 + $0x28] sm:$0xff]
      %v231 = vld [vmem:[%s219 + $0x30] sm:$0xff]
      %v232 = vld [vmem:[%s219 + $0x38] sm:$0xf]
      %v233 = vld [vmem:[%s219 + $0x40] sm:$0xff]
      %v234 = vld [vmem:[%s219 + $0x48] sm:$0xff]
      %v235 = vld [vmem:[%s219 + $0x50] sm:$0xff]
      %v236 = vld [vmem:[%s219 + $0x58] sm:$0xf]
      %v237 = vld [vmem:[%s219 + $0x60] sm:$0xff]
      %v238 = vld [vmem:[%s219 + $0x68] sm:$0xff]
      %v239 = vld [vmem:[%s219 + $0x70] sm:$0xff]
      %v240 = vld [vmem:[%s219 + $0x78] sm:$0xf]
      %v241 = vld [vmem:[%s219 + $0x80] sm:$0xff]
      %v242 = vld [vmem:[%s219 + $0x88] sm:$0xff]
      %v243 = vld [vmem:[%s219 + $0x90] sm:$0xff]
      %v244 = vld [vmem:[%s219 + $0x98] sm:$0xf]
      %v245 = vld [vmem:[%s219 + $0xa0] sm:$0xff]
      %v246 = vld [vmem:[%s219 + $0xa8] sm:$0xff]
      %v247 = vld [vmem:[%s219 + $0xb0] sm:$0xff]
      %v248 = vld [vmem:[%s219 + $0xb8] sm:$0xf]
      %v249 = vld [vmem:[%s219 + $0xc0] sm:$0xff]
      %v250 = vld [vmem:[%s219 + $0xc8] sm:$0xff]
      %v251 = vld [vmem:[%s219 + $0xd0] sm:$0xff]
      %v252 = vld [vmem:[%s219 + $0xd8] sm:$0xf]
      %v253 = vld [vmem:[%s219 + $0xe0] sm:$0xff]
      %v254 = vld [vmem:[%s219 + $0xe8] sm:$0xff]
      %v255 = vld [vmem:[%s219 + $0xf0] sm:$0xff]
      %v256 = vld [vmem:[%s219 + $0xf8] sm:$0xf]
      %v257 = vld [vmem:[%s219 + $0x100] sm:$0xff]
      %v258 = vld [vmem:[%s219 + $0x108] sm:$0xff]
      %v259 = vld [vmem:[%s219 + $0x110] sm:$0xff]
      %v260 = vld [vmem:[%s219 + $0x118] sm:$0xf]
      %v261 = vld [vmem:[%s219 + $0x120] sm:$0xff]
      %v262 = vld [vmem:[%s219 + $0x128] sm:$0xff]
      %v263 = vld [vmem:[%s219 + $0x130] sm:$0xff]
      %v264 = vld [vmem:[%s219 + $0x138] sm:$0xf]
      %v265 = vld [vmem:[%s219 + $0x140] sm:$0xff]
      %v266 = vld [vmem:[%s219 + $0x148] sm:$0xff]
      %v267 = vld [vmem:[%s219 + $0x150] sm:$0xff]
      %v268 = vld [vmem:[%s219 + $0x158] sm:$0xf]
      %v269 = vld [vmem:[%s219 + $0x160] sm:$0xff]
      %v270 = vld [vmem:[%s219 + $0x168] sm:$0xff]
      %v271 = vld [vmem:[%s219 + $0x170] sm:$0xff]
      %v272 = vld [vmem:[%s219 + $0x178] sm:$0xf]
      %v273 = vld [vmem:[%s219 + $0x180] sm:$0xff]
      %v274 = vld [vmem:[%s219 + $0x188] sm:$0xff]
      %v275 = vld [vmem:[%s219 + $0x190] sm:$0xff]
      %v276 = vld [vmem:[%s219 + $0x198] sm:$0xf]
      %v277 = vld [vmem:[%s219 + $0x1a0] sm:$0xff]
      %v278 = vld [vmem:[%s219 + $0x1a8] sm:$0xff]
      %v279 = vld [vmem:[%s219 + $0x1b0] sm:$0xff]
      %v280 = vld [vmem:[%s219 + $0x1b8] sm:$0xf]
      %v281 = vld [vmem:[%s219 + $0x1c0] sm:$0xff]
      %v282 = vld [vmem:[%s219 + $0x1c8] sm:$0xff]
      %v283 = vld [vmem:[%s219 + $0x1d0] sm:$0xff]
      %v284 = vld [vmem:[%s219 + $0x1d8] sm:$0xf]
      %v285 = vld [vmem:[%s219 + $0x1e0] sm:$0xff]
      %v286 = vld [vmem:[%s219 + $0x1e8] sm:$0xff]
      %v287 = vld [vmem:[%s219 + $0x1f0] sm:$0xff]
      %v288 = vld [vmem:[%s219 + $0x1f8] sm:$0xf]
      %v289 = vld [vmem:[%s219 + $0x200] sm:$0xff]
      %v290 = vld [vmem:[%s219 + $0x208] sm:$0xff]
      %v291 = vld [vmem:[%s219 + $0x210] sm:$0xff]
      %v292 = vld [vmem:[%s219 + $0x218] sm:$0xf]
      %v293 = vld [vmem:[%s219 + $0x220] sm:$0xff]
      %v294 = vld [vmem:[%s219 + $0x228] sm:$0xff]
      %v295 = vld [vmem:[%s219 + $0x230] sm:$0xff]
      %v296 = vld [vmem:[%s219 + $0x238] sm:$0xf]
      %v297 = vld [vmem:[%s219 + $0x240] sm:$0xff]
      %v298 = vld [vmem:[%s219 + $0x248] sm:$0xff]
      %v299 = vld [vmem:[%s219 + $0x250] sm:$0xff]
      %v300 = vld [vmem:[%s219 + $0x258] sm:$0xf]
      %v301 = vld [vmem:[%s219 + $0x260] sm:$0xff]
      %v302 = vld [vmem:[%s219 + $0x268] sm:$0xff]
      %v303 = vld [vmem:[%s219 + $0x270] sm:$0xff]
      %v304 = vld [vmem:[%s219 + $0x278] sm:$0xf]
      %v305 = vld [vmem:[%s219 + $0x280] sm:$0xff]
      %v306 = vld [vmem:[%s219 + $0x288] sm:$0xff]
      %v307 = vld [vmem:[%s219 + $0x290] sm:$0xff]
      %v308 = vld [vmem:[%s219 + $0x298] sm:$0xf]
      %v309 = vld [vmem:[%s219 + $0x2a0] sm:$0xff]
      %v310 = vld [vmem:[%s219 + $0x2a8] sm:$0xff]
      %v311 = vld [vmem:[%s219 + $0x2b0] sm:$0xff]
      %v312 = vld [vmem:[%s219 + $0x2b8] sm:$0xf]
      %v313 = vld [vmem:[%s219 + $0x2c0] sm:$0xff]
      %v314 = vld [vmem:[%s219 + $0x2c8] sm:$0xff]
      %v315 = vld [vmem:[%s219 + $0x2d0] sm:$0xff]
      %v316 = vld [vmem:[%s219 + $0x2d8] sm:$0xf]
      %v317 = vld [vmem:[%s219 + $0x2e0] sm:$0xff]
      %v318 = vld [vmem:[%s219 + $0x2e8] sm:$0xff]
      %v319 = vld [vmem:[%s219 + $0x2f0] sm:$0xff]
      %v320 = vld [vmem:[%s219 + $0x2f8] sm:$0xf]
      %v321 = vld [vmem:[%s219 + $0x300] sm:$0xff]
      %v322 = vld [vmem:[%s219 + $0x308] sm:$0xff]
      %v323 = vld [vmem:[%s219 + $0x310] sm:$0xff]
      %v324 = vld [vmem:[%s219 + $0x318] sm:$0xf]
      %v325 = vld [vmem:[%s219 + $0x320] sm:$0xff]
      %v326 = vld [vmem:[%s219 + $0x328] sm:$0xff]
      %v327 = vld [vmem:[%s219 + $0x330] sm:$0xff]
      %v328 = vld [vmem:[%s219 + $0x338] sm:$0xf]
      %v329 = vld [vmem:[%s219 + $0x340] sm:$0xff]
      %v330 = vld [vmem:[%s219 + $0x348] sm:$0xff]
      %v331 = vld [vmem:[%s219 + $0x350] sm:$0xff]
      %v332 = vld [vmem:[%s219 + $0x358] sm:$0xf]
      %v333 = vld [vmem:[%s219 + $0x360] sm:$0xff]
      %v334 = vld [vmem:[%s219 + $0x368] sm:$0xff]
      %v335 = vld [vmem:[%s219 + $0x370] sm:$0xff]
      %v336 = vld [vmem:[%s219 + $0x378] sm:$0xf]
      %v337 = vld [vmem:[%s1] sm:$0xff]
      %v338 = vld [vmem:[%s1 + $0x8] sm:$0x1]
      %340 = vset.pattern.permute.xlu0 0
      %341 = vperm.xlu0 %340, %v225
      %v342 = vpop.permute.xlu0 %341
      %345 = vset.pattern.permute.xlu0 0
      %346 = vperm.xlu0 %345, %v226
      %v347 = vpop.permute.xlu0 %346
      %350 = vset.pattern.permute.xlu0 0
      %351 = vperm.xlu0 %350, %v227
      %v352 = vpop.permute.xlu0 %351
      %355 = vset.pattern.permute.xlu0 0
      %356 = vperm.xlu0 %355, %v228
      %v357 = vpop.permute.xlu0 %356
      %360 = vset.pattern.permute.xlu0 0
      %361 = vperm.xlu0 %360, %v229
      %v362 = vpop.permute.xlu0 %361
      %365 = vset.pattern.permute.xlu0 0
      %366 = vperm.xlu0 %365, %v230
      %v367 = vpop.permute.xlu0 %366
      %370 = vset.pattern.permute.xlu0 0
      %371 = vperm.xlu0 %370, %v231
      %v372 = vpop.permute.xlu0 %371
      %375 = vset.pattern.permute.xlu0 0
      %376 = vperm.xlu0 %375, %v232
      %v377 = vpop.permute.xlu0 %376
      %380 = vset.pattern.permute.xlu0 0
      %381 = vperm.xlu0 %380, %v233
      %v382 = vpop.permute.xlu0 %381
      %385 = vset.pattern.permute.xlu0 0
      %386 = vperm.xlu0 %385, %v234
      %v387 = vpop.permute.xlu0 %386
      %390 = vset.pattern.permute.xlu0 0
      %391 = vperm.xlu0 %390, %v235
      %v392 = vpop.permute.xlu0 %391
      %395 = vset.pattern.permute.xlu0 0
      %396 = vperm.xlu0 %395, %v236
      %v397 = vpop.permute.xlu0 %396
      %400 = vset.pattern.permute.xlu0 0
      %401 = vperm.xlu0 %400, %v237
      %v402 = vpop.permute.xlu0 %401
      %405 = vset.pattern.permute.xlu0 0
      %406 = vperm.xlu0 %405, %v238
      %v407 = vpop.permute.xlu0 %406
      %410 = vset.pattern.permute.xlu0 0
      %411 = vperm.xlu0 %410, %v239
      %v412 = vpop.permute.xlu0 %411
      %415 = vset.pattern.permute.xlu0 0
      %416 = vperm.xlu0 %415, %v240
      %v417 = vpop.permute.xlu0 %416
      %420 = vset.pattern.permute.xlu0 0
      %421 = vperm.xlu0 %420, %v241
      %v422 = vpop.permute.xlu0 %421
      %425 = vset.pattern.permute.xlu0 0
      %426 = vperm.xlu0 %425, %v242
      %v427 = vpop.permute.xlu0 %426
      %430 = vset.pattern.permute.xlu0 0
      %431 = vperm.xlu0 %430, %v243
      %v432 = vpop.permute.xlu0 %431
      %435 = vset.pattern.permute.xlu0 0
      %436 = vperm.xlu0 %435, %v244
      %v437 = vpop.permute.xlu0 %436
      %440 = vset.pattern.permute.xlu0 0
      %441 = vperm.xlu0 %440, %v245
      %v442 = vpop.permute.xlu0 %441
      %445 = vset.pattern.permute.xlu0 0
      %446 = vperm.xlu0 %445, %v246
      %v447 = vpop.permute.xlu0 %446
      %450 = vset.pattern.permute.xlu0 0
      %451 = vperm.xlu0 %450, %v247
      %v452 = vpop.permute.xlu0 %451
      %455 = vset.pattern.permute.xlu0 0
      %456 = vperm.xlu0 %455, %v248
      %v457 = vpop.permute.xlu0 %456
      %460 = vset.pattern.permute.xlu0 0
      %461 = vperm.xlu0 %460, %v249
      %v462 = vpop.permute.xlu0 %461
      %465 = vset.pattern.permute.xlu0 0
      %466 = vperm.xlu0 %465, %v250
      %v467 = vpop.permute.xlu0 %466
      %470 = vset.pattern.permute.xlu0 0
      %471 = vperm.xlu0 %470, %v251
      %v472 = vpop.permute.xlu0 %471
      %475 = vset.pattern.permute.xlu0 0
      %476 = vperm.xlu0 %475, %v252
      %v477 = vpop.permute.xlu0 %476
      %480 = vset.pattern.permute.xlu0 0
      %481 = vperm.xlu0 %480, %v253
      %v482 = vpop.permute.xlu0 %481
      %485 = vset.pattern.permute.xlu0 0
      %486 = vperm.xlu0 %485, %v254
      %v487 = vpop.permute.xlu0 %486
      %490 = vset.pattern.permute.xlu0 0
      %491 = vperm.xlu0 %490, %v255
      %v492 = vpop.permute.xlu0 %491
      %495 = vset.pattern.permute.xlu0 0
      %496 = vperm.xlu0 %495, %v256
      %v497 = vpop.permute.xlu0 %496
      %500 = vset.pattern.permute.xlu0 0
      %501 = vperm.xlu0 %500, %v257
      %v502 = vpop.permute.xlu0 %501
      %505 = vset.pattern.permute.xlu0 0
      %506 = vperm.xlu0 %505, %v258
      %v507 = vpop.permute.xlu0 %506
      %510 = vset.pattern.permute.xlu0 0
      %511 = vperm.xlu0 %510, %v259
      %v512 = vpop.permute.xlu0 %511
      %515 = vset.pattern.permute.xlu0 0
      %516 = vperm.xlu0 %515, %v260
      %v517 = vpop.permute.xlu0 %516
      %520 = vset.pattern.permute.xlu0 0
      %521 = vperm.xlu0 %520, %v261
      %v522 = vpop.permute.xlu0 %521
      %525 = vset.pattern.permute.xlu0 0
      %526 = vperm.xlu0 %525, %v262
      %v527 = vpop.permute.xlu0 %526
      %530 = vset.pattern.permute.xlu0 0
      %531 = vperm.xlu0 %530, %v263
      %v532 = vpop.permute.xlu0 %531
      %535 = vset.pattern.permute.xlu0 0
      %536 = vperm.xlu0 %535, %v264
      %v537 = vpop.permute.xlu0 %536
      %540 = vset.pattern.permute.xlu0 0
      %541 = vperm.xlu0 %540, %v265
      %v542 = vpop.permute.xlu0 %541
      %545 = vset.pattern.permute.xlu0 0
      %546 = vperm.xlu0 %545, %v266
      %v547 = vpop.permute.xlu0 %546
      %550 = vset.pattern.permute.xlu0 0
      %551 = vperm.xlu0 %550, %v267
      %v552 = vpop.permute.xlu0 %551
      %555 = vset.pattern.permute.xlu0 0
      %556 = vperm.xlu0 %555, %v268
      %v557 = vpop.permute.xlu0 %556
      %560 = vset.pattern.permute.xlu0 0
      %561 = vperm.xlu0 %560, %v269
      %v562 = vpop.permute.xlu0 %561
      %565 = vset.pattern.permute.xlu0 0
      %566 = vperm.xlu0 %565, %v270
      %v567 = vpop.permute.xlu0 %566
      %570 = vset.pattern.permute.xlu0 0
      %571 = vperm.xlu0 %570, %v271
      %v572 = vpop.permute.xlu0 %571
      %575 = vset.pattern.permute.xlu0 0
      %576 = vperm.xlu0 %575, %v272
      %v577 = vpop.permute.xlu0 %576
      %580 = vset.pattern.permute.xlu0 0
      %581 = vperm.xlu0 %580, %v273
      %v582 = vpop.permute.xlu0 %581
      %585 = vset.pattern.permute.xlu0 0
      %586 = vperm.xlu0 %585, %v274
      %v587 = vpop.permute.xlu0 %586
      %590 = vset.pattern.permute.xlu0 0
      %591 = vperm.xlu0 %590, %v275
      %v592 = vpop.permute.xlu0 %591
      %595 = vset.pattern.permute.xlu0 0
      %596 = vperm.xlu0 %595, %v276
      %v597 = vpop.permute.xlu0 %596
      %600 = vset.pattern.permute.xlu0 0
      %601 = vperm.xlu0 %600, %v277
      %v602 = vpop.permute.xlu0 %601
      %605 = vset.pattern.permute.xlu0 0
      %606 = vperm.xlu0 %605, %v278
      %v607 = vpop.permute.xlu0 %606
      %610 = vset.pattern.permute.xlu0 0
      %611 = vperm.xlu0 %610, %v279
      %v612 = vpop.permute.xlu0 %611
      %615 = vset.pattern.permute.xlu0 0
      %616 = vperm.xlu0 %615, %v280
      %v617 = vpop.permute.xlu0 %616
      %620 = vset.pattern.permute.xlu0 0
      %621 = vperm.xlu0 %620, %v281
      %v622 = vpop.permute.xlu0 %621
      %625 = vset.pattern.permute.xlu0 0
      %626 = vperm.xlu0 %625, %v282
      %v627 = vpop.permute.xlu0 %626
      %630 = vset.pattern.permute.xlu0 0
      %631 = vperm.xlu0 %630, %v283
      %v632 = vpop.permute.xlu0 %631
      %635 = vset.pattern.permute.xlu0 0
      %636 = vperm.xlu0 %635, %v284
      %v637 = vpop.permute.xlu0 %636
      %640 = vset.pattern.permute.xlu0 0
      %641 = vperm.xlu0 %640, %v285
      %v642 = vpop.permute.xlu0 %641
      %645 = vset.pattern.permute.xlu0 0
      %646 = vperm.xlu0 %645, %v286
      %v647 = vpop.permute.xlu0 %646
      %650 = vset.pattern.permute.xlu0 0
      %651 = vperm.xlu0 %650, %v287
      %v652 = vpop.permute.xlu0 %651
      %655 = vset.pattern.permute.xlu0 0
      %656 = vperm.xlu0 %655, %v288
      %v657 = vpop.permute.xlu0 %656
      %660 = vset.pattern.permute.xlu0 0
      %661 = vperm.xlu0 %660, %v289
      %v662 = vpop.permute.xlu0 %661
      %665 = vset.pattern.permute.xlu0 0
      %666 = vperm.xlu0 %665, %v290
      %v667 = vpop.permute.xlu0 %666
      %670 = vset.pattern.permute.xlu0 0
      %671 = vperm.xlu0 %670, %v291
      %v672 = vpop.permute.xlu0 %671
      %675 = vset.pattern.permute.xlu0 0
      %676 = vperm.xlu0 %675, %v292
      %v677 = vpop.permute.xlu0 %676
      %680 = vset.pattern.permute.xlu0 0
      %681 = vperm.xlu0 %680, %v293
      %v682 = vpop.permute.xlu0 %681
      %685 = vset.pattern.permute.xlu0 0
      %686 = vperm.xlu0 %685, %v294
      %v687 = vpop.permute.xlu0 %686
      %690 = vset.pattern.permute.xlu0 0
      %691 = vperm.xlu0 %690, %v295
      %v692 = vpop.permute.xlu0 %691
      %695 = vset.pattern.permute.xlu0 0
      %696 = vperm.xlu0 %695, %v296
      %v697 = vpop.permute.xlu0 %696
      %700 = vset.pattern.permute.xlu0 0
      %701 = vperm.xlu0 %700, %v297
      %v702 = vpop.permute.xlu0 %701
      %705 = vset.pattern.permute.xlu0 0
      %706 = vperm.xlu0 %705, %v298
      %v707 = vpop.permute.xlu0 %706
      %710 = vset.pattern.permute.xlu0 0
      %711 = vperm.xlu0 %710, %v299
      %v712 = vpop.permute.xlu0 %711
      %715 = vset.pattern.permute.xlu0 0
      %716 = vperm.xlu0 %715, %v300
      %v717 = vpop.permute.xlu0 %716
      %720 = vset.pattern.permute.xlu0 0
      %721 = vperm.xlu0 %720, %v301
      %v722 = vpop.permute.xlu0 %721
      %725 = vset.pattern.permute.xlu0 0
      %726 = vperm.xlu0 %725, %v302
      %v727 = vpop.permute.xlu0 %726
      %730 = vset.pattern.permute.xlu0 0
      %731 = vperm.xlu0 %730, %v303
      %v732 = vpop.permute.xlu0 %731
      %735 = vset.pattern.permute.xlu0 0
      %736 = vperm.xlu0 %735, %v304
      %v737 = vpop.permute.xlu0 %736
      %740 = vset.pattern.permute.xlu0 0
      %741 = vperm.xlu0 %740, %v305
      %v742 = vpop.permute.xlu0 %741
      %745 = vset.pattern.permute.xlu0 0
      %746 = vperm.xlu0 %745, %v306
      %v747 = vpop.permute.xlu0 %746
      %750 = vset.pattern.permute.xlu0 0
      %751 = vperm.xlu0 %750, %v307
      %v752 = vpop.permute.xlu0 %751
      %755 = vset.pattern.permute.xlu0 0
      %756 = vperm.xlu0 %755, %v308
      %v757 = vpop.permute.xlu0 %756
      %760 = vset.pattern.permute.xlu0 0
      %761 = vperm.xlu0 %760, %v309
      %v762 = vpop.permute.xlu0 %761
      %765 = vset.pattern.permute.xlu0 0
      %766 = vperm.xlu0 %765, %v310
      %v767 = vpop.permute.xlu0 %766
      %770 = vset.pattern.permute.xlu0 0
      %771 = vperm.xlu0 %770, %v311
      %v772 = vpop.permute.xlu0 %771
      %775 = vset.pattern.permute.xlu0 0
      %776 = vperm.xlu0 %775, %v312
      %v777 = vpop.permute.xlu0 %776
      %780 = vset.pattern.permute.xlu0 0
      %781 = vperm.xlu0 %780, %v313
      %v782 = vpop.permute.xlu0 %781
      %785 = vset.pattern.permute.xlu0 0
      %786 = vperm.xlu0 %785, %v314
      %v787 = vpop.permute.xlu0 %786
      %790 = vset.pattern.permute.xlu0 0
      %791 = vperm.xlu0 %790, %v315
      %v792 = vpop.permute.xlu0 %791
      %795 = vset.pattern.permute.xlu0 0
      %796 = vperm.xlu0 %795, %v316
      %v797 = vpop.permute.xlu0 %796
      %800 = vset.pattern.permute.xlu0 0
      %801 = vperm.xlu0 %800, %v317
      %v802 = vpop.permute.xlu0 %801
      %805 = vset.pattern.permute.xlu0 0
      %806 = vperm.xlu0 %805, %v318
      %v807 = vpop.permute.xlu0 %806
      %810 = vset.pattern.permute.xlu0 0
      %811 = vperm.xlu0 %810, %v319
      %v812 = vpop.permute.xlu0 %811
      %815 = vset.pattern.permute.xlu0 0
      %816 = vperm.xlu0 %815, %v320
      %v817 = vpop.permute.xlu0 %816
      %820 = vset.pattern.permute.xlu0 0
      %821 = vperm.xlu0 %820, %v321
      %v822 = vpop.permute.xlu0 %821
      %825 = vset.pattern.permute.xlu0 0
      %826 = vperm.xlu0 %825, %v322
      %v827 = vpop.permute.xlu0 %826
      %830 = vset.pattern.permute.xlu0 0
      %831 = vperm.xlu0 %830, %v323
      %v832 = vpop.permute.xlu0 %831
      %835 = vset.pattern.permute.xlu0 0
      %836 = vperm.xlu0 %835, %v324
      %v837 = vpop.permute.xlu0 %836
      %840 = vset.pattern.permute.xlu0 0
      %841 = vperm.xlu0 %840, %v325
      %v842 = vpop.permute.xlu0 %841
      %845 = vset.pattern.permute.xlu0 0
      %846 = vperm.xlu0 %845, %v326
      %v847 = vpop.permute.xlu0 %846
      %850 = vset.pattern.permute.xlu0 0
      %851 = vperm.xlu0 %850, %v327
      %v852 = vpop.permute.xlu0 %851
      %855 = vset.pattern.permute.xlu0 0
      %856 = vperm.xlu0 %855, %v328
      %v857 = vpop.permute.xlu0 %856
      %v859 = vlaneseq
      %v860 = vshrl.u32 %v859, 7
      %v861 = vsub.s32 0, %v860
      %v862 = vrot.slane %v337, %v861
      %v863 = vmul.f32 %v342, %v862
      %v864 = vmul.f32 %v347, %v862
      %v865 = vmul.f32 %v352, %v862
      %v866 = vmul.f32 %v357, %v862
      %v867 = vmul.f32 %v362, %v862
      %v868 = vmul.f32 %v367, %v862
      %v869 = vmul.f32 %v372, %v862
      %v870 = vmul.f32 %v377, %v862
      %v871 = vmul.f32 %v382, %v862
      %v872 = vmul.f32 %v387, %v862
      %v873 = vmul.f32 %v392, %v862
      %v874 = vmul.f32 %v397, %v862
      %v875 = vmul.f32 %v402, %v862
      %v876 = vmul.f32 %v407, %v862
      %v877 = vmul.f32 %v412, %v862
      %v878 = vmul.f32 %v417, %v862
      %v879 = vmul.f32 %v422, %v862
      %v880 = vmul.f32 %v427, %v862
      %v881 = vmul.f32 %v432, %v862
      %v882 = vmul.f32 %v437, %v862
      %v883 = vmul.f32 %v442, %v862
      %v884 = vmul.f32 %v447, %v862
      %v885 = vmul.f32 %v452, %v862
      %v886 = vmul.f32 %v457, %v862
      %v887 = vmul.f32 %v462, %v862
      %v888 = vmul.f32 %v467, %v862
      %v889 = vmul.f32 %v472, %v862
      %v890 = vmul.f32 %v477, %v862
      %v891 = vmul.f32 %v482, %v862
      %v892 = vmul.f32 %v487, %v862
      %v893 = vmul.f32 %v492, %v862
      %v894 = vmul.f32 %v497, %v862
      %v895 = vmul.f32 %v502, %v862
      %v896 = vmul.f32 %v507, %v862
      %v897 = vmul.f32 %v512, %v862
      %v898 = vmul.f32 %v517, %v862
      %v899 = vmul.f32 %v522, %v862
      %v900 = vmul.f32 %v527, %v862
      %v901 = vmul.f32 %v532, %v862
      %v902 = vmul.f32 %v537, %v862
      %v903 = vmul.f32 %v542, %v862
      %v904 = vmul.f32 %v547, %v862
      %v905 = vmul.f32 %v552, %v862
      %v906 = vmul.f32 %v557, %v862
      %v907 = vmul.f32 %v562, %v862
      %v908 = vmul.f32 %v567, %v862
      %v909 = vmul.f32 %v572, %v862
      %v910 = vmul.f32 %v577, %v862
      %v911 = vmul.f32 %v582, %v862
      %v912 = vmul.f32 %v587, %v862
      %v913 = vmul.f32 %v592, %v862
      %v914 = vmul.f32 %v597, %v862
      %v915 = vmul.f32 %v602, %v862
      %v916 = vmul.f32 %v607, %v862
      %v917 = vmul.f32 %v612, %v862
      %v918 = vmul.f32 %v617, %v862
      %v919 = vmul.f32 %v622, %v862
      %v920 = vmul.f32 %v627, %v862
      %v921 = vmul.f32 %v632, %v862
      %v922 = vmul.f32 %v637, %v862
      %v923 = vmul.f32 %v642, %v862
      %v924 = vmul.f32 %v647, %v862
      %v925 = vmul.f32 %v652, %v862
      %v926 = vmul.f32 %v657, %v862
      %v927 = vmul.f32 %v662, %v862
      %v928 = vmul.f32 %v667, %v862
      %v929 = vmul.f32 %v672, %v862
      %v930 = vmul.f32 %v677, %v862
      %v931 = vmul.f32 %v682, %v862
      %v932 = vmul.f32 %v687, %v862
      %v933 = vmul.f32 %v692, %v862
      %v934 = vmul.f32 %v697, %v862
      %v935 = vmul.f32 %v702, %v862
      %v936 = vmul.f32 %v707, %v862
      %v937 = vmul.f32 %v712, %v862
      %v938 = vmul.f32 %v717, %v862
      %v939 = vmul.f32 %v722, %v862
      %v940 = vmul.f32 %v727, %v862
      %v941 = vmul.f32 %v732, %v862
      %v942 = vmul.f32 %v737, %v862
      %v943 = vmul.f32 %v742, %v862
      %v944 = vmul.f32 %v747, %v862
      %v945 = vmul.f32 %v752, %v862
      %v946 = vmul.f32 %v757, %v862
      %v947 = vmul.f32 %v762, %v862
      %v948 = vmul.f32 %v767, %v862
      %v949 = vmul.f32 %v772, %v862
      %v950 = vmul.f32 %v777, %v862
      %v951 = vmul.f32 %v782, %v862
      %v952 = vmul.f32 %v787, %v862
      %v953 = vmul.f32 %v792, %v862
      %v954 = vmul.f32 %v797, %v862
      %v955 = vmul.f32 %v802, %v862
      %v956 = vmul.f32 %v807, %v862
      %v957 = vmul.f32 %v812, %v862
      %v958 = vmul.f32 %v817, %v862
      %v959 = vmul.f32 %v822, %v862
      %v960 = vmul.f32 %v827, %v862
      %v961 = vmul.f32 %v832, %v862
      %v962 = vmul.f32 %v837, %v862
      %v963 = vmul.f32 %v842, %v862
      %v964 = vmul.f32 %v847, %v862
      %v965 = vmul.f32 %v852, %v862
      %v966 = vmul.f32 %v857, %v862
      %v967 = vlaneseq
      %v968 = vshrl.u32 %v967, 7
      %v969 = vsub.s32 1, %v968
      %v970 = vrot.slane %v337, %v969
      %v971 = vmul.f32 %v342, %v970
      %v972 = vmul.f32 %v347, %v970
      %v973 = vmul.f32 %v352, %v970
      %v974 = vmul.f32 %v357, %v970
      %v975 = vmul.f32 %v362, %v970
      %v976 = vmul.f32 %v367, %v970
      %v977 = vmul.f32 %v372, %v970
      %v978 = vmul.f32 %v377, %v970
      %v979 = vmul.f32 %v382, %v970
      %v980 = vmul.f32 %v387, %v970
      %v981 = vmul.f32 %v392, %v970
      %v982 = vmul.f32 %v397, %v970
      %v983 = vmul.f32 %v402, %v970
      %v984 = vmul.f32 %v407, %v970
      %v985 = vmul.f32 %v412, %v970
      %v986 = vmul.f32 %v417, %v970
      %v987 = vmul.f32 %v422, %v970
      %v988 = vmul.f32 %v427, %v970
      %v989 = vmul.f32 %v432, %v970
      %v990 = vmul.f32 %v437, %v970
      %v991 = vmul.f32 %v442, %v970
      %v992 = vmul.f32 %v447, %v970
      %v993 = vmul.f32 %v452, %v970
      %v994 = vmul.f32 %v457, %v970
      %v995 = vmul.f32 %v462, %v970
      %v996 = vmul.f32 %v467, %v970
      %v997 = vmul.f32 %v472, %v970
      %v998 = vmul.f32 %v477, %v970
      %v999 = vmul.f32 %v482, %v970
      %v1000 = vmul.f32 %v487, %v970
      %v1001 = vmul.f32 %v492, %v970
      %v1002 = vmul.f32 %v497, %v970
      %v1003 = vmul.f32 %v502, %v970
      %v1004 = vmul.f32 %v507, %v970
      %v1005 = vmul.f32 %v512, %v970
      %v1006 = vmul.f32 %v517, %v970
      %v1007 = vmul.f32 %v522, %v970
      %v1008 = vmul.f32 %v527, %v970
      %v1009 = vmul.f32 %v532, %v970
      %v1010 = vmul.f32 %v537, %v970
      %v1011 = vmul.f32 %v542, %v970
      %v1012 = vmul.f32 %v547, %v970
      %v1013 = vmul.f32 %v552, %v970
      %v1014 = vmul.f32 %v557, %v970
      %v1015 = vmul.f32 %v562, %v970
      %v1016 = vmul.f32 %v567, %v970
      %v1017 = vmul.f32 %v572, %v970
      %v1018 = vmul.f32 %v577, %v970
      %v1019 = vmul.f32 %v582, %v970
      %v1020 = vmul.f32 %v587, %v970
      %v1021 = vmul.f32 %v592, %v970
      %v1022 = vmul.f32 %v597, %v970
      %v1023 = vmul.f32 %v602, %v970
      %v1024 = vmul.f32 %v607, %v970
      %v1025 = vmul.f32 %v612, %v970
      %v1026 = vmul.f32 %v617, %v970
      %v1027 = vmul.f32 %v622, %v970
      %v1028 = vmul.f32 %v627, %v970
      %v1029 = vmul.f32 %v632, %v970
      %v1030 = vmul.f32 %v637, %v970
      %v1031 = vmul.f32 %v642, %v970
      %v1032 = vmul.f32 %v647, %v970
      %v1033 = vmul.f32 %v652, %v970
      %v1034 = vmul.f32 %v657, %v970
      %v1035 = vmul.f32 %v662, %v970
      %v1036 = vmul.f32 %v667, %v970
      %v1037 = vmul.f32 %v672, %v970
      %v1038 = vmul.f32 %v677, %v970
      %v1039 = vmul.f32 %v682, %v970
      %v1040 = vmul.f32 %v687, %v970
      %v1041 = vmul.f32 %v692, %v970
      %v1042 = vmul.f32 %v697, %v970
      %v1043 = vmul.f32 %v702, %v970
      %v1044 = vmul.f32 %v707, %v970
      %v1045 = vmul.f32 %v712, %v970
      %v1046 = vmul.f32 %v717, %v970
      %v1047 = vmul.f32 %v722, %v970
      %v1048 = vmul.f32 %v727, %v970
      %v1049 = vmul.f32 %v732, %v970
      %v1050 = vmul.f32 %v737, %v970
      %v1051 = vmul.f32 %v742, %v970
      %v1052 = vmul.f32 %v747, %v970
      %v1053 = vmul.f32 %v752, %v970
      %v1054 = vmul.f32 %v757, %v970
      %v1055 = vmul.f32 %v762, %v970
      %v1056 = vmul.f32 %v767, %v970
      %v1057 = vmul.f32 %v772, %v970
      %v1058 = vmul.f32 %v777, %v970
      %v1059 = vmul.f32 %v782, %v970
      %v1060 = vmul.f32 %v787, %v970
      %v1061 = vmul.f32 %v792, %v970
      %v1062 = vmul.f32 %v797, %v970
      %v1063 = vmul.f32 %v802, %v970
      %v1064 = vmul.f32 %v807, %v970
      %v1065 = vmul.f32 %v812, %v970
      %v1066 = vmul.f32 %v817, %v970
      %v1067 = vmul.f32 %v822, %v970
      %v1068 = vmul.f32 %v827, %v970
      %v1069 = vmul.f32 %v832, %v970
      %v1070 = vmul.f32 %v837, %v970
      %v1071 = vmul.f32 %v842, %v970
      %v1072 = vmul.f32 %v847, %v970
      %v1073 = vmul.f32 %v852, %v970
      %v1074 = vmul.f32 %v857, %v970
      %vm1179 = vcmask 1046528
      %v1180 = vrot.slane %v971, 1
      %v1181 = vrot.slane %v972, 1
      %v1182 = vsel %vm1179, %v1180, %v1181
      %v1183 = vrot.slane %v973, 1
      %v1184 = vsel %vm1179, %v1181, %v1183
      %v1185 = vrot.slane %v974, 1
      %v1186 = vsel %vm1179, %v1183, %v1185
      %v1187 = vrot.slane %v975, 1
      %v1188 = vrot.slane %v976, 1
      %v1189 = vsel %vm1179, %v1187, %v1188
      %v1190 = vrot.slane %v977, 1
      %v1191 = vsel %vm1179, %v1188, %v1190
      %v1192 = vrot.slane %v978, 1
      %v1193 = vsel %vm1179, %v1190, %v1192
      %v1194 = vrot.slane %v979, 1
      %v1195 = vrot.slane %v980, 1
      %v1196 = vsel %vm1179, %v1194, %v1195
      %v1197 = vrot.slane %v981, 1
      %v1198 = vsel %vm1179, %v1195, %v1197
      %v1199 = vrot.slane %v982, 1
      %v1200 = vsel %vm1179, %v1197, %v1199
      %v1201 = vrot.slane %v983, 1
      %v1202 = vrot.slane %v984, 1
      %v1203 = vsel %vm1179, %v1201, %v1202
      %v1204 = vrot.slane %v985, 1
      %v1205 = vsel %vm1179, %v1202, %v1204
      %v1206 = vrot.slane %v986, 1
      %v1207 = vsel %vm1179, %v1204, %v1206
      %v1208 = vrot.slane %v987, 1
      %v1209 = vrot.slane %v988, 1
      %v1210 = vsel %vm1179, %v1208, %v1209
      %v1211 = vrot.slane %v989, 1
      %v1212 = vsel %vm1179, %v1209, %v1211
      %v1213 = vrot.slane %v990, 1
      %v1214 = vsel %vm1179, %v1211, %v1213
      %v1215 = vrot.slane %v991, 1
      %v1216 = vrot.slane %v992, 1
      %v1217 = vsel %vm1179, %v1215, %v1216
      %v1218 = vrot.slane %v993, 1
      %v1219 = vsel %vm1179, %v1216, %v1218
      %v1220 = vrot.slane %v994, 1
      %v1221 = vsel %vm1179, %v1218, %v1220
      %v1222 = vrot.slane %v995, 1
      %v1223 = vrot.slane %v996, 1
      %v1224 = vsel %vm1179, %v1222, %v1223
      %v1225 = vrot.slane %v997, 1
      %v1226 = vsel %vm1179, %v1223, %v1225
      %v1227 = vrot.slane %v998, 1
      %v1228 = vsel %vm1179, %v1225, %v1227
      %v1229 = vrot.slane %v999, 1
      %v1230 = vrot.slane %v1000, 1
      %v1231 = vsel %vm1179, %v1229, %v1230
      %v1232 = vrot.slane %v1001, 1
      %v1233 = vsel %vm1179, %v1230, %v1232
      %v1234 = vrot.slane %v1002, 1
      %v1235 = vsel %vm1179, %v1232, %v1234
      %v1236 = vrot.slane %v1003, 1
      %v1237 = vrot.slane %v1004, 1
      %v1238 = vsel %vm1179, %v1236, %v1237
      %v1239 = vrot.slane %v1005, 1
      %v1240 = vsel %vm1179, %v1237, %v1239
      %v1241 = vrot.slane %v1006, 1
      %v1242 = vsel %vm1179, %v1239, %v1241
      %v1243 = vrot.slane %v1007, 1
      %v1244 = vrot.slane %v1008, 1
      %v1245 = vsel %vm1179, %v1243, %v1244
      %v1246 = vrot.slane %v1009, 1
      %v1247 = vsel %vm1179, %v1244, %v1246
      %v1248 = vrot.slane %v1010, 1
      %v1249 = vsel %vm1179, %v1246, %v1248
      %v1250 = vrot.slane %v1011, 1
      %v1251 = vrot.slane %v1012, 1
      %v1252 = vsel %vm1179, %v1250, %v1251
      %v1253 = vrot.slane %v1013, 1
      %v1254 = vsel %vm1179, %v1251, %v1253
      %v1255 = vrot.slane %v1014, 1
      %v1256 = vsel %vm1179, %v1253, %v1255
      %v1257 = vrot.slane %v1015, 1
      %v1258 = vrot.slane %v1016, 1
      %v1259 = vsel %vm1179, %v1257, %v1258
      %v1260 = vrot.slane %v1017, 1
      %v1261 = vsel %vm1179, %v1258, %v1260
      %v1262 = vrot.slane %v1018, 1
      %v1263 = vsel %vm1179, %v1260, %v1262
      %v1264 = vrot.slane %v1019, 1
      %v1265 = vrot.slane %v1020, 1
      %v1266 = vsel %vm1179, %v1264, %v1265
      %v1267 = vrot.slane %v1021, 1
      %v1268 = vsel %vm1179, %v1265, %v1267
      %v1269 = vrot.slane %v1022, 1
      %v1270 = vsel %vm1179, %v1267, %v1269
      %v1271 = vrot.slane %v1023, 1
      %v1272 = vrot.slane %v1024, 1
      %v1273 = vsel %vm1179, %v1271, %v1272
      %v1274 = vrot.slane %v1025, 1
      %v1275 = vsel %vm1179, %v1272, %v1274
      %v1276 = vrot.slane %v1026, 1
      %v1277 = vsel %vm1179, %v1274, %v1276
      %v1278 = vrot.slane %v1027, 1
      %v1279 = vrot.slane %v1028, 1
      %v1280 = vsel %vm1179, %v1278, %v1279
      %v1281 = vrot.slane %v1029, 1
      %v1282 = vsel %vm1179, %v1279, %v1281
      %v1283 = vrot.slane %v1030, 1
      %v1284 = vsel %vm1179, %v1281, %v1283
      %v1285 = vrot.slane %v1031, 1
      %v1286 = vrot.slane %v1032, 1
      %v1287 = vsel %vm1179, %v1285, %v1286
      %v1288 = vrot.slane %v1033, 1
      %v1289 = vsel %vm1179, %v1286, %v1288
      %v1290 = vrot.slane %v1034, 1
      %v1291 = vsel %vm1179, %v1288, %v1290
      %v1292 = vrot.slane %v1035, 1
      %v1293 = vrot.slane %v1036, 1
      %v1294 = vsel %vm1179, %v1292, %v1293
      %v1295 = vrot.slane %v1037, 1
      %v1296 = vsel %vm1179, %v1293, %v1295
      %v1297 = vrot.slane %v1038, 1
      %v1298 = vsel %vm1179, %v1295, %v1297
      %v1299 = vrot.slane %v1039, 1
      %v1300 = vrot.slane %v1040, 1
      %v1301 = vsel %vm1179, %v1299, %v1300
      %v1302 = vrot.slane %v1041, 1
      %v1303 = vsel %vm1179, %v1300, %v1302
      %v1304 = vrot.slane %v1042, 1
      %v1305 = vsel %vm1179, %v1302, %v1304
      %v1306 = vrot.slane %v1043, 1
      %v1307 = vrot.slane %v1044, 1
      %v1308 = vsel %vm1179, %v1306, %v1307
      %v1309 = vrot.slane %v1045, 1
      %v1310 = vsel %vm1179, %v1307, %v1309
      %v1311 = vrot.slane %v1046, 1
      %v1312 = vsel %vm1179, %v1309, %v1311
      %v1313 = vrot.slane %v1047, 1
      %v1314 = vrot.slane %v1048, 1
      %v1315 = vsel %vm1179, %v1313, %v1314
      %v1316 = vrot.slane %v1049, 1
      %v1317 = vsel %vm1179, %v1314, %v1316
      %v1318 = vrot.slane %v1050, 1
      %v1319 = vsel %vm1179, %v1316, %v1318
      %v1320 = vrot.slane %v1051, 1
      %v1321 = vrot.slane %v1052, 1
      %v1322 = vsel %vm1179, %v1320, %v1321
      %v1323 = vrot.slane %v1053, 1
      %v1324 = vsel %vm1179, %v1321, %v1323
      %v1325 = vrot.slane %v1054, 1
      %v1326 = vsel %vm1179, %v1323, %v1325
      %v1327 = vrot.slane %v1055, 1
      %v1328 = vrot.slane %v1056, 1
      %v1329 = vsel %vm1179, %v1327, %v1328
      %v1330 = vrot.slane %v1057, 1
      %v1331 = vsel %vm1179, %v1328, %v1330
      %v1332 = vrot.slane %v1058, 1
      %v1333 = vsel %vm1179, %v1330, %v1332
      %v1334 = vrot.slane %v1059, 1
      %v1335 = vrot.slane %v1060, 1
      %v1336 = vsel %vm1179, %v1334, %v1335
      %v1337 = vrot.slane %v1061, 1
      %v1338 = vsel %vm1179, %v1335, %v1337
      %v1339 = vrot.slane %v1062, 1
      %v1340 = vsel %vm1179, %v1337, %v1339
      %v1341 = vrot.slane %v1063, 1
      %v1342 = vrot.slane %v1064, 1
      %v1343 = vsel %vm1179, %v1341, %v1342
      %v1344 = vrot.slane %v1065, 1
      %v1345 = vsel %vm1179, %v1342, %v1344
      %v1346 = vrot.slane %v1066, 1
      %v1347 = vsel %vm1179, %v1344, %v1346
      %v1348 = vrot.slane %v1067, 1
      %v1349 = vrot.slane %v1068, 1
      %v1350 = vsel %vm1179, %v1348, %v1349
      %v1351 = vrot.slane %v1069, 1
      %v1352 = vsel %vm1179, %v1349, %v1351
      %v1353 = vrot.slane %v1070, 1
      %v1354 = vsel %vm1179, %v1351, %v1353
      %v1355 = vrot.slane %v1071, 1
      %v1356 = vrot.slane %v1072, 1
      %v1357 = vsel %vm1179, %v1355, %v1356
      %v1358 = vrot.slane %v1073, 1
      %v1359 = vsel %vm1179, %v1356, %v1358
      %v1360 = vrot.slane %v1074, 1
      %v1361 = vsel %vm1179, %v1358, %v1360
      %v1466 = vadd.f32 %v863, %v1182
      %v1467 = vadd.f32 %v864, %v1184
      %v1468 = vadd.f32 %v865, %v1186
      %v1469 = vadd.f32 %v866, %v1185
      %v1470 = vadd.f32 %v867, %v1189
      %v1471 = vadd.f32 %v868, %v1191
      %v1472 = vadd.f32 %v869, %v1193
      %v1473 = vadd.f32 %v870, %v1192
      %v1474 = vadd.f32 %v871, %v1196
      %v1475 = vadd.f32 %v872, %v1198
      %v1476 = vadd.f32 %v873, %v1200
      %v1477 = vadd.f32 %v874, %v1199
      %v1478 = vadd.f32 %v875, %v1203
      %v1479 = vadd.f32 %v876, %v1205
      %v1480 = vadd.f32 %v877, %v1207
      %v1481 = vadd.f32 %v878, %v1206
      %v1482 = vadd.f32 %v879, %v1210
      %v1483 = vadd.f32 %v880, %v1212
      %v1484 = vadd.f32 %v881, %v1214
      %v1485 = vadd.f32 %v882, %v1213
      %v1486 = vadd.f32 %v883, %v1217
      %v1487 = vadd.f32 %v884, %v1219
      %v1488 = vadd.f32 %v885, %v1221
      %v1489 = vadd.f32 %v886, %v1220
      %v1490 = vadd.f32 %v887, %v1224
      %v1491 = vadd.f32 %v888, %v1226
      %v1492 = vadd.f32 %v889, %v1228
      %v1493 = vadd.f32 %v890, %v1227
      %v1494 = vadd.f32 %v891, %v1231
      %v1495 = vadd.f32 %v892, %v1233
      %v1496 = vadd.f32 %v893, %v1235
      %v1497 = vadd.f32 %v894, %v1234
      %v1498 = vadd.f32 %v895, %v1238
      %v1499 = vadd.f32 %v896, %v1240
      %v1500 = vadd.f32 %v897, %v1242
      %v1501 = vadd.f32 %v898, %v1241
      %v1502 = vadd.f32 %v899, %v1245
      %v1503 = vadd.f32 %v900, %v1247
      %v1504 = vadd.f32 %v901, %v1249
      %v1505 = vadd.f32 %v902, %v1248
      %v1506 = vadd.f32 %v903, %v1252
      %v1507 = vadd.f32 %v904, %v1254
      %v1508 = vadd.f32 %v905, %v1256
      %v1509 = vadd.f32 %v906, %v1255
      %v1510 = vadd.f32 %v907, %v1259
      %v1511 = vadd.f32 %v908, %v1261
      %v1512 = vadd.f32 %v909, %v1263
      %v1513 = vadd.f32 %v910, %v1262
      %v1514 = vadd.f32 %v911, %v1266
      %v1515 = vadd.f32 %v912, %v1268
      %v1516 = vadd.f32 %v913, %v1270
      %v1517 = vadd.f32 %v914, %v1269
      %v1518 = vadd.f32 %v915, %v1273
      %v1519 = vadd.f32 %v916, %v1275
      %v1520 = vadd.f32 %v917, %v1277
      %v1521 = vadd.f32 %v918, %v1276
      %v1522 = vadd.f32 %v919, %v1280
      %v1523 = vadd.f32 %v920, %v1282
      %v1524 = vadd.f32 %v921, %v1284
      %v1525 = vadd.f32 %v922, %v1283
      %v1526 = vadd.f32 %v923, %v1287
      %v1527 = vadd.f32 %v924, %v1289
      %v1528 = vadd.f32 %v925, %v1291
      %v1529 = vadd.f32 %v926, %v1290
      %v1530 = vadd.f32 %v927, %v1294
      %v1531 = vadd.f32 %v928, %v1296
      %v1532 = vadd.f32 %v929, %v1298
      %v1533 = vadd.f32 %v930, %v1297
      %v1534 = vadd.f32 %v931, %v1301
      %v1535 = vadd.f32 %v932, %v1303
      %v1536 = vadd.f32 %v933, %v1305
      %v1537 = vadd.f32 %v934, %v1304
      %v1538 = vadd.f32 %v935, %v1308
      %v1539 = vadd.f32 %v936, %v1310
      %v1540 = vadd.f32 %v937, %v1312
      %v1541 = vadd.f32 %v938, %v1311
      %v1542 = vadd.f32 %v939, %v1315
      %v1543 = vadd.f32 %v940, %v1317
      %v1544 = vadd.f32 %v941, %v1319
      %v1545 = vadd.f32 %v942, %v1318
      %v1546 = vadd.f32 %v943, %v1322
      %v1547 = vadd.f32 %v944, %v1324
      %v1548 = vadd.f32 %v945, %v1326
      %v1549 = vadd.f32 %v946, %v1325
      %v1550 = vadd.f32 %v947, %v1329
      %v1551 = vadd.f32 %v948, %v1331
      %v1552 = vadd.f32 %v949, %v1333
      %v1553 = vadd.f32 %v950, %v1332
      %v1554 = vadd.f32 %v951, %v1336
      %v1555 = vadd.f32 %v952, %v1338
      %v1556 = vadd.f32 %v953, %v1340
      %v1557 = vadd.f32 %v954, %v1339
      %v1558 = vadd.f32 %v955, %v1343
      %v1559 = vadd.f32 %v956, %v1345
      %v1560 = vadd.f32 %v957, %v1347
      %v1561 = vadd.f32 %v958, %v1346
      %v1562 = vadd.f32 %v959, %v1350
      %v1563 = vadd.f32 %v960, %v1352
      %v1564 = vadd.f32 %v961, %v1354
      %v1565 = vadd.f32 %v962, %v1353
      %v1566 = vadd.f32 %v963, %v1357
      %v1567 = vadd.f32 %v964, %v1359
      %v1568 = vadd.f32 %v965, %v1361
      %v1569 = vadd.f32 %v966, %v1360
      %v1570 = vlaneseq
      %v1571 = vshrl.u32 %v1570, 7
      %v1572 = vsub.s32 2, %v1571
      %v1573 = vrot.slane %v337, %v1572
      %v1574 = vmul.f32 %v342, %v1573
      %v1575 = vmul.f32 %v347, %v1573
      %v1576 = vmul.f32 %v352, %v1573
      %v1577 = vmul.f32 %v357, %v1573
      %v1578 = vmul.f32 %v362, %v1573
      %v1579 = vmul.f32 %v367, %v1573
      %v1580 = vmul.f32 %v372, %v1573
      %v1581 = vmul.f32 %v377, %v1573
      %v1582 = vmul.f32 %v382, %v1573
      %v1583 = vmul.f32 %v387, %v1573
      %v1584 = vmul.f32 %v392, %v1573
      %v1585 = vmul.f32 %v397, %v1573
      %v1586 = vmul.f32 %v402, %v1573
      %v1587 = vmul.f32 %v407, %v1573
      %v1588 = vmul.f32 %v412, %v1573
      %v1589 = vmul.f32 %v417, %v1573
      %v1590 = vmul.f32 %v422, %v1573
      %v1591 = vmul.f32 %v427, %v1573
      %v1592 = vmul.f32 %v432, %v1573
      %v1593 = vmul.f32 %v437, %v1573
      %v1594 = vmul.f32 %v442, %v1573
      %v1595 = vmul.f32 %v447, %v1573
      %v1596 = vmul.f32 %v452, %v1573
      %v1597 = vmul.f32 %v457, %v1573
      %v1598 = vmul.f32 %v462, %v1573
      %v1599 = vmul.f32 %v467, %v1573
      %v1600 = vmul.f32 %v472, %v1573
      %v1601 = vmul.f32 %v477, %v1573
      %v1602 = vmul.f32 %v482, %v1573
      %v1603 = vmul.f32 %v487, %v1573
      %v1604 = vmul.f32 %v492, %v1573
      %v1605 = vmul.f32 %v497, %v1573
      %v1606 = vmul.f32 %v502, %v1573
      %v1607 = vmul.f32 %v507, %v1573
      %v1608 = vmul.f32 %v512, %v1573
      %v1609 = vmul.f32 %v517, %v1573
      %v1610 = vmul.f32 %v522, %v1573
      %v1611 = vmul.f32 %v527, %v1573
      %v1612 = vmul.f32 %v532, %v1573
      %v1613 = vmul.f32 %v537, %v1573
      %v1614 = vmul.f32 %v542, %v1573
      %v1615 = vmul.f32 %v547, %v1573
      %v1616 = vmul.f32 %v552, %v1573
      %v1617 = vmul.f32 %v557, %v1573
      %v1618 = vmul.f32 %v562, %v1573
      %v1619 = vmul.f32 %v567, %v1573
      %v1620 = vmul.f32 %v572, %v1573
      %v1621 = vmul.f32 %v577, %v1573
      %v1622 = vmul.f32 %v582, %v1573
      %v1623 = vmul.f32 %v587, %v1573
      %v1624 = vmul.f32 %v592, %v1573
      %v1625 = vmul.f32 %v597, %v1573
      %v1626 = vmul.f32 %v602, %v1573
      %v1627 = vmul.f32 %v607, %v1573
      %v1628 = vmul.f32 %v612, %v1573
      %v1629 = vmul.f32 %v617, %v1573
      %v1630 = vmul.f32 %v622, %v1573
      %v1631 = vmul.f32 %v627, %v1573
      %v1632 = vmul.f32 %v632, %v1573
      %v1633 = vmul.f32 %v637, %v1573
      %v1634 = vmul.f32 %v642, %v1573
      %v1635 = vmul.f32 %v647, %v1573
      %v1636 = vmul.f32 %v652, %v1573
      %v1637 = vmul.f32 %v657, %v1573
      %v1638 = vmul.f32 %v662, %v1573
      %v1639 = vmul.f32 %v667, %v1573
      %v1640 = vmul.f32 %v672, %v1573
      %v1641 = vmul.f32 %v677, %v1573
      %v1642 = vmul.f32 %v682, %v1573
      %v1643 = vmul.f32 %v687, %v1573
      %v1644 = vmul.f32 %v692, %v1573
      %v1645 = vmul.f32 %v697, %v1573
      %v1646 = vmul.f32 %v702, %v1573
      %v1647 = vmul.f32 %v707, %v1573
      %v1648 = vmul.f32 %v712, %v1573
      %v1649 = vmul.f32 %v717, %v1573
      %v1650 = vmul.f32 %v722, %v1573
      %v1651 = vmul.f32 %v727, %v1573
      %v1652 = vmul.f32 %v732, %v1573
      %v1653 = vmul.f32 %v737, %v1573
      %v1654 = vmul.f32 %v742, %v1573
      %v1655 = vmul.f32 %v747, %v1573
      %v1656 = vmul.f32 %v752, %v1573
      %v1657 = vmul.f32 %v757, %v1573
      %v1658 = vmul.f32 %v762, %v1573
      %v1659 = vmul.f32 %v767, %v1573
      %v1660 = vmul.f32 %v772, %v1573
      %v1661 = vmul.f32 %v777, %v1573
      %v1662 = vmul.f32 %v782, %v1573
      %v1663 = vmul.f32 %v787, %v1573
      %v1664 = vmul.f32 %v792, %v1573
      %v1665 = vmul.f32 %v797, %v1573
      %v1666 = vmul.f32 %v802, %v1573
      %v1667 = vmul.f32 %v807, %v1573
      %v1668 = vmul.f32 %v812, %v1573
      %v1669 = vmul.f32 %v817, %v1573
      %v1670 = vmul.f32 %v822, %v1573
      %v1671 = vmul.f32 %v827, %v1573
      %v1672 = vmul.f32 %v832, %v1573
      %v1673 = vmul.f32 %v837, %v1573
      %v1674 = vmul.f32 %v842, %v1573
      %v1675 = vmul.f32 %v847, %v1573
      %v1676 = vmul.f32 %v852, %v1573
      %v1677 = vmul.f32 %v857, %v1573
      %vm1782 = vcmask 1045504
      %v1783 = vrot.slane %v1574, 2
      %v1784 = vrot.slane %v1575, 2
      %v1785 = vsel %vm1782, %v1783, %v1784
      %v1786 = vrot.slane %v1576, 2
      %v1787 = vsel %vm1782, %v1784, %v1786
      %v1788 = vrot.slane %v1577, 2
      %v1789 = vsel %vm1782, %v1786, %v1788
      %v1790 = vrot.slane %v1578, 2
      %v1791 = vrot.slane %v1579, 2
      %v1792 = vsel %vm1782, %v1790, %v1791
      %v1793 = vrot.slane %v1580, 2
      %v1794 = vsel %vm1782, %v1791, %v1793
      %v1795 = vrot.slane %v1581, 2
      %v1796 = vsel %vm1782, %v1793, %v1795
      %v1797 = vrot.slane %v1582, 2
      %v1798 = vrot.slane %v1583, 2
      %v1799 = vsel %vm1782, %v1797, %v1798
      %v1800 = vrot.slane %v1584, 2
      %v1801 = vsel %vm1782, %v1798, %v1800
      %v1802 = vrot.slane %v1585, 2
      %v1803 = vsel %vm1782, %v1800, %v1802
      %v1804 = vrot.slane %v1586, 2
      %v1805 = vrot.slane %v1587, 2
      %v1806 = vsel %vm1782, %v1804, %v1805
      %v1807 = vrot.slane %v1588, 2
      %v1808 = vsel %vm1782, %v1805, %v1807
      %v1809 = vrot.slane %v1589, 2
      %v1810 = vsel %vm1782, %v1807, %v1809
      %v1811 = vrot.slane %v1590, 2
      %v1812 = vrot.slane %v1591, 2
      %v1813 = vsel %vm1782, %v1811, %v1812
      %v1814 = vrot.slane %v1592, 2
      %v1815 = vsel %vm1782, %v1812, %v1814
      %v1816 = vrot.slane %v1593, 2
      %v1817 = vsel %vm1782, %v1814, %v1816
      %v1818 = vrot.slane %v1594, 2
      %v1819 = vrot.slane %v1595, 2
      %v1820 = vsel %vm1782, %v1818, %v1819
      %v1821 = vrot.slane %v1596, 2
      %v1822 = vsel %vm1782, %v1819, %v1821
      %v1823 = vrot.slane %v1597, 2
      %v1824 = vsel %vm1782, %v1821, %v1823
      %v1825 = vrot.slane %v1598, 2
      %v1826 = vrot.slane %v1599, 2
      %v1827 = vsel %vm1782, %v1825, %v1826
      %v1828 = vrot.slane %v1600, 2
      %v1829 = vsel %vm1782, %v1826, %v1828
      %v1830 = vrot.slane %v1601, 2
      %v1831 = vsel %vm1782, %v1828, %v1830
      %v1832 = vrot.slane %v1602, 2
      %v1833 = vrot.slane %v1603, 2
      %v1834 = vsel %vm1782, %v1832, %v1833
      %v1835 = vrot.slane %v1604, 2
      %v1836 = vsel %vm1782, %v1833, %v1835
      %v1837 = vrot.slane %v1605, 2
      %v1838 = vsel %vm1782, %v1835, %v1837
      %v1839 = vrot.slane %v1606, 2
      %v1840 = vrot.slane %v1607, 2
      %v1841 = vsel %vm1782, %v1839, %v1840
      %v1842 = vrot.slane %v1608, 2
      %v1843 = vsel %vm1782, %v1840, %v1842
      %v1844 = vrot.slane %v1609, 2
      %v1845 = vsel %vm1782, %v1842, %v1844
      %v1846 = vrot.slane %v1610, 2
      %v1847 = vrot.slane %v1611, 2
      %v1848 = vsel %vm1782, %v1846, %v1847
      %v1849 = vrot.slane %v1612, 2
      %v1850 = vsel %vm1782, %v1847, %v1849
      %v1851 = vrot.slane %v1613, 2
      %v1852 = vsel %vm1782, %v1849, %v1851
      %v1853 = vrot.slane %v1614, 2
      %v1854 = vrot.slane %v1615, 2
      %v1855 = vsel %vm1782, %v1853, %v1854
      %v1856 = vrot.slane %v1616, 2
      %v1857 = vsel %vm1782, %v1854, %v1856
      %v1858 = vrot.slane %v1617, 2
      %v1859 = vsel %vm1782, %v1856, %v1858
      %v1860 = vrot.slane %v1618, 2
      %v1861 = vrot.slane %v1619, 2
      %v1862 = vsel %vm1782, %v1860, %v1861
      %v1863 = vrot.slane %v1620, 2
      %v1864 = vsel %vm1782, %v1861, %v1863
      %v1865 = vrot.slane %v1621, 2
      %v1866 = vsel %vm1782, %v1863, %v1865
      %v1867 = vrot.slane %v1622, 2
      %v1868 = vrot.slane %v1623, 2
      %v1869 = vsel %vm1782, %v1867, %v1868
      %v1870 = vrot.slane %v1624, 2
      %v1871 = vsel %vm1782, %v1868, %v1870
      %v1872 = vrot.slane %v1625, 2
      %v1873 = vsel %vm1782, %v1870, %v1872
      %v1874 = vrot.slane %v1626, 2
      %v1875 = vrot.slane %v1627, 2
      %v1876 = vsel %vm1782, %v1874, %v1875
      %v1877 = vrot.slane %v1628, 2
      %v1878 = vsel %vm1782, %v1875, %v1877
      %v1879 = vrot.slane %v1629, 2
      %v1880 = vsel %vm1782, %v1877, %v1879
      %v1881 = vrot.slane %v1630, 2
      %v1882 = vrot.slane %v1631, 2
      %v1883 = vsel %vm1782, %v1881, %v1882
      %v1884 = vrot.slane %v1632, 2
      %v1885 = vsel %vm1782, %v1882, %v1884
      %v1886 = vrot.slane %v1633, 2
      %v1887 = vsel %vm1782, %v1884, %v1886
      %v1888 = vrot.slane %v1634, 2
      %v1889 = vrot.slane %v1635, 2
      %v1890 = vsel %vm1782, %v1888, %v1889
      %v1891 = vrot.slane %v1636, 2
      %v1892 = vsel %vm1782, %v1889, %v1891
      %v1893 = vrot.slane %v1637, 2
      %v1894 = vsel %vm1782, %v1891, %v1893
      %v1895 = vrot.slane %v1638, 2
      %v1896 = vrot.slane %v1639, 2
      %v1897 = vsel %vm1782, %v1895, %v1896
      %v1898 = vrot.slane %v1640, 2
      %v1899 = vsel %vm1782, %v1896, %v1898
      %v1900 = vrot.slane %v1641, 2
      %v1901 = vsel %vm1782, %v1898, %v1900
      %v1902 = vrot.slane %v1642, 2
      %v1903 = vrot.slane %v1643, 2
      %v1904 = vsel %vm1782, %v1902, %v1903
      %v1905 = vrot.slane %v1644, 2
      %v1906 = vsel %vm1782, %v1903, %v1905
      %v1907 = vrot.slane %v1645, 2
      %v1908 = vsel %vm1782, %v1905, %v1907
      %v1909 = vrot.slane %v1646, 2
      %v1910 = vrot.slane %v1647, 2
      %v1911 = vsel %vm1782, %v1909, %v1910
      %v1912 = vrot.slane %v1648, 2
      %v1913 = vsel %vm1782, %v1910, %v1912
      %v1914 = vrot.slane %v1649, 2
      %v1915 = vsel %vm1782, %v1912, %v1914
      %v1916 = vrot.slane %v1650, 2
      %v1917 = vrot.slane %v1651, 2
      %v1918 = vsel %vm1782, %v1916, %v1917
      %v1919 = vrot.slane %v1652, 2
      %v1920 = vsel %vm1782, %v1917, %v1919
      %v1921 = vrot.slane %v1653, 2
      %v1922 = vsel %vm1782, %v1919, %v1921
      %v1923 = vrot.slane %v1654, 2
      %v1924 = vrot.slane %v1655, 2
      %v1925 = vsel %vm1782, %v1923, %v1924
      %v1926 = vrot.slane %v1656, 2
      %v1927 = vsel %vm1782, %v1924, %v1926
      %v1928 = vrot.slane %v1657, 2
      %v1929 = vsel %vm1782, %v1926, %v1928
      %v1930 = vrot.slane %v1658, 2
      %v1931 = vrot.slane %v1659, 2
      %v1932 = vsel %vm1782, %v1930, %v1931
      %v1933 = vrot.slane %v1660, 2
      %v1934 = vsel %vm1782, %v1931, %v1933
      %v1935 = vrot.slane %v1661, 2
      %v1936 = vsel %vm1782, %v1933, %v1935
      %v1937 = vrot.slane %v1662, 2
      %v1938 = vrot.slane %v1663, 2
      %v1939 = vsel %vm1782, %v1937, %v1938
      %v1940 = vrot.slane %v1664, 2
      %v1941 = vsel %vm1782, %v1938, %v1940
      %v1942 = vrot.slane %v1665, 2
      %v1943 = vsel %vm1782, %v1940, %v1942
      %v1944 = vrot.slane %v1666, 2
      %v1945 = vrot.slane %v1667, 2
      %v1946 = vsel %vm1782, %v1944, %v1945
      %v1947 = vrot.slane %v1668, 2
      %v1948 = vsel %vm1782, %v1945, %v1947
      %v1949 = vrot.slane %v1669, 2
      %v1950 = vsel %vm1782, %v1947, %v1949
      %v1951 = vrot.slane %v1670, 2
      %v1952 = vrot.slane %v1671, 2
      %v1953 = vsel %vm1782, %v1951, %v1952
      %v1954 = vrot.slane %v1672, 2
      %v1955 = vsel %vm1782, %v1952, %v1954
      %v1956 = vrot.slane %v1673, 2
      %v1957 = vsel %vm1782, %v1954, %v1956
      %v1958 = vrot.slane %v1674, 2
      %v1959 = vrot.slane %v1675, 2
      %v1960 = vsel %vm1782, %v1958, %v1959
      %v1961 = vrot.slane %v1676, 2
      %v1962 = vsel %vm1782, %v1959, %v1961
      %v1963 = vrot.slane %v1677, 2
      %v1964 = vsel %vm1782, %v1961, %v1963
      %v2069 = vadd.f32 %v1466, %v1785
      %v2070 = vadd.f32 %v1467, %v1787
      %v2071 = vadd.f32 %v1468, %v1789
      %v2072 = vadd.f32 %v1469, %v1788
      %v2073 = vadd.f32 %v1470, %v1792
      %v2074 = vadd.f32 %v1471, %v1794
      %v2075 = vadd.f32 %v1472, %v1796
      %v2076 = vadd.f32 %v1473, %v1795
      %v2077 = vadd.f32 %v1474, %v1799
      %v2078 = vadd.f32 %v1475, %v1801
      %v2079 = vadd.f32 %v1476, %v1803
      %v2080 = vadd.f32 %v1477, %v1802
      %v2081 = vadd.f32 %v1478, %v1806
      %v2082 = vadd.f32 %v1479, %v1808
      %v2083 = vadd.f32 %v1480, %v1810
      %v2084 = vadd.f32 %v1481, %v1809
      %v2085 = vadd.f32 %v1482, %v1813
      %v2086 = vadd.f32 %v1483, %v1815
      %v2087 = vadd.f32 %v1484, %v1817
      %v2088 = vadd.f32 %v1485, %v1816
      %v2089 = vadd.f32 %v1486, %v1820
      %v2090 = vadd.f32 %v1487, %v1822
      %v2091 = vadd.f32 %v1488, %v1824
      %v2092 = vadd.f32 %v1489, %v1823
      %v2093 = vadd.f32 %v1490, %v1827
      %v2094 = vadd.f32 %v1491, %v1829
      %v2095 = vadd.f32 %v1492, %v1831
      %v2096 = vadd.f32 %v1493, %v1830
      %v2097 = vadd.f32 %v1494, %v1834
      %v2098 = vadd.f32 %v1495, %v1836
      %v2099 = vadd.f32 %v1496, %v1838
      %v2100 = vadd.f32 %v1497, %v1837
      %v2101 = vadd.f32 %v1498, %v1841
      %v2102 = vadd.f32 %v1499, %v1843
      %v2103 = vadd.f32 %v1500, %v1845
      %v2104 = vadd.f32 %v1501, %v1844
      %v2105 = vadd.f32 %v1502, %v1848
      %v2106 = vadd.f32 %v1503, %v1850
      %v2107 = vadd.f32 %v1504, %v1852
      %v2108 = vadd.f32 %v1505, %v1851
      %v2109 = vadd.f32 %v1506, %v1855
      %v2110 = vadd.f32 %v1507, %v1857
      %v2111 = vadd.f32 %v1508, %v1859
      %v2112 = vadd.f32 %v1509, %v1858
      %v2113 = vadd.f32 %v1510, %v1862
      %v2114 = vadd.f32 %v1511, %v1864
      %v2115 = vadd.f32 %v1512, %v1866
      %v2116 = vadd.f32 %v1513, %v1865
      %v2117 = vadd.f32 %v1514, %v1869
      %v2118 = vadd.f32 %v1515, %v1871
      %v2119 = vadd.f32 %v1516, %v1873
      %v2120 = vadd.f32 %v1517, %v1872
      %v2121 = vadd.f32 %v1518, %v1876
      %v2122 = vadd.f32 %v1519, %v1878
      %v2123 = vadd.f32 %v1520, %v1880
      %v2124 = vadd.f32 %v1521, %v1879
      %v2125 = vadd.f32 %v1522, %v1883
      %v2126 = vadd.f32 %v1523, %v1885
      %v2127 = vadd.f32 %v1524, %v1887
      %v2128 = vadd.f32 %v1525, %v1886
      %v2129 = vadd.f32 %v1526, %v1890
      %v2130 = vadd.f32 %v1527, %v1892
      %v2131 = vadd.f32 %v1528, %v1894
      %v2132 = vadd.f32 %v1529, %v1893
      %v2133 = vadd.f32 %v1530, %v1897
      %v2134 = vadd.f32 %v1531, %v1899
      %v2135 = vadd.f32 %v1532, %v1901
      %v2136 = vadd.f32 %v1533, %v1900
      %v2137 = vadd.f32 %v1534, %v1904
      %v2138 = vadd.f32 %v1535, %v1906
      %v2139 = vadd.f32 %v1536, %v1908
      %v2140 = vadd.f32 %v1537, %v1907
      %v2141 = vadd.f32 %v1538, %v1911
      %v2142 = vadd.f32 %v1539, %v1913
      %v2143 = vadd.f32 %v1540, %v1915
      %v2144 = vadd.f32 %v1541, %v1914
      %v2145 = vadd.f32 %v1542, %v1918
      %v2146 = vadd.f32 %v1543, %v1920
      %v2147 = vadd.f32 %v1544, %v1922
      %v2148 = vadd.f32 %v1545, %v1921
      %v2149 = vadd.f32 %v1546, %v1925
      %v2150 = vadd.f32 %v1547, %v1927
      %v2151 = vadd.f32 %v1548, %v1929
      %v2152 = vadd.f32 %v1549, %v1928
      %v2153 = vadd.f32 %v1550, %v1932
      %v2154 = vadd.f32 %v1551, %v1934
      %v2155 = vadd.f32 %v1552, %v1936
      %v2156 = vadd.f32 %v1553, %v1935
      %v2157 = vadd.f32 %v1554, %v1939
      %v2158 = vadd.f32 %v1555, %v1941
      %v2159 = vadd.f32 %v1556, %v1943
      %v2160 = vadd.f32 %v1557, %v1942
      %v2161 = vadd.f32 %v1558, %v1946
      %v2162 = vadd.f32 %v1559, %v1948
      %v2163 = vadd.f32 %v1560, %v1950
      %v2164 = vadd.f32 %v1561, %v1949
      %v2165 = vadd.f32 %v1562, %v1953
      %v2166 = vadd.f32 %v1563, %v1955
      %v2167 = vadd.f32 %v1564, %v1957
      %v2168 = vadd.f32 %v1565, %v1956
      %v2169 = vadd.f32 %v1566, %v1960
      %v2170 = vadd.f32 %v1567, %v1962
      %v2171 = vadd.f32 %v1568, %v1964
      %v2172 = vadd.f32 %v1569, %v1963
      %2174 = vset.pattern.permute.xlu0 0
      %2175 = vperm.xlu0 %2174, %v329
      %v2176 = vpop.permute.xlu0 %2175
      %2179 = vset.pattern.permute.xlu0 0
      %2180 = vperm.xlu0 %2179, %v330
      %v2181 = vpop.permute.xlu0 %2180
      %2184 = vset.pattern.permute.xlu0 0
      %2185 = vperm.xlu0 %2184, %v331
      %v2186 = vpop.permute.xlu0 %2185
      %2189 = vset.pattern.permute.xlu0 0
      %2190 = vperm.xlu0 %2189, %v332
      %v2191 = vpop.permute.xlu0 %2190
      %v2193 = vlaneseq
      %v2194 = vshrl.u32 %v2193, 7
      %v2195 = vsub.s32 3, %v2194
      %v2196 = vrot.slane %v337, %v2195
      %v2197 = vmul.f32 %v362, %v2196
      %v2198 = vmul.f32 %v367, %v2196
      %v2199 = vmul.f32 %v372, %v2196
      %v2200 = vmul.f32 %v377, %v2196
      %v2201 = vmul.f32 %v382, %v2196
      %v2202 = vmul.f32 %v387, %v2196
      %v2203 = vmul.f32 %v392, %v2196
      %v2204 = vmul.f32 %v397, %v2196
      %v2205 = vmul.f32 %v402, %v2196
      %v2206 = vmul.f32 %v407, %v2196
      %v2207 = vmul.f32 %v412, %v2196
      %v2208 = vmul.f32 %v417, %v2196
      %v2209 = vmul.f32 %v422, %v2196
      %v2210 = vmul.f32 %v427, %v2196
      %v2211 = vmul.f32 %v432, %v2196
      %v2212 = vmul.f32 %v437, %v2196
      %v2213 = vmul.f32 %v442, %v2196
      %v2214 = vmul.f32 %v447, %v2196
      %v2215 = vmul.f32 %v452, %v2196
      %v2216 = vmul.f32 %v457, %v2196
      %v2217 = vmul.f32 %v462, %v2196
      %v2218 = vmul.f32 %v467, %v2196
      %v2219 = vmul.f32 %v472, %v2196
      %v2220 = vmul.f32 %v477, %v2196
      %v2221 = vmul.f32 %v482, %v2196
      %v2222 = vmul.f32 %v487, %v2196
      %v2223 = vmul.f32 %v492, %v2196
      %v2224 = vmul.f32 %v497, %v2196
      %v2225 = vmul.f32 %v502, %v2196
      %v2226 = vmul.f32 %v507, %v2196
      %v2227 = vmul.f32 %v512, %v2196
      %v2228 = vmul.f32 %v517, %v2196
      %v2229 = vmul.f32 %v522, %v2196
      %v2230 = vmul.f32 %v527, %v2196
      %v2231 = vmul.f32 %v532, %v2196
      %v2232 = vmul.f32 %v537, %v2196
      %v2233 = vmul.f32 %v542, %v2196
      %v2234 = vmul.f32 %v547, %v2196
      %v2235 = vmul.f32 %v552, %v2196
      %v2236 = vmul.f32 %v557, %v2196
      %v2237 = vmul.f32 %v562, %v2196
      %v2238 = vmul.f32 %v567, %v2196
      %v2239 = vmul.f32 %v572, %v2196
      %v2240 = vmul.f32 %v577, %v2196
      %v2241 = vmul.f32 %v582, %v2196
      %v2242 = vmul.f32 %v587, %v2196
      %v2243 = vmul.f32 %v592, %v2196
      %v2244 = vmul.f32 %v597, %v2196
      %v2245 = vmul.f32 %v602, %v2196
      %v2246 = vmul.f32 %v607, %v2196
      %v2247 = vmul.f32 %v612, %v2196
      %v2248 = vmul.f32 %v617, %v2196
      %v2249 = vmul.f32 %v622, %v2196
      %v2250 = vmul.f32 %v627, %v2196
      %v2251 = vmul.f32 %v632, %v2196
      %v2252 = vmul.f32 %v637, %v2196
      %v2253 = vmul.f32 %v642, %v2196
      %v2254 = vmul.f32 %v647, %v2196
      %v2255 = vmul.f32 %v652, %v2196
      %v2256 = vmul.f32 %v657, %v2196
      %v2257 = vmul.f32 %v662, %v2196
      %v2258 = vmul.f32 %v667, %v2196
      %v2259 = vmul.f32 %v672, %v2196
      %v2260 = vmul.f32 %v677, %v2196
      %v2261 = vmul.f32 %v682, %v2196
      %v2262 = vmul.f32 %v687, %v2196
      %v2263 = vmul.f32 %v692, %v2196
      %v2264 = vmul.f32 %v697, %v2196
      %v2265 = vmul.f32 %v702, %v2196
      %v2266 = vmul.f32 %v707, %v2196
      %v2267 = vmul.f32 %v712, %v2196
      %v2268 = vmul.f32 %v717, %v2196
      %v2269 = vmul.f32 %v722, %v2196
      %v2270 = vmul.f32 %v727, %v2196
      %v2271 = vmul.f32 %v732, %v2196
      %v2272 = vmul.f32 %v737, %v2196
      %v2273 = vmul.f32 %v742, %v2196
      %v2274 = vmul.f32 %v747, %v2196
      %v2275 = vmul.f32 %v752, %v2196
      %v2276 = vmul.f32 %v757, %v2196
      %v2277 = vmul.f32 %v762, %v2196
      %v2278 = vmul.f32 %v767, %v2196
      %v2279 = vmul.f32 %v772, %v2196
      %v2280 = vmul.f32 %v777, %v2196
      %v2281 = vmul.f32 %v782, %v2196
      %v2282 = vmul.f32 %v787, %v2196
      %v2283 = vmul.f32 %v792, %v2196
      %v2284 = vmul.f32 %v797, %v2196
      %v2285 = vmul.f32 %v802, %v2196
      %v2286 = vmul.f32 %v807, %v2196
      %v2287 = vmul.f32 %v812, %v2196
      %v2288 = vmul.f32 %v817, %v2196
      %v2289 = vmul.f32 %v822, %v2196
      %v2290 = vmul.f32 %v827, %v2196
      %v2291 = vmul.f32 %v832, %v2196
      %v2292 = vmul.f32 %v837, %v2196
      %v2293 = vmul.f32 %v842, %v2196
      %v2294 = vmul.f32 %v847, %v2196
      %v2295 = vmul.f32 %v852, %v2196
      %v2296 = vmul.f32 %v857, %v2196
      %v2297 = vmul.f32 %v2176, %v2196
      %v2298 = vmul.f32 %v2181, %v2196
      %v2299 = vmul.f32 %v2186, %v2196
      %v2300 = vmul.f32 %v2191, %v2196
      %v2301 = vadd.f32 %v2069, %v2197
      %v2302 = vadd.f32 %v2070, %v2198
      %v2303 = vadd.f32 %v2071, %v2199
      %v2304 = vadd.f32 %v2072, %v2200
      %v2305 = vadd.f32 %v2073, %v2201
      %v2306 = vadd.f32 %v2074, %v2202
      %v2307 = vadd.f32 %v2075, %v2203
      %v2308 = vadd.f32 %v2076, %v2204
      %v2309 = vadd.f32 %v2077, %v2205
      %v2310 = vadd.f32 %v2078, %v2206
      %v2311 = vadd.f32 %v2079, %v2207
      %v2312 = vadd.f32 %v2080, %v2208
      %v2313 = vadd.f32 %v2081, %v2209
      %v2314 = vadd.f32 %v2082, %v2210
      %v2315 = vadd.f32 %v2083, %v2211
      %v2316 = vadd.f32 %v2084, %v2212
      %v2317 = vadd.f32 %v2085, %v2213
      %v2318 = vadd.f32 %v2086, %v2214
      %v2319 = vadd.f32 %v2087, %v2215
      %v2320 = vadd.f32 %v2088, %v2216
      %v2321 = vadd.f32 %v2089, %v2217
      %v2322 = vadd.f32 %v2090, %v2218
      %v2323 = vadd.f32 %v2091, %v2219
      %v2324 = vadd.f32 %v2092, %v2220
      %v2325 = vadd.f32 %v2093, %v2221
      %v2326 = vadd.f32 %v2094, %v2222
      %v2327 = vadd.f32 %v2095, %v2223
      %v2328 = vadd.f32 %v2096, %v2224
      %v2329 = vadd.f32 %v2097, %v2225
      %v2330 = vadd.f32 %v2098, %v2226
      %v2331 = vadd.f32 %v2099, %v2227
      %v2332 = vadd.f32 %v2100, %v2228
      %v2333 = vadd.f32 %v2101, %v2229
      %v2334 = vadd.f32 %v2102, %v2230
      %v2335 = vadd.f32 %v2103, %v2231
      %v2336 = vadd.f32 %v2104, %v2232
      %v2337 = vadd.f32 %v2105, %v2233
      %v2338 = vadd.f32 %v2106, %v2234
      %v2339 = vadd.f32 %v2107, %v2235
      %v2340 = vadd.f32 %v2108, %v2236
      %v2341 = vadd.f32 %v2109, %v2237
      %v2342 = vadd.f32 %v2110, %v2238
      %v2343 = vadd.f32 %v2111, %v2239
      %v2344 = vadd.f32 %v2112, %v2240
      %v2345 = vadd.f32 %v2113, %v2241
      %v2346 = vadd.f32 %v2114, %v2242
      %v2347 = vadd.f32 %v2115, %v2243
      %v2348 = vadd.f32 %v2116, %v2244
      %v2349 = vadd.f32 %v2117, %v2245
      %v2350 = vadd.f32 %v2118, %v2246
      %v2351 = vadd.f32 %v2119, %v2247
      %v2352 = vadd.f32 %v2120, %v2248
      %v2353 = vadd.f32 %v2121, %v2249
      %v2354 = vadd.f32 %v2122, %v2250
      %v2355 = vadd.f32 %v2123, %v2251
      %v2356 = vadd.f32 %v2124, %v2252
      %v2357 = vadd.f32 %v2125, %v2253
      %v2358 = vadd.f32 %v2126, %v2254
      %v2359 = vadd.f32 %v2127, %v2255
      %v2360 = vadd.f32 %v2128, %v2256
      %v2361 = vadd.f32 %v2129, %v2257
      %v2362 = vadd.f32 %v2130, %v2258
      %v2363 = vadd.f32 %v2131, %v2259
      %v2364 = vadd.f32 %v2132, %v2260
      %v2365 = vadd.f32 %v2133, %v2261
      %v2366 = vadd.f32 %v2134, %v2262
      %v2367 = vadd.f32 %v2135, %v2263
      %v2368 = vadd.f32 %v2136, %v2264
      %v2369 = vadd.f32 %v2137, %v2265
      %v2370 = vadd.f32 %v2138, %v2266
      %v2371 = vadd.f32 %v2139, %v2267
      %v2372 = vadd.f32 %v2140, %v2268
      %v2373 = vadd.f32 %v2141, %v2269
      %v2374 = vadd.f32 %v2142, %v2270
      %v2375 = vadd.f32 %v2143, %v2271
      %v2376 = vadd.f32 %v2144, %v2272
      %v2377 = vadd.f32 %v2145, %v2273
      %v2378 = vadd.f32 %v2146, %v2274
      %v2379 = vadd.f32 %v2147, %v2275
      %v2380 = vadd.f32 %v2148, %v2276
      %v2381 = vadd.f32 %v2149, %v2277
      %v2382 = vadd.f32 %v2150, %v2278
      %v2383 = vadd.f32 %v2151, %v2279
      %v2384 = vadd.f32 %v2152, %v2280
      %v2385 = vadd.f32 %v2153, %v2281
      %v2386 = vadd.f32 %v2154, %v2282
      %v2387 = vadd.f32 %v2155, %v2283
      %v2388 = vadd.f32 %v2156, %v2284
      %v2389 = vadd.f32 %v2157, %v2285
      %v2390 = vadd.f32 %v2158, %v2286
      %v2391 = vadd.f32 %v2159, %v2287
      %v2392 = vadd.f32 %v2160, %v2288
      %v2393 = vadd.f32 %v2161, %v2289
      %v2394 = vadd.f32 %v2162, %v2290
      %v2395 = vadd.f32 %v2163, %v2291
      %v2396 = vadd.f32 %v2164, %v2292
      %v2397 = vadd.f32 %v2165, %v2293
      %v2398 = vadd.f32 %v2166, %v2294
      %v2399 = vadd.f32 %v2167, %v2295
      %v2400 = vadd.f32 %v2168, %v2296
      %v2401 = vadd.f32 %v2169, %v2297
      %v2402 = vadd.f32 %v2170, %v2298
      %v2403 = vadd.f32 %v2171, %v2299
      %v2404 = vadd.f32 %v2172, %v2300
      %v2405 = vlaneseq
      %v2406 = vshrl.u32 %v2405, 7
      %v2407 = vsub.s32 4, %v2406
      %v2408 = vrot.slane %v337, %v2407
      %v2409 = vmul.f32 %v362, %v2408
      %v2410 = vmul.f32 %v367, %v2408
      %v2411 = vmul.f32 %v372, %v2408
      %v2412 = vmul.f32 %v377, %v2408
      %v2413 = vmul.f32 %v382, %v2408
      %v2414 = vmul.f32 %v387, %v2408
      %v2415 = vmul.f32 %v392, %v2408
      %v2416 = vmul.f32 %v397, %v2408
      %v2417 = vmul.f32 %v402, %v2408
      %v2418 = vmul.f32 %v407, %v2408
      %v2419 = vmul.f32 %v412, %v2408
      %v2420 = vmul.f32 %v417, %v2408
      %v2421 = vmul.f32 %v422, %v2408
      %v2422 = vmul.f32 %v427, %v2408
      %v2423 = vmul.f32 %v432, %v2408
      %v2424 = vmul.f32 %v437, %v2408
      %v2425 = vmul.f32 %v442, %v2408
      %v2426 = vmul.f32 %v447, %v2408
      %v2427 = vmul.f32 %v452, %v2408
      %v2428 = vmul.f32 %v457, %v2408
      %v2429 = vmul.f32 %v462, %v2408
      %v2430 = vmul.f32 %v467, %v2408
      %v2431 = vmul.f32 %v472, %v2408
      %v2432 = vmul.f32 %v477, %v2408
      %v2433 = vmul.f32 %v482, %v2408
      %v2434 = vmul.f32 %v487, %v2408
      %v2435 = vmul.f32 %v492, %v2408
      %v2436 = vmul.f32 %v497, %v2408
      %v2437 = vmul.f32 %v502, %v2408
      %v2438 = vmul.f32 %v507, %v2408
      %v2439 = vmul.f32 %v512, %v2408
      %v2440 = vmul.f32 %v517, %v2408
      %v2441 = vmul.f32 %v522, %v2408
      %v2442 = vmul.f32 %v527, %v2408
      %v2443 = vmul.f32 %v532, %v2408
      %v2444 = vmul.f32 %v537, %v2408
      %v2445 = vmul.f32 %v542, %v2408
      %v2446 = vmul.f32 %v547, %v2408
      %v2447 = vmul.f32 %v552, %v2408
      %v2448 = vmul.f32 %v557, %v2408
      %v2449 = vmul.f32 %v562, %v2408
      %v2450 = vmul.f32 %v567, %v2408
      %v2451 = vmul.f32 %v572, %v2408
      %v2452 = vmul.f32 %v577, %v2408
      %v2453 = vmul.f32 %v582, %v2408
      %v2454 = vmul.f32 %v587, %v2408
      %v2455 = vmul.f32 %v592, %v2408
      %v2456 = vmul.f32 %v597, %v2408
      %v2457 = vmul.f32 %v602, %v2408
      %v2458 = vmul.f32 %v607, %v2408
      %v2459 = vmul.f32 %v612, %v2408
      %v2460 = vmul.f32 %v617, %v2408
      %v2461 = vmul.f32 %v622, %v2408
      %v2462 = vmul.f32 %v627, %v2408
      %v2463 = vmul.f32 %v632, %v2408
      %v2464 = vmul.f32 %v637, %v2408
      %v2465 = vmul.f32 %v642, %v2408
      %v2466 = vmul.f32 %v647, %v2408
      %v2467 = vmul.f32 %v652, %v2408
      %v2468 = vmul.f32 %v657, %v2408
      %v2469 = vmul.f32 %v662, %v2408
      %v2470 = vmul.f32 %v667, %v2408
      %v2471 = vmul.f32 %v672, %v2408
      %v2472 = vmul.f32 %v677, %v2408
      %v2473 = vmul.f32 %v682, %v2408
      %v2474 = vmul.f32 %v687, %v2408
      %v2475 = vmul.f32 %v692, %v2408
      %v2476 = vmul.f32 %v697, %v2408
      %v2477 = vmul.f32 %v702, %v2408
      %v2478 = vmul.f32 %v707, %v2408
      %v2479 = vmul.f32 %v712, %v2408
      %v2480 = vmul.f32 %v717, %v2408
      %v2481 = vmul.f32 %v722, %v2408
      %v2482 = vmul.f32 %v727, %v2408
      %v2483 = vmul.f32 %v732, %v2408
      %v2484 = vmul.f32 %v737, %v2408
      %v2485 = vmul.f32 %v742, %v2408
      %v2486 = vmul.f32 %v747, %v2408
      %v2487 = vmul.f32 %v752, %v2408
      %v2488 = vmul.f32 %v757, %v2408
      %v2489 = vmul.f32 %v762, %v2408
      %v2490 = vmul.f32 %v767, %v2408
      %v2491 = vmul.f32 %v772, %v2408
      %v2492 = vmul.f32 %v777, %v2408
      %v2493 = vmul.f32 %v782, %v2408
      %v2494 = vmul.f32 %v787, %v2408
      %v2495 = vmul.f32 %v792, %v2408
      %v2496 = vmul.f32 %v797, %v2408
      %v2497 = vmul.f32 %v802, %v2408
      %v2498 = vmul.f32 %v807, %v2408
      %v2499 = vmul.f32 %v812, %v2408
      %v2500 = vmul.f32 %v817, %v2408
      %v2501 = vmul.f32 %v822, %v2408
      %v2502 = vmul.f32 %v827, %v2408
      %v2503 = vmul.f32 %v832, %v2408
      %v2504 = vmul.f32 %v837, %v2408
      %v2505 = vmul.f32 %v842, %v2408
      %v2506 = vmul.f32 %v847, %v2408
      %v2507 = vmul.f32 %v852, %v2408
      %v2508 = vmul.f32 %v857, %v2408
      %v2509 = vmul.f32 %v2176, %v2408
      %v2510 = vmul.f32 %v2181, %v2408
      %v2511 = vmul.f32 %v2186, %v2408
      %v2512 = vmul.f32 %v2191, %v2408
      %v2617 = vrot.slane %v2409, 1
      %v2618 = vrot.slane %v2410, 1
      %v2619 = vsel %vm1179, %v2617, %v2618
      %v2620 = vrot.slane %v2411, 1
      %v2621 = vsel %vm1179, %v2618, %v2620
      %v2622 = vrot.slane %v2412, 1
      %v2623 = vsel %vm1179, %v2620, %v2622
      %v2624 = vrot.slane %v2413, 1
      %v2625 = vrot.slane %v2414, 1
      %v2626 = vsel %vm1179, %v2624, %v2625
      %v2627 = vrot.slane %v2415, 1
      %v2628 = vsel %vm1179, %v2625, %v2627
      %v2629 = vrot.slane %v2416, 1
      %v2630 = vsel %vm1179, %v2627, %v2629
      %v2631 = vrot.slane %v2417, 1
      %v2632 = vrot.slane %v2418, 1
      %v2633 = vsel %vm1179, %v2631, %v2632
      %v2634 = vrot.slane %v2419, 1
      %v2635 = vsel %vm1179, %v2632, %v2634
      %v2636 = vrot.slane %v2420, 1
      %v2637 = vsel %vm1179, %v2634, %v2636
      %v2638 = vrot.slane %v2421, 1
      %v2639 = vrot.slane %v2422, 1
      %v2640 = vsel %vm1179, %v2638, %v2639
      %v2641 = vrot.slane %v2423, 1
      %v2642 = vsel %vm1179, %v2639, %v2641
      %v2643 = vrot.slane %v2424, 1
      %v2644 = vsel %vm1179, %v2641, %v2643
      %v2645 = vrot.slane %v2425, 1
      %v2646 = vrot.slane %v2426, 1
      %v2647 = vsel %vm1179, %v2645, %v2646
      %v2648 = vrot.slane %v2427, 1
      %v2649 = vsel %vm1179, %v2646, %v2648
      %v2650 = vrot.slane %v2428, 1
      %v2651 = vsel %vm1179, %v2648, %v2650
      %v2652 = vrot.slane %v2429, 1
      %v2653 = vrot.slane %v2430, 1
      %v2654 = vsel %vm1179, %v2652, %v2653
      %v2655 = vrot.slane %v2431, 1
      %v2656 = vsel %vm1179, %v2653, %v2655
      %v2657 = vrot.slane %v2432, 1
      %v2658 = vsel %vm1179, %v2655, %v2657
      %v2659 = vrot.slane %v2433, 1
      %v2660 = vrot.slane %v2434, 1
      %v2661 = vsel %vm1179, %v2659, %v2660
      %v2662 = vrot.slane %v2435, 1
      %v2663 = vsel %vm1179, %v2660, %v2662
      %v2664 = vrot.slane %v2436, 1
      %v2665 = vsel %vm1179, %v2662, %v2664
      %v2666 = vrot.slane %v2437, 1
      %v2667 = vrot.slane %v2438, 1
      %v2668 = vsel %vm1179, %v2666, %v2667
      %v2669 = vrot.slane %v2439, 1
      %v2670 = vsel %vm1179, %v2667, %v2669
      %v2671 = vrot.slane %v2440, 1
      %v2672 = vsel %vm1179, %v2669, %v2671
      %v2673 = vrot.slane %v2441, 1
      %v2674 = vrot.slane %v2442, 1
      %v2675 = vsel %vm1179, %v2673, %v2674
      %v2676 = vrot.slane %v2443, 1
      %v2677 = vsel %vm1179, %v2674, %v2676
      %v2678 = vrot.slane %v2444, 1
      %v2679 = vsel %vm1179, %v2676, %v2678
      %v2680 = vrot.slane %v2445, 1
      %v2681 = vrot.slane %v2446, 1
      %v2682 = vsel %vm1179, %v2680, %v2681
      %v2683 = vrot.slane %v2447, 1
      %v2684 = vsel %vm1179, %v2681, %v2683
      %v2685 = vrot.slane %v2448, 1
      %v2686 = vsel %vm1179, %v2683, %v2685
      %v2687 = vrot.slane %v2449, 1
      %v2688 = vrot.slane %v2450, 1
      %v2689 = vsel %vm1179, %v2687, %v2688
      %v2690 = vrot.slane %v2451, 1
      %v2691 = vsel %vm1179, %v2688, %v2690
      %v2692 = vrot.slane %v2452, 1
      %v2693 = vsel %vm1179, %v2690, %v2692
      %v2694 = vrot.slane %v2453, 1
      %v2695 = vrot.slane %v2454, 1
      %v2696 = vsel %vm1179, %v2694, %v2695
      %v2697 = vrot.slane %v2455, 1
      %v2698 = vsel %vm1179, %v2695, %v2697
      %v2699 = vrot.slane %v2456, 1
      %v2700 = vsel %vm1179, %v2697, %v2699
      %v2701 = vrot.slane %v2457, 1
      %v2702 = vrot.slane %v2458, 1
      %v2703 = vsel %vm1179, %v2701, %v2702
      %v2704 = vrot.slane %v2459, 1
      %v2705 = vsel %vm1179, %v2702, %v2704
      %v2706 = vrot.slane %v2460, 1
      %v2707 = vsel %vm1179, %v2704, %v2706
      %v2708 = vrot.slane %v2461, 1
      %v2709 = vrot.slane %v2462, 1
      %v2710 = vsel %vm1179, %v2708, %v2709
      %v2711 = vrot.slane %v2463, 1
      %v2712 = vsel %vm1179, %v2709, %v2711
      %v2713 = vrot.slane %v2464, 1
      %v2714 = vsel %vm1179, %v2711, %v2713
      %v2715 = vrot.slane %v2465, 1
      %v2716 = vrot.slane %v2466, 1
      %v2717 = vsel %vm1179, %v2715, %v2716
      %v2718 = vrot.slane %v2467, 1
      %v2719 = vsel %vm1179, %v2716, %v2718
      %v2720 = vrot.slane %v2468, 1
      %v2721 = vsel %vm1179, %v2718, %v2720
      %v2722 = vrot.slane %v2469, 1
      %v2723 = vrot.slane %v2470, 1
      %v2724 = vsel %vm1179, %v2722, %v2723
      %v2725 = vrot.slane %v2471, 1
      %v2726 = vsel %vm1179, %v2723, %v2725
      %v2727 = vrot.slane %v2472, 1
      %v2728 = vsel %vm1179, %v2725, %v2727
      %v2729 = vrot.slane %v2473, 1
      %v2730 = vrot.slane %v2474, 1
      %v2731 = vsel %vm1179, %v2729, %v2730
      %v2732 = vrot.slane %v2475, 1
      %v2733 = vsel %vm1179, %v2730, %v2732
      %v2734 = vrot.slane %v2476, 1
      %v2735 = vsel %vm1179, %v2732, %v2734
      %v2736 = vrot.slane %v2477, 1
      %v2737 = vrot.slane %v2478, 1
      %v2738 = vsel %vm1179, %v2736, %v2737
      %v2739 = vrot.slane %v2479, 1
      %v2740 = vsel %vm1179, %v2737, %v2739
      %v2741 = vrot.slane %v2480, 1
      %v2742 = vsel %vm1179, %v2739, %v2741
      %v2743 = vrot.slane %v2481, 1
      %v2744 = vrot.slane %v2482, 1
      %v2745 = vsel %vm1179, %v2743, %v2744
      %v2746 = vrot.slane %v2483, 1
      %v2747 = vsel %vm1179, %v2744, %v2746
      %v2748 = vrot.slane %v2484, 1
      %v2749 = vsel %vm1179, %v2746, %v2748
      %v2750 = vrot.slane %v2485, 1
      %v2751 = vrot.slane %v2486, 1
      %v2752 = vsel %vm1179, %v2750, %v2751
      %v2753 = vrot.slane %v2487, 1
      %v2754 = vsel %vm1179, %v2751, %v2753
      %v2755 = vrot.slane %v2488, 1
      %v2756 = vsel %vm1179, %v2753, %v2755
      %v2757 = vrot.slane %v2489, 1
      %v2758 = vrot.slane %v2490, 1
      %v2759 = vsel %vm1179, %v2757, %v2758
      %v2760 = vrot.slane %v2491, 1
      %v2761 = vsel %vm1179, %v2758, %v2760
      %v2762 = vrot.slane %v2492, 1
      %v2763 = vsel %vm1179, %v2760, %v2762
      %v2764 = vrot.slane %v2493, 1
      %v2765 = vrot.slane %v2494, 1
      %v2766 = vsel %vm1179, %v2764, %v2765
      %v2767 = vrot.slane %v2495, 1
      %v2768 = vsel %vm1179, %v2765, %v2767
      %v2769 = vrot.slane %v2496, 1
      %v2770 = vsel %vm1179, %v2767, %v2769
      %v2771 = vrot.slane %v2497, 1
      %v2772 = vrot.slane %v2498, 1
      %v2773 = vsel %vm1179, %v2771, %v2772
      %v2774 = vrot.slane %v2499, 1
      %v2775 = vsel %vm1179, %v2772, %v2774
      %v2776 = vrot.slane %v2500, 1
      %v2777 = vsel %vm1179, %v2774, %v2776
      %v2778 = vrot.slane %v2501, 1
      %v2779 = vrot.slane %v2502, 1
      %v2780 = vsel %vm1179, %v2778, %v2779
      %v2781 = vrot.slane %v2503, 1
      %v2782 = vsel %vm1179, %v2779, %v2781
      %v2783 = vrot.slane %v2504, 1
      %v2784 = vsel %vm1179, %v2781, %v2783
      %v2785 = vrot.slane %v2505, 1
      %v2786 = vrot.slane %v2506, 1
      %v2787 = vsel %vm1179, %v2785, %v2786
      %v2788 = vrot.slane %v2507, 1
      %v2789 = vsel %vm1179, %v2786, %v2788
      %v2790 = vrot.slane %v2508, 1
      %v2791 = vsel %vm1179, %v2788, %v2790
      %v2792 = vrot.slane %v2509, 1
      %v2793 = vrot.slane %v2510, 1
      %v2794 = vsel %vm1179, %v2792, %v2793
      %v2795 = vrot.slane %v2511, 1
      %v2796 = vsel %vm1179, %v2793, %v2795
      %v2797 = vrot.slane %v2512, 1
      %v2798 = vsel %vm1179, %v2795, %v2797
      %v2903 = vadd.f32 %v2301, %v2619
      %v2904 = vadd.f32 %v2302, %v2621
      %v2905 = vadd.f32 %v2303, %v2623
      %v2906 = vadd.f32 %v2304, %v2622
      %v2907 = vadd.f32 %v2305, %v2626
      %v2908 = vadd.f32 %v2306, %v2628
      %v2909 = vadd.f32 %v2307, %v2630
      %v2910 = vadd.f32 %v2308, %v2629
      %v2911 = vadd.f32 %v2309, %v2633
      %v2912 = vadd.f32 %v2310, %v2635
      %v2913 = vadd.f32 %v2311, %v2637
      %v2914 = vadd.f32 %v2312, %v2636
      %v2915 = vadd.f32 %v2313, %v2640
      %v2916 = vadd.f32 %v2314, %v2642
      %v2917 = vadd.f32 %v2315, %v2644
      %v2918 = vadd.f32 %v2316, %v2643
      %v2919 = vadd.f32 %v2317, %v2647
      %v2920 = vadd.f32 %v2318, %v2649
      %v2921 = vadd.f32 %v2319, %v2651
      %v2922 = vadd.f32 %v2320, %v2650
      %v2923 = vadd.f32 %v2321, %v2654
      %v2924 = vadd.f32 %v2322, %v2656
      %v2925 = vadd.f32 %v2323, %v2658
      %v2926 = vadd.f32 %v2324, %v2657
      %v2927 = vadd.f32 %v2325, %v2661
      %v2928 = vadd.f32 %v2326, %v2663
      %v2929 = vadd.f32 %v2327, %v2665
      %v2930 = vadd.f32 %v2328, %v2664
      %v2931 = vadd.f32 %v2329, %v2668
      %v2932 = vadd.f32 %v2330, %v2670
      %v2933 = vadd.f32 %v2331, %v2672
      %v2934 = vadd.f32 %v2332, %v2671
      %v2935 = vadd.f32 %v2333, %v2675
      %v2936 = vadd.f32 %v2334, %v2677
      %v2937 = vadd.f32 %v2335, %v2679
      %v2938 = vadd.f32 %v2336, %v2678
      %v2939 = vadd.f32 %v2337, %v2682
      %v2940 = vadd.f32 %v2338, %v2684
      %v2941 = vadd.f32 %v2339, %v2686
      %v2942 = vadd.f32 %v2340, %v2685
      %v2943 = vadd.f32 %v2341, %v2689
      %v2944 = vadd.f32 %v2342, %v2691
      %v2945 = vadd.f32 %v2343, %v2693
      %v2946 = vadd.f32 %v2344, %v2692
      %v2947 = vadd.f32 %v2345, %v2696
      %v2948 = vadd.f32 %v2346, %v2698
      %v2949 = vadd.f32 %v2347, %v2700
      %v2950 = vadd.f32 %v2348, %v2699
      %v2951 = vadd.f32 %v2349, %v2703
      %v2952 = vadd.f32 %v2350, %v2705
      %v2953 = vadd.f32 %v2351, %v2707
      %v2954 = vadd.f32 %v2352, %v2706
      %v2955 = vadd.f32 %v2353, %v2710
      %v2956 = vadd.f32 %v2354, %v2712
      %v2957 = vadd.f32 %v2355, %v2714
      %v2958 = vadd.f32 %v2356, %v2713
      %v2959 = vadd.f32 %v2357, %v2717
      %v2960 = vadd.f32 %v2358, %v2719
      %v2961 = vadd.f32 %v2359, %v2721
      %v2962 = vadd.f32 %v2360, %v2720
      %v2963 = vadd.f32 %v2361, %v2724
      %v2964 = vadd.f32 %v2362, %v2726
      %v2965 = vadd.f32 %v2363, %v2728
      %v2966 = vadd.f32 %v2364, %v2727
      %v2967 = vadd.f32 %v2365, %v2731
      %v2968 = vadd.f32 %v2366, %v2733
      %v2969 = vadd.f32 %v2367, %v2735
      %v2970 = vadd.f32 %v2368, %v2734
      %v2971 = vadd.f32 %v2369, %v2738
      %v2972 = vadd.f32 %v2370, %v2740
      %v2973 = vadd.f32 %v2371, %v2742
      %v2974 = vadd.f32 %v2372, %v2741
      %v2975 = vadd.f32 %v2373, %v2745
      %v2976 = vadd.f32 %v2374, %v2747
      %v2977 = vadd.f32 %v2375, %v2749
      %v2978 = vadd.f32 %v2376, %v2748
      %v2979 = vadd.f32 %v2377, %v2752
      %v2980 = vadd.f32 %v2378, %v2754
      %v2981 = vadd.f32 %v2379, %v2756
      %v2982 = vadd.f32 %v2380, %v2755
      %v2983 = vadd.f32 %v2381, %v2759
      %v2984 = vadd.f32 %v2382, %v2761
      %v2985 = vadd.f32 %v2383, %v2763
      %v2986 = vadd.f32 %v2384, %v2762
      %v2987 = vadd.f32 %v2385, %v2766
      %v2988 = vadd.f32 %v2386, %v2768
      %v2989 = vadd.f32 %v2387, %v2770
      %v2990 = vadd.f32 %v2388, %v2769
      %v2991 = vadd.f32 %v2389, %v2773
      %v2992 = vadd.f32 %v2390, %v2775
      %v2993 = vadd.f32 %v2391, %v2777
      %v2994 = vadd.f32 %v2392, %v2776
      %v2995 = vadd.f32 %v2393, %v2780
      %v2996 = vadd.f32 %v2394, %v2782
      %v2997 = vadd.f32 %v2395, %v2784
      %v2998 = vadd.f32 %v2396, %v2783
      %v2999 = vadd.f32 %v2397, %v2787
      %v3000 = vadd.f32 %v2398, %v2789
      %v3001 = vadd.f32 %v2399, %v2791
      %v3002 = vadd.f32 %v2400, %v2790
      %v3003 = vadd.f32 %v2401, %v2794
      %v3004 = vadd.f32 %v2402, %v2796
      %v3005 = vadd.f32 %v2403, %v2798
      %v3006 = vadd.f32 %v2404, %v2797
      %v3007 = vlaneseq
      %v3008 = vshrl.u32 %v3007, 7
      %v3009 = vsub.s32 5, %v3008
      %v3010 = vrot.slane %v337, %v3009
      %v3011 = vmul.f32 %v362, %v3010
      %v3012 = vmul.f32 %v367, %v3010
      %v3013 = vmul.f32 %v372, %v3010
      %v3014 = vmul.f32 %v377, %v3010
      %v3015 = vmul.f32 %v382, %v3010
      %v3016 = vmul.f32 %v387, %v3010
      %v3017 = vmul.f32 %v392, %v3010
      %v3018 = vmul.f32 %v397, %v3010
      %v3019 = vmul.f32 %v402, %v3010
      %v3020 = vmul.f32 %v407, %v3010
      %v3021 = vmul.f32 %v412, %v3010
      %v3022 = vmul.f32 %v417, %v3010
      %v3023 = vmul.f32 %v422, %v3010
      %v3024 = vmul.f32 %v427, %v3010
      %v3025 = vmul.f32 %v432, %v3010
      %v3026 = vmul.f32 %v437, %v3010
      %v3027 = vmul.f32 %v442, %v3010
      %v3028 = vmul.f32 %v447, %v3010
      %v3029 = vmul.f32 %v452, %v3010
      %v3030 = vmul.f32 %v457, %v3010
      %v3031 = vmul.f32 %v462, %v3010
      %v3032 = vmul.f32 %v467, %v3010
      %v3033 = vmul.f32 %v472, %v3010
      %v3034 = vmul.f32 %v477, %v3010
      %v3035 = vmul.f32 %v482, %v3010
      %v3036 = vmul.f32 %v487, %v3010
      %v3037 = vmul.f32 %v492, %v3010
      %v3038 = vmul.f32 %v497, %v3010
      %v3039 = vmul.f32 %v502, %v3010
      %v3040 = vmul.f32 %v507, %v3010
      %v3041 = vmul.f32 %v512, %v3010
      %v3042 = vmul.f32 %v517, %v3010
      %v3043 = vmul.f32 %v522, %v3010
      %v3044 = vmul.f32 %v527, %v3010
      %v3045 = vmul.f32 %v532, %v3010
      %v3046 = vmul.f32 %v537, %v3010
      %v3047 = vmul.f32 %v542, %v3010
      %v3048 = vmul.f32 %v547, %v3010
      %v3049 = vmul.f32 %v552, %v3010
      %v3050 = vmul.f32 %v557, %v3010
      %v3051 = vmul.f32 %v562, %v3010
      %v3052 = vmul.f32 %v567, %v3010
      %v3053 = vmul.f32 %v572, %v3010
      %v3054 = vmul.f32 %v577, %v3010
      %v3055 = vmul.f32 %v582, %v3010
      %v3056 = vmul.f32 %v587, %v3010
      %v3057 = vmul.f32 %v592, %v3010
      %v3058 = vmul.f32 %v597, %v3010
      %v3059 = vmul.f32 %v602, %v3010
      %v3060 = vmul.f32 %v607, %v3010
      %v3061 = vmul.f32 %v612, %v3010
      %v3062 = vmul.f32 %v617, %v3010
      %v3063 = vmul.f32 %v622, %v3010
      %v3064 = vmul.f32 %v627, %v3010
      %v3065 = vmul.f32 %v632, %v3010
      %v3066 = vmul.f32 %v637, %v3010
      %v3067 = vmul.f32 %v642, %v3010
      %v3068 = vmul.f32 %v647, %v3010
      %v3069 = vmul.f32 %v652, %v3010
      %v3070 = vmul.f32 %v657, %v3010
      %v3071 = vmul.f32 %v662, %v3010
      %v3072 = vmul.f32 %v667, %v3010
      %v3073 = vmul.f32 %v672, %v3010
      %v3074 = vmul.f32 %v677, %v3010
      %v3075 = vmul.f32 %v682, %v3010
      %v3076 = vmul.f32 %v687, %v3010
      %v3077 = vmul.f32 %v692, %v3010
      %v3078 = vmul.f32 %v697, %v3010
      %v3079 = vmul.f32 %v702, %v3010
      %v3080 = vmul.f32 %v707, %v3010
      %v3081 = vmul.f32 %v712, %v3010
      %v3082 = vmul.f32 %v717, %v3010
      %v3083 = vmul.f32 %v722, %v3010
      %v3084 = vmul.f32 %v727, %v3010
      %v3085 = vmul.f32 %v732, %v3010
      %v3086 = vmul.f32 %v737, %v3010
      %v3087 = vmul.f32 %v742, %v3010
      %v3088 = vmul.f32 %v747, %v3010
      %v3089 = vmul.f32 %v752, %v3010
      %v3090 = vmul.f32 %v757, %v3010
      %v3091 = vmul.f32 %v762, %v3010
      %v3092 = vmul.f32 %v767, %v3010
      %v3093 = vmul.f32 %v772, %v3010
      %v3094 = vmul.f32 %v777, %v3010
      %v3095 = vmul.f32 %v782, %v3010
      %v3096 = vmul.f32 %v787, %v3010
      %v3097 = vmul.f32 %v792, %v3010
      %v3098 = vmul.f32 %v797, %v3010
      %v3099 = vmul.f32 %v802, %v3010
      %v3100 = vmul.f32 %v807, %v3010
      %v3101 = vmul.f32 %v812, %v3010
      %v3102 = vmul.f32 %v817, %v3010
      %v3103 = vmul.f32 %v822, %v3010
      %v3104 = vmul.f32 %v827, %v3010
      %v3105 = vmul.f32 %v832, %v3010
      %v3106 = vmul.f32 %v837, %v3010
      %v3107 = vmul.f32 %v842, %v3010
      %v3108 = vmul.f32 %v847, %v3010
      %v3109 = vmul.f32 %v852, %v3010
      %v3110 = vmul.f32 %v857, %v3010
      %v3111 = vmul.f32 %v2176, %v3010
      %v3112 = vmul.f32 %v2181, %v3010
      %v3113 = vmul.f32 %v2186, %v3010
      %v3114 = vmul.f32 %v2191, %v3010
      %v3219 = vrot.slane %v3011, 2
      %v3220 = vrot.slane %v3012, 2
      %v3221 = vsel %vm1782, %v3219, %v3220
      %v3222 = vrot.slane %v3013, 2
      %v3223 = vsel %vm1782, %v3220, %v3222
      %v3224 = vrot.slane %v3014, 2
      %v3225 = vsel %vm1782, %v3222, %v3224
      %v3226 = vrot.slane %v3015, 2
      %v3227 = vrot.slane %v3016, 2
      %v3228 = vsel %vm1782, %v3226, %v3227
      %v3229 = vrot.slane %v3017, 2
      %v3230 = vsel %vm1782, %v3227, %v3229
      %v3231 = vrot.slane %v3018, 2
      %v3232 = vsel %vm1782, %v3229, %v3231
      %v3233 = vrot.slane %v3019, 2
      %v3234 = vrot.slane %v3020, 2
      %v3235 = vsel %vm1782, %v3233, %v3234
      %v3236 = vrot.slane %v3021, 2
      %v3237 = vsel %vm1782, %v3234, %v3236
      %v3238 = vrot.slane %v3022, 2
      %v3239 = vsel %vm1782, %v3236, %v3238
      %v3240 = vrot.slane %v3023, 2
      %v3241 = vrot.slane %v3024, 2
      %v3242 = vsel %vm1782, %v3240, %v3241
      %v3243 = vrot.slane %v3025, 2
      %v3244 = vsel %vm1782, %v3241, %v3243
      %v3245 = vrot.slane %v3026, 2
      %v3246 = vsel %vm1782, %v3243, %v3245
      %v3247 = vrot.slane %v3027, 2
      %v3248 = vrot.slane %v3028, 2
      %v3249 = vsel %vm1782, %v3247, %v3248
      %v3250 = vrot.slane %v3029, 2
      %v3251 = vsel %vm1782, %v3248, %v3250
      %v3252 = vrot.slane %v3030, 2
      %v3253 = vsel %vm1782, %v3250, %v3252
      %v3254 = vrot.slane %v3031, 2
      %v3255 = vrot.slane %v3032, 2
      %v3256 = vsel %vm1782, %v3254, %v3255
      %v3257 = vrot.slane %v3033, 2
      %v3258 = vsel %vm1782, %v3255, %v3257
      %v3259 = vrot.slane %v3034, 2
      %v3260 = vsel %vm1782, %v3257, %v3259
      %v3261 = vrot.slane %v3035, 2
      %v3262 = vrot.slane %v3036, 2
      %v3263 = vsel %vm1782, %v3261, %v3262
      %v3264 = vrot.slane %v3037, 2
      %v3265 = vsel %vm1782, %v3262, %v3264
      %v3266 = vrot.slane %v3038, 2
      %v3267 = vsel %vm1782, %v3264, %v3266
      %v3268 = vrot.slane %v3039, 2
      %v3269 = vrot.slane %v3040, 2
      %v3270 = vsel %vm1782, %v3268, %v3269
      %v3271 = vrot.slane %v3041, 2
      %v3272 = vsel %vm1782, %v3269, %v3271
      %v3273 = vrot.slane %v3042, 2
      %v3274 = vsel %vm1782, %v3271, %v3273
      %v3275 = vrot.slane %v3043, 2
      %v3276 = vrot.slane %v3044, 2
      %v3277 = vsel %vm1782, %v3275, %v3276
      %v3278 = vrot.slane %v3045, 2
      %v3279 = vsel %vm1782, %v3276, %v3278
      %v3280 = vrot.slane %v3046, 2
      %v3281 = vsel %vm1782, %v3278, %v3280
      %v3282 = vrot.slane %v3047, 2
      %v3283 = vrot.slane %v3048, 2
      %v3284 = vsel %vm1782, %v3282, %v3283
      %v3285 = vrot.slane %v3049, 2
      %v3286 = vsel %vm1782, %v3283, %v3285
      %v3287 = vrot.slane %v3050, 2
      %v3288 = vsel %vm1782, %v3285, %v3287
      %v3289 = vrot.slane %v3051, 2
      %v3290 = vrot.slane %v3052, 2
      %v3291 = vsel %vm1782, %v3289, %v3290
      %v3292 = vrot.slane %v3053, 2
      %v3293 = vsel %vm1782, %v3290, %v3292
      %v3294 = vrot.slane %v3054, 2
      %v3295 = vsel %vm1782, %v3292, %v3294
      %v3296 = vrot.slane %v3055, 2
      %v3297 = vrot.slane %v3056, 2
      %v3298 = vsel %vm1782, %v3296, %v3297
      %v3299 = vrot.slane %v3057, 2
      %v3300 = vsel %vm1782, %v3297, %v3299
      %v3301 = vrot.slane %v3058, 2
      %v3302 = vsel %vm1782, %v3299, %v3301
      %v3303 = vrot.slane %v3059, 2
      %v3304 = vrot.slane %v3060, 2
      %v3305 = vsel %vm1782, %v3303, %v3304
      %v3306 = vrot.slane %v3061, 2
      %v3307 = vsel %vm1782, %v3304, %v3306
      %v3308 = vrot.slane %v3062, 2
      %v3309 = vsel %vm1782, %v3306, %v3308
      %v3310 = vrot.slane %v3063, 2
      %v3311 = vrot.slane %v3064, 2
      %v3312 = vsel %vm1782, %v3310, %v3311
      %v3313 = vrot.slane %v3065, 2
      %v3314 = vsel %vm1782, %v3311, %v3313
      %v3315 = vrot.slane %v3066, 2
      %v3316 = vsel %vm1782, %v3313, %v3315
      %v3317 = vrot.slane %v3067, 2
      %v3318 = vrot.slane %v3068, 2
      %v3319 = vsel %vm1782, %v3317, %v3318
      %v3320 = vrot.slane %v3069, 2
      %v3321 = vsel %vm1782, %v3318, %v3320
      %v3322 = vrot.slane %v3070, 2
      %v3323 = vsel %vm1782, %v3320, %v3322
      %v3324 = vrot.slane %v3071, 2
      %v3325 = vrot.slane %v3072, 2
      %v3326 = vsel %vm1782, %v3324, %v3325
      %v3327 = vrot.slane %v3073, 2
      %v3328 = vsel %vm1782, %v3325, %v3327
      %v3329 = vrot.slane %v3074, 2
      %v3330 = vsel %vm1782, %v3327, %v3329
      %v3331 = vrot.slane %v3075, 2
      %v3332 = vrot.slane %v3076, 2
      %v3333 = vsel %vm1782, %v3331, %v3332
      %v3334 = vrot.slane %v3077, 2
      %v3335 = vsel %vm1782, %v3332, %v3334
      %v3336 = vrot.slane %v3078, 2
      %v3337 = vsel %vm1782, %v3334, %v3336
      %v3338 = vrot.slane %v3079, 2
      %v3339 = vrot.slane %v3080, 2
      %v3340 = vsel %vm1782, %v3338, %v3339
      %v3341 = vrot.slane %v3081, 2
      %v3342 = vsel %vm1782, %v3339, %v3341
      %v3343 = vrot.slane %v3082, 2
      %v3344 = vsel %vm1782, %v3341, %v3343
      %v3345 = vrot.slane %v3083, 2
      %v3346 = vrot.slane %v3084, 2
      %v3347 = vsel %vm1782, %v3345, %v3346
      %v3348 = vrot.slane %v3085, 2
      %v3349 = vsel %vm1782, %v3346, %v3348
      %v3350 = vrot.slane %v3086, 2
      %v3351 = vsel %vm1782, %v3348, %v3350
      %v3352 = vrot.slane %v3087, 2
      %v3353 = vrot.slane %v3088, 2
      %v3354 = vsel %vm1782, %v3352, %v3353
      %v3355 = vrot.slane %v3089, 2
      %v3356 = vsel %vm1782, %v3353, %v3355
      %v3357 = vrot.slane %v3090, 2
      %v3358 = vsel %vm1782, %v3355, %v3357
      %v3359 = vrot.slane %v3091, 2
      %v3360 = vrot.slane %v3092, 2
      %v3361 = vsel %vm1782, %v3359, %v3360
      %v3362 = vrot.slane %v3093, 2
      %v3363 = vsel %vm1782, %v3360, %v3362
      %v3364 = vrot.slane %v3094, 2
      %v3365 = vsel %vm1782, %v3362, %v3364
      %v3366 = vrot.slane %v3095, 2
      %v3367 = vrot.slane %v3096, 2
      %v3368 = vsel %vm1782, %v3366, %v3367
      %v3369 = vrot.slane %v3097, 2
      %v3370 = vsel %vm1782, %v3367, %v3369
      %v3371 = vrot.slane %v3098, 2
      %v3372 = vsel %vm1782, %v3369, %v3371
      %v3373 = vrot.slane %v3099, 2
      %v3374 = vrot.slane %v3100, 2
      %v3375 = vsel %vm1782, %v3373, %v3374
      %v3376 = vrot.slane %v3101, 2
      %v3377 = vsel %vm1782, %v3374, %v3376
      %v3378 = vrot.slane %v3102, 2
      %v3379 = vsel %vm1782, %v3376, %v3378
      %v3380 = vrot.slane %v3103, 2
      %v3381 = vrot.slane %v3104, 2
      %v3382 = vsel %vm1782, %v3380, %v3381
      %v3383 = vrot.slane %v3105, 2
      %v3384 = vsel %vm1782, %v3381, %v3383
      %v3385 = vrot.slane %v3106, 2
      %v3386 = vsel %vm1782, %v3383, %v3385
      %v3387 = vrot.slane %v3107, 2
      %v3388 = vrot.slane %v3108, 2
      %v3389 = vsel %vm1782, %v3387, %v3388
      %v3390 = vrot.slane %v3109, 2
      %v3391 = vsel %vm1782, %v3388, %v3390
      %v3392 = vrot.slane %v3110, 2
      %v3393 = vsel %vm1782, %v3390, %v3392
      %v3394 = vrot.slane %v3111, 2
      %v3395 = vrot.slane %v3112, 2
      %v3396 = vsel %vm1782, %v3394, %v3395
      %v3397 = vrot.slane %v3113, 2
      %v3398 = vsel %vm1782, %v3395, %v3397
      %v3399 = vrot.slane %v3114, 2
      %v3400 = vsel %vm1782, %v3397, %v3399
      %v3505 = vadd.f32 %v2903, %v3221
      %v3506 = vadd.f32 %v2904, %v3223
      %v3507 = vadd.f32 %v2905, %v3225
      %v3508 = vadd.f32 %v2906, %v3224
      %v3509 = vadd.f32 %v2907, %v3228
      %v3510 = vadd.f32 %v2908, %v3230
      %v3511 = vadd.f32 %v2909, %v3232
      %v3512 = vadd.f32 %v2910, %v3231
      %v3513 = vadd.f32 %v2911, %v3235
      %v3514 = vadd.f32 %v2912, %v3237
      %v3515 = vadd.f32 %v2913, %v3239
      %v3516 = vadd.f32 %v2914, %v3238
      %v3517 = vadd.f32 %v2915, %v3242
      %v3518 = vadd.f32 %v2916, %v3244
      %v3519 = vadd.f32 %v2917, %v3246
      %v3520 = vadd.f32 %v2918, %v3245
      %v3521 = vadd.f32 %v2919, %v3249
      %v3522 = vadd.f32 %v2920, %v3251
      %v3523 = vadd.f32 %v2921, %v3253
      %v3524 = vadd.f32 %v2922, %v3252
      %v3525 = vadd.f32 %v2923, %v3256
      %v3526 = vadd.f32 %v2924, %v3258
      %v3527 = vadd.f32 %v2925, %v3260
      %v3528 = vadd.f32 %v2926, %v3259
      %v3529 = vadd.f32 %v2927, %v3263
      %v3530 = vadd.f32 %v2928, %v3265
      %v3531 = vadd.f32 %v2929, %v3267
      %v3532 = vadd.f32 %v2930, %v3266
      %v3533 = vadd.f32 %v2931, %v3270
      %v3534 = vadd.f32 %v2932, %v3272
      %v3535 = vadd.f32 %v2933, %v3274
      %v3536 = vadd.f32 %v2934, %v3273
      %v3537 = vadd.f32 %v2935, %v3277
      %v3538 = vadd.f32 %v2936, %v3279
      %v3539 = vadd.f32 %v2937, %v3281
      %v3540 = vadd.f32 %v2938, %v3280
      %v3541 = vadd.f32 %v2939, %v3284
      %v3542 = vadd.f32 %v2940, %v3286
      %v3543 = vadd.f32 %v2941, %v3288
      %v3544 = vadd.f32 %v2942, %v3287
      %v3545 = vadd.f32 %v2943, %v3291
      %v3546 = vadd.f32 %v2944, %v3293
      %v3547 = vadd.f32 %v2945, %v3295
      %v3548 = vadd.f32 %v2946, %v3294
      %v3549 = vadd.f32 %v2947, %v3298
      %v3550 = vadd.f32 %v2948, %v3300
      %v3551 = vadd.f32 %v2949, %v3302
      %v3552 = vadd.f32 %v2950, %v3301
      %v3553 = vadd.f32 %v2951, %v3305
      %v3554 = vadd.f32 %v2952, %v3307
      %v3555 = vadd.f32 %v2953, %v3309
      %v3556 = vadd.f32 %v2954, %v3308
      %v3557 = vadd.f32 %v2955, %v3312
      %v3558 = vadd.f32 %v2956, %v3314
      %v3559 = vadd.f32 %v2957, %v3316
      %v3560 = vadd.f32 %v2958, %v3315
      %v3561 = vadd.f32 %v2959, %v3319
      %v3562 = vadd.f32 %v2960, %v3321
      %v3563 = vadd.f32 %v2961, %v3323
      %v3564 = vadd.f32 %v2962, %v3322
      %v3565 = vadd.f32 %v2963, %v3326
      %v3566 = vadd.f32 %v2964, %v3328
      %v3567 = vadd.f32 %v2965, %v3330
      %v3568 = vadd.f32 %v2966, %v3329
      %v3569 = vadd.f32 %v2967, %v3333
      %v3570 = vadd.f32 %v2968, %v3335
      %v3571 = vadd.f32 %v2969, %v3337
      %v3572 = vadd.f32 %v2970, %v3336
      %v3573 = vadd.f32 %v2971, %v3340
      %v3574 = vadd.f32 %v2972, %v3342
      %v3575 = vadd.f32 %v2973, %v3344
      %v3576 = vadd.f32 %v2974, %v3343
      %v3577 = vadd.f32 %v2975, %v3347
      %v3578 = vadd.f32 %v2976, %v3349
      %v3579 = vadd.f32 %v2977, %v3351
      %v3580 = vadd.f32 %v2978, %v3350
      %v3581 = vadd.f32 %v2979, %v3354
      %v3582 = vadd.f32 %v2980, %v3356
      %v3583 = vadd.f32 %v2981, %v3358
      %v3584 = vadd.f32 %v2982, %v3357
      %v3585 = vadd.f32 %v2983, %v3361
      %v3586 = vadd.f32 %v2984, %v3363
      %v3587 = vadd.f32 %v2985, %v3365
      %v3588 = vadd.f32 %v2986, %v3364
      %v3589 = vadd.f32 %v2987, %v3368
      %v3590 = vadd.f32 %v2988, %v3370
      %v3591 = vadd.f32 %v2989, %v3372
      %v3592 = vadd.f32 %v2990, %v3371
      %v3593 = vadd.f32 %v2991, %v3375
      %v3594 = vadd.f32 %v2992, %v3377
      %v3595 = vadd.f32 %v2993, %v3379
      %v3596 = vadd.f32 %v2994, %v3378
      %v3597 = vadd.f32 %v2995, %v3382
      %v3598 = vadd.f32 %v2996, %v3384
      %v3599 = vadd.f32 %v2997, %v3386
      %v3600 = vadd.f32 %v2998, %v3385
      %v3601 = vadd.f32 %v2999, %v3389
      %v3602 = vadd.f32 %v3000, %v3391
      %v3603 = vadd.f32 %v3001, %v3393
      %v3604 = vadd.f32 %v3002, %v3392
      %v3605 = vadd.f32 %v3003, %v3396
      %v3606 = vadd.f32 %v3004, %v3398
      %v3607 = vadd.f32 %v3005, %v3400
      %v3608 = vadd.f32 %v3006, %v3399
      %3610 = vset.pattern.permute.xlu0 0
      %3611 = vperm.xlu0 %3610, %v333
      %v3612 = vpop.permute.xlu0 %3611
      %3615 = vset.pattern.permute.xlu0 0
      %3616 = vperm.xlu0 %3615, %v334
      %v3617 = vpop.permute.xlu0 %3616
      %3620 = vset.pattern.permute.xlu0 0
      %3621 = vperm.xlu0 %3620, %v335
      %v3622 = vpop.permute.xlu0 %3621
      %3625 = vset.pattern.permute.xlu0 0
      %3626 = vperm.xlu0 %3625, %v336
      %v3627 = vpop.permute.xlu0 %3626
      %v3629 = vlaneseq
      %v3630 = vshrl.u32 %v3629, 7
      %v3631 = vsub.s32 6, %v3630
      %v3632 = vrot.slane %v337, %v3631
      %v3633 = vmul.f32 %v382, %v3632
      %v3634 = vmul.f32 %v387, %v3632
      %v3635 = vmul.f32 %v392, %v3632
      %v3636 = vmul.f32 %v397, %v3632
      %v3637 = vmul.f32 %v402, %v3632
      %v3638 = vmul.f32 %v407, %v3632
      %v3639 = vmul.f32 %v412, %v3632
      %v3640 = vmul.f32 %v417, %v3632
      %v3641 = vmul.f32 %v422, %v3632
      %v3642 = vmul.f32 %v427, %v3632
      %v3643 = vmul.f32 %v432, %v3632
      %v3644 = vmul.f32 %v437, %v3632
      %v3645 = vmul.f32 %v442, %v3632
      %v3646 = vmul.f32 %v447, %v3632
      %v3647 = vmul.f32 %v452, %v3632
      %v3648 = vmul.f32 %v457, %v3632
      %v3649 = vmul.f32 %v462, %v3632
      %v3650 = vmul.f32 %v467, %v3632
      %v3651 = vmul.f32 %v472, %v3632
      %v3652 = vmul.f32 %v477, %v3632
      %v3653 = vmul.f32 %v482, %v3632
      %v3654 = vmul.f32 %v487, %v3632
      %v3655 = vmul.f32 %v492, %v3632
      %v3656 = vmul.f32 %v497, %v3632
      %v3657 = vmul.f32 %v502, %v3632
      %v3658 = vmul.f32 %v507, %v3632
      %v3659 = vmul.f32 %v512, %v3632
      %v3660 = vmul.f32 %v517, %v3632
      %v3661 = vmul.f32 %v522, %v3632
      %v3662 = vmul.f32 %v527, %v3632
      %v3663 = vmul.f32 %v532, %v3632
      %v3664 = vmul.f32 %v537, %v3632
      %v3665 = vmul.f32 %v542, %v3632
      %v3666 = vmul.f32 %v547, %v3632
      %v3667 = vmul.f32 %v552, %v3632
      %v3668 = vmul.f32 %v557, %v3632
      %v3669 = vmul.f32 %v562, %v3632
      %v3670 = vmul.f32 %v567, %v3632
      %v3671 = vmul.f32 %v572, %v3632
      %v3672 = vmul.f32 %v577, %v3632
      %v3673 = vmul.f32 %v582, %v3632
      %v3674 = vmul.f32 %v587, %v3632
      %v3675 = vmul.f32 %v592, %v3632
      %v3676 = vmul.f32 %v597, %v3632
      %v3677 = vmul.f32 %v602, %v3632
      %v3678 = vmul.f32 %v607, %v3632
      %v3679 = vmul.f32 %v612, %v3632
      %v3680 = vmul.f32 %v617, %v3632
      %v3681 = vmul.f32 %v622, %v3632
      %v3682 = vmul.f32 %v627, %v3632
      %v3683 = vmul.f32 %v632, %v3632
      %v3684 = vmul.f32 %v637, %v3632
      %v3685 = vmul.f32 %v642, %v3632
      %v3686 = vmul.f32 %v647, %v3632
      %v3687 = vmul.f32 %v652, %v3632
      %v3688 = vmul.f32 %v657, %v3632
      %v3689 = vmul.f32 %v662, %v3632
      %v3690 = vmul.f32 %v667, %v3632
      %v3691 = vmul.f32 %v672, %v3632
      %v3692 = vmul.f32 %v677, %v3632
      %v3693 = vmul.f32 %v682, %v3632
      %v3694 = vmul.f32 %v687, %v3632
      %v3695 = vmul.f32 %v692, %v3632
      %v3696 = vmul.f32 %v697, %v3632
      %v3697 = vmul.f32 %v702, %v3632
      %v3698 = vmul.f32 %v707, %v3632
      %v3699 = vmul.f32 %v712, %v3632
      %v3700 = vmul.f32 %v717, %v3632
      %v3701 = vmul.f32 %v722, %v3632
      %v3702 = vmul.f32 %v727, %v3632
      %v3703 = vmul.f32 %v732, %v3632
      %v3704 = vmul.f32 %v737, %v3632
      %v3705 = vmul.f32 %v742, %v3632
      %v3706 = vmul.f32 %v747, %v3632
      %v3707 = vmul.f32 %v752, %v3632
      %v3708 = vmul.f32 %v757, %v3632
      %v3709 = vmul.f32 %v762, %v3632
      %v3710 = vmul.f32 %v767, %v3632
      %v3711 = vmul.f32 %v772, %v3632
      %v3712 = vmul.f32 %v777, %v3632
      %v3713 = vmul.f32 %v782, %v3632
      %v3714 = vmul.f32 %v787, %v3632
      %v3715 = vmul.f32 %v792, %v3632
      %v3716 = vmul.f32 %v797, %v3632
      %v3717 = vmul.f32 %v802, %v3632
      %v3718 = vmul.f32 %v807, %v3632
      %v3719 = vmul.f32 %v812, %v3632
      %v3720 = vmul.f32 %v817, %v3632
      %v3721 = vmul.f32 %v822, %v3632
      %v3722 = vmul.f32 %v827, %v3632
      %v3723 = vmul.f32 %v832, %v3632
      %v3724 = vmul.f32 %v837, %v3632
      %v3725 = vmul.f32 %v842, %v3632
      %v3726 = vmul.f32 %v847, %v3632
      %v3727 = vmul.f32 %v852, %v3632
      %v3728 = vmul.f32 %v857, %v3632
      %v3729 = vmul.f32 %v2176, %v3632
      %v3730 = vmul.f32 %v2181, %v3632
      %v3731 = vmul.f32 %v2186, %v3632
      %v3732 = vmul.f32 %v2191, %v3632
      %v3733 = vmul.f32 %v3612, %v3632
      %v3734 = vmul.f32 %v3617, %v3632
      %v3735 = vmul.f32 %v3622, %v3632
      %v3736 = vmul.f32 %v3627, %v3632
      %v3737 = vadd.f32 %v3505, %v3633
      %v3738 = vadd.f32 %v3506, %v3634
      %v3739 = vadd.f32 %v3507, %v3635
      %v3740 = vadd.f32 %v3508, %v3636
      %v3741 = vadd.f32 %v3509, %v3637
      %v3742 = vadd.f32 %v3510, %v3638
      %v3743 = vadd.f32 %v3511, %v3639
      %v3744 = vadd.f32 %v3512, %v3640
      %v3745 = vadd.f32 %v3513, %v3641
      %v3746 = vadd.f32 %v3514, %v3642
      %v3747 = vadd.f32 %v3515, %v3643
      %v3748 = vadd.f32 %v3516, %v3644
      %v3749 = vadd.f32 %v3517, %v3645
      %v3750 = vadd.f32 %v3518, %v3646
      %v3751 = vadd.f32 %v3519, %v3647
      %v3752 = vadd.f32 %v3520, %v3648
      %v3753 = vadd.f32 %v3521, %v3649
      %v3754 = vadd.f32 %v3522, %v3650
      %v3755 = vadd.f32 %v3523, %v3651
      %v3756 = vadd.f32 %v3524, %v3652
      %v3757 = vadd.f32 %v3525, %v3653
      %v3758 = vadd.f32 %v3526, %v3654
      %v3759 = vadd.f32 %v3527, %v3655
      %v3760 = vadd.f32 %v3528, %v3656
      %v3761 = vadd.f32 %v3529, %v3657
      %v3762 = vadd.f32 %v3530, %v3658
      %v3763 = vadd.f32 %v3531, %v3659
      %v3764 = vadd.f32 %v3532, %v3660
      %v3765 = vadd.f32 %v3533, %v3661
      %v3766 = vadd.f32 %v3534, %v3662
      %v3767 = vadd.f32 %v3535, %v3663
      %v3768 = vadd.f32 %v3536, %v3664
      %v3769 = vadd.f32 %v3537, %v3665
      %v3770 = vadd.f32 %v3538, %v3666
      %v3771 = vadd.f32 %v3539, %v3667
      %v3772 = vadd.f32 %v3540, %v3668
      %v3773 = vadd.f32 %v3541, %v3669
      %v3774 = vadd.f32 %v3542, %v3670
      %v3775 = vadd.f32 %v3543, %v3671
      %v3776 = vadd.f32 %v3544, %v3672
      %v3777 = vadd.f32 %v3545, %v3673
      %v3778 = vadd.f32 %v3546, %v3674
      %v3779 = vadd.f32 %v3547, %v3675
      %v3780 = vadd.f32 %v3548, %v3676
      %v3781 = vadd.f32 %v3549, %v3677
      %v3782 = vadd.f32 %v3550, %v3678
      %v3783 = vadd.f32 %v3551, %v3679
      %v3784 = vadd.f32 %v3552, %v3680
      %v3785 = vadd.f32 %v3553, %v3681
      %v3786 = vadd.f32 %v3554, %v3682
      %v3787 = vadd.f32 %v3555, %v3683
      %v3788 = vadd.f32 %v3556, %v3684
      %v3789 = vadd.f32 %v3557, %v3685
      %v3790 = vadd.f32 %v3558, %v3686
      %v3791 = vadd.f32 %v3559, %v3687
      %v3792 = vadd.f32 %v3560, %v3688
      %v3793 = vadd.f32 %v3561, %v3689
      %v3794 = vadd.f32 %v3562, %v3690
      %v3795 = vadd.f32 %v3563, %v3691
      %v3796 = vadd.f32 %v3564, %v3692
      %v3797 = vadd.f32 %v3565, %v3693
      %v3798 = vadd.f32 %v3566, %v3694
      %v3799 = vadd.f32 %v3567, %v3695
      %v3800 = vadd.f32 %v3568, %v3696
      %v3801 = vadd.f32 %v3569, %v3697
      %v3802 = vadd.f32 %v3570, %v3698
      %v3803 = vadd.f32 %v3571, %v3699
      %v3804 = vadd.f32 %v3572, %v3700
      %v3805 = vadd.f32 %v3573, %v3701
      %v3806 = vadd.f32 %v3574, %v3702
      %v3807 = vadd.f32 %v3575, %v3703
      %v3808 = vadd.f32 %v3576, %v3704
      %v3809 = vadd.f32 %v3577, %v3705
      %v3810 = vadd.f32 %v3578, %v3706
      %v3811 = vadd.f32 %v3579, %v3707
      %v3812 = vadd.f32 %v3580, %v3708
      %v3813 = vadd.f32 %v3581, %v3709
      %v3814 = vadd.f32 %v3582, %v3710
      %v3815 = vadd.f32 %v3583, %v3711
      %v3816 = vadd.f32 %v3584, %v3712
      %v3817 = vadd.f32 %v3585, %v3713
      %v3818 = vadd.f32 %v3586, %v3714
      %v3819 = vadd.f32 %v3587, %v3715
      %v3820 = vadd.f32 %v3588, %v3716
      %v3821 = vadd.f32 %v3589, %v3717
      %v3822 = vadd.f32 %v3590, %v3718
      %v3823 = vadd.f32 %v3591, %v3719
      %v3824 = vadd.f32 %v3592, %v3720
      %v3825 = vadd.f32 %v3593, %v3721
      %v3826 = vadd.f32 %v3594, %v3722
      %v3827 = vadd.f32 %v3595, %v3723
      %v3828 = vadd.f32 %v3596, %v3724
      %v3829 = vadd.f32 %v3597, %v3725
      %v3830 = vadd.f32 %v3598, %v3726
      %v3831 = vadd.f32 %v3599, %v3727
      %v3832 = vadd.f32 %v3600, %v3728
      %v3833 = vadd.f32 %v3601, %v3729
      %v3834 = vadd.f32 %v3602, %v3730
      %v3835 = vadd.f32 %v3603, %v3731
      %v3836 = vadd.f32 %v3604, %v3732
      %v3837 = vadd.f32 %v3605, %v3733
      %v3838 = vadd.f32 %v3606, %v3734
      %v3839 = vadd.f32 %v3607, %v3735
      %v3840 = vadd.f32 %v3608, %v3736
      %v3841 = vlaneseq
      %v3842 = vshrl.u32 %v3841, 7
      %v3843 = vsub.s32 7, %v3842
      %v3844 = vrot.slane %v337, %v3843
      %v3845 = vmul.f32 %v382, %v3844
      %v3846 = vmul.f32 %v387, %v3844
      %v3847 = vmul.f32 %v392, %v3844
      %v3848 = vmul.f32 %v397, %v3844
      %v3849 = vmul.f32 %v402, %v3844
      %v3850 = vmul.f32 %v407, %v3844
      %v3851 = vmul.f32 %v412, %v3844
      %v3852 = vmul.f32 %v417, %v3844
      %v3853 = vmul.f32 %v422, %v3844
      %v3854 = vmul.f32 %v427, %v3844
      %v3855 = vmul.f32 %v432, %v3844
      %v3856 = vmul.f32 %v437, %v3844
      %v3857 = vmul.f32 %v442, %v3844
      %v3858 = vmul.f32 %v447, %v3844
      %v3859 = vmul.f32 %v452, %v3844
      %v3860 = vmul.f32 %v457, %v3844
      %v3861 = vmul.f32 %v462, %v3844
      %v3862 = vmul.f32 %v467, %v3844
      %v3863 = vmul.f32 %v472, %v3844
      %v3864 = vmul.f32 %v477, %v3844
      %v3865 = vmul.f32 %v482, %v3844
      %v3866 = vmul.f32 %v487, %v3844
      %v3867 = vmul.f32 %v492, %v3844
      %v3868 = vmul.f32 %v497, %v3844
      %v3869 = vmul.f32 %v502, %v3844
      %v3870 = vmul.f32 %v507, %v3844
      %v3871 = vmul.f32 %v512, %v3844
      %v3872 = vmul.f32 %v517, %v3844
      %v3873 = vmul.f32 %v522, %v3844
      %v3874 = vmul.f32 %v527, %v3844
      %v3875 = vmul.f32 %v532, %v3844
      %v3876 = vmul.f32 %v537, %v3844
      %v3877 = vmul.f32 %v542, %v3844
      %v3878 = vmul.f32 %v547, %v3844
      %v3879 = vmul.f32 %v552, %v3844
      %v3880 = vmul.f32 %v557, %v3844
      %v3881 = vmul.f32 %v562, %v3844
      %v3882 = vmul.f32 %v567, %v3844
      %v3883 = vmul.f32 %v572, %v3844
      %v3884 = vmul.f32 %v577, %v3844
      %v3885 = vmul.f32 %v582, %v3844
      %v3886 = vmul.f32 %v587, %v3844
      %v3887 = vmul.f32 %v592, %v3844
      %v3888 = vmul.f32 %v597, %v3844
      %v3889 = vmul.f32 %v602, %v3844
      %v3890 = vmul.f32 %v607, %v3844
      %v3891 = vmul.f32 %v612, %v3844
      %v3892 = vmul.f32 %v617, %v3844
      %v3893 = vmul.f32 %v622, %v3844
      %v3894 = vmul.f32 %v627, %v3844
      %v3895 = vmul.f32 %v632, %v3844
      %v3896 = vmul.f32 %v637, %v3844
      %v3897 = vmul.f32 %v642, %v3844
      %v3898 = vmul.f32 %v647, %v3844
      %v3899 = vmul.f32 %v652, %v3844
      %v3900 = vmul.f32 %v657, %v3844
      %v3901 = vmul.f32 %v662, %v3844
      %v3902 = vmul.f32 %v667, %v3844
      %v3903 = vmul.f32 %v672, %v3844
      %v3904 = vmul.f32 %v677, %v3844
      %v3905 = vmul.f32 %v682, %v3844
      %v3906 = vmul.f32 %v687, %v3844
      %v3907 = vmul.f32 %v692, %v3844
      %v3908 = vmul.f32 %v697, %v3844
      %v3909 = vmul.f32 %v702, %v3844
      %v3910 = vmul.f32 %v707, %v3844
      %v3911 = vmul.f32 %v712, %v3844
      %v3912 = vmul.f32 %v717, %v3844
      %v3913 = vmul.f32 %v722, %v3844
      %v3914 = vmul.f32 %v727, %v3844
      %v3915 = vmul.f32 %v732, %v3844
      %v3916 = vmul.f32 %v737, %v3844
      %v3917 = vmul.f32 %v742, %v3844
      %v3918 = vmul.f32 %v747, %v3844
      %v3919 = vmul.f32 %v752, %v3844
      %v3920 = vmul.f32 %v757, %v3844
      %v3921 = vmul.f32 %v762, %v3844
      %v3922 = vmul.f32 %v767, %v3844
      %v3923 = vmul.f32 %v772, %v3844
      %v3924 = vmul.f32 %v777, %v3844
      %v3925 = vmul.f32 %v782, %v3844
      %v3926 = vmul.f32 %v787, %v3844
      %v3927 = vmul.f32 %v792, %v3844
      %v3928 = vmul.f32 %v797, %v3844
      %v3929 = vmul.f32 %v802, %v3844
      %v3930 = vmul.f32 %v807, %v3844
      %v3931 = vmul.f32 %v812, %v3844
      %v3932 = vmul.f32 %v817, %v3844
      %v3933 = vmul.f32 %v822, %v3844
      %v3934 = vmul.f32 %v827, %v3844
      %v3935 = vmul.f32 %v832, %v3844
      %v3936 = vmul.f32 %v837, %v3844
      %v3937 = vmul.f32 %v842, %v3844
      %v3938 = vmul.f32 %v847, %v3844
      %v3939 = vmul.f32 %v852, %v3844
      %v3940 = vmul.f32 %v857, %v3844
      %v3941 = vmul.f32 %v2176, %v3844
      %v3942 = vmul.f32 %v2181, %v3844
      %v3943 = vmul.f32 %v2186, %v3844
      %v3944 = vmul.f32 %v2191, %v3844
      %v3945 = vmul.f32 %v3612, %v3844
      %v3946 = vmul.f32 %v3617, %v3844
      %v3947 = vmul.f32 %v3622, %v3844
      %v3948 = vmul.f32 %v3627, %v3844
      %v4053 = vrot.slane %v3845, 1
      %v4054 = vrot.slane %v3846, 1
      %v4055 = vsel %vm1179, %v4053, %v4054
      %v4056 = vrot.slane %v3847, 1
      %v4057 = vsel %vm1179, %v4054, %v4056
      %v4058 = vrot.slane %v3848, 1
      %v4059 = vsel %vm1179, %v4056, %v4058
      %v4060 = vrot.slane %v3849, 1
      %v4061 = vrot.slane %v3850, 1
      %v4062 = vsel %vm1179, %v4060, %v4061
      %v4063 = vrot.slane %v3851, 1
      %v4064 = vsel %vm1179, %v4061, %v4063
      %v4065 = vrot.slane %v3852, 1
      %v4066 = vsel %vm1179, %v4063, %v4065
      %v4067 = vrot.slane %v3853, 1
      %v4068 = vrot.slane %v3854, 1
      %v4069 = vsel %vm1179, %v4067, %v4068
      %v4070 = vrot.slane %v3855, 1
      %v4071 = vsel %vm1179, %v4068, %v4070
      %v4072 = vrot.slane %v3856, 1
      %v4073 = vsel %vm1179, %v4070, %v4072
      %v4074 = vrot.slane %v3857, 1
      %v4075 = vrot.slane %v3858, 1
      %v4076 = vsel %vm1179, %v4074, %v4075
      %v4077 = vrot.slane %v3859, 1
      %v4078 = vsel %vm1179, %v4075, %v4077
      %v4079 = vrot.slane %v3860, 1
      %v4080 = vsel %vm1179, %v4077, %v4079
      %v4081 = vrot.slane %v3861, 1
      %v4082 = vrot.slane %v3862, 1
      %v4083 = vsel %vm1179, %v4081, %v4082
      %v4084 = vrot.slane %v3863, 1
      %v4085 = vsel %vm1179, %v4082, %v4084
      %v4086 = vrot.slane %v3864, 1
      %v4087 = vsel %vm1179, %v4084, %v4086
      %v4088 = vrot.slane %v3865, 1
      %v4089 = vrot.slane %v3866, 1
      %v4090 = vsel %vm1179, %v4088, %v4089
      %v4091 = vrot.slane %v3867, 1
      %v4092 = vsel %vm1179, %v4089, %v4091
      %v4093 = vrot.slane %v3868, 1
      %v4094 = vsel %vm1179, %v4091, %v4093
      %v4095 = vrot.slane %v3869, 1
      %v4096 = vrot.slane %v3870, 1
      %v4097 = vsel %vm1179, %v4095, %v4096
      %v4098 = vrot.slane %v3871, 1
      %v4099 = vsel %vm1179, %v4096, %v4098
      %v4100 = vrot.slane %v3872, 1
      %v4101 = vsel %vm1179, %v4098, %v4100
      %v4102 = vrot.slane %v3873, 1
      %v4103 = vrot.slane %v3874, 1
      %v4104 = vsel %vm1179, %v4102, %v4103
      %v4105 = vrot.slane %v3875, 1
      %v4106 = vsel %vm1179, %v4103, %v4105
      %v4107 = vrot.slane %v3876, 1
      %v4108 = vsel %vm1179, %v4105, %v4107
      %v4109 = vrot.slane %v3877, 1
      %v4110 = vrot.slane %v3878, 1
      %v4111 = vsel %vm1179, %v4109, %v4110
      %v4112 = vrot.slane %v3879, 1
      %v4113 = vsel %vm1179, %v4110, %v4112
      %v4114 = vrot.slane %v3880, 1
      %v4115 = vsel %vm1179, %v4112, %v4114
      %v4116 = vrot.slane %v3881, 1
      %v4117 = vrot.slane %v3882, 1
      %v4118 = vsel %vm1179, %v4116, %v4117
      %v4119 = vrot.slane %v3883, 1
      %v4120 = vsel %vm1179, %v4117, %v4119
      %v4121 = vrot.slane %v3884, 1
      %v4122 = vsel %vm1179, %v4119, %v4121
      %v4123 = vrot.slane %v3885, 1
      %v4124 = vrot.slane %v3886, 1
      %v4125 = vsel %vm1179, %v4123, %v4124
      %v4126 = vrot.slane %v3887, 1
      %v4127 = vsel %vm1179, %v4124, %v4126
      %v4128 = vrot.slane %v3888, 1
      %v4129 = vsel %vm1179, %v4126, %v4128
      %v4130 = vrot.slane %v3889, 1
      %v4131 = vrot.slane %v3890, 1
      %v4132 = vsel %vm1179, %v4130, %v4131
      %v4133 = vrot.slane %v3891, 1
      %v4134 = vsel %vm1179, %v4131, %v4133
      %v4135 = vrot.slane %v3892, 1
      %v4136 = vsel %vm1179, %v4133, %v4135
      %v4137 = vrot.slane %v3893, 1
      %v4138 = vrot.slane %v3894, 1
      %v4139 = vsel %vm1179, %v4137, %v4138
      %v4140 = vrot.slane %v3895, 1
      %v4141 = vsel %vm1179, %v4138, %v4140
      %v4142 = vrot.slane %v3896, 1
      %v4143 = vsel %vm1179, %v4140, %v4142
      %v4144 = vrot.slane %v3897, 1
      %v4145 = vrot.slane %v3898, 1
      %v4146 = vsel %vm1179, %v4144, %v4145
      %v4147 = vrot.slane %v3899, 1
      %v4148 = vsel %vm1179, %v4145, %v4147
      %v4149 = vrot.slane %v3900, 1
      %v4150 = vsel %vm1179, %v4147, %v4149
      %v4151 = vrot.slane %v3901, 1
      %v4152 = vrot.slane %v3902, 1
      %v4153 = vsel %vm1179, %v4151, %v4152
      %v4154 = vrot.slane %v3903, 1
      %v4155 = vsel %vm1179, %v4152, %v4154
      %v4156 = vrot.slane %v3904, 1
      %v4157 = vsel %vm1179, %v4154, %v4156
      %v4158 = vrot.slane %v3905, 1
      %v4159 = vrot.slane %v3906, 1
      %v4160 = vsel %vm1179, %v4158, %v4159
      %v4161 = vrot.slane %v3907, 1
      %v4162 = vsel %vm1179, %v4159, %v4161
      %v4163 = vrot.slane %v3908, 1
      %v4164 = vsel %vm1179, %v4161, %v4163
      %v4165 = vrot.slane %v3909, 1
      %v4166 = vrot.slane %v3910, 1
      %v4167 = vsel %vm1179, %v4165, %v4166
      %v4168 = vrot.slane %v3911, 1
      %v4169 = vsel %vm1179, %v4166, %v4168
      %v4170 = vrot.slane %v3912, 1
      %v4171 = vsel %vm1179, %v4168, %v4170
      %v4172 = vrot.slane %v3913, 1
      %v4173 = vrot.slane %v3914, 1
      %v4174 = vsel %vm1179, %v4172, %v4173
      %v4175 = vrot.slane %v3915, 1
      %v4176 = vsel %vm1179, %v4173, %v4175
      %v4177 = vrot.slane %v3916, 1
      %v4178 = vsel %vm1179, %v4175, %v4177
      %v4179 = vrot.slane %v3917, 1
      %v4180 = vrot.slane %v3918, 1
      %v4181 = vsel %vm1179, %v4179, %v4180
      %v4182 = vrot.slane %v3919, 1
      %v4183 = vsel %vm1179, %v4180, %v4182
      %v4184 = vrot.slane %v3920, 1
      %v4185 = vsel %vm1179, %v4182, %v4184
      %v4186 = vrot.slane %v3921, 1
      %v4187 = vrot.slane %v3922, 1
      %v4188 = vsel %vm1179, %v4186, %v4187
      %v4189 = vrot.slane %v3923, 1
      %v4190 = vsel %vm1179, %v4187, %v4189
      %v4191 = vrot.slane %v3924, 1
      %v4192 = vsel %vm1179, %v4189, %v4191
      %v4193 = vrot.slane %v3925, 1
      %v4194 = vrot.slane %v3926, 1
      %v4195 = vsel %vm1179, %v4193, %v4194
      %v4196 = vrot.slane %v3927, 1
      %v4197 = vsel %vm1179, %v4194, %v4196
      %v4198 = vrot.slane %v3928, 1
      %v4199 = vsel %vm1179, %v4196, %v4198
      %v4200 = vrot.slane %v3929, 1
      %v4201 = vrot.slane %v3930, 1
      %v4202 = vsel %vm1179, %v4200, %v4201
      %v4203 = vrot.slane %v3931, 1
      %v4204 = vsel %vm1179, %v4201, %v4203
      %v4205 = vrot.slane %v3932, 1
      %v4206 = vsel %vm1179, %v4203, %v4205
      %v4207 = vrot.slane %v3933, 1
      %v4208 = vrot.slane %v3934, 1
      %v4209 = vsel %vm1179, %v4207, %v4208
      %v4210 = vrot.slane %v3935, 1
      %v4211 = vsel %vm1179, %v4208, %v4210
      %v4212 = vrot.slane %v3936, 1
      %v4213 = vsel %vm1179, %v4210, %v4212
      %v4214 = vrot.slane %v3937, 1
      %v4215 = vrot.slane %v3938, 1
      %v4216 = vsel %vm1179, %v4214, %v4215
      %v4217 = vrot.slane %v3939, 1
      %v4218 = vsel %vm1179, %v4215, %v4217
      %v4219 = vrot.slane %v3940, 1
      %v4220 = vsel %vm1179, %v4217, %v4219
      %v4221 = vrot.slane %v3941, 1
      %v4222 = vrot.slane %v3942, 1
      %v4223 = vsel %vm1179, %v4221, %v4222
      %v4224 = vrot.slane %v3943, 1
      %v4225 = vsel %vm1179, %v4222, %v4224
      %v4226 = vrot.slane %v3944, 1
      %v4227 = vsel %vm1179, %v4224, %v4226
      %v4228 = vrot.slane %v3945, 1
      %v4229 = vrot.slane %v3946, 1
      %v4230 = vsel %vm1179, %v4228, %v4229
      %v4231 = vrot.slane %v3947, 1
      %v4232 = vsel %vm1179, %v4229, %v4231
      %v4233 = vrot.slane %v3948, 1
      %v4234 = vsel %vm1179, %v4231, %v4233
      %v4339 = vadd.f32 %v3737, %v4055
      %v4340 = vadd.f32 %v3738, %v4057
      %v4341 = vadd.f32 %v3739, %v4059
      %v4342 = vadd.f32 %v3740, %v4058
      %v4343 = vadd.f32 %v3741, %v4062
      %v4344 = vadd.f32 %v3742, %v4064
      %v4345 = vadd.f32 %v3743, %v4066
      %v4346 = vadd.f32 %v3744, %v4065
      %v4347 = vadd.f32 %v3745, %v4069
      %v4348 = vadd.f32 %v3746, %v4071
      %v4349 = vadd.f32 %v3747, %v4073
      %v4350 = vadd.f32 %v3748, %v4072
      %v4351 = vadd.f32 %v3749, %v4076
      %v4352 = vadd.f32 %v3750, %v4078
      %v4353 = vadd.f32 %v3751, %v4080
      %v4354 = vadd.f32 %v3752, %v4079
      %v4355 = vadd.f32 %v3753, %v4083
      %v4356 = vadd.f32 %v3754, %v4085
      %v4357 = vadd.f32 %v3755, %v4087
      %v4358 = vadd.f32 %v3756, %v4086
      %v4359 = vadd.f32 %v3757, %v4090
      %v4360 = vadd.f32 %v3758, %v4092
      %v4361 = vadd.f32 %v3759, %v4094
      %v4362 = vadd.f32 %v3760, %v4093
      %v4363 = vadd.f32 %v3761, %v4097
      %v4364 = vadd.f32 %v3762, %v4099
      %v4365 = vadd.f32 %v3763, %v4101
      %v4366 = vadd.f32 %v3764, %v4100
      %v4367 = vadd.f32 %v3765, %v4104
      %v4368 = vadd.f32 %v3766, %v4106
      %v4369 = vadd.f32 %v3767, %v4108
      %v4370 = vadd.f32 %v3768, %v4107
      %v4371 = vadd.f32 %v3769, %v4111
      %v4372 = vadd.f32 %v3770, %v4113
      %v4373 = vadd.f32 %v3771, %v4115
      %v4374 = vadd.f32 %v3772, %v4114
      %v4375 = vadd.f32 %v3773, %v4118
      %v4376 = vadd.f32 %v3774, %v4120
      %v4377 = vadd.f32 %v3775, %v4122
      %v4378 = vadd.f32 %v3776, %v4121
      %v4379 = vadd.f32 %v3777, %v4125
      %v4380 = vadd.f32 %v3778, %v4127
      %v4381 = vadd.f32 %v3779, %v4129
      %v4382 = vadd.f32 %v3780, %v4128
      %v4383 = vadd.f32 %v3781, %v4132
      %v4384 = vadd.f32 %v3782, %v4134
      %v4385 = vadd.f32 %v3783, %v4136
      %v4386 = vadd.f32 %v3784, %v4135
      %v4387 = vadd.f32 %v3785, %v4139
      %v4388 = vadd.f32 %v3786, %v4141
      %v4389 = vadd.f32 %v3787, %v4143
      %v4390 = vadd.f32 %v3788, %v4142
      %v4391 = vadd.f32 %v3789, %v4146
      %v4392 = vadd.f32 %v3790, %v4148
      %v4393 = vadd.f32 %v3791, %v4150
      %v4394 = vadd.f32 %v3792, %v4149
      %v4395 = vadd.f32 %v3793, %v4153
      %v4396 = vadd.f32 %v3794, %v4155
      %v4397 = vadd.f32 %v3795, %v4157
      %v4398 = vadd.f32 %v3796, %v4156
      %v4399 = vadd.f32 %v3797, %v4160
      %v4400 = vadd.f32 %v3798, %v4162
      %v4401 = vadd.f32 %v3799, %v4164
      %v4402 = vadd.f32 %v3800, %v4163
      %v4403 = vadd.f32 %v3801, %v4167
      %v4404 = vadd.f32 %v3802, %v4169
      %v4405 = vadd.f32 %v3803, %v4171
      %v4406 = vadd.f32 %v3804, %v4170
      %v4407 = vadd.f32 %v3805, %v4174
      %v4408 = vadd.f32 %v3806, %v4176
      %v4409 = vadd.f32 %v3807, %v4178
      %v4410 = vadd.f32 %v3808, %v4177
      %v4411 = vadd.f32 %v3809, %v4181
      %v4412 = vadd.f32 %v3810, %v4183
      %v4413 = vadd.f32 %v3811, %v4185
      %v4414 = vadd.f32 %v3812, %v4184
      %v4415 = vadd.f32 %v3813, %v4188
      %v4416 = vadd.f32 %v3814, %v4190
      %v4417 = vadd.f32 %v3815, %v4192
      %v4418 = vadd.f32 %v3816, %v4191
      %v4419 = vadd.f32 %v3817, %v4195
      %v4420 = vadd.f32 %v3818, %v4197
      %v4421 = vadd.f32 %v3819, %v4199
      %v4422 = vadd.f32 %v3820, %v4198
      %v4423 = vadd.f32 %v3821, %v4202
      %v4424 = vadd.f32 %v3822, %v4204
      %v4425 = vadd.f32 %v3823, %v4206
      %v4426 = vadd.f32 %v3824, %v4205
      %v4427 = vadd.f32 %v3825, %v4209
      %v4428 = vadd.f32 %v3826, %v4211
      %v4429 = vadd.f32 %v3827, %v4213
      %v4430 = vadd.f32 %v3828, %v4212
      %v4431 = vadd.f32 %v3829, %v4216
      %v4432 = vadd.f32 %v3830, %v4218
      %v4433 = vadd.f32 %v3831, %v4220
      %v4434 = vadd.f32 %v3832, %v4219
      %v4435 = vadd.f32 %v3833, %v4223
      %v4436 = vadd.f32 %v3834, %v4225
      %v4437 = vadd.f32 %v3835, %v4227
      %v4438 = vadd.f32 %v3836, %v4226
      %v4439 = vadd.f32 %v3837, %v4230
      %v4440 = vadd.f32 %v3838, %v4232
      %v4441 = vadd.f32 %v3839, %v4234
      %v4442 = vadd.f32 %v3840, %v4233
      %v4443 = vlaneseq
      %v4444 = vshrl.u32 %v4443, 7
      %v4445 = vsub.s32 0, %v4444
      %v4446 = vrot.slane %v338, %v4445
      %v4447 = vmul.f32 %v382, %v4446
      %v4448 = vmul.f32 %v387, %v4446
      %v4449 = vmul.f32 %v392, %v4446
      %v4450 = vmul.f32 %v397, %v4446
      %v4451 = vmul.f32 %v402, %v4446
      %v4452 = vmul.f32 %v407, %v4446
      %v4453 = vmul.f32 %v412, %v4446
      %v4454 = vmul.f32 %v417, %v4446
      %v4455 = vmul.f32 %v422, %v4446
      %v4456 = vmul.f32 %v427, %v4446
      %v4457 = vmul.f32 %v432, %v4446
      %v4458 = vmul.f32 %v437, %v4446
      %v4459 = vmul.f32 %v442, %v4446
      %v4460 = vmul.f32 %v447, %v4446
      %v4461 = vmul.f32 %v452, %v4446
      %v4462 = vmul.f32 %v457, %v4446
      %v4463 = vmul.f32 %v462, %v4446
      %v4464 = vmul.f32 %v467, %v4446
      %v4465 = vmul.f32 %v472, %v4446
      %v4466 = vmul.f32 %v477, %v4446
      %v4467 = vmul.f32 %v482, %v4446
      %v4468 = vmul.f32 %v487, %v4446
      %v4469 = vmul.f32 %v492, %v4446
      %v4470 = vmul.f32 %v497, %v4446
      %v4471 = vmul.f32 %v502, %v4446
      %v4472 = vmul.f32 %v507, %v4446
      %v4473 = vmul.f32 %v512, %v4446
      %v4474 = vmul.f32 %v517, %v4446
      %v4475 = vmul.f32 %v522, %v4446
      %v4476 = vmul.f32 %v527, %v4446
      %v4477 = vmul.f32 %v532, %v4446
      %v4478 = vmul.f32 %v537, %v4446
      %v4479 = vmul.f32 %v542, %v4446
      %v4480 = vmul.f32 %v547, %v4446
      %v4481 = vmul.f32 %v552, %v4446
      %v4482 = vmul.f32 %v557, %v4446
      %v4483 = vmul.f32 %v562, %v4446
      %v4484 = vmul.f32 %v567, %v4446
      %v4485 = vmul.f32 %v572, %v4446
      %v4486 = vmul.f32 %v577, %v4446
      %v4487 = vmul.f32 %v582, %v4446
      %v4488 = vmul.f32 %v587, %v4446
      %v4489 = vmul.f32 %v592, %v4446
      %v4490 = vmul.f32 %v597, %v4446
      %v4491 = vmul.f32 %v602, %v4446
      %v4492 = vmul.f32 %v607, %v4446
      %v4493 = vmul.f32 %v612, %v4446
      %v4494 = vmul.f32 %v617, %v4446
      %v4495 = vmul.f32 %v622, %v4446
      %v4496 = vmul.f32 %v627, %v4446
      %v4497 = vmul.f32 %v632, %v4446
      %v4498 = vmul.f32 %v637, %v4446
      %v4499 = vmul.f32 %v642, %v4446
      %v4500 = vmul.f32 %v647, %v4446
      %v4501 = vmul.f32 %v652, %v4446
      %v4502 = vmul.f32 %v657, %v4446
      %v4503 = vmul.f32 %v662, %v4446
      %v4504 = vmul.f32 %v667, %v4446
      %v4505 = vmul.f32 %v672, %v4446
      %v4506 = vmul.f32 %v677, %v4446
      %v4507 = vmul.f32 %v682, %v4446
      %v4508 = vmul.f32 %v687, %v4446
      %v4509 = vmul.f32 %v692, %v4446
      %v4510 = vmul.f32 %v697, %v4446
      %v4511 = vmul.f32 %v702, %v4446
      %v4512 = vmul.f32 %v707, %v4446
      %v4513 = vmul.f32 %v712, %v4446
      %v4514 = vmul.f32 %v717, %v4446
      %v4515 = vmul.f32 %v722, %v4446
      %v4516 = vmul.f32 %v727, %v4446
      %v4517 = vmul.f32 %v732, %v4446
      %v4518 = vmul.f32 %v737, %v4446
      %v4519 = vmul.f32 %v742, %v4446
      %v4520 = vmul.f32 %v747, %v4446
      %v4521 = vmul.f32 %v752, %v4446
      %v4522 = vmul.f32 %v757, %v4446
      %v4523 = vmul.f32 %v762, %v4446
      %v4524 = vmul.f32 %v767, %v4446
      %v4525 = vmul.f32 %v772, %v4446
      %v4526 = vmul.f32 %v777, %v4446
      %v4527 = vmul.f32 %v782, %v4446
      %v4528 = vmul.f32 %v787, %v4446
      %v4529 = vmul.f32 %v792, %v4446
      %v4530 = vmul.f32 %v797, %v4446
      %v4531 = vmul.f32 %v802, %v4446
      %v4532 = vmul.f32 %v807, %v4446
      %v4533 = vmul.f32 %v812, %v4446
      %v4534 = vmul.f32 %v817, %v4446
      %v4535 = vmul.f32 %v822, %v4446
      %v4536 = vmul.f32 %v827, %v4446
      %v4537 = vmul.f32 %v832, %v4446
      %v4538 = vmul.f32 %v837, %v4446
      %v4539 = vmul.f32 %v842, %v4446
      %v4540 = vmul.f32 %v847, %v4446
      %v4541 = vmul.f32 %v852, %v4446
      %v4542 = vmul.f32 %v857, %v4446
      %v4543 = vmul.f32 %v2176, %v4446
      %v4544 = vmul.f32 %v2181, %v4446
      %v4545 = vmul.f32 %v2186, %v4446
      %v4546 = vmul.f32 %v2191, %v4446
      %v4547 = vmul.f32 %v3612, %v4446
      %v4548 = vmul.f32 %v3617, %v4446
      %v4549 = vmul.f32 %v3622, %v4446
      %v4550 = vmul.f32 %v3627, %v4446
      %v4655 = vrot.slane %v4447, 2
      %v4656 = vrot.slane %v4448, 2
      %v4657 = vsel %vm1782, %v4655, %v4656
      %v4658 = vrot.slane %v4449, 2
      %v4659 = vsel %vm1782, %v4656, %v4658
      %v4660 = vrot.slane %v4450, 2
      %v4661 = vsel %vm1782, %v4658, %v4660
      %v4662 = vrot.slane %v4451, 2
      %v4663 = vrot.slane %v4452, 2
      %v4664 = vsel %vm1782, %v4662, %v4663
      %v4665 = vrot.slane %v4453, 2
      %v4666 = vsel %vm1782, %v4663, %v4665
      %v4667 = vrot.slane %v4454, 2
      %v4668 = vsel %vm1782, %v4665, %v4667
      %v4669 = vrot.slane %v4455, 2
      %v4670 = vrot.slane %v4456, 2
      %v4671 = vsel %vm1782, %v4669, %v4670
      %v4672 = vrot.slane %v4457, 2
      %v4673 = vsel %vm1782, %v4670, %v4672
      %v4674 = vrot.slane %v4458, 2
      %v4675 = vsel %vm1782, %v4672, %v4674
      %v4676 = vrot.slane %v4459, 2
      %v4677 = vrot.slane %v4460, 2
      %v4678 = vsel %vm1782, %v4676, %v4677
      %v4679 = vrot.slane %v4461, 2
      %v4680 = vsel %vm1782, %v4677, %v4679
      %v4681 = vrot.slane %v4462, 2
      %v4682 = vsel %vm1782, %v4679, %v4681
      %v4683 = vrot.slane %v4463, 2
      %v4684 = vrot.slane %v4464, 2
      %v4685 = vsel %vm1782, %v4683, %v4684
      %v4686 = vrot.slane %v4465, 2
      %v4687 = vsel %vm1782, %v4684, %v4686
      %v4688 = vrot.slane %v4466, 2
      %v4689 = vsel %vm1782, %v4686, %v4688
      %v4690 = vrot.slane %v4467, 2
      %v4691 = vrot.slane %v4468, 2
      %v4692 = vsel %vm1782, %v4690, %v4691
      %v4693 = vrot.slane %v4469, 2
      %v4694 = vsel %vm1782, %v4691, %v4693
      %v4695 = vrot.slane %v4470, 2
      %v4696 = vsel %vm1782, %v4693, %v4695
      %v4697 = vrot.slane %v4471, 2
      %v4698 = vrot.slane %v4472, 2
      %v4699 = vsel %vm1782, %v4697, %v4698
      %v4700 = vrot.slane %v4473, 2
      %v4701 = vsel %vm1782, %v4698, %v4700
      %v4702 = vrot.slane %v4474, 2
      %v4703 = vsel %vm1782, %v4700, %v4702
      %v4704 = vrot.slane %v4475, 2
      %v4705 = vrot.slane %v4476, 2
      %v4706 = vsel %vm1782, %v4704, %v4705
      %v4707 = vrot.slane %v4477, 2
      %v4708 = vsel %vm1782, %v4705, %v4707
      %v4709 = vrot.slane %v4478, 2
      %v4710 = vsel %vm1782, %v4707, %v4709
      %v4711 = vrot.slane %v4479, 2
      %v4712 = vrot.slane %v4480, 2
      %v4713 = vsel %vm1782, %v4711, %v4712
      %v4714 = vrot.slane %v4481, 2
      %v4715 = vsel %vm1782, %v4712, %v4714
      %v4716 = vrot.slane %v4482, 2
      %v4717 = vsel %vm1782, %v4714, %v4716
      %v4718 = vrot.slane %v4483, 2
      %v4719 = vrot.slane %v4484, 2
      %v4720 = vsel %vm1782, %v4718, %v4719
      %v4721 = vrot.slane %v4485, 2
      %v4722 = vsel %vm1782, %v4719, %v4721
      %v4723 = vrot.slane %v4486, 2
      %v4724 = vsel %vm1782, %v4721, %v4723
      %v4725 = vrot.slane %v4487, 2
      %v4726 = vrot.slane %v4488, 2
      %v4727 = vsel %vm1782, %v4725, %v4726
      %v4728 = vrot.slane %v4489, 2
      %v4729 = vsel %vm1782, %v4726, %v4728
      %v4730 = vrot.slane %v4490, 2
      %v4731 = vsel %vm1782, %v4728, %v4730
      %v4732 = vrot.slane %v4491, 2
      %v4733 = vrot.slane %v4492, 2
      %v4734 = vsel %vm1782, %v4732, %v4733
      %v4735 = vrot.slane %v4493, 2
      %v4736 = vsel %vm1782, %v4733, %v4735
      %v4737 = vrot.slane %v4494, 2
      %v4738 = vsel %vm1782, %v4735, %v4737
      %v4739 = vrot.slane %v4495, 2
      %v4740 = vrot.slane %v4496, 2
      %v4741 = vsel %vm1782, %v4739, %v4740
      %v4742 = vrot.slane %v4497, 2
      %v4743 = vsel %vm1782, %v4740, %v4742
      %v4744 = vrot.slane %v4498, 2
      %v4745 = vsel %vm1782, %v4742, %v4744
      %v4746 = vrot.slane %v4499, 2
      %v4747 = vrot.slane %v4500, 2
      %v4748 = vsel %vm1782, %v4746, %v4747
      %v4749 = vrot.slane %v4501, 2
      %v4750 = vsel %vm1782, %v4747, %v4749
      %v4751 = vrot.slane %v4502, 2
      %v4752 = vsel %vm1782, %v4749, %v4751
      %v4753 = vrot.slane %v4503, 2
      %v4754 = vrot.slane %v4504, 2
      %v4755 = vsel %vm1782, %v4753, %v4754
      %v4756 = vrot.slane %v4505, 2
      %v4757 = vsel %vm1782, %v4754, %v4756
      %v4758 = vrot.slane %v4506, 2
      %v4759 = vsel %vm1782, %v4756, %v4758
      %v4760 = vrot.slane %v4507, 2
      %v4761 = vrot.slane %v4508, 2
      %v4762 = vsel %vm1782, %v4760, %v4761
      %v4763 = vrot.slane %v4509, 2
      %v4764 = vsel %vm1782, %v4761, %v4763
      %v4765 = vrot.slane %v4510, 2
      %v4766 = vsel %vm1782, %v4763, %v4765
      %v4767 = vrot.slane %v4511, 2
      %v4768 = vrot.slane %v4512, 2
      %v4769 = vsel %vm1782, %v4767, %v4768
      %v4770 = vrot.slane %v4513, 2
      %v4771 = vsel %vm1782, %v4768, %v4770
      %v4772 = vrot.slane %v4514, 2
      %v4773 = vsel %vm1782, %v4770, %v4772
      %v4774 = vrot.slane %v4515, 2
      %v4775 = vrot.slane %v4516, 2
      %v4776 = vsel %vm1782, %v4774, %v4775
      %v4777 = vrot.slane %v4517, 2
      %v4778 = vsel %vm1782, %v4775, %v4777
      %v4779 = vrot.slane %v4518, 2
      %v4780 = vsel %vm1782, %v4777, %v4779
      %v4781 = vrot.slane %v4519, 2
      %v4782 = vrot.slane %v4520, 2
      %v4783 = vsel %vm1782, %v4781, %v4782
      %v4784 = vrot.slane %v4521, 2
      %v4785 = vsel %vm1782, %v4782, %v4784
      %v4786 = vrot.slane %v4522, 2
      %v4787 = vsel %vm1782, %v4784, %v4786
      %v4788 = vrot.slane %v4523, 2
      %v4789 = vrot.slane %v4524, 2
      %v4790 = vsel %vm1782, %v4788, %v4789
      %v4791 = vrot.slane %v4525, 2
      %v4792 = vsel %vm1782, %v4789, %v4791
      %v4793 = vrot.slane %v4526, 2
      %v4794 = vsel %vm1782, %v4791, %v4793
      %v4795 = vrot.slane %v4527, 2
      %v4796 = vrot.slane %v4528, 2
      %v4797 = vsel %vm1782, %v4795, %v4796
      %v4798 = vrot.slane %v4529, 2
      %v4799 = vsel %vm1782, %v4796, %v4798
      %v4800 = vrot.slane %v4530, 2
      %v4801 = vsel %vm1782, %v4798, %v4800
      %v4802 = vrot.slane %v4531, 2
      %v4803 = vrot.slane %v4532, 2
      %v4804 = vsel %vm1782, %v4802, %v4803
      %v4805 = vrot.slane %v4533, 2
      %v4806 = vsel %vm1782, %v4803, %v4805
      %v4807 = vrot.slane %v4534, 2
      %v4808 = vsel %vm1782, %v4805, %v4807
      %v4809 = vrot.slane %v4535, 2
      %v4810 = vrot.slane %v4536, 2
      %v4811 = vsel %vm1782, %v4809, %v4810
      %v4812 = vrot.slane %v4537, 2
      %v4813 = vsel %vm1782, %v4810, %v4812
      %v4814 = vrot.slane %v4538, 2
      %v4815 = vsel %vm1782, %v4812, %v4814
      %v4816 = vrot.slane %v4539, 2
      %v4817 = vrot.slane %v4540, 2
      %v4818 = vsel %vm1782, %v4816, %v4817
      %v4819 = vrot.slane %v4541, 2
      %v4820 = vsel %vm1782, %v4817, %v4819
      %v4821 = vrot.slane %v4542, 2
      %v4822 = vsel %vm1782, %v4819, %v4821
      %v4823 = vrot.slane %v4543, 2
      %v4824 = vrot.slane %v4544, 2
      %v4825 = vsel %vm1782, %v4823, %v4824
      %v4826 = vrot.slane %v4545, 2
      %v4827 = vsel %vm1782, %v4824, %v4826
      %v4828 = vrot.slane %v4546, 2
      %v4829 = vsel %vm1782, %v4826, %v4828
      %v4830 = vrot.slane %v4547, 2
      %v4831 = vrot.slane %v4548, 2
      %v4832 = vsel %vm1782, %v4830, %v4831
      %v4833 = vrot.slane %v4549, 2
      %v4834 = vsel %vm1782, %v4831, %v4833
      %v4835 = vrot.slane %v4550, 2
      %v4836 = vsel %vm1782, %v4833, %v4835
      %v4941 = vadd.f32 %v4339, %v4657
      %v4942 = vadd.f32 %v4340, %v4659
      %v4943 = vadd.f32 %v4341, %v4661
      %v4944 = vadd.f32 %v4342, %v4660
      %v4945 = vadd.f32 %v4343, %v4664
      %v4946 = vadd.f32 %v4344, %v4666
      %v4947 = vadd.f32 %v4345, %v4668
      %v4948 = vadd.f32 %v4346, %v4667
      %v4949 = vadd.f32 %v4347, %v4671
      %v4950 = vadd.f32 %v4348, %v4673
      %v4951 = vadd.f32 %v4349, %v4675
      %v4952 = vadd.f32 %v4350, %v4674
      %v4953 = vadd.f32 %v4351, %v4678
      %v4954 = vadd.f32 %v4352, %v4680
      %v4955 = vadd.f32 %v4353, %v4682
      %v4956 = vadd.f32 %v4354, %v4681
      %v4957 = vadd.f32 %v4355, %v4685
      %v4958 = vadd.f32 %v4356, %v4687
      %v4959 = vadd.f32 %v4357, %v4689
      %v4960 = vadd.f32 %v4358, %v4688
      %v4961 = vadd.f32 %v4359, %v4692
      %v4962 = vadd.f32 %v4360, %v4694
      %v4963 = vadd.f32 %v4361, %v4696
      %v4964 = vadd.f32 %v4362, %v4695
      %v4965 = vadd.f32 %v4363, %v4699
      %v4966 = vadd.f32 %v4364, %v4701
      %v4967 = vadd.f32 %v4365, %v4703
      %v4968 = vadd.f32 %v4366, %v4702
      %v4969 = vadd.f32 %v4367, %v4706
      %v4970 = vadd.f32 %v4368, %v4708
      %v4971 = vadd.f32 %v4369, %v4710
      %v4972 = vadd.f32 %v4370, %v4709
      %v4973 = vadd.f32 %v4371, %v4713
      %v4974 = vadd.f32 %v4372, %v4715
      %v4975 = vadd.f32 %v4373, %v4717
      %v4976 = vadd.f32 %v4374, %v4716
      %v4977 = vadd.f32 %v4375, %v4720
      %v4978 = vadd.f32 %v4376, %v4722
      %v4979 = vadd.f32 %v4377, %v4724
      %v4980 = vadd.f32 %v4378, %v4723
      %v4981 = vadd.f32 %v4379, %v4727
      %v4982 = vadd.f32 %v4380, %v4729
      %v4983 = vadd.f32 %v4381, %v4731
      %v4984 = vadd.f32 %v4382, %v4730
      %v4985 = vadd.f32 %v4383, %v4734
      %v4986 = vadd.f32 %v4384, %v4736
      %v4987 = vadd.f32 %v4385, %v4738
      %v4988 = vadd.f32 %v4386, %v4737
      %v4989 = vadd.f32 %v4387, %v4741
      %v4990 = vadd.f32 %v4388, %v4743
      %v4991 = vadd.f32 %v4389, %v4745
      %v4992 = vadd.f32 %v4390, %v4744
      %v4993 = vadd.f32 %v4391, %v4748
      %v4994 = vadd.f32 %v4392, %v4750
      %v4995 = vadd.f32 %v4393, %v4752
      %v4996 = vadd.f32 %v4394, %v4751
      %v4997 = vadd.f32 %v4395, %v4755
      %v4998 = vadd.f32 %v4396, %v4757
      %v4999 = vadd.f32 %v4397, %v4759
      %v5000 = vadd.f32 %v4398, %v4758
      %v5001 = vadd.f32 %v4399, %v4762
      %v5002 = vadd.f32 %v4400, %v4764
      %v5003 = vadd.f32 %v4401, %v4766
      %v5004 = vadd.f32 %v4402, %v4765
      %v5005 = vadd.f32 %v4403, %v4769
      %v5006 = vadd.f32 %v4404, %v4771
      %v5007 = vadd.f32 %v4405, %v4773
      %v5008 = vadd.f32 %v4406, %v4772
      %v5009 = vadd.f32 %v4407, %v4776
      %v5010 = vadd.f32 %v4408, %v4778
      %v5011 = vadd.f32 %v4409, %v4780
      %v5012 = vadd.f32 %v4410, %v4779
      %v5013 = vadd.f32 %v4411, %v4783
      %v5014 = vadd.f32 %v4412, %v4785
      %v5015 = vadd.f32 %v4413, %v4787
      %v5016 = vadd.f32 %v4414, %v4786
      %v5017 = vadd.f32 %v4415, %v4790
      %v5018 = vadd.f32 %v4416, %v4792
      %v5019 = vadd.f32 %v4417, %v4794
      %v5020 = vadd.f32 %v4418, %v4793
      %v5021 = vadd.f32 %v4419, %v4797
      %v5022 = vadd.f32 %v4420, %v4799
      %v5023 = vadd.f32 %v4421, %v4801
      %v5024 = vadd.f32 %v4422, %v4800
      %v5025 = vadd.f32 %v4423, %v4804
      %v5026 = vadd.f32 %v4424, %v4806
      %v5027 = vadd.f32 %v4425, %v4808
      %v5028 = vadd.f32 %v4426, %v4807
      %v5029 = vadd.f32 %v4427, %v4811
      %v5030 = vadd.f32 %v4428, %v4813
      %v5031 = vadd.f32 %v4429, %v4815
      %v5032 = vadd.f32 %v4430, %v4814
      %v5033 = vadd.f32 %v4431, %v4818
      %v5034 = vadd.f32 %v4432, %v4820
      %v5035 = vadd.f32 %v4433, %v4822
      %v5036 = vadd.f32 %v4434, %v4821
      %v5037 = vadd.f32 %v4435, %v4825
      %v5038 = vadd.f32 %v4436, %v4827
      %v5039 = vadd.f32 %v4437, %v4829
      %v5040 = vadd.f32 %v4438, %v4828
      %v5041 = vadd.f32 %v4439, %v4832
      %v5042 = vadd.f32 %v4440, %v4834
      %v5043 = vadd.f32 %v4441, %v4836
      %v5044 = vadd.f32 %v4442, %v4835
      %v5045 = vld [vmem:[%s2] sm:$0x1]
      %v5047 = vlaneseq
      %v5048 = vshrl.u32 %v5047, 7
      %v5049 = vsub.s32 0, %v5048
      %v5050 = vrot.slane %v5045, %v5049
      %v5052 = vadd.f32 %v4941, %v5050
      %v5053 = vadd.f32 %v4942, %v5050
      %v5054 = vadd.f32 %v4943, %v5050
      %v5055 = vadd.f32 %v4944, %v5050
      %v5056 = vadd.f32 %v4945, %v5050
      %v5057 = vadd.f32 %v4946, %v5050
      %v5058 = vadd.f32 %v4947, %v5050
      %v5059 = vadd.f32 %v4948, %v5050
      %v5060 = vadd.f32 %v4949, %v5050
      %v5061 = vadd.f32 %v4950, %v5050
      %v5062 = vadd.f32 %v4951, %v5050
      %v5063 = vadd.f32 %v4952, %v5050
      %v5064 = vadd.f32 %v4953, %v5050
      %v5065 = vadd.f32 %v4954, %v5050
      %v5066 = vadd.f32 %v4955, %v5050
      %v5067 = vadd.f32 %v4956, %v5050
      %v5068 = vadd.f32 %v4957, %v5050
      %v5069 = vadd.f32 %v4958, %v5050
      %v5070 = vadd.f32 %v4959, %v5050
      %v5071 = vadd.f32 %v4960, %v5050
      %v5072 = vadd.f32 %v4961, %v5050
      %v5073 = vadd.f32 %v4962, %v5050
      %v5074 = vadd.f32 %v4963, %v5050
      %v5075 = vadd.f32 %v4964, %v5050
      %v5076 = vadd.f32 %v4965, %v5050
      %v5077 = vadd.f32 %v4966, %v5050
      %v5078 = vadd.f32 %v4967, %v5050
      %v5079 = vadd.f32 %v4968, %v5050
      %v5080 = vadd.f32 %v4969, %v5050
      %v5081 = vadd.f32 %v4970, %v5050
      %v5082 = vadd.f32 %v4971, %v5050
      %v5083 = vadd.f32 %v4972, %v5050
      %v5084 = vadd.f32 %v4973, %v5050
      %v5085 = vadd.f32 %v4974, %v5050
      %v5086 = vadd.f32 %v4975, %v5050
      %v5087 = vadd.f32 %v4976, %v5050
      %v5088 = vadd.f32 %v4977, %v5050
      %v5089 = vadd.f32 %v4978, %v5050
      %v5090 = vadd.f32 %v4979, %v5050
      %v5091 = vadd.f32 %v4980, %v5050
      %v5092 = vadd.f32 %v4981, %v5050
      %v5093 = vadd.f32 %v4982, %v5050
      %v5094 = vadd.f32 %v4983, %v5050
      %v5095 = vadd.f32 %v4984, %v5050
      %v5096 = vadd.f32 %v4985, %v5050
      %v5097 = vadd.f32 %v4986, %v5050
      %v5098 = vadd.f32 %v4987, %v5050
      %v5099 = vadd.f32 %v4988, %v5050
      %v5100 = vadd.f32 %v4989, %v5050
      %v5101 = vadd.f32 %v4990, %v5050
      %v5102 = vadd.f32 %v4991, %v5050
      %v5103 = vadd.f32 %v4992, %v5050
      %v5104 = vadd.f32 %v4993, %v5050
      %v5105 = vadd.f32 %v4994, %v5050
      %v5106 = vadd.f32 %v4995, %v5050
      %v5107 = vadd.f32 %v4996, %v5050
      %v5108 = vadd.f32 %v4997, %v5050
      %v5109 = vadd.f32 %v4998, %v5050
      %v5110 = vadd.f32 %v4999, %v5050
      %v5111 = vadd.f32 %v5000, %v5050
      %v5112 = vadd.f32 %v5001, %v5050
      %v5113 = vadd.f32 %v5002, %v5050
      %v5114 = vadd.f32 %v5003, %v5050
      %v5115 = vadd.f32 %v5004, %v5050
      %v5116 = vadd.f32 %v5005, %v5050
      %v5117 = vadd.f32 %v5006, %v5050
      %v5118 = vadd.f32 %v5007, %v5050
      %v5119 = vadd.f32 %v5008, %v5050
      %v5120 = vadd.f32 %v5009, %v5050
      %v5121 = vadd.f32 %v5010, %v5050
      %v5122 = vadd.f32 %v5011, %v5050
      %v5123 = vadd.f32 %v5012, %v5050
      %v5124 = vadd.f32 %v5013, %v5050
      %v5125 = vadd.f32 %v5014, %v5050
      %v5126 = vadd.f32 %v5015, %v5050
      %v5127 = vadd.f32 %v5016, %v5050
      %v5128 = vadd.f32 %v5017, %v5050
      %v5129 = vadd.f32 %v5018, %v5050
      %v5130 = vadd.f32 %v5019, %v5050
      %v5131 = vadd.f32 %v5020, %v5050
      %v5132 = vadd.f32 %v5021, %v5050
      %v5133 = vadd.f32 %v5022, %v5050
      %v5134 = vadd.f32 %v5023, %v5050
      %v5135 = vadd.f32 %v5024, %v5050
      %v5136 = vadd.f32 %v5025, %v5050
      %v5137 = vadd.f32 %v5026, %v5050
      %v5138 = vadd.f32 %v5027, %v5050
      %v5139 = vadd.f32 %v5028, %v5050
      %v5140 = vadd.f32 %v5029, %v5050
      %v5141 = vadd.f32 %v5030, %v5050
      %v5142 = vadd.f32 %v5031, %v5050
      %v5143 = vadd.f32 %v5032, %v5050
      %v5144 = vadd.f32 %v5033, %v5050
      %v5145 = vadd.f32 %v5034, %v5050
      %v5146 = vadd.f32 %v5035, %v5050
      %v5147 = vadd.f32 %v5036, %v5050
      %v5148 = vadd.f32 %v5037, %v5050
      %v5149 = vadd.f32 %v5038, %v5050
      %v5150 = vadd.f32 %v5039, %v5050
      %v5151 = vadd.f32 %v5040, %v5050
      %v5152 = vadd.f32 %v5041, %v5050
      %v5153 = vadd.f32 %v5042, %v5050
      %v5154 = vadd.f32 %v5043, %v5050
      %v5155 = vadd.f32 %v5044, %v5050
      %v5156 = vmax.f32 %v5052, 0.0
      %v5157 = vmax.f32 %v5053, 0.0
      %v5158 = vmax.f32 %v5054, 0.0
      %v5159 = vmax.f32 %v5055, 0.0
      %v5160 = vmax.f32 %v5056, 0.0
      %v5161 = vmax.f32 %v5057, 0.0
      %v5162 = vmax.f32 %v5058, 0.0
      %v5163 = vmax.f32 %v5059, 0.0
      %v5164 = vmax.f32 %v5060, 0.0
      %v5165 = vmax.f32 %v5061, 0.0
      %v5166 = vmax.f32 %v5062, 0.0
      %v5167 = vmax.f32 %v5063, 0.0
      %v5168 = vmax.f32 %v5064, 0.0
      %v5169 = vmax.f32 %v5065, 0.0
      %v5170 = vmax.f32 %v5066, 0.0
      %v5171 = vmax.f32 %v5067, 0.0
      %v5172 = vmax.f32 %v5068, 0.0
      %v5173 = vmax.f32 %v5069, 0.0
      %v5174 = vmax.f32 %v5070, 0.0
      %v5175 = vmax.f32 %v5071, 0.0
      %v5176 = vmax.f32 %v5072, 0.0
      %v5177 = vmax.f32 %v5073, 0.0
      %v5178 = vmax.f32 %v5074, 0.0
      %v5179 = vmax.f32 %v5075, 0.0
      %v5180 = vmax.f32 %v5076, 0.0
      %v5181 = vmax.f32 %v5077, 0.0
      %v5182 = vmax.f32 %v5078, 0.0
      %v5183 = vmax.f32 %v5079, 0.0
      %v5184 = vmax.f32 %v5080, 0.0
      %v5185 = vmax.f32 %v5081, 0.0
      %v5186 = vmax.f32 %v5082, 0.0
      %v5187 = vmax.f32 %v5083, 0.0
      %v5188 = vmax.f32 %v5084, 0.0
      %v5189 = vmax.f32 %v5085, 0.0
      %v5190 = vmax.f32 %v5086, 0.0
      %v5191 = vmax.f32 %v5087, 0.0
      %v5192 = vmax.f32 %v5088, 0.0
      %v5193 = vmax.f32 %v5089, 0.0
      %v5194 = vmax.f32 %v5090, 0.0
      %v5195 = vmax.f32 %v5091, 0.0
      %v5196 = vmax.f32 %v5092, 0.0
      %v5197 = vmax.f32 %v5093, 0.0
      %v5198 = vmax.f32 %v5094, 0.0
      %v5199 = vmax.f32 %v5095, 0.0
      %v5200 = vmax.f32 %v5096, 0.0
      %v5201 = vmax.f32 %v5097, 0.0
      %v5202 = vmax.f32 %v5098, 0.0
      %v5203 = vmax.f32 %v5099, 0.0
      %v5204 = vmax.f32 %v5100, 0.0
      %v5205 = vmax.f32 %v5101, 0.0
      %v5206 = vmax.f32 %v5102, 0.0
      %v5207 = vmax.f32 %v5103, 0.0
      %v5208 = vmax.f32 %v5104, 0.0
      %v5209 = vmax.f32 %v5105, 0.0
      %v5210 = vmax.f32 %v5106, 0.0
      %v5211 = vmax.f32 %v5107, 0.0
      %v5212 = vmax.f32 %v5108, 0.0
      %v5213 = vmax.f32 %v5109, 0.0
      %v5214 = vmax.f32 %v5110, 0.0
      %v5215 = vmax.f32 %v5111, 0.0
      %v5216 = vmax.f32 %v5112, 0.0
      %v5217 = vmax.f32 %v5113, 0.0
      %v5218 = vmax.f32 %v5114, 0.0
      %v5219 = vmax.f32 %v5115, 0.0
      %v5220 = vmax.f32 %v5116, 0.0
      %v5221 = vmax.f32 %v5117, 0.0
      %v5222 = vmax.f32 %v5118, 0.0
      %v5223 = vmax.f32 %v5119, 0.0
      %v5224 = vmax.f32 %v5120, 0.0
      %v5225 = vmax.f32 %v5121, 0.0
      %v5226 = vmax.f32 %v5122, 0.0
      %v5227 = vmax.f32 %v5123, 0.0
      %v5228 = vmax.f32 %v5124, 0.0
      %v5229 = vmax.f32 %v5125, 0.0
      %v5230 = vmax.f32 %v5126, 0.0
      %v5231 = vmax.f32 %v5127, 0.0
      %v5232 = vmax.f32 %v5128, 0.0
      %v5233 = vmax.f32 %v5129, 0.0
      %v5234 = vmax.f32 %v5130, 0.0
      %v5235 = vmax.f32 %v5131, 0.0
      %v5236 = vmax.f32 %v5132, 0.0
      %v5237 = vmax.f32 %v5133, 0.0
      %v5238 = vmax.f32 %v5134, 0.0
      %v5239 = vmax.f32 %v5135, 0.0
      %v5240 = vmax.f32 %v5136, 0.0
      %v5241 = vmax.f32 %v5137, 0.0
      %v5242 = vmax.f32 %v5138, 0.0
      %v5243 = vmax.f32 %v5139, 0.0
      %v5244 = vmax.f32 %v5140, 0.0
      %v5245 = vmax.f32 %v5141, 0.0
      %v5246 = vmax.f32 %v5142, 0.0
      %v5247 = vmax.f32 %v5143, 0.0
      %v5248 = vmax.f32 %v5144, 0.0
      %v5249 = vmax.f32 %v5145, 0.0
      %v5250 = vmax.f32 %v5146, 0.0
      %v5251 = vmax.f32 %v5147, 0.0
      %v5252 = vmax.f32 %v5148, 0.0
      %v5253 = vmax.f32 %v5149, 0.0
      %v5254 = vmax.f32 %v5150, 0.0
      %v5255 = vmax.f32 %v5151, 0.0
      %v5256 = vmax.f32 %v5152, 0.0
      %v5257 = vmax.f32 %v5153, 0.0
      %v5258 = vmax.f32 %v5154, 0.0
      %v5259 = vmax.f32 %v5155, 0.0
      %v5260 = vld [vmem:[%s3] sm:$0xff]
      %v5357 = vrot.slane %v5156, 1
      %v5358 = vrot.slane %v5157, 1
      %v5359 = vsel %vm1179, %v5357, %v5358
      %v5360 = vrot.slane %v5158, 1
      %v5361 = vsel %vm1179, %v5358, %v5360
      %v5362 = vrot.slane %v5159, 1
      %v5363 = vsel %vm1179, %v5360, %v5362
      %v5364 = vrot.slane %v5160, 1
      %v5365 = vrot.slane %v5161, 1
      %v5366 = vsel %vm1179, %v5364, %v5365
      %v5367 = vrot.slane %v5162, 1
      %v5368 = vsel %vm1179, %v5365, %v5367
      %v5369 = vrot.slane %v5163, 1
      %v5370 = vsel %vm1179, %v5367, %v5369
      %v5371 = vrot.slane %v5164, 1
      %v5372 = vrot.slane %v5165, 1
      %v5373 = vsel %vm1179, %v5371, %v5372
      %v5374 = vrot.slane %v5166, 1
      %v5375 = vsel %vm1179, %v5372, %v5374
      %v5376 = vrot.slane %v5167, 1
      %v5377 = vsel %vm1179, %v5374, %v5376
      %v5378 = vrot.slane %v5168, 1
      %v5379 = vrot.slane %v5169, 1
      %v5380 = vsel %vm1179, %v5378, %v5379
      %v5381 = vrot.slane %v5170, 1
      %v5382 = vsel %vm1179, %v5379, %v5381
      %v5383 = vrot.slane %v5171, 1
      %v5384 = vsel %vm1179, %v5381, %v5383
      %v5385 = vrot.slane %v5172, 1
      %v5386 = vrot.slane %v5173, 1
      %v5387 = vsel %vm1179, %v5385, %v5386
      %v5388 = vrot.slane %v5174, 1
      %v5389 = vsel %vm1179, %v5386, %v5388
      %v5390 = vrot.slane %v5175, 1
      %v5391 = vsel %vm1179, %v5388, %v5390
      %v5392 = vrot.slane %v5176, 1
      %v5393 = vrot.slane %v5177, 1
      %v5394 = vsel %vm1179, %v5392, %v5393
      %v5395 = vrot.slane %v5178, 1
      %v5396 = vsel %vm1179, %v5393, %v5395
      %v5397 = vrot.slane %v5179, 1
      %v5398 = vsel %vm1179, %v5395, %v5397
      %v5399 = vrot.slane %v5180, 1
      %v5400 = vrot.slane %v5181, 1
      %v5401 = vsel %vm1179, %v5399, %v5400
      %v5402 = vrot.slane %v5182, 1
      %v5403 = vsel %vm1179, %v5400, %v5402
      %v5404 = vrot.slane %v5183, 1
      %v5405 = vsel %vm1179, %v5402, %v5404
      %v5406 = vrot.slane %v5184, 1
      %v5407 = vrot.slane %v5185, 1
      %v5408 = vsel %vm1179, %v5406, %v5407
      %v5409 = vrot.slane %v5186, 1
      %v5410 = vsel %vm1179, %v5407, %v5409
      %v5411 = vrot.slane %v5187, 1
      %v5412 = vsel %vm1179, %v5409, %v5411
      %v5413 = vrot.slane %v5188, 1
      %v5414 = vrot.slane %v5189, 1
      %v5415 = vsel %vm1179, %v5413, %v5414
      %v5416 = vrot.slane %v5190, 1
      %v5417 = vsel %vm1179, %v5414, %v5416
      %v5418 = vrot.slane %v5191, 1
      %v5419 = vsel %vm1179, %v5416, %v5418
      %v5420 = vrot.slane %v5192, 1
      %v5421 = vrot.slane %v5193, 1
      %v5422 = vsel %vm1179, %v5420, %v5421
      %v5423 = vrot.slane %v5194, 1
      %v5424 = vsel %vm1179, %v5421, %v5423
      %v5425 = vrot.slane %v5195, 1
      %v5426 = vsel %vm1179, %v5423, %v5425
      %v5427 = vrot.slane %v5196, 1
      %v5428 = vrot.slane %v5197, 1
      %v5429 = vsel %vm1179, %v5427, %v5428
      %v5430 = vrot.slane %v5198, 1
      %v5431 = vsel %vm1179, %v5428, %v5430
      %v5432 = vrot.slane %v5199, 1
      %v5433 = vsel %vm1179, %v5430, %v5432
      %v5434 = vrot.slane %v5200, 1
      %v5435 = vrot.slane %v5201, 1
      %v5436 = vsel %vm1179, %v5434, %v5435
      %v5437 = vrot.slane %v5202, 1
      %v5438 = vsel %vm1179, %v5435, %v5437
      %v5439 = vrot.slane %v5203, 1
      %v5440 = vsel %vm1179, %v5437, %v5439
      %v5441 = vrot.slane %v5204, 1
      %v5442 = vrot.slane %v5205, 1
      %v5443 = vsel %vm1179, %v5441, %v5442
      %v5444 = vrot.slane %v5206, 1
      %v5445 = vsel %vm1179, %v5442, %v5444
      %v5446 = vrot.slane %v5207, 1
      %v5447 = vsel %vm1179, %v5444, %v5446
      %v5448 = vrot.slane %v5208, 1
      %v5449 = vrot.slane %v5209, 1
      %v5450 = vsel %vm1179, %v5448, %v5449
      %v5451 = vrot.slane %v5210, 1
      %v5452 = vsel %vm1179, %v5449, %v5451
      %v5453 = vrot.slane %v5211, 1
      %v5454 = vsel %vm1179, %v5451, %v5453
      %v5455 = vrot.slane %v5212, 1
      %v5456 = vrot.slane %v5213, 1
      %v5457 = vsel %vm1179, %v5455, %v5456
      %v5458 = vrot.slane %v5214, 1
      %v5459 = vsel %vm1179, %v5456, %v5458
      %v5460 = vrot.slane %v5215, 1
      %v5461 = vsel %vm1179, %v5458, %v5460
      %v5462 = vrot.slane %v5216, 1
      %v5463 = vrot.slane %v5217, 1
      %v5464 = vsel %vm1179, %v5462, %v5463
      %v5465 = vrot.slane %v5218, 1
      %v5466 = vsel %vm1179, %v5463, %v5465
      %v5467 = vrot.slane %v5219, 1
      %v5468 = vsel %vm1179, %v5465, %v5467
      %v5469 = vrot.slane %v5220, 1
      %v5470 = vrot.slane %v5221, 1
      %v5471 = vsel %vm1179, %v5469, %v5470
      %v5472 = vrot.slane %v5222, 1
      %v5473 = vsel %vm1179, %v5470, %v5472
      %v5474 = vrot.slane %v5223, 1
      %v5475 = vsel %vm1179, %v5472, %v5474
      %v5476 = vrot.slane %v5224, 1
      %v5477 = vrot.slane %v5225, 1
      %v5478 = vsel %vm1179, %v5476, %v5477
      %v5479 = vrot.slane %v5226, 1
      %v5480 = vsel %vm1179, %v5477, %v5479
      %v5481 = vrot.slane %v5227, 1
      %v5482 = vsel %vm1179, %v5479, %v5481
      %v5483 = vrot.slane %v5228, 1
      %v5484 = vrot.slane %v5229, 1
      %v5485 = vsel %vm1179, %v5483, %v5484
      %v5486 = vrot.slane %v5230, 1
      %v5487 = vsel %vm1179, %v5484, %v5486
      %v5488 = vrot.slane %v5231, 1
      %v5489 = vsel %vm1179, %v5486, %v5488
      %v5490 = vrot.slane %v5232, 1
      %v5491 = vrot.slane %v5233, 1
      %v5492 = vsel %vm1179, %v5490, %v5491
      %v5493 = vrot.slane %v5234, 1
      %v5494 = vsel %vm1179, %v5491, %v5493
      %v5495 = vrot.slane %v5235, 1
      %v5496 = vsel %vm1179, %v5493, %v5495
      %v5497 = vrot.slane %v5236, 1
      %v5498 = vrot.slane %v5237, 1
      %v5499 = vsel %vm1179, %v5497, %v5498
      %v5500 = vrot.slane %v5238, 1
      %v5501 = vsel %vm1179, %v5498, %v5500
      %v5502 = vrot.slane %v5239, 1
      %v5503 = vsel %vm1179, %v5500, %v5502
      %v5504 = vrot.slane %v5240, 1
      %v5505 = vrot.slane %v5241, 1
      %v5506 = vsel %vm1179, %v5504, %v5505
      %v5507 = vrot.slane %v5242, 1
      %v5508 = vsel %vm1179, %v5505, %v5507
      %v5509 = vrot.slane %v5243, 1
      %v5510 = vsel %vm1179, %v5507, %v5509
      %v5511 = vrot.slane %v5244, 1
      %v5512 = vrot.slane %v5245, 1
      %v5513 = vsel %vm1179, %v5511, %v5512
      %v5514 = vrot.slane %v5246, 1
      %v5515 = vsel %vm1179, %v5512, %v5514
      %v5516 = vrot.slane %v5247, 1
      %v5517 = vsel %vm1179, %v5514, %v5516
      %v5518 = vrot.slane %v5248, 1
      %v5519 = vrot.slane %v5249, 1
      %v5520 = vsel %vm1179, %v5518, %v5519
      %v5521 = vrot.slane %v5250, 1
      %v5522 = vsel %vm1179, %v5519, %v5521
      %v5523 = vrot.slane %v5251, 1
      %v5524 = vsel %vm1179, %v5521, %v5523
      %s5525 = scalar_lea.vmem %s3, 8
      %v5526 = vld [vmem:[%s5525] sm:$0xff]
      %vm5527 = vcmask 64512
      %v5528 = vsel %vm5527, %v5359, 0
      %v5530 = vsel %vm5527, %v5361, 0
      %v5532 = vsel %vm5527, %v5363, 0
      %v5534 = vsel %vm5527, %v5366, 0
      %v5536 = vsel %vm5527, %v5368, 0
      %v5538 = vsel %vm5527, %v5370, 0
      %v5540 = vsel %vm5527, %v5373, 0
      %v5542 = vsel %vm5527, %v5375, 0
      %v5544 = vsel %vm5527, %v5377, 0
      %v5546 = vsel %vm5527, %v5380, 0
      %v5548 = vsel %vm5527, %v5382, 0
      %v5550 = vsel %vm5527, %v5384, 0
      %v5552 = vsel %vm5527, %v5387, 0
      %v5554 = vsel %vm5527, %v5389, 0
      %v5556 = vsel %vm5527, %v5391, 0
      %v5558 = vsel %vm5527, %v5394, 0
      %v5560 = vsel %vm5527, %v5396, 0
      %v5562 = vsel %vm5527, %v5398, 0
      %v5564 = vsel %vm5527, %v5401, 0
      %v5566 = vsel %vm5527, %v5403, 0
      %v5568 = vsel %vm5527, %v5405, 0
      %v5570 = vsel %vm5527, %v5408, 0
      %v5572 = vsel %vm5527, %v5410, 0
      %v5574 = vsel %vm5527, %v5412, 0
      %v5576 = vsel %vm5527, %v5415, 0
      %v5578 = vsel %vm5527, %v5417, 0
      %v5580 = vsel %vm5527, %v5419, 0
      %v5582 = vsel %vm5527, %v5422, 0
      %v5584 = vsel %vm5527, %v5424, 0
      %v5586 = vsel %vm5527, %v5426, 0
      %v5588 = vsel %vm5527, %v5429, 0
      %v5590 = vsel %vm5527, %v5431, 0
      %v5592 = vsel %vm5527, %v5433, 0
      %v5594 = vsel %vm5527, %v5436, 0
      %v5596 = vsel %vm5527, %v5438, 0
      %v5598 = vsel %vm5527, %v5440, 0
      %v5600 = vsel %vm5527, %v5443, 0
      %v5602 = vsel %vm5527, %v5445, 0
      %v5604 = vsel %vm5527, %v5447, 0
      %v5606 = vsel %vm5527, %v5450, 0
      %v5608 = vsel %vm5527, %v5452, 0
      %v5610 = vsel %vm5527, %v5454, 0
      %v5612 = vsel %vm5527, %v5457, 0
      %v5614 = vsel %vm5527, %v5459, 0
      %v5616 = vsel %vm5527, %v5461, 0
      %v5618 = vsel %vm5527, %v5464, 0
      %v5620 = vsel %vm5527, %v5466, 0
      %v5622 = vsel %vm5527, %v5468, 0
      %v5624 = vsel %vm5527, %v5471, 0
      %v5626 = vsel %vm5527, %v5473, 0
      %v5628 = vsel %vm5527, %v5475, 0
      %v5630 = vsel %vm5527, %v5478, 0
      %v5632 = vsel %vm5527, %v5480, 0
      %v5634 = vsel %vm5527, %v5482, 0
      %v5636 = vsel %vm5527, %v5485, 0
      %v5638 = vsel %vm5527, %v5487, 0
      %v5640 = vsel %vm5527, %v5489, 0
      %v5642 = vsel %vm5527, %v5492, 0
      %v5644 = vsel %vm5527, %v5494, 0
      %v5646 = vsel %vm5527, %v5496, 0
      %v5648 = vsel %vm5527, %v5499, 0
      %v5650 = vsel %vm5527, %v5501, 0
      %v5652 = vsel %vm5527, %v5503, 0
      %v5654 = vsel %vm5527, %v5506, 0
      %v5656 = vsel %vm5527, %v5508, 0
      %v5658 = vsel %vm5527, %v5510, 0
      %v5660 = vsel %vm5527, %v5513, 0
      %v5662 = vsel %vm5527, %v5515, 0
      %v5664 = vsel %vm5527, %v5517, 0
      %v5666 = vsel %vm5527, %v5520, 0
      %v5668 = vsel %vm5527, %v5522, 0
      %v5670 = vsel %vm5527, %v5524, 0
      %5672 = vmatprep.subr.mxu0 0.0
      %5673 = vmatpush1.msra.mxu0 0.0
      %5674 = vmatprep.subr.mxu0 0.0
      %5675 = vmatpush1.msra.mxu0 0.0
      %5676 = vmatprep.subr.mxu0 0.0
      %5677 = vmatpush1.msra.mxu0 0.0
      %5678 = vmatprep.subr.mxu0 0.0
      %5679 = vmatpush1.msra.mxu0 0.0
      %5680 = vmatprep.subr.mxu0 0.0
      %5681 = vmatpush1.msra.mxu0 0.0
      %5682 = vmatprep.subr.mxu0 0.0
      %5683 = vmatpush1.msra.mxu0 0.0
      %5684 = vmatprep.subr.mxu0 0.0
      %5685 = vmatpush1.msra.mxu0 0.0
      %5686 = vmatprep.subr.mxu0 0.0
      %5687 = vmatpush1.msra.mxu0 0.0
      %5688 = vmatprep.subr.mxu0 0.0
      %5689 = vmatpush1.msra.mxu0 0.0
      %5690 = vmatprep.subr.mxu0 0.0
      %5691 = vmatpush1.msra.mxu0 0.0
      %5692 = vmatprep.subr.mxu0 0.0
      %5693 = vmatpush1.msra.mxu0 0.0
      %5694 = vmatprep.subr.mxu0 0.0
      %5695 = vmatpush1.msra.mxu0 0.0
      %5696 = vmatprep.subr.mxu0 0.0
      %5697 = vmatpush1.msra.mxu0 0.0
      %5698 = vmatprep.subr.mxu0 0.0
      %5699 = vmatpush1.msra.mxu0 0.0
      %5700 = vmatprep.subr.mxu0 0.0
      %5701 = vmatpush1.msra.mxu0 0.0
      %5702 = vmatprep.subr.mxu0 0.0
      %5703 = vmatpush1.msra.mxu0 %v5526
      %5704 = vmatprep.subr.mxu0 0.0
      %5705 = vmatpush2.msra.mxu0 0.0
      %5706 = vmatprep.subr.mxu0 0.0
      %5707 = vmatpush2.msra.mxu0 0.0
      %5708 = vmatprep.subr.mxu0 0.0
      %5709 = vmatpush2.msra.mxu0 0.0
      %5710 = vmatprep.subr.mxu0 0.0
      %5711 = vmatpush2.msra.mxu0 0.0
      %5712 = vmatprep.subr.mxu0 0.0
      %5713 = vmatpush2.msra.mxu0 0.0
      %5714 = vmatprep.subr.mxu0 0.0
      %5715 = vmatpush2.msra.mxu0 0.0
      %5716 = vmatprep.subr.mxu0 0.0
      %5717 = vmatpush2.msra.mxu0 0.0
      %5718 = vmatprep.subr.mxu0 0.0
      %5719 = vmatpush2.msra.mxu0 0.0
      %5720 = vmatprep.subr.mxu0 0.0
      %5721 = vmatpush2.msra.mxu0 0.0
      %5722 = vmatprep.subr.mxu0 0.0
      %5723 = vmatpush2.msra.mxu0 0.0
      %5724 = vmatprep.subr.mxu0 0.0
      %5725 = vmatpush2.msra.mxu0 0.0
      %5726 = vmatprep.subr.mxu0 0.0
      %5727 = vmatpush2.msra.mxu0 0.0
      %5728 = vmatprep.subr.mxu0 0.0
      %5729 = vmatpush2.msra.mxu0 0.0
      %5730 = vmatprep.subr.mxu0 0.0
      %5731 = vmatpush2.msra.mxu0 0.0
      %5732 = vmatprep.subr.mxu0 0.0
      %5733 = vmatpush2.msra.mxu0 0.0
      %5734 = vmatprep.subr.mxu0 0.0
      %5735 = vmatpush2.msra.mxu0 0.0
      %5736 = vmatprep.mubr.f32.mxu0 0.0
      %5737 = vmatmul.mubr.f32.gmra.mxu0 %v5528
      %v5738 = vpop.f32.mrf.mxu0
      %v5739 = vadd.f32 0.0, %v5738
      %v5740 = vpop.f32.mrf.mxu0
      %5741 = vmatprep.mubr.f32.mxu0 0.0
      %5742 = vmatmul.mubr.f32.gmra.mxu0 %v5530
      %v5743 = vpop.f32.mrf.mxu0
      %v5744 = vadd.f32 0.0, %v5743
      %v5745 = vpop.f32.mrf.mxu0
      %5746 = vmatprep.mubr.f32.mxu0 0.0
      %5747 = vmatmul.mubr.f32.gmra.mxu0 %v5532
      %v5748 = vpop.f32.mrf.mxu0
      %v5749 = vadd.f32 0.0, %v5748
      %v5750 = vpop.f32.mrf.mxu0
      %5751 = vmatprep.mubr.f32.mxu0 0.0
      %5752 = vmatmul.mubr.f32.gmra.mxu0 %v5534
      %v5753 = vpop.f32.mrf.mxu0
      %v5754 = vadd.f32 0.0, %v5753
      %v5755 = vpop.f32.mrf.mxu0
      %5756 = vmatprep.mubr.f32.mxu0 0.0
      %5757 = vmatmul.mubr.f32.gmra.mxu0 %v5536
      %v5758 = vpop.f32.mrf.mxu0
      %v5759 = vadd.f32 0.0, %v5758
      %v5760 = vpop.f32.mrf.mxu0
      %5761 = vmatprep.mubr.f32.mxu0 0.0
      %5762 = vmatmul.mubr.f32.gmra.mxu0 %v5538
      %v5763 = vpop.f32.mrf.mxu0
      %v5764 = vadd.f32 0.0, %v5763
      %v5765 = vpop.f32.mrf.mxu0
      %5766 = vmatprep.mubr.f32.mxu0 0.0
      %5767 = vmatmul.mubr.f32.gmra.mxu0 %v5540
      %v5768 = vpop.f32.mrf.mxu0
      %v5769 = vadd.f32 0.0, %v5768
      %v5770 = vpop.f32.mrf.mxu0
      %5771 = vmatprep.mubr.f32.mxu0 0.0
      %5772 = vmatmul.mubr.f32.gmra.mxu0 %v5542
      %v5773 = vpop.f32.mrf.mxu0
      %v5774 = vadd.f32 0.0, %v5773
      %v5775 = vpop.f32.mrf.mxu0
      %5776 = vmatprep.mubr.f32.mxu0 0.0
      %5777 = vmatmul.mubr.f32.gmra.mxu0 %v5544
      %v5778 = vpop.f32.mrf.mxu0
      %v5779 = vadd.f32 0.0, %v5778
      %v5780 = vpop.f32.mrf.mxu0
      %5781 = vmatprep.mubr.f32.mxu0 0.0
      %5782 = vmatmul.mubr.f32.gmra.mxu0 %v5546
      %v5783 = vpop.f32.mrf.mxu0
      %v5784 = vadd.f32 0.0, %v5783
      %v5785 = vpop.f32.mrf.mxu0
      %5786 = vmatprep.mubr.f32.mxu0 0.0
      %5787 = vmatmul.mubr.f32.gmra.mxu0 %v5548
      %v5788 = vpop.f32.mrf.mxu0
      %v5789 = vadd.f32 0.0, %v5788
      %v5790 = vpop.f32.mrf.mxu0
      %5791 = vmatprep.mubr.f32.mxu0 0.0
      %5792 = vmatmul.mubr.f32.gmra.mxu0 %v5550
      %v5793 = vpop.f32.mrf.mxu0
      %v5794 = vadd.f32 0.0, %v5793
      %v5795 = vpop.f32.mrf.mxu0
      %5796 = vmatprep.mubr.f32.mxu0 0.0
      %5797 = vmatmul.mubr.f32.gmra.mxu0 %v5552
      %v5798 = vpop.f32.mrf.mxu0
      %v5799 = vadd.f32 0.0, %v5798
      %v5800 = vpop.f32.mrf.mxu0
      %5801 = vmatprep.mubr.f32.mxu0 0.0
      %5802 = vmatmul.mubr.f32.gmra.mxu0 %v5554
      %v5803 = vpop.f32.mrf.mxu0
      %v5804 = vadd.f32 0.0, %v5803
      %v5805 = vpop.f32.mrf.mxu0
      %5806 = vmatprep.mubr.f32.mxu0 0.0
      %5807 = vmatmul.mubr.f32.gmra.mxu0 %v5556
      %v5808 = vpop.f32.mrf.mxu0
      %v5809 = vadd.f32 0.0, %v5808
      %v5810 = vpop.f32.mrf.mxu0
      %5811 = vmatprep.mubr.f32.mxu0 0.0
      %5812 = vmatmul.mubr.f32.gmra.mxu0 %v5558
      %v5813 = vpop.f32.mrf.mxu0
      %v5814 = vadd.f32 0.0, %v5813
      %v5815 = vpop.f32.mrf.mxu0
      %5816 = vmatprep.mubr.f32.mxu0 0.0
      %5817 = vmatmul.mubr.f32.gmra.mxu0 %v5560
      %v5818 = vpop.f32.mrf.mxu0
      %v5819 = vadd.f32 0.0, %v5818
      %v5820 = vpop.f32.mrf.mxu0
      %5821 = vmatprep.mubr.f32.mxu0 0.0
      %5822 = vmatmul.mubr.f32.gmra.mxu0 %v5562
      %v5823 = vpop.f32.mrf.mxu0
      %v5824 = vadd.f32 0.0, %v5823
      %v5825 = vpop.f32.mrf.mxu0
      %5826 = vmatprep.mubr.f32.mxu0 0.0
      %5827 = vmatmul.mubr.f32.gmra.mxu0 %v5564
      %v5828 = vpop.f32.mrf.mxu0
      %v5829 = vadd.f32 0.0, %v5828
      %v5830 = vpop.f32.mrf.mxu0
      %5831 = vmatprep.mubr.f32.mxu0 0.0
      %5832 = vmatmul.mubr.f32.gmra.mxu0 %v5566
      %v5833 = vpop.f32.mrf.mxu0
      %v5834 = vadd.f32 0.0, %v5833
      %v5835 = vpop.f32.mrf.mxu0
      %5836 = vmatprep.mubr.f32.mxu0 0.0
      %5837 = vmatmul.mubr.f32.gmra.mxu0 %v5568
      %v5838 = vpop.f32.mrf.mxu0
      %v5839 = vadd.f32 0.0, %v5838
      %v5840 = vpop.f32.mrf.mxu0
      %5841 = vmatprep.mubr.f32.mxu0 0.0
      %5842 = vmatmul.mubr.f32.gmra.mxu0 %v5570
      %v5843 = vpop.f32.mrf.mxu0
      %v5844 = vadd.f32 0.0, %v5843
      %v5845 = vpop.f32.mrf.mxu0
      %5846 = vmatprep.mubr.f32.mxu0 0.0
      %5847 = vmatmul.mubr.f32.gmra.mxu0 %v5572
      %v5848 = vpop.f32.mrf.mxu0
      %v5849 = vadd.f32 0.0, %v5848
      %v5850 = vpop.f32.mrf.mxu0
      %5851 = vmatprep.mubr.f32.mxu0 0.0
      %5852 = vmatmul.mubr.f32.gmra.mxu0 %v5574
      %v5853 = vpop.f32.mrf.mxu0
      %v5854 = vadd.f32 0.0, %v5853
      %v5855 = vpop.f32.mrf.mxu0
      %5856 = vmatprep.mubr.f32.mxu0 0.0
      %5857 = vmatmul.mubr.f32.gmra.mxu0 %v5576
      %v5858 = vpop.f32.mrf.mxu0
      %v5859 = vadd.f32 0.0, %v5858
      %v5860 = vpop.f32.mrf.mxu0
      %5861 = vmatprep.mubr.f32.mxu0 0.0
      %5862 = vmatmul.mubr.f32.gmra.mxu0 %v5578
      %v5863 = vpop.f32.mrf.mxu0
      %v5864 = vadd.f32 0.0, %v5863
      %v5865 = vpop.f32.mrf.mxu0
      %5866 = vmatprep.mubr.f32.mxu0 0.0
      %5867 = vmatmul.mubr.f32.gmra.mxu0 %v5580
      %v5868 = vpop.f32.mrf.mxu0
      %v5869 = vadd.f32 0.0, %v5868
      %v5870 = vpop.f32.mrf.mxu0
      %5871 = vmatprep.mubr.f32.mxu0 0.0
      %5872 = vmatmul.mubr.f32.gmra.mxu0 %v5582
      %v5873 = vpop.f32.mrf.mxu0
      %v5874 = vadd.f32 0.0, %v5873
      %v5875 = vpop.f32.mrf.mxu0
      %5876 = vmatprep.mubr.f32.mxu0 0.0
      %5877 = vmatmul.mubr.f32.gmra.mxu0 %v5584
      %v5878 = vpop.f32.mrf.mxu0
      %v5879 = vadd.f32 0.0, %v5878
      %v5880 = vpop.f32.mrf.mxu0
      %5881 = vmatprep.mubr.f32.mxu0 0.0
      %5882 = vmatmul.mubr.f32.gmra.mxu0 %v5586
      %v5883 = vpop.f32.mrf.mxu0
      %v5884 = vadd.f32 0.0, %v5883
      %v5885 = vpop.f32.mrf.mxu0
      %5886 = vmatprep.mubr.f32.mxu0 0.0
      %5887 = vmatmul.mubr.f32.gmra.mxu0 %v5588
      %v5888 = vpop.f32.mrf.mxu0
      %v5889 = vadd.f32 0.0, %v5888
      %v5890 = vpop.f32.mrf.mxu0
      %5891 = vmatprep.mubr.f32.mxu0 0.0
      %5892 = vmatmul.mubr.f32.gmra.mxu0 %v5590
      %v5893 = vpop.f32.mrf.mxu0
      %v5894 = vadd.f32 0.0, %v5893
      %v5895 = vpop.f32.mrf.mxu0
      %5896 = vmatprep.mubr.f32.mxu0 0.0
      %5897 = vmatmul.mubr.f32.gmra.mxu0 %v5592
      %v5898 = vpop.f32.mrf.mxu0
      %v5899 = vadd.f32 0.0, %v5898
      %v5900 = vpop.f32.mrf.mxu0
      %5901 = vmatprep.mubr.f32.mxu0 0.0
      %5902 = vmatmul.mubr.f32.gmra.mxu0 %v5594
      %v5903 = vpop.f32.mrf.mxu0
      %v5904 = vadd.f32 0.0, %v5903
      %v5905 = vpop.f32.mrf.mxu0
      %5906 = vmatprep.mubr.f32.mxu0 0.0
      %5907 = vmatmul.mubr.f32.gmra.mxu0 %v5596
      %v5908 = vpop.f32.mrf.mxu0
      %v5909 = vadd.f32 0.0, %v5908
      %v5910 = vpop.f32.mrf.mxu0
      %5911 = vmatprep.mubr.f32.mxu0 0.0
      %5912 = vmatmul.mubr.f32.gmra.mxu0 %v5598
      %v5913 = vpop.f32.mrf.mxu0
      %v5914 = vadd.f32 0.0, %v5913
      %v5915 = vpop.f32.mrf.mxu0
      %5916 = vmatprep.mubr.f32.mxu0 0.0
      %5917 = vmatmul.mubr.f32.gmra.mxu0 %v5600
      %v5918 = vpop.f32.mrf.mxu0
      %v5919 = vadd.f32 0.0, %v5918
      %v5920 = vpop.f32.mrf.mxu0
      %5921 = vmatprep.mubr.f32.mxu0 0.0
      %5922 = vmatmul.mubr.f32.gmra.mxu0 %v5602
      %v5923 = vpop.f32.mrf.mxu0
      %v5924 = vadd.f32 0.0, %v5923
      %v5925 = vpop.f32.mrf.mxu0
      %5926 = vmatprep.mubr.f32.mxu0 0.0
      %5927 = vmatmul.mubr.f32.gmra.mxu0 %v5604
      %v5928 = vpop.f32.mrf.mxu0
      %v5929 = vadd.f32 0.0, %v5928
      %v5930 = vpop.f32.mrf.mxu0
      %5931 = vmatprep.mubr.f32.mxu0 0.0
      %5932 = vmatmul.mubr.f32.gmra.mxu0 %v5606
      %v5933 = vpop.f32.mrf.mxu0
      %v5934 = vadd.f32 0.0, %v5933
      %v5935 = vpop.f32.mrf.mxu0
      %5936 = vmatprep.mubr.f32.mxu0 0.0
      %5937 = vmatmul.mubr.f32.gmra.mxu0 %v5608
      %v5938 = vpop.f32.mrf.mxu0
      %v5939 = vadd.f32 0.0, %v5938
      %v5940 = vpop.f32.mrf.mxu0
      %5941 = vmatprep.mubr.f32.mxu0 0.0
      %5942 = vmatmul.mubr.f32.gmra.mxu0 %v5610
      %v5943 = vpop.f32.mrf.mxu0
      %v5944 = vadd.f32 0.0, %v5943
      %v5945 = vpop.f32.mrf.mxu0
      %5946 = vmatprep.mubr.f32.mxu0 0.0
      %5947 = vmatmul.mubr.f32.gmra.mxu0 %v5612
      %v5948 = vpop.f32.mrf.mxu0
      %v5949 = vadd.f32 0.0, %v5948
      %v5950 = vpop.f32.mrf.mxu0
      %5951 = vmatprep.mubr.f32.mxu0 0.0
      %5952 = vmatmul.mubr.f32.gmra.mxu0 %v5614
      %v5953 = vpop.f32.mrf.mxu0
      %v5954 = vadd.f32 0.0, %v5953
      %v5955 = vpop.f32.mrf.mxu0
      %5956 = vmatprep.mubr.f32.mxu0 0.0
      %5957 = vmatmul.mubr.f32.gmra.mxu0 %v5616
      %v5958 = vpop.f32.mrf.mxu0
      %v5959 = vadd.f32 0.0, %v5958
      %v5960 = vpop.f32.mrf.mxu0
      %5961 = vmatprep.mubr.f32.mxu0 0.0
      %5962 = vmatmul.mubr.f32.gmra.mxu0 %v5618
      %v5963 = vpop.f32.mrf.mxu0
      %v5964 = vadd.f32 0.0, %v5963
      %v5965 = vpop.f32.mrf.mxu0
      %5966 = vmatprep.mubr.f32.mxu0 0.0
      %5967 = vmatmul.mubr.f32.gmra.mxu0 %v5620
      %v5968 = vpop.f32.mrf.mxu0
      %v5969 = vadd.f32 0.0, %v5968
      %v5970 = vpop.f32.mrf.mxu0
      %5971 = vmatprep.mubr.f32.mxu0 0.0
      %5972 = vmatmul.mubr.f32.gmra.mxu0 %v5622
      %v5973 = vpop.f32.mrf.mxu0
      %v5974 = vadd.f32 0.0, %v5973
      %v5975 = vpop.f32.mrf.mxu0
      %5976 = vmatprep.mubr.f32.mxu0 0.0
      %5977 = vmatmul.mubr.f32.gmra.mxu0 %v5624
      %v5978 = vpop.f32.mrf.mxu0
      %v5979 = vadd.f32 0.0, %v5978
      %v5980 = vpop.f32.mrf.mxu0
      %5981 = vmatprep.mubr.f32.mxu0 0.0
      %5982 = vmatmul.mubr.f32.gmra.mxu0 %v5626
      %v5983 = vpop.f32.mrf.mxu0
      %v5984 = vadd.f32 0.0, %v5983
      %v5985 = vpop.f32.mrf.mxu0
      %5986 = vmatprep.mubr.f32.mxu0 0.0
      %5987 = vmatmul.mubr.f32.gmra.mxu0 %v5628
      %v5988 = vpop.f32.mrf.mxu0
      %v5989 = vadd.f32 0.0, %v5988
      %v5990 = vpop.f32.mrf.mxu0
      %5991 = vmatprep.mubr.f32.mxu0 0.0
      %5992 = vmatmul.mubr.f32.gmra.mxu0 %v5630
      %v5993 = vpop.f32.mrf.mxu0
      %v5994 = vadd.f32 0.0, %v5993
      %v5995 = vpop.f32.mrf.mxu0
      %5996 = vmatprep.mubr.f32.mxu0 0.0
      %5997 = vmatmul.mubr.f32.gmra.mxu0 %v5632
      %v5998 = vpop.f32.mrf.mxu0
      %v5999 = vadd.f32 0.0, %v5998
      %v6000 = vpop.f32.mrf.mxu0
      %6001 = vmatprep.mubr.f32.mxu0 0.0
      %6002 = vmatmul.mubr.f32.gmra.mxu0 %v5634
      %v6003 = vpop.f32.mrf.mxu0
      %v6004 = vadd.f32 0.0, %v6003
      %v6005 = vpop.f32.mrf.mxu0
      %6006 = vmatprep.mubr.f32.mxu0 0.0
      %6007 = vmatmul.mubr.f32.gmra.mxu0 %v5636
      %v6008 = vpop.f32.mrf.mxu0
      %v6009 = vadd.f32 0.0, %v6008
      %v6010 = vpop.f32.mrf.mxu0
      %6011 = vmatprep.mubr.f32.mxu0 0.0
      %6012 = vmatmul.mubr.f32.gmra.mxu0 %v5638
      %v6013 = vpop.f32.mrf.mxu0
      %v6014 = vadd.f32 0.0, %v6013
      %v6015 = vpop.f32.mrf.mxu0
      %6016 = vmatprep.mubr.f32.mxu0 0.0
      %6017 = vmatmul.mubr.f32.gmra.mxu0 %v5640
      %v6018 = vpop.f32.mrf.mxu0
      %v6019 = vadd.f32 0.0, %v6018
      %v6020 = vpop.f32.mrf.mxu0
      %6021 = vmatprep.mubr.f32.mxu0 0.0
      %6022 = vmatmul.mubr.f32.gmra.mxu0 %v5642
      %v6023 = vpop.f32.mrf.mxu0
      %v6024 = vadd.f32 0.0, %v6023
      %v6025 = vpop.f32.mrf.mxu0
      %6026 = vmatprep.mubr.f32.mxu0 0.0
      %6027 = vmatmul.mubr.f32.gmra.mxu0 %v5644
      %v6028 = vpop.f32.mrf.mxu0
      %v6029 = vadd.f32 0.0, %v6028
      %v6030 = vpop.f32.mrf.mxu0
      %6031 = vmatprep.mubr.f32.mxu0 0.0
      %6032 = vmatmul.mubr.f32.gmra.mxu0 %v5646
      %v6033 = vpop.f32.mrf.mxu0
      %v6034 = vadd.f32 0.0, %v6033
      %v6035 = vpop.f32.mrf.mxu0
      %6036 = vmatprep.mubr.f32.mxu0 0.0
      %6037 = vmatmul.mubr.f32.gmra.mxu0 %v5648
      %v6038 = vpop.f32.mrf.mxu0
      %v6039 = vadd.f32 0.0, %v6038
      %v6040 = vpop.f32.mrf.mxu0
      %6041 = vmatprep.mubr.f32.mxu0 0.0
      %6042 = vmatmul.mubr.f32.gmra.mxu0 %v5650
      %v6043 = vpop.f32.mrf.mxu0
      %v6044 = vadd.f32 0.0, %v6043
      %v6045 = vpop.f32.mrf.mxu0
      %6046 = vmatprep.mubr.f32.mxu0 0.0
      %6047 = vmatmul.mubr.f32.gmra.mxu0 %v5652
      %v6048 = vpop.f32.mrf.mxu0
      %v6049 = vadd.f32 0.0, %v6048
      %v6050 = vpop.f32.mrf.mxu0
      %6051 = vmatprep.mubr.f32.mxu0 0.0
      %6052 = vmatmul.mubr.f32.gmra.mxu0 %v5654
      %v6053 = vpop.f32.mrf.mxu0
      %v6054 = vadd.f32 0.0, %v6053
      %v6055 = vpop.f32.mrf.mxu0
      %6056 = vmatprep.mubr.f32.mxu0 0.0
      %6057 = vmatmul.mubr.f32.gmra.mxu0 %v5656
      %v6058 = vpop.f32.mrf.mxu0
      %v6059 = vadd.f32 0.0, %v6058
      %v6060 = vpop.f32.mrf.mxu0
      %6061 = vmatprep.mubr.f32.mxu0 0.0
      %6062 = vmatmul.mubr.f32.gmra.mxu0 %v5658
      %v6063 = vpop.f32.mrf.mxu0
      %v6064 = vadd.f32 0.0, %v6063
      %v6065 = vpop.f32.mrf.mxu0
      %6066 = vmatprep.mubr.f32.mxu0 0.0
      %6067 = vmatmul.mubr.f32.gmra.mxu0 %v5660
      %v6068 = vpop.f32.mrf.mxu0
      %v6069 = vadd.f32 0.0, %v6068
      %v6070 = vpop.f32.mrf.mxu0
      %6071 = vmatprep.mubr.f32.mxu0 0.0
      %6072 = vmatmul.mubr.f32.gmra.mxu0 %v5662
      %v6073 = vpop.f32.mrf.mxu0
      %v6074 = vadd.f32 0.0, %v6073
      %v6075 = vpop.f32.mrf.mxu0
      %6076 = vmatprep.mubr.f32.mxu0 0.0
      %6077 = vmatmul.mubr.f32.gmra.mxu0 %v5664
      %v6078 = vpop.f32.mrf.mxu0
      %v6079 = vadd.f32 0.0, %v6078
      %v6080 = vpop.f32.mrf.mxu0
      %6081 = vmatprep.mubr.f32.mxu0 0.0
      %6082 = vmatmul.mubr.f32.gmra.mxu0 %v5666
      %v6083 = vpop.f32.mrf.mxu0
      %v6084 = vadd.f32 0.0, %v6083
      %v6085 = vpop.f32.mrf.mxu0
      %6086 = vmatprep.mubr.f32.mxu0 0.0
      %6087 = vmatmul.mubr.f32.gmra.mxu0 %v5668
      %v6088 = vpop.f32.mrf.mxu0
      %v6089 = vadd.f32 0.0, %v6088
      %v6090 = vpop.f32.mrf.mxu0
      %6091 = vmatprep.mubr.f32.mxu0 0.0
      %6092 = vmatmul.mubr.f32.gmra.mxu0 %v5670
      %v6093 = vpop.f32.mrf.mxu0
      %v6094 = vadd.f32 0.0, %v6093
      %v6095 = vpop.f32.mrf.mxu0
      %6096 = vdwg.mxu0
      %v6097 = vsel %vm5527, %v5156, 0
      %v6099 = vsel %vm5527, %v5157, 0
      %v6101 = vsel %vm5527, %v5158, 0
      %v6103 = vsel %vm5527, %v5160, 0
      %v6105 = vsel %vm5527, %v5161, 0
      %v6107 = vsel %vm5527, %v5162, 0
      %v6109 = vsel %vm5527, %v5164, 0
      %v6111 = vsel %vm5527, %v5165, 0
      %v6113 = vsel %vm5527, %v5166, 0
      %v6115 = vsel %vm5527, %v5168, 0
      %v6117 = vsel %vm5527, %v5169, 0
      %v6119 = vsel %vm5527, %v5170, 0
      %v6121 = vsel %vm5527, %v5172, 0
      %v6123 = vsel %vm5527, %v5173, 0
      %v6125 = vsel %vm5527, %v5174, 0
      %v6127 = vsel %vm5527, %v5176, 0
      %v6129 = vsel %vm5527, %v5177, 0
      %v6131 = vsel %vm5527, %v5178, 0
      %v6133 = vsel %vm5527, %v5180, 0
      %v6135 = vsel %vm5527, %v5181, 0
      %v6137 = vsel %vm5527, %v5182, 0
      %v6139 = vsel %vm5527, %v5184, 0
      %v6141 = vsel %vm5527, %v5185, 0
      %v6143 = vsel %vm5527, %v5186, 0
      %v6145 = vsel %vm5527, %v5188, 0
      %v6147 = vsel %vm5527, %v5189, 0
      %v6149 = vsel %vm5527, %v5190, 0
      %v6151 = vsel %vm5527, %v5192, 0
      %v6153 = vsel %vm5527, %v5193, 0
      %v6155 = vsel %vm5527, %v5194, 0
      %v6157 = vsel %vm5527, %v5196, 0
      %v6159 = vsel %vm5527, %v5197, 0
      %v6161 = vsel %vm5527, %v5198, 0
      %v6163 = vsel %vm5527, %v5200, 0
      %v6165 = vsel %vm5527, %v5201, 0
      %v6167 = vsel %vm5527, %v5202, 0
      %v6169 = vsel %vm5527, %v5204, 0
      %v6171 = vsel %vm5527, %v5205, 0
      %v6173 = vsel %vm5527, %v5206, 0
      %v6175 = vsel %vm5527, %v5208, 0
      %v6177 = vsel %vm5527, %v5209, 0
      %v6179 = vsel %vm5527, %v5210, 0
      %v6181 = vsel %vm5527, %v5212, 0
      %v6183 = vsel %vm5527, %v5213, 0
      %v6185 = vsel %vm5527, %v5214, 0
      %v6187 = vsel %vm5527, %v5216, 0
      %v6189 = vsel %vm5527, %v5217, 0
      %v6191 = vsel %vm5527, %v5218, 0
      %v6193 = vsel %vm5527, %v5220, 0
      %v6195 = vsel %vm5527, %v5221, 0
      %v6197 = vsel %vm5527, %v5222, 0
      %v6199 = vsel %vm5527, %v5224, 0
      %v6201 = vsel %vm5527, %v5225, 0
      %v6203 = vsel %vm5527, %v5226, 0
      %v6205 = vsel %vm5527, %v5228, 0
      %v6207 = vsel %vm5527, %v5229, 0
      %v6209 = vsel %vm5527, %v5230, 0
      %v6211 = vsel %vm5527, %v5232, 0
      %v6213 = vsel %vm5527, %v5233, 0
      %v6215 = vsel %vm5527, %v5234, 0
      %v6217 = vsel %vm5527, %v5236, 0
      %v6219 = vsel %vm5527, %v5237, 0
      %v6221 = vsel %vm5527, %v5238, 0
      %v6223 = vsel %vm5527, %v5240, 0
      %v6225 = vsel %vm5527, %v5241, 0
      %v6227 = vsel %vm5527, %v5242, 0
      %v6229 = vsel %vm5527, %v5244, 0
      %v6231 = vsel %vm5527, %v5245, 0
      %v6233 = vsel %vm5527, %v5246, 0
      %v6235 = vsel %vm5527, %v5248, 0
      %v6237 = vsel %vm5527, %v5249, 0
      %v6239 = vsel %vm5527, %v5250, 0
      %6241 = vmatprep.subr.mxu0 0.0
      %6242 = vmatpush1.msra.mxu0 0.0
      %6243 = vmatprep.subr.mxu0 0.0
      %6244 = vmatpush1.msra.mxu0 0.0
      %6245 = vmatprep.subr.mxu0 0.0
      %6246 = vmatpush1.msra.mxu0 0.0
      %6247 = vmatprep.subr.mxu0 0.0
      %6248 = vmatpush1.msra.mxu0 0.0
      %6249 = vmatprep.subr.mxu0 0.0
      %6250 = vmatpush1.msra.mxu0 0.0
      %6251 = vmatprep.subr.mxu0 0.0
      %6252 = vmatpush1.msra.mxu0 0.0
      %6253 = vmatprep.subr.mxu0 0.0
      %6254 = vmatpush1.msra.mxu0 0.0
      %6255 = vmatprep.subr.mxu0 0.0
      %6256 = vmatpush1.msra.mxu0 0.0
      %6257 = vmatprep.subr.mxu0 0.0
      %6258 = vmatpush1.msra.mxu0 0.0
      %6259 = vmatprep.subr.mxu0 0.0
      %6260 = vmatpush1.msra.mxu0 0.0
      %6261 = vmatprep.subr.mxu0 0.0
      %6262 = vmatpush1.msra.mxu0 0.0
      %6263 = vmatprep.subr.mxu0 0.0
      %6264 = vmatpush1.msra.mxu0 0.0
      %6265 = vmatprep.subr.mxu0 0.0
      %6266 = vmatpush1.msra.mxu0 0.0
      %6267 = vmatprep.subr.mxu0 0.0
      %6268 = vmatpush1.msra.mxu0 0.0
      %6269 = vmatprep.subr.mxu0 0.0
      %6270 = vmatpush1.msra.mxu0 0.0
      %6271 = vmatprep.subr.mxu0 0.0
      %6272 = vmatpush1.msra.mxu0 %v5260
      %6273 = vmatprep.subr.mxu0 0.0
      %6274 = vmatpush2.msra.mxu0 0.0
      %6275 = vmatprep.subr.mxu0 0.0
      %6276 = vmatpush2.msra.mxu0 0.0
      %6277 = vmatprep.subr.mxu0 0.0
      %6278 = vmatpush2.msra.mxu0 0.0
      %6279 = vmatprep.subr.mxu0 0.0
      %6280 = vmatpush2.msra.mxu0 0.0
      %6281 = vmatprep.subr.mxu0 0.0
      %6282 = vmatpush2.msra.mxu0 0.0
      %6283 = vmatprep.subr.mxu0 0.0
      %6284 = vmatpush2.msra.mxu0 0.0
      %6285 = vmatprep.subr.mxu0 0.0
      %6286 = vmatpush2.msra.mxu0 0.0
      %6287 = vmatprep.subr.mxu0 0.0
      %6288 = vmatpush2.msra.mxu0 0.0
      %6289 = vmatprep.subr.mxu0 0.0
      %6290 = vmatpush2.msra.mxu0 0.0
      %6291 = vmatprep.subr.mxu0 0.0
      %6292 = vmatpush2.msra.mxu0 0.0
      %6293 = vmatprep.subr.mxu0 0.0
      %6294 = vmatpush2.msra.mxu0 0.0
      %6295 = vmatprep.subr.mxu0 0.0
      %6296 = vmatpush2.msra.mxu0 0.0
      %6297 = vmatprep.subr.mxu0 0.0
      %6298 = vmatpush2.msra.mxu0 0.0
      %6299 = vmatprep.subr.mxu0 0.0
      %6300 = vmatpush2.msra.mxu0 0.0
      %6301 = vmatprep.subr.mxu0 0.0
      %6302 = vmatpush2.msra.mxu0 0.0
      %6303 = vmatprep.subr.mxu0 0.0
      %6304 = vmatpush2.msra.mxu0 0.0
      %6305 = vmatprep.mubr.f32.mxu0 0.0
      %6306 = vmatmul.mubr.f32.gmra.mxu0 %v6097
      %v6307 = vpop.f32.mrf.mxu0
      %v6308 = vadd.f32 %v5739, %v6307
      %v6309 = vpop.f32.mrf.mxu0
      %6310 = vmatprep.mubr.f32.mxu0 0.0
      %6311 = vmatmul.mubr.f32.gmra.mxu0 %v6099
      %v6312 = vpop.f32.mrf.mxu0
      %v6313 = vadd.f32 %v5744, %v6312
      %v6314 = vpop.f32.mrf.mxu0
      %6315 = vmatprep.mubr.f32.mxu0 0.0
      %6316 = vmatmul.mubr.f32.gmra.mxu0 %v6101
      %v6317 = vpop.f32.mrf.mxu0
      %v6318 = vadd.f32 %v5749, %v6317
      %v6319 = vpop.f32.mrf.mxu0
      %6320 = vmatprep.mubr.f32.mxu0 0.0
      %6321 = vmatmul.mubr.f32.gmra.mxu0 %v6103
      %v6322 = vpop.f32.mrf.mxu0
      %v6323 = vadd.f32 %v5754, %v6322
      %v6324 = vpop.f32.mrf.mxu0
      %6325 = vmatprep.mubr.f32.mxu0 0.0
      %6326 = vmatmul.mubr.f32.gmra.mxu0 %v6105
      %v6327 = vpop.f32.mrf.mxu0
      %v6328 = vadd.f32 %v5759, %v6327
      %v6329 = vpop.f32.mrf.mxu0
      %6330 = vmatprep.mubr.f32.mxu0 0.0
      %6331 = vmatmul.mubr.f32.gmra.mxu0 %v6107
      %v6332 = vpop.f32.mrf.mxu0
      %v6333 = vadd.f32 %v5764, %v6332
      %v6334 = vpop.f32.mrf.mxu0
      %6335 = vmatprep.mubr.f32.mxu0 0.0
      %6336 = vmatmul.mubr.f32.gmra.mxu0 %v6109
      %v6337 = vpop.f32.mrf.mxu0
      %v6338 = vadd.f32 %v5769, %v6337
      %v6339 = vpop.f32.mrf.mxu0
      %6340 = vmatprep.mubr.f32.mxu0 0.0
      %6341 = vmatmul.mubr.f32.gmra.mxu0 %v6111
      %v6342 = vpop.f32.mrf.mxu0
      %v6343 = vadd.f32 %v5774, %v6342
      %v6344 = vpop.f32.mrf.mxu0
      %6345 = vmatprep.mubr.f32.mxu0 0.0
      %6346 = vmatmul.mubr.f32.gmra.mxu0 %v6113
      %v6347 = vpop.f32.mrf.mxu0
      %v6348 = vadd.f32 %v5779, %v6347
      %v6349 = vpop.f32.mrf.mxu0
      %6350 = vmatprep.mubr.f32.mxu0 0.0
      %6351 = vmatmul.mubr.f32.gmra.mxu0 %v6115
      %v6352 = vpop.f32.mrf.mxu0
      %v6353 = vadd.f32 %v5784, %v6352
      %v6354 = vpop.f32.mrf.mxu0
      %6355 = vmatprep.mubr.f32.mxu0 0.0
      %6356 = vmatmul.mubr.f32.gmra.mxu0 %v6117
      %v6357 = vpop.f32.mrf.mxu0
      %v6358 = vadd.f32 %v5789, %v6357
      %v6359 = vpop.f32.mrf.mxu0
      %6360 = vmatprep.mubr.f32.mxu0 0.0
      %6361 = vmatmul.mubr.f32.gmra.mxu0 %v6119
      %v6362 = vpop.f32.mrf.mxu0
      %v6363 = vadd.f32 %v5794, %v6362
      %v6364 = vpop.f32.mrf.mxu0
      %6365 = vmatprep.mubr.f32.mxu0 0.0
      %6366 = vmatmul.mubr.f32.gmra.mxu0 %v6121
      %v6367 = vpop.f32.mrf.mxu0
      %v6368 = vadd.f32 %v5799, %v6367
      %v6369 = vpop.f32.mrf.mxu0
      %6370 = vmatprep.mubr.f32.mxu0 0.0
      %6371 = vmatmul.mubr.f32.gmra.mxu0 %v6123
      %v6372 = vpop.f32.mrf.mxu0
      %v6373 = vadd.f32 %v5804, %v6372
      %v6374 = vpop.f32.mrf.mxu0
      %6375 = vmatprep.mubr.f32.mxu0 0.0
      %6376 = vmatmul.mubr.f32.gmra.mxu0 %v6125
      %v6377 = vpop.f32.mrf.mxu0
      %v6378 = vadd.f32 %v5809, %v6377
      %v6379 = vpop.f32.mrf.mxu0
      %6380 = vmatprep.mubr.f32.mxu0 0.0
      %6381 = vmatmul.mubr.f32.gmra.mxu0 %v6127
      %v6382 = vpop.f32.mrf.mxu0
      %v6383 = vadd.f32 %v5814, %v6382
      %v6384 = vpop.f32.mrf.mxu0
      %6385 = vmatprep.mubr.f32.mxu0 0.0
      %6386 = vmatmul.mubr.f32.gmra.mxu0 %v6129
      %v6387 = vpop.f32.mrf.mxu0
      %v6388 = vadd.f32 %v5819, %v6387
      %v6389 = vpop.f32.mrf.mxu0
      %6390 = vmatprep.mubr.f32.mxu0 0.0
      %6391 = vmatmul.mubr.f32.gmra.mxu0 %v6131
      %v6392 = vpop.f32.mrf.mxu0
      %v6393 = vadd.f32 %v5824, %v6392
      %v6394 = vpop.f32.mrf.mxu0
      %6395 = vmatprep.mubr.f32.mxu0 0.0
      %6396 = vmatmul.mubr.f32.gmra.mxu0 %v6133
      %v6397 = vpop.f32.mrf.mxu0
      %v6398 = vadd.f32 %v5829, %v6397
      %v6399 = vpop.f32.mrf.mxu0
      %6400 = vmatprep.mubr.f32.mxu0 0.0
      %6401 = vmatmul.mubr.f32.gmra.mxu0 %v6135
      %v6402 = vpop.f32.mrf.mxu0
      %v6403 = vadd.f32 %v5834, %v6402
      %v6404 = vpop.f32.mrf.mxu0
      %6405 = vmatprep.mubr.f32.mxu0 0.0
      %6406 = vmatmul.mubr.f32.gmra.mxu0 %v6137
      %v6407 = vpop.f32.mrf.mxu0
      %v6408 = vadd.f32 %v5839, %v6407
      %v6409 = vpop.f32.mrf.mxu0
      %6410 = vmatprep.mubr.f32.mxu0 0.0
      %6411 = vmatmul.mubr.f32.gmra.mxu0 %v6139
      %v6412 = vpop.f32.mrf.mxu0
      %v6413 = vadd.f32 %v5844, %v6412
      %v6414 = vpop.f32.mrf.mxu0
      %6415 = vmatprep.mubr.f32.mxu0 0.0
      %6416 = vmatmul.mubr.f32.gmra.mxu0 %v6141
      %v6417 = vpop.f32.mrf.mxu0
      %v6418 = vadd.f32 %v5849, %v6417
      %v6419 = vpop.f32.mrf.mxu0
      %6420 = vmatprep.mubr.f32.mxu0 0.0
      %6421 = vmatmul.mubr.f32.gmra.mxu0 %v6143
      %v6422 = vpop.f32.mrf.mxu0
      %v6423 = vadd.f32 %v5854, %v6422
      %v6424 = vpop.f32.mrf.mxu0
      %6425 = vmatprep.mubr.f32.mxu0 0.0
      %6426 = vmatmul.mubr.f32.gmra.mxu0 %v6145
      %v6427 = vpop.f32.mrf.mxu0
      %v6428 = vadd.f32 %v5859, %v6427
      %v6429 = vpop.f32.mrf.mxu0
      %6430 = vmatprep.mubr.f32.mxu0 0.0
      %6431 = vmatmul.mubr.f32.gmra.mxu0 %v6147
      %v6432 = vpop.f32.mrf.mxu0
      %v6433 = vadd.f32 %v5864, %v6432
      %v6434 = vpop.f32.mrf.mxu0
      %6435 = vmatprep.mubr.f32.mxu0 0.0
      %6436 = vmatmul.mubr.f32.gmra.mxu0 %v6149
      %v6437 = vpop.f32.mrf.mxu0
      %v6438 = vadd.f32 %v5869, %v6437
      %v6439 = vpop.f32.mrf.mxu0
      %6440 = vmatprep.mubr.f32.mxu0 0.0
      %6441 = vmatmul.mubr.f32.gmra.mxu0 %v6151
      %v6442 = vpop.f32.mrf.mxu0
      %v6443 = vadd.f32 %v5874, %v6442
      %v6444 = vpop.f32.mrf.mxu0
      %6445 = vmatprep.mubr.f32.mxu0 0.0
      %6446 = vmatmul.mubr.f32.gmra.mxu0 %v6153
      %v6447 = vpop.f32.mrf.mxu0
      %v6448 = vadd.f32 %v5879, %v6447
      %v6449 = vpop.f32.mrf.mxu0
      %6450 = vmatprep.mubr.f32.mxu0 0.0
      %6451 = vmatmul.mubr.f32.gmra.mxu0 %v6155
      %v6452 = vpop.f32.mrf.mxu0
      %v6453 = vadd.f32 %v5884, %v6452
      %v6454 = vpop.f32.mrf.mxu0
      %6455 = vmatprep.mubr.f32.mxu0 0.0
      %6456 = vmatmul.mubr.f32.gmra.mxu0 %v6157
      %v6457 = vpop.f32.mrf.mxu0
      %v6458 = vadd.f32 %v5889, %v6457
      %v6459 = vpop.f32.mrf.mxu0
      %6460 = vmatprep.mubr.f32.mxu0 0.0
      %6461 = vmatmul.mubr.f32.gmra.mxu0 %v6159
      %v6462 = vpop.f32.mrf.mxu0
      %v6463 = vadd.f32 %v5894, %v6462
      %v6464 = vpop.f32.mrf.mxu0
      %6465 = vmatprep.mubr.f32.mxu0 0.0
      %6466 = vmatmul.mubr.f32.gmra.mxu0 %v6161
      %v6467 = vpop.f32.mrf.mxu0
      %v6468 = vadd.f32 %v5899, %v6467
      %v6469 = vpop.f32.mrf.mxu0
      %6470 = vmatprep.mubr.f32.mxu0 0.0
      %6471 = vmatmul.mubr.f32.gmra.mxu0 %v6163
      %v6472 = vpop.f32.mrf.mxu0
      %v6473 = vadd.f32 %v5904, %v6472
      %v6474 = vpop.f32.mrf.mxu0
      %6475 = vmatprep.mubr.f32.mxu0 0.0
      %6476 = vmatmul.mubr.f32.gmra.mxu0 %v6165
      %v6477 = vpop.f32.mrf.mxu0
      %v6478 = vadd.f32 %v5909, %v6477
      %v6479 = vpop.f32.mrf.mxu0
      %6480 = vmatprep.mubr.f32.mxu0 0.0
      %6481 = vmatmul.mubr.f32.gmra.mxu0 %v6167
      %v6482 = vpop.f32.mrf.mxu0
      %v6483 = vadd.f32 %v5914, %v6482
      %v6484 = vpop.f32.mrf.mxu0
      %6485 = vmatprep.mubr.f32.mxu0 0.0
      %6486 = vmatmul.mubr.f32.gmra.mxu0 %v6169
      %v6487 = vpop.f32.mrf.mxu0
      %v6488 = vadd.f32 %v5919, %v6487
      %v6489 = vpop.f32.mrf.mxu0
      %6490 = vmatprep.mubr.f32.mxu0 0.0
      %6491 = vmatmul.mubr.f32.gmra.mxu0 %v6171
      %v6492 = vpop.f32.mrf.mxu0
      %v6493 = vadd.f32 %v5924, %v6492
      %v6494 = vpop.f32.mrf.mxu0
      %6495 = vmatprep.mubr.f32.mxu0 0.0
      %6496 = vmatmul.mubr.f32.gmra.mxu0 %v6173
      %v6497 = vpop.f32.mrf.mxu0
      %v6498 = vadd.f32 %v5929, %v6497
      %v6499 = vpop.f32.mrf.mxu0
      %6500 = vmatprep.mubr.f32.mxu0 0.0
      %6501 = vmatmul.mubr.f32.gmra.mxu0 %v6175
      %v6502 = vpop.f32.mrf.mxu0
      %v6503 = vadd.f32 %v5934, %v6502
      %v6504 = vpop.f32.mrf.mxu0
      %6505 = vmatprep.mubr.f32.mxu0 0.0
      %6506 = vmatmul.mubr.f32.gmra.mxu0 %v6177
      %v6507 = vpop.f32.mrf.mxu0
      %v6508 = vadd.f32 %v5939, %v6507
      %v6509 = vpop.f32.mrf.mxu0
      %6510 = vmatprep.mubr.f32.mxu0 0.0
      %6511 = vmatmul.mubr.f32.gmra.mxu0 %v6179
      %v6512 = vpop.f32.mrf.mxu0
      %v6513 = vadd.f32 %v5944, %v6512
      %v6514 = vpop.f32.mrf.mxu0
      %6515 = vmatprep.mubr.f32.mxu0 0.0
      %6516 = vmatmul.mubr.f32.gmra.mxu0 %v6181
      %v6517 = vpop.f32.mrf.mxu0
      %v6518 = vadd.f32 %v5949, %v6517
      %v6519 = vpop.f32.mrf.mxu0
      %6520 = vmatprep.mubr.f32.mxu0 0.0
      %6521 = vmatmul.mubr.f32.gmra.mxu0 %v6183
      %v6522 = vpop.f32.mrf.mxu0
      %v6523 = vadd.f32 %v5954, %v6522
      %v6524 = vpop.f32.mrf.mxu0
      %6525 = vmatprep.mubr.f32.mxu0 0.0
      %6526 = vmatmul.mubr.f32.gmra.mxu0 %v6185
      %v6527 = vpop.f32.mrf.mxu0
      %v6528 = vadd.f32 %v5959, %v6527
      %v6529 = vpop.f32.mrf.mxu0
      %6530 = vmatprep.mubr.f32.mxu0 0.0
      %6531 = vmatmul.mubr.f32.gmra.mxu0 %v6187
      %v6532 = vpop.f32.mrf.mxu0
      %v6533 = vadd.f32 %v5964, %v6532
      %v6534 = vpop.f32.mrf.mxu0
      %6535 = vmatprep.mubr.f32.mxu0 0.0
      %6536 = vmatmul.mubr.f32.gmra.mxu0 %v6189
      %v6537 = vpop.f32.mrf.mxu0
      %v6538 = vadd.f32 %v5969, %v6537
      %v6539 = vpop.f32.mrf.mxu0
      %6540 = vmatprep.mubr.f32.mxu0 0.0
      %6541 = vmatmul.mubr.f32.gmra.mxu0 %v6191
      %v6542 = vpop.f32.mrf.mxu0
      %v6543 = vadd.f32 %v5974, %v6542
      %v6544 = vpop.f32.mrf.mxu0
      %6545 = vmatprep.mubr.f32.mxu0 0.0
      %6546 = vmatmul.mubr.f32.gmra.mxu0 %v6193
      %v6547 = vpop.f32.mrf.mxu0
      %v6548 = vadd.f32 %v5979, %v6547
      %v6549 = vpop.f32.mrf.mxu0
      %6550 = vmatprep.mubr.f32.mxu0 0.0
      %6551 = vmatmul.mubr.f32.gmra.mxu0 %v6195
      %v6552 = vpop.f32.mrf.mxu0
      %v6553 = vadd.f32 %v5984, %v6552
      %v6554 = vpop.f32.mrf.mxu0
      %6555 = vmatprep.mubr.f32.mxu0 0.0
      %6556 = vmatmul.mubr.f32.gmra.mxu0 %v6197
      %v6557 = vpop.f32.mrf.mxu0
      %v6558 = vadd.f32 %v5989, %v6557
      %v6559 = vpop.f32.mrf.mxu0
      %6560 = vmatprep.mubr.f32.mxu0 0.0
      %6561 = vmatmul.mubr.f32.gmra.mxu0 %v6199
      %v6562 = vpop.f32.mrf.mxu0
      %v6563 = vadd.f32 %v5994, %v6562
      %v6564 = vpop.f32.mrf.mxu0
      %6565 = vmatprep.mubr.f32.mxu0 0.0
      %6566 = vmatmul.mubr.f32.gmra.mxu0 %v6201
      %v6567 = vpop.f32.mrf.mxu0
      %v6568 = vadd.f32 %v5999, %v6567
      %v6569 = vpop.f32.mrf.mxu0
      %6570 = vmatprep.mubr.f32.mxu0 0.0
      %6571 = vmatmul.mubr.f32.gmra.mxu0 %v6203
      %v6572 = vpop.f32.mrf.mxu0
      %v6573 = vadd.f32 %v6004, %v6572
      %v6574 = vpop.f32.mrf.mxu0
      %6575 = vmatprep.mubr.f32.mxu0 0.0
      %6576 = vmatmul.mubr.f32.gmra.mxu0 %v6205
      %v6577 = vpop.f32.mrf.mxu0
      %v6578 = vadd.f32 %v6009, %v6577
      %v6579 = vpop.f32.mrf.mxu0
      %6580 = vmatprep.mubr.f32.mxu0 0.0
      %6581 = vmatmul.mubr.f32.gmra.mxu0 %v6207
      %v6582 = vpop.f32.mrf.mxu0
      %v6583 = vadd.f32 %v6014, %v6582
      %v6584 = vpop.f32.mrf.mxu0
      %6585 = vmatprep.mubr.f32.mxu0 0.0
      %6586 = vmatmul.mubr.f32.gmra.mxu0 %v6209
      %v6587 = vpop.f32.mrf.mxu0
      %v6588 = vadd.f32 %v6019, %v6587
      %v6589 = vpop.f32.mrf.mxu0
      %6590 = vmatprep.mubr.f32.mxu0 0.0
      %6591 = vmatmul.mubr.f32.gmra.mxu0 %v6211
      %v6592 = vpop.f32.mrf.mxu0
      %v6593 = vadd.f32 %v6024, %v6592
      %v6594 = vpop.f32.mrf.mxu0
      %6595 = vmatprep.mubr.f32.mxu0 0.0
      %6596 = vmatmul.mubr.f32.gmra.mxu0 %v6213
      %v6597 = vpop.f32.mrf.mxu0
      %v6598 = vadd.f32 %v6029, %v6597
      %v6599 = vpop.f32.mrf.mxu0
      %6600 = vmatprep.mubr.f32.mxu0 0.0
      %6601 = vmatmul.mubr.f32.gmra.mxu0 %v6215
      %v6602 = vpop.f32.mrf.mxu0
      %v6603 = vadd.f32 %v6034, %v6602
      %v6604 = vpop.f32.mrf.mxu0
      %6605 = vmatprep.mubr.f32.mxu0 0.0
      %6606 = vmatmul.mubr.f32.gmra.mxu0 %v6217
      %v6607 = vpop.f32.mrf.mxu0
      %v6608 = vadd.f32 %v6039, %v6607
      %v6609 = vpop.f32.mrf.mxu0
      %6610 = vmatprep.mubr.f32.mxu0 0.0
      %6611 = vmatmul.mubr.f32.gmra.mxu0 %v6219
      %v6612 = vpop.f32.mrf.mxu0
      %v6613 = vadd.f32 %v6044, %v6612
      %v6614 = vpop.f32.mrf.mxu0
      %6615 = vmatprep.mubr.f32.mxu0 0.0
      %6616 = vmatmul.mubr.f32.gmra.mxu0 %v6221
      %v6617 = vpop.f32.mrf.mxu0
      %v6618 = vadd.f32 %v6049, %v6617
      %v6619 = vpop.f32.mrf.mxu0
      %6620 = vmatprep.mubr.f32.mxu0 0.0
      %6621 = vmatmul.mubr.f32.gmra.mxu0 %v6223
      %v6622 = vpop.f32.mrf.mxu0
      %v6623 = vadd.f32 %v6054, %v6622
      %v6624 = vpop.f32.mrf.mxu0
      %6625 = vmatprep.mubr.f32.mxu0 0.0
      %6626 = vmatmul.mubr.f32.gmra.mxu0 %v6225
      %v6627 = vpop.f32.mrf.mxu0
      %v6628 = vadd.f32 %v6059, %v6627
      %v6629 = vpop.f32.mrf.mxu0
      %6630 = vmatprep.mubr.f32.mxu0 0.0
      %6631 = vmatmul.mubr.f32.gmra.mxu0 %v6227
      %v6632 = vpop.f32.mrf.mxu0
      %v6633 = vadd.f32 %v6064, %v6632
      %v6634 = vpop.f32.mrf.mxu0
      %6635 = vmatprep.mubr.f32.mxu0 0.0
      %6636 = vmatmul.mubr.f32.gmra.mxu0 %v6229
      %v6637 = vpop.f32.mrf.mxu0
      %v6638 = vadd.f32 %v6069, %v6637
      %v6639 = vpop.f32.mrf.mxu0
      %6640 = vmatprep.mubr.f32.mxu0 0.0
      %6641 = vmatmul.mubr.f32.gmra.mxu0 %v6231
      %v6642 = vpop.f32.mrf.mxu0
      %v6643 = vadd.f32 %v6074, %v6642
      %v6644 = vpop.f32.mrf.mxu0
      %6645 = vmatprep.mubr.f32.mxu0 0.0
      %6646 = vmatmul.mubr.f32.gmra.mxu0 %v6233
      %v6647 = vpop.f32.mrf.mxu0
      %v6648 = vadd.f32 %v6079, %v6647
      %v6649 = vpop.f32.mrf.mxu0
      %6650 = vmatprep.mubr.f32.mxu0 0.0
      %6651 = vmatmul.mubr.f32.gmra.mxu0 %v6235
      %v6652 = vpop.f32.mrf.mxu0
      %v6653 = vadd.f32 %v6084, %v6652
      %v6654 = vpop.f32.mrf.mxu0
      %6655 = vmatprep.mubr.f32.mxu0 0.0
      %6656 = vmatmul.mubr.f32.gmra.mxu0 %v6237
      %v6657 = vpop.f32.mrf.mxu0
      %v6658 = vadd.f32 %v6089, %v6657
      %v6659 = vpop.f32.mrf.mxu0
      %6660 = vmatprep.mubr.f32.mxu0 0.0
      %6661 = vmatmul.mubr.f32.gmra.mxu0 %v6239
      %v6662 = vpop.f32.mrf.mxu0
      %v6663 = vadd.f32 %v6094, %v6662
      %v6664 = vpop.f32.mrf.mxu0
      %6665 = vdwg.mxu0
      %v6666 = vrot.slane %v5156, 2
      %v6667 = vrot.slane %v5157, 2
      %v6668 = vsel %vm1782, %v6666, %v6667
      %v6669 = vrot.slane %v5158, 2
      %v6670 = vsel %vm1782, %v6667, %v6669
      %v6671 = vrot.slane %v5159, 2
      %v6672 = vsel %vm1782, %v6669, %v6671
      %v6673 = vrot.slane %v5160, 2
      %v6674 = vrot.slane %v5161, 2
      %v6675 = vsel %vm1782, %v6673, %v6674
      %v6676 = vrot.slane %v5162, 2
      %v6677 = vsel %vm1782, %v6674, %v6676
      %v6678 = vrot.slane %v5163, 2
      %v6679 = vsel %vm1782, %v6676, %v6678
      %v6680 = vrot.slane %v5164, 2
      %v6681 = vrot.slane %v5165, 2
      %v6682 = vsel %vm1782, %v6680, %v6681
      %v6683 = vrot.slane %v5166, 2
      %v6684 = vsel %vm1782, %v6681, %v6683
      %v6685 = vrot.slane %v5167, 2
      %v6686 = vsel %vm1782, %v6683, %v6685
      %v6687 = vrot.slane %v5168, 2
      %v6688 = vrot.slane %v5169, 2
      %v6689 = vsel %vm1782, %v6687, %v6688
      %v6690 = vrot.slane %v5170, 2
      %v6691 = vsel %vm1782, %v6688, %v6690
      %v6692 = vrot.slane %v5171, 2
      %v6693 = vsel %vm1782, %v6690, %v6692
      %v6694 = vrot.slane %v5172, 2
      %v6695 = vrot.slane %v5173, 2
      %v6696 = vsel %vm1782, %v6694, %v6695
      %v6697 = vrot.slane %v5174, 2
      %v6698 = vsel %vm1782, %v6695, %v6697
      %v6699 = vrot.slane %v5175, 2
      %v6700 = vsel %vm1782, %v6697, %v6699
      %v6701 = vrot.slane %v5176, 2
      %v6702 = vrot.slane %v5177, 2
      %v6703 = vsel %vm1782, %v6701, %v6702
      %v6704 = vrot.slane %v5178, 2
      %v6705 = vsel %vm1782, %v6702, %v6704
      %v6706 = vrot.slane %v5179, 2
      %v6707 = vsel %vm1782, %v6704, %v6706
      %v6708 = vrot.slane %v5180, 2
      %v6709 = vrot.slane %v5181, 2
      %v6710 = vsel %vm1782, %v6708, %v6709
      %v6711 = vrot.slane %v5182, 2
      %v6712 = vsel %vm1782, %v6709, %v6711
      %v6713 = vrot.slane %v5183, 2
      %v6714 = vsel %vm1782, %v6711, %v6713
      %v6715 = vrot.slane %v5184, 2
      %v6716 = vrot.slane %v5185, 2
      %v6717 = vsel %vm1782, %v6715, %v6716
      %v6718 = vrot.slane %v5186, 2
      %v6719 = vsel %vm1782, %v6716, %v6718
      %v6720 = vrot.slane %v5187, 2
      %v6721 = vsel %vm1782, %v6718, %v6720
      %v6722 = vrot.slane %v5188, 2
      %v6723 = vrot.slane %v5189, 2
      %v6724 = vsel %vm1782, %v6722, %v6723
      %v6725 = vrot.slane %v5190, 2
      %v6726 = vsel %vm1782, %v6723, %v6725
      %v6727 = vrot.slane %v5191, 2
      %v6728 = vsel %vm1782, %v6725, %v6727
      %v6729 = vrot.slane %v5192, 2
      %v6730 = vrot.slane %v5193, 2
      %v6731 = vsel %vm1782, %v6729, %v6730
      %v6732 = vrot.slane %v5194, 2
      %v6733 = vsel %vm1782, %v6730, %v6732
      %v6734 = vrot.slane %v5195, 2
      %v6735 = vsel %vm1782, %v6732, %v6734
      %v6736 = vrot.slane %v5196, 2
      %v6737 = vrot.slane %v5197, 2
      %v6738 = vsel %vm1782, %v6736, %v6737
      %v6739 = vrot.slane %v5198, 2
      %v6740 = vsel %vm1782, %v6737, %v6739
      %v6741 = vrot.slane %v5199, 2
      %v6742 = vsel %vm1782, %v6739, %v6741
      %v6743 = vrot.slane %v5200, 2
      %v6744 = vrot.slane %v5201, 2
      %v6745 = vsel %vm1782, %v6743, %v6744
      %v6746 = vrot.slane %v5202, 2
      %v6747 = vsel %vm1782, %v6744, %v6746
      %v6748 = vrot.slane %v5203, 2
      %v6749 = vsel %vm1782, %v6746, %v6748
      %v6750 = vrot.slane %v5204, 2
      %v6751 = vrot.slane %v5205, 2
      %v6752 = vsel %vm1782, %v6750, %v6751
      %v6753 = vrot.slane %v5206, 2
      %v6754 = vsel %vm1782, %v6751, %v6753
      %v6755 = vrot.slane %v5207, 2
      %v6756 = vsel %vm1782, %v6753, %v6755
      %v6757 = vrot.slane %v5208, 2
      %v6758 = vrot.slane %v5209, 2
      %v6759 = vsel %vm1782, %v6757, %v6758
      %v6760 = vrot.slane %v5210, 2
      %v6761 = vsel %vm1782, %v6758, %v6760
      %v6762 = vrot.slane %v5211, 2
      %v6763 = vsel %vm1782, %v6760, %v6762
      %v6764 = vrot.slane %v5212, 2
      %v6765 = vrot.slane %v5213, 2
      %v6766 = vsel %vm1782, %v6764, %v6765
      %v6767 = vrot.slane %v5214, 2
      %v6768 = vsel %vm1782, %v6765, %v6767
      %v6769 = vrot.slane %v5215, 2
      %v6770 = vsel %vm1782, %v6767, %v6769
      %v6771 = vrot.slane %v5216, 2
      %v6772 = vrot.slane %v5217, 2
      %v6773 = vsel %vm1782, %v6771, %v6772
      %v6774 = vrot.slane %v5218, 2
      %v6775 = vsel %vm1782, %v6772, %v6774
      %v6776 = vrot.slane %v5219, 2
      %v6777 = vsel %vm1782, %v6774, %v6776
      %v6778 = vrot.slane %v5220, 2
      %v6779 = vrot.slane %v5221, 2
      %v6780 = vsel %vm1782, %v6778, %v6779
      %v6781 = vrot.slane %v5222, 2
      %v6782 = vsel %vm1782, %v6779, %v6781
      %v6783 = vrot.slane %v5223, 2
      %v6784 = vsel %vm1782, %v6781, %v6783
      %v6785 = vrot.slane %v5224, 2
      %v6786 = vrot.slane %v5225, 2
      %v6787 = vsel %vm1782, %v6785, %v6786
      %v6788 = vrot.slane %v5226, 2
      %v6789 = vsel %vm1782, %v6786, %v6788
      %v6790 = vrot.slane %v5227, 2
      %v6791 = vsel %vm1782, %v6788, %v6790
      %v6792 = vrot.slane %v5228, 2
      %v6793 = vrot.slane %v5229, 2
      %v6794 = vsel %vm1782, %v6792, %v6793
      %v6795 = vrot.slane %v5230, 2
      %v6796 = vsel %vm1782, %v6793, %v6795
      %v6797 = vrot.slane %v5231, 2
      %v6798 = vsel %vm1782, %v6795, %v6797
      %v6799 = vrot.slane %v5232, 2
      %v6800 = vrot.slane %v5233, 2
      %v6801 = vsel %vm1782, %v6799, %v6800
      %v6802 = vrot.slane %v5234, 2
      %v6803 = vsel %vm1782, %v6800, %v6802
      %v6804 = vrot.slane %v5235, 2
      %v6805 = vsel %vm1782, %v6802, %v6804
      %v6806 = vrot.slane %v5236, 2
      %v6807 = vrot.slane %v5237, 2
      %v6808 = vsel %vm1782, %v6806, %v6807
      %v6809 = vrot.slane %v5238, 2
      %v6810 = vsel %vm1782, %v6807, %v6809
      %v6811 = vrot.slane %v5239, 2
      %v6812 = vsel %vm1782, %v6809, %v6811
      %v6813 = vrot.slane %v5240, 2
      %v6814 = vrot.slane %v5241, 2
      %v6815 = vsel %vm1782, %v6813, %v6814
      %v6816 = vrot.slane %v5242, 2
      %v6817 = vsel %vm1782, %v6814, %v6816
      %v6818 = vrot.slane %v5243, 2
      %v6819 = vsel %vm1782, %v6816, %v6818
      %v6820 = vrot.slane %v5244, 2
      %v6821 = vrot.slane %v5245, 2
      %v6822 = vsel %vm1782, %v6820, %v6821
      %v6823 = vrot.slane %v5246, 2
      %v6824 = vsel %vm1782, %v6821, %v6823
      %v6825 = vrot.slane %v5247, 2
      %v6826 = vsel %vm1782, %v6823, %v6825
      %v6827 = vrot.slane %v5248, 2
      %v6828 = vrot.slane %v5249, 2
      %v6829 = vsel %vm1782, %v6827, %v6828
      %v6830 = vrot.slane %v5250, 2
      %v6831 = vsel %vm1782, %v6828, %v6830
      %v6832 = vrot.slane %v5251, 2
      %v6833 = vsel %vm1782, %v6830, %v6832
      %s6834 = scalar_lea.vmem %s3, 16
      %v6835 = vld [vmem:[%s6834] sm:$0xff]
      %v6836 = vsel %vm5527, %v6668, 0
      %v6838 = vsel %vm5527, %v6670, 0
      %v6840 = vsel %vm5527, %v6672, 0
      %v6842 = vsel %vm5527, %v6675, 0
      %v6844 = vsel %vm5527, %v6677, 0
      %v6846 = vsel %vm5527, %v6679, 0
      %v6848 = vsel %vm5527, %v6682, 0
      %v6850 = vsel %vm5527, %v6684, 0
      %v6852 = vsel %vm5527, %v6686, 0
      %v6854 = vsel %vm5527, %v6689, 0
      %v6856 = vsel %vm5527, %v6691, 0
      %v6858 = vsel %vm5527, %v6693, 0
      %v6860 = vsel %vm5527, %v6696, 0
      %v6862 = vsel %vm5527, %v6698, 0
      %v6864 = vsel %vm5527, %v6700, 0
      %v6866 = vsel %vm5527, %v6703, 0
      %v6868 = vsel %vm5527, %v6705, 0
      %v6870 = vsel %vm5527, %v6707, 0
      %v6872 = vsel %vm5527, %v6710, 0
      %v6874 = vsel %vm5527, %v6712, 0
      %v6876 = vsel %vm5527, %v6714, 0
      %v6878 = vsel %vm5527, %v6717, 0
      %v6880 = vsel %vm5527, %v6719, 0
      %v6882 = vsel %vm5527, %v6721, 0
      %v6884 = vsel %vm5527, %v6724, 0
      %v6886 = vsel %vm5527, %v6726, 0
      %v6888 = vsel %vm5527, %v6728, 0
      %v6890 = vsel %vm5527, %v6731, 0
      %v6892 = vsel %vm5527, %v6733, 0
      %v6894 = vsel %vm5527, %v6735, 0
      %v6896 = vsel %vm5527, %v6738, 0
      %v6898 = vsel %vm5527, %v6740, 0
      %v6900 = vsel %vm5527, %v6742, 0
      %v6902 = vsel %vm5527, %v6745, 0
      %v6904 = vsel %vm5527, %v6747, 0
      %v6906 = vsel %vm5527, %v6749, 0
      %v6908 = vsel %vm5527, %v6752, 0
      %v6910 = vsel %vm5527, %v6754, 0
      %v6912 = vsel %vm5527, %v6756, 0
      %v6914 = vsel %vm5527, %v6759, 0
      %v6916 = vsel %vm5527, %v6761, 0
      %v6918 = vsel %vm5527, %v6763, 0
      %v6920 = vsel %vm5527, %v6766, 0
      %v6922 = vsel %vm5527, %v6768, 0
      %v6924 = vsel %vm5527, %v6770, 0
      %v6926 = vsel %vm5527, %v6773, 0
      %v6928 = vsel %vm5527, %v6775, 0
      %v6930 = vsel %vm5527, %v6777, 0
      %v6932 = vsel %vm5527, %v6780, 0
      %v6934 = vsel %vm5527, %v6782, 0
      %v6936 = vsel %vm5527, %v6784, 0
      %v6938 = vsel %vm5527, %v6787, 0
      %v6940 = vsel %vm5527, %v6789, 0
      %v6942 = vsel %vm5527, %v6791, 0
      %v6944 = vsel %vm5527, %v6794, 0
      %v6946 = vsel %vm5527, %v6796, 0
      %v6948 = vsel %vm5527, %v6798, 0
      %v6950 = vsel %vm5527, %v6801, 0
      %v6952 = vsel %vm5527, %v6803, 0
      %v6954 = vsel %vm5527, %v6805, 0
      %v6956 = vsel %vm5527, %v6808, 0
      %v6958 = vsel %vm5527, %v6810, 0
      %v6960 = vsel %vm5527, %v6812, 0
      %v6962 = vsel %vm5527, %v6815, 0
      %v6964 = vsel %vm5527, %v6817, 0
      %v6966 = vsel %vm5527, %v6819, 0
      %v6968 = vsel %vm5527, %v6822, 0
      %v6970 = vsel %vm5527, %v6824, 0
      %v6972 = vsel %vm5527, %v6826, 0
      %v6974 = vsel %vm5527, %v6829, 0
      %v6976 = vsel %vm5527, %v6831, 0
      %v6978 = vsel %vm5527, %v6833, 0
      %6980 = vmatprep.subr.mxu0 0.0
      %6981 = vmatpush1.msra.mxu0 0.0
      %6982 = vmatprep.subr.mxu0 0.0
      %6983 = vmatpush1.msra.mxu0 0.0
      %6984 = vmatprep.subr.mxu0 0.0
      %6985 = vmatpush1.msra.mxu0 0.0
      %6986 = vmatprep.subr.mxu0 0.0
      %6987 = vmatpush1.msra.mxu0 0.0
      %6988 = vmatprep.subr.mxu0 0.0
      %6989 = vmatpush1.msra.mxu0 0.0
      %6990 = vmatprep.subr.mxu0 0.0
      %6991 = vmatpush1.msra.mxu0 0.0
      %6992 = vmatprep.subr.mxu0 0.0
      %6993 = vmatpush1.msra.mxu0 0.0
      %6994 = vmatprep.subr.mxu0 0.0
      %6995 = vmatpush1.msra.mxu0 0.0
      %6996 = vmatprep.subr.mxu0 0.0
      %6997 = vmatpush1.msra.mxu0 0.0
      %6998 = vmatprep.subr.mxu0 0.0
      %6999 = vmatpush1.msra.mxu0 0.0
      %7000 = vmatprep.subr.mxu0 0.0
      %7001 = vmatpush1.msra.mxu0 0.0
      %7002 = vmatprep.subr.mxu0 0.0
      %7003 = vmatpush1.msra.mxu0 0.0
      %7004 = vmatprep.subr.mxu0 0.0
      %7005 = vmatpush1.msra.mxu0 0.0
      %7006 = vmatprep.subr.mxu0 0.0
      %7007 = vmatpush1.msra.mxu0 0.0
      %7008 = vmatprep.subr.mxu0 0.0
      %7009 = vmatpush1.msra.mxu0 0.0
      %7010 = vmatprep.subr.mxu0 0.0
      %7011 = vmatpush1.msra.mxu0 %v6835
      %7012 = vmatprep.subr.mxu0 0.0
      %7013 = vmatpush2.msra.mxu0 0.0
      %7014 = vmatprep.subr.mxu0 0.0
      %7015 = vmatpush2.msra.mxu0 0.0
      %7016 = vmatprep.subr.mxu0 0.0
      %7017 = vmatpush2.msra.mxu0 0.0
      %7018 = vmatprep.subr.mxu0 0.0
      %7019 = vmatpush2.msra.mxu0 0.0
      %7020 = vmatprep.subr.mxu0 0.0
      %7021 = vmatpush2.msra.mxu0 0.0
      %7022 = vmatprep.subr.mxu0 0.0
      %7023 = vmatpush2.msra.mxu0 0.0
      %7024 = vmatprep.subr.mxu0 0.0
      %7025 = vmatpush2.msra.mxu0 0.0
      %7026 = vmatprep.subr.mxu0 0.0
      %7027 = vmatpush2.msra.mxu0 0.0
      %7028 = vmatprep.subr.mxu0 0.0
      %7029 = vmatpush2.msra.mxu0 0.0
      %7030 = vmatprep.subr.mxu0 0.0
      %7031 = vmatpush2.msra.mxu0 0.0
      %7032 = vmatprep.subr.mxu0 0.0
      %7033 = vmatpush2.msra.mxu0 0.0
      %7034 = vmatprep.subr.mxu0 0.0
      %7035 = vmatpush2.msra.mxu0 0.0
      %7036 = vmatprep.subr.mxu0 0.0
      %7037 = vmatpush2.msra.mxu0 0.0
      %7038 = vmatprep.subr.mxu0 0.0
      %7039 = vmatpush2.msra.mxu0 0.0
      %7040 = vmatprep.subr.mxu0 0.0
      %7041 = vmatpush2.msra.mxu0 0.0
      %7042 = vmatprep.subr.mxu0 0.0
      %7043 = vmatpush2.msra.mxu0 0.0
      %7044 = vmatprep.mubr.f32.mxu0 0.0
      %7045 = vmatmul.mubr.f32.gmra.mxu0 %v6836
      %v7046 = vpop.f32.mrf.mxu0
      %v7047 = vadd.f32 0.0, %v7046
      %v7048 = vpop.f32.mrf.mxu0
      %7049 = vmatprep.mubr.f32.mxu0 0.0
      %7050 = vmatmul.mubr.f32.gmra.mxu0 %v6838
      %v7051 = vpop.f32.mrf.mxu0
      %v7052 = vadd.f32 0.0, %v7051
      %v7053 = vpop.f32.mrf.mxu0
      %7054 = vmatprep.mubr.f32.mxu0 0.0
      %7055 = vmatmul.mubr.f32.gmra.mxu0 %v6840
      %v7056 = vpop.f32.mrf.mxu0
      %v7057 = vadd.f32 0.0, %v7056
      %v7058 = vpop.f32.mrf.mxu0
      %7059 = vmatprep.mubr.f32.mxu0 0.0
      %7060 = vmatmul.mubr.f32.gmra.mxu0 %v6842
      %v7061 = vpop.f32.mrf.mxu0
      %v7062 = vadd.f32 0.0, %v7061
      %v7063 = vpop.f32.mrf.mxu0
      %7064 = vmatprep.mubr.f32.mxu0 0.0
      %7065 = vmatmul.mubr.f32.gmra.mxu0 %v6844
      %v7066 = vpop.f32.mrf.mxu0
      %v7067 = vadd.f32 0.0, %v7066
      %v7068 = vpop.f32.mrf.mxu0
      %7069 = vmatprep.mubr.f32.mxu0 0.0
      %7070 = vmatmul.mubr.f32.gmra.mxu0 %v6846
      %v7071 = vpop.f32.mrf.mxu0
      %v7072 = vadd.f32 0.0, %v7071
      %v7073 = vpop.f32.mrf.mxu0
      %7074 = vmatprep.mubr.f32.mxu0 0.0
      %7075 = vmatmul.mubr.f32.gmra.mxu0 %v6848
      %v7076 = vpop.f32.mrf.mxu0
      %v7077 = vadd.f32 0.0, %v7076
      %v7078 = vpop.f32.mrf.mxu0
      %7079 = vmatprep.mubr.f32.mxu0 0.0
      %7080 = vmatmul.mubr.f32.gmra.mxu0 %v6850
      %v7081 = vpop.f32.mrf.mxu0
      %v7082 = vadd.f32 0.0, %v7081
      %v7083 = vpop.f32.mrf.mxu0
      %7084 = vmatprep.mubr.f32.mxu0 0.0
      %7085 = vmatmul.mubr.f32.gmra.mxu0 %v6852
      %v7086 = vpop.f32.mrf.mxu0
      %v7087 = vadd.f32 0.0, %v7086
      %v7088 = vpop.f32.mrf.mxu0
      %7089 = vmatprep.mubr.f32.mxu0 0.0
      %7090 = vmatmul.mubr.f32.gmra.mxu0 %v6854
      %v7091 = vpop.f32.mrf.mxu0
      %v7092 = vadd.f32 0.0, %v7091
      %v7093 = vpop.f32.mrf.mxu0
      %7094 = vmatprep.mubr.f32.mxu0 0.0
      %7095 = vmatmul.mubr.f32.gmra.mxu0 %v6856
      %v7096 = vpop.f32.mrf.mxu0
      %v7097 = vadd.f32 0.0, %v7096
      %v7098 = vpop.f32.mrf.mxu0
      %7099 = vmatprep.mubr.f32.mxu0 0.0
      %7100 = vmatmul.mubr.f32.gmra.mxu0 %v6858
      %v7101 = vpop.f32.mrf.mxu0
      %v7102 = vadd.f32 0.0, %v7101
      %v7103 = vpop.f32.mrf.mxu0
      %7104 = vmatprep.mubr.f32.mxu0 0.0
      %7105 = vmatmul.mubr.f32.gmra.mxu0 %v6860
      %v7106 = vpop.f32.mrf.mxu0
      %v7107 = vadd.f32 0.0, %v7106
      %v7108 = vpop.f32.mrf.mxu0
      %7109 = vmatprep.mubr.f32.mxu0 0.0
      %7110 = vmatmul.mubr.f32.gmra.mxu0 %v6862
      %v7111 = vpop.f32.mrf.mxu0
      %v7112 = vadd.f32 0.0, %v7111
      %v7113 = vpop.f32.mrf.mxu0
      %7114 = vmatprep.mubr.f32.mxu0 0.0
      %7115 = vmatmul.mubr.f32.gmra.mxu0 %v6864
      %v7116 = vpop.f32.mrf.mxu0
      %v7117 = vadd.f32 0.0, %v7116
      %v7118 = vpop.f32.mrf.mxu0
      %7119 = vmatprep.mubr.f32.mxu0 0.0
      %7120 = vmatmul.mubr.f32.gmra.mxu0 %v6866
      %v7121 = vpop.f32.mrf.mxu0
      %v7122 = vadd.f32 0.0, %v7121
      %v7123 = vpop.f32.mrf.mxu0
      %7124 = vmatprep.mubr.f32.mxu0 0.0
      %7125 = vmatmul.mubr.f32.gmra.mxu0 %v6868
      %v7126 = vpop.f32.mrf.mxu0
      %v7127 = vadd.f32 0.0, %v7126
      %v7128 = vpop.f32.mrf.mxu0
      %7129 = vmatprep.mubr.f32.mxu0 0.0
      %7130 = vmatmul.mubr.f32.gmra.mxu0 %v6870
      %v7131 = vpop.f32.mrf.mxu0
      %v7132 = vadd.f32 0.0, %v7131
      %v7133 = vpop.f32.mrf.mxu0
      %7134 = vmatprep.mubr.f32.mxu0 0.0
      %7135 = vmatmul.mubr.f32.gmra.mxu0 %v6872
      %v7136 = vpop.f32.mrf.mxu0
      %v7137 = vadd.f32 0.0, %v7136
      %v7138 = vpop.f32.mrf.mxu0
      %7139 = vmatprep.mubr.f32.mxu0 0.0
      %7140 = vmatmul.mubr.f32.gmra.mxu0 %v6874
      %v7141 = vpop.f32.mrf.mxu0
      %v7142 = vadd.f32 0.0, %v7141
      %v7143 = vpop.f32.mrf.mxu0
      %7144 = vmatprep.mubr.f32.mxu0 0.0
      %7145 = vmatmul.mubr.f32.gmra.mxu0 %v6876
      %v7146 = vpop.f32.mrf.mxu0
      %v7147 = vadd.f32 0.0, %v7146
      %v7148 = vpop.f32.mrf.mxu0
      %7149 = vmatprep.mubr.f32.mxu0 0.0
      %7150 = vmatmul.mubr.f32.gmra.mxu0 %v6878
      %v7151 = vpop.f32.mrf.mxu0
      %v7152 = vadd.f32 0.0, %v7151
      %v7153 = vpop.f32.mrf.mxu0
      %7154 = vmatprep.mubr.f32.mxu0 0.0
      %7155 = vmatmul.mubr.f32.gmra.mxu0 %v6880
      %v7156 = vpop.f32.mrf.mxu0
      %v7157 = vadd.f32 0.0, %v7156
      %v7158 = vpop.f32.mrf.mxu0
      %7159 = vmatprep.mubr.f32.mxu0 0.0
      %7160 = vmatmul.mubr.f32.gmra.mxu0 %v6882
      %v7161 = vpop.f32.mrf.mxu0
      %v7162 = vadd.f32 0.0, %v7161
      %v7163 = vpop.f32.mrf.mxu0
      %7164 = vmatprep.mubr.f32.mxu0 0.0
      %7165 = vmatmul.mubr.f32.gmra.mxu0 %v6884
      %v7166 = vpop.f32.mrf.mxu0
      %v7167 = vadd.f32 0.0, %v7166
      %v7168 = vpop.f32.mrf.mxu0
      %7169 = vmatprep.mubr.f32.mxu0 0.0
      %7170 = vmatmul.mubr.f32.gmra.mxu0 %v6886
      %v7171 = vpop.f32.mrf.mxu0
      %v7172 = vadd.f32 0.0, %v7171
      %v7173 = vpop.f32.mrf.mxu0
      %7174 = vmatprep.mubr.f32.mxu0 0.0
      %7175 = vmatmul.mubr.f32.gmra.mxu0 %v6888
      %v7176 = vpop.f32.mrf.mxu0
      %v7177 = vadd.f32 0.0, %v7176
      %v7178 = vpop.f32.mrf.mxu0
      %7179 = vmatprep.mubr.f32.mxu0 0.0
      %7180 = vmatmul.mubr.f32.gmra.mxu0 %v6890
      %v7181 = vpop.f32.mrf.mxu0
      %v7182 = vadd.f32 0.0, %v7181
      %v7183 = vpop.f32.mrf.mxu0
      %7184 = vmatprep.mubr.f32.mxu0 0.0
      %7185 = vmatmul.mubr.f32.gmra.mxu0 %v6892
      %v7186 = vpop.f32.mrf.mxu0
      %v7187 = vadd.f32 0.0, %v7186
      %v7188 = vpop.f32.mrf.mxu0
      %7189 = vmatprep.mubr.f32.mxu0 0.0
      %7190 = vmatmul.mubr.f32.gmra.mxu0 %v6894
      %v7191 = vpop.f32.mrf.mxu0
      %v7192 = vadd.f32 0.0, %v7191
      %v7193 = vpop.f32.mrf.mxu0
      %7194 = vmatprep.mubr.f32.mxu0 0.0
      %7195 = vmatmul.mubr.f32.gmra.mxu0 %v6896
      %v7196 = vpop.f32.mrf.mxu0
      %v7197 = vadd.f32 0.0, %v7196
      %v7198 = vpop.f32.mrf.mxu0
      %7199 = vmatprep.mubr.f32.mxu0 0.0
      %7200 = vmatmul.mubr.f32.gmra.mxu0 %v6898
      %v7201 = vpop.f32.mrf.mxu0
      %v7202 = vadd.f32 0.0, %v7201
      %v7203 = vpop.f32.mrf.mxu0
      %7204 = vmatprep.mubr.f32.mxu0 0.0
      %7205 = vmatmul.mubr.f32.gmra.mxu0 %v6900
      %v7206 = vpop.f32.mrf.mxu0
      %v7207 = vadd.f32 0.0, %v7206
      %v7208 = vpop.f32.mrf.mxu0
      %7209 = vmatprep.mubr.f32.mxu0 0.0
      %7210 = vmatmul.mubr.f32.gmra.mxu0 %v6902
      %v7211 = vpop.f32.mrf.mxu0
      %v7212 = vadd.f32 0.0, %v7211
      %v7213 = vpop.f32.mrf.mxu0
      %7214 = vmatprep.mubr.f32.mxu0 0.0
      %7215 = vmatmul.mubr.f32.gmra.mxu0 %v6904
      %v7216 = vpop.f32.mrf.mxu0
      %v7217 = vadd.f32 0.0, %v7216
      %v7218 = vpop.f32.mrf.mxu0
      %7219 = vmatprep.mubr.f32.mxu0 0.0
      %7220 = vmatmul.mubr.f32.gmra.mxu0 %v6906
      %v7221 = vpop.f32.mrf.mxu0
      %v7222 = vadd.f32 0.0, %v7221
      %v7223 = vpop.f32.mrf.mxu0
      %7224 = vmatprep.mubr.f32.mxu0 0.0
      %7225 = vmatmul.mubr.f32.gmra.mxu0 %v6908
      %v7226 = vpop.f32.mrf.mxu0
      %v7227 = vadd.f32 0.0, %v7226
      %v7228 = vpop.f32.mrf.mxu0
      %7229 = vmatprep.mubr.f32.mxu0 0.0
      %7230 = vmatmul.mubr.f32.gmra.mxu0 %v6910
      %v7231 = vpop.f32.mrf.mxu0
      %v7232 = vadd.f32 0.0, %v7231
      %v7233 = vpop.f32.mrf.mxu0
      %7234 = vmatprep.mubr.f32.mxu0 0.0
      %7235 = vmatmul.mubr.f32.gmra.mxu0 %v6912
      %v7236 = vpop.f32.mrf.mxu0
      %v7237 = vadd.f32 0.0, %v7236
      %v7238 = vpop.f32.mrf.mxu0
      %7239 = vmatprep.mubr.f32.mxu0 0.0
      %7240 = vmatmul.mubr.f32.gmra.mxu0 %v6914
      %v7241 = vpop.f32.mrf.mxu0
      %v7242 = vadd.f32 0.0, %v7241
      %v7243 = vpop.f32.mrf.mxu0
      %7244 = vmatprep.mubr.f32.mxu0 0.0
      %7245 = vmatmul.mubr.f32.gmra.mxu0 %v6916
      %v7246 = vpop.f32.mrf.mxu0
      %v7247 = vadd.f32 0.0, %v7246
      %v7248 = vpop.f32.mrf.mxu0
      %7249 = vmatprep.mubr.f32.mxu0 0.0
      %7250 = vmatmul.mubr.f32.gmra.mxu0 %v6918
      %v7251 = vpop.f32.mrf.mxu0
      %v7252 = vadd.f32 0.0, %v7251
      %v7253 = vpop.f32.mrf.mxu0
      %7254 = vmatprep.mubr.f32.mxu0 0.0
      %7255 = vmatmul.mubr.f32.gmra.mxu0 %v6920
      %v7256 = vpop.f32.mrf.mxu0
      %v7257 = vadd.f32 0.0, %v7256
      %v7258 = vpop.f32.mrf.mxu0
      %7259 = vmatprep.mubr.f32.mxu0 0.0
      %7260 = vmatmul.mubr.f32.gmra.mxu0 %v6922
      %v7261 = vpop.f32.mrf.mxu0
      %v7262 = vadd.f32 0.0, %v7261
      %v7263 = vpop.f32.mrf.mxu0
      %7264 = vmatprep.mubr.f32.mxu0 0.0
      %7265 = vmatmul.mubr.f32.gmra.mxu0 %v6924
      %v7266 = vpop.f32.mrf.mxu0
      %v7267 = vadd.f32 0.0, %v7266
      %v7268 = vpop.f32.mrf.mxu0
      %7269 = vmatprep.mubr.f32.mxu0 0.0
      %7270 = vmatmul.mubr.f32.gmra.mxu0 %v6926
      %v7271 = vpop.f32.mrf.mxu0
      %v7272 = vadd.f32 0.0, %v7271
      %v7273 = vpop.f32.mrf.mxu0
      %7274 = vmatprep.mubr.f32.mxu0 0.0
      %7275 = vmatmul.mubr.f32.gmra.mxu0 %v6928
      %v7276 = vpop.f32.mrf.mxu0
      %v7277 = vadd.f32 0.0, %v7276
      %v7278 = vpop.f32.mrf.mxu0
      %7279 = vmatprep.mubr.f32.mxu0 0.0
      %7280 = vmatmul.mubr.f32.gmra.mxu0 %v6930
      %v7281 = vpop.f32.mrf.mxu0
      %v7282 = vadd.f32 0.0, %v7281
      %v7283 = vpop.f32.mrf.mxu0
      %7284 = vmatprep.mubr.f32.mxu0 0.0
      %7285 = vmatmul.mubr.f32.gmra.mxu0 %v6932
      %v7286 = vpop.f32.mrf.mxu0
      %v7287 = vadd.f32 0.0, %v7286
      %v7288 = vpop.f32.mrf.mxu0
      %7289 = vmatprep.mubr.f32.mxu0 0.0
      %7290 = vmatmul.mubr.f32.gmra.mxu0 %v6934
      %v7291 = vpop.f32.mrf.mxu0
      %v7292 = vadd.f32 0.0, %v7291
      %v7293 = vpop.f32.mrf.mxu0
      %7294 = vmatprep.mubr.f32.mxu0 0.0
      %7295 = vmatmul.mubr.f32.gmra.mxu0 %v6936
      %v7296 = vpop.f32.mrf.mxu0
      %v7297 = vadd.f32 0.0, %v7296
      %v7298 = vpop.f32.mrf.mxu0
      %7299 = vmatprep.mubr.f32.mxu0 0.0
      %7300 = vmatmul.mubr.f32.gmra.mxu0 %v6938
      %v7301 = vpop.f32.mrf.mxu0
      %v7302 = vadd.f32 0.0, %v7301
      %v7303 = vpop.f32.mrf.mxu0
      %7304 = vmatprep.mubr.f32.mxu0 0.0
      %7305 = vmatmul.mubr.f32.gmra.mxu0 %v6940
      %v7306 = vpop.f32.mrf.mxu0
      %v7307 = vadd.f32 0.0, %v7306
      %v7308 = vpop.f32.mrf.mxu0
      %7309 = vmatprep.mubr.f32.mxu0 0.0
      %7310 = vmatmul.mubr.f32.gmra.mxu0 %v6942
      %v7311 = vpop.f32.mrf.mxu0
      %v7312 = vadd.f32 0.0, %v7311
      %v7313 = vpop.f32.mrf.mxu0
      %7314 = vmatprep.mubr.f32.mxu0 0.0
      %7315 = vmatmul.mubr.f32.gmra.mxu0 %v6944
      %v7316 = vpop.f32.mrf.mxu0
      %v7317 = vadd.f32 0.0, %v7316
      %v7318 = vpop.f32.mrf.mxu0
      %7319 = vmatprep.mubr.f32.mxu0 0.0
      %7320 = vmatmul.mubr.f32.gmra.mxu0 %v6946
      %v7321 = vpop.f32.mrf.mxu0
      %v7322 = vadd.f32 0.0, %v7321
      %v7323 = vpop.f32.mrf.mxu0
      %7324 = vmatprep.mubr.f32.mxu0 0.0
      %7325 = vmatmul.mubr.f32.gmra.mxu0 %v6948
      %v7326 = vpop.f32.mrf.mxu0
      %v7327 = vadd.f32 0.0, %v7326
      %v7328 = vpop.f32.mrf.mxu0
      %7329 = vmatprep.mubr.f32.mxu0 0.0
      %7330 = vmatmul.mubr.f32.gmra.mxu0 %v6950
      %v7331 = vpop.f32.mrf.mxu0
      %v7332 = vadd.f32 0.0, %v7331
      %v7333 = vpop.f32.mrf.mxu0
      %7334 = vmatprep.mubr.f32.mxu0 0.0
      %7335 = vmatmul.mubr.f32.gmra.mxu0 %v6952
      %v7336 = vpop.f32.mrf.mxu0
      %v7337 = vadd.f32 0.0, %v7336
      %v7338 = vpop.f32.mrf.mxu0
      %7339 = vmatprep.mubr.f32.mxu0 0.0
      %7340 = vmatmul.mubr.f32.gmra.mxu0 %v6954
      %v7341 = vpop.f32.mrf.mxu0
      %v7342 = vadd.f32 0.0, %v7341
      %v7343 = vpop.f32.mrf.mxu0
      %7344 = vmatprep.mubr.f32.mxu0 0.0
      %7345 = vmatmul.mubr.f32.gmra.mxu0 %v6956
      %v7346 = vpop.f32.mrf.mxu0
      %v7347 = vadd.f32 0.0, %v7346
      %v7348 = vpop.f32.mrf.mxu0
      %7349 = vmatprep.mubr.f32.mxu0 0.0
      %7350 = vmatmul.mubr.f32.gmra.mxu0 %v6958
      %v7351 = vpop.f32.mrf.mxu0
      %v7352 = vadd.f32 0.0, %v7351
      %v7353 = vpop.f32.mrf.mxu0
      %7354 = vmatprep.mubr.f32.mxu0 0.0
      %7355 = vmatmul.mubr.f32.gmra.mxu0 %v6960
      %v7356 = vpop.f32.mrf.mxu0
      %v7357 = vadd.f32 0.0, %v7356
      %v7358 = vpop.f32.mrf.mxu0
      %7359 = vmatprep.mubr.f32.mxu0 0.0
      %7360 = vmatmul.mubr.f32.gmra.mxu0 %v6962
      %v7361 = vpop.f32.mrf.mxu0
      %v7362 = vadd.f32 0.0, %v7361
      %v7363 = vpop.f32.mrf.mxu0
      %7364 = vmatprep.mubr.f32.mxu0 0.0
      %7365 = vmatmul.mubr.f32.gmra.mxu0 %v6964
      %v7366 = vpop.f32.mrf.mxu0
      %v7367 = vadd.f32 0.0, %v7366
      %v7368 = vpop.f32.mrf.mxu0
      %7369 = vmatprep.mubr.f32.mxu0 0.0
      %7370 = vmatmul.mubr.f32.gmra.mxu0 %v6966
      %v7371 = vpop.f32.mrf.mxu0
      %v7372 = vadd.f32 0.0, %v7371
      %v7373 = vpop.f32.mrf.mxu0
      %7374 = vmatprep.mubr.f32.mxu0 0.0
      %7375 = vmatmul.mubr.f32.gmra.mxu0 %v6968
      %v7376 = vpop.f32.mrf.mxu0
      %v7377 = vadd.f32 0.0, %v7376
      %v7378 = vpop.f32.mrf.mxu0
      %7379 = vmatprep.mubr.f32.mxu0 0.0
      %7380 = vmatmul.mubr.f32.gmra.mxu0 %v6970
      %v7381 = vpop.f32.mrf.mxu0
      %v7382 = vadd.f32 0.0, %v7381
      %v7383 = vpop.f32.mrf.mxu0
      %7384 = vmatprep.mubr.f32.mxu0 0.0
      %7385 = vmatmul.mubr.f32.gmra.mxu0 %v6972
      %v7386 = vpop.f32.mrf.mxu0
      %v7387 = vadd.f32 0.0, %v7386
      %v7388 = vpop.f32.mrf.mxu0
      %7389 = vmatprep.mubr.f32.mxu0 0.0
      %7390 = vmatmul.mubr.f32.gmra.mxu0 %v6974
      %v7391 = vpop.f32.mrf.mxu0
      %v7392 = vadd.f32 0.0, %v7391
      %v7393 = vpop.f32.mrf.mxu0
      %7394 = vmatprep.mubr.f32.mxu0 0.0
      %7395 = vmatmul.mubr.f32.gmra.mxu0 %v6976
      %v7396 = vpop.f32.mrf.mxu0
      %v7397 = vadd.f32 0.0, %v7396
      %v7398 = vpop.f32.mrf.mxu0
      %7399 = vmatprep.mubr.f32.mxu0 0.0
      %7400 = vmatmul.mubr.f32.gmra.mxu0 %v6978
      %v7401 = vpop.f32.mrf.mxu0
      %v7402 = vadd.f32 0.0, %v7401
      %v7403 = vpop.f32.mrf.mxu0
      %7404 = vdwg.mxu0
      %v7405 = vadd.f32 %v6308, %v7047
      %v7406 = vadd.f32 %v6313, %v7052
      %v7407 = vadd.f32 %v6318, %v7057
      %v7408 = vadd.f32 %v6323, %v7062
      %v7409 = vadd.f32 %v6328, %v7067
      %v7410 = vadd.f32 %v6333, %v7072
      %v7411 = vadd.f32 %v6338, %v7077
      %v7412 = vadd.f32 %v6343, %v7082
      %v7413 = vadd.f32 %v6348, %v7087
      %v7414 = vadd.f32 %v6353, %v7092
      %v7415 = vadd.f32 %v6358, %v7097
      %v7416 = vadd.f32 %v6363, %v7102
      %v7417 = vadd.f32 %v6368, %v7107
      %v7418 = vadd.f32 %v6373, %v7112
      %v7419 = vadd.f32 %v6378, %v7117
      %v7420 = vadd.f32 %v6383, %v7122
      %v7421 = vadd.f32 %v6388, %v7127
      %v7422 = vadd.f32 %v6393, %v7132
      %v7423 = vadd.f32 %v6398, %v7137
      %v7424 = vadd.f32 %v6403, %v7142
      %v7425 = vadd.f32 %v6408, %v7147
      %v7426 = vadd.f32 %v6413, %v7152
      %v7427 = vadd.f32 %v6418, %v7157
      %v7428 = vadd.f32 %v6423, %v7162
      %v7429 = vadd.f32 %v6428, %v7167
      %v7430 = vadd.f32 %v6433, %v7172
      %v7431 = vadd.f32 %v6438, %v7177
      %v7432 = vadd.f32 %v6443, %v7182
      %v7433 = vadd.f32 %v6448, %v7187
      %v7434 = vadd.f32 %v6453, %v7192
      %v7435 = vadd.f32 %v6458, %v7197
      %v7436 = vadd.f32 %v6463, %v7202
      %v7437 = vadd.f32 %v6468, %v7207
      %v7438 = vadd.f32 %v6473, %v7212
      %v7439 = vadd.f32 %v6478, %v7217
      %v7440 = vadd.f32 %v6483, %v7222
      %v7441 = vadd.f32 %v6488, %v7227
      %v7442 = vadd.f32 %v6493, %v7232
      %v7443 = vadd.f32 %v6498, %v7237
      %v7444 = vadd.f32 %v6503, %v7242
      %v7445 = vadd.f32 %v6508, %v7247
      %v7446 = vadd.f32 %v6513, %v7252
      %v7447 = vadd.f32 %v6518, %v7257
      %v7448 = vadd.f32 %v6523, %v7262
      %v7449 = vadd.f32 %v6528, %v7267
      %v7450 = vadd.f32 %v6533, %v7272
      %v7451 = vadd.f32 %v6538, %v7277
      %v7452 = vadd.f32 %v6543, %v7282
      %v7453 = vadd.f32 %v6548, %v7287
      %v7454 = vadd.f32 %v6553, %v7292
      %v7455 = vadd.f32 %v6558, %v7297
      %v7456 = vadd.f32 %v6563, %v7302
      %v7457 = vadd.f32 %v6568, %v7307
      %v7458 = vadd.f32 %v6573, %v7312
      %v7459 = vadd.f32 %v6578, %v7317
      %v7460 = vadd.f32 %v6583, %v7322
      %v7461 = vadd.f32 %v6588, %v7327
      %v7462 = vadd.f32 %v6593, %v7332
      %v7463 = vadd.f32 %v6598, %v7337
      %v7464 = vadd.f32 %v6603, %v7342
      %v7465 = vadd.f32 %v6608, %v7347
      %v7466 = vadd.f32 %v6613, %v7352
      %v7467 = vadd.f32 %v6618, %v7357
      %v7468 = vadd.f32 %v6623, %v7362
      %v7469 = vadd.f32 %v6628, %v7367
      %v7470 = vadd.f32 %v6633, %v7372
      %v7471 = vadd.f32 %v6638, %v7377
      %v7472 = vadd.f32 %v6643, %v7382
      %v7473 = vadd.f32 %v6648, %v7387
      %v7474 = vadd.f32 %v6653, %v7392
      %v7475 = vadd.f32 %v6658, %v7397
      %v7476 = vadd.f32 %v6663, %v7402
      %s7477 = scalar_lea.vmem %s3, 24
      %v7478 = vld [vmem:[%s7477] sm:$0xff]
      %v7480 = vsel %vm5527, %v5252, 0
      %v7483 = vsel %vm5527, %v5253, 0
      %v7486 = vsel %vm5527, %v5254, 0
      %7488 = vmatprep.subr.mxu0 0.0
      %7489 = vmatpush1.msra.mxu0 0.0
      %7490 = vmatprep.subr.mxu0 0.0
      %7491 = vmatpush1.msra.mxu0 0.0
      %7492 = vmatprep.subr.mxu0 0.0
      %7493 = vmatpush1.msra.mxu0 0.0
      %7494 = vmatprep.subr.mxu0 0.0
      %7495 = vmatpush1.msra.mxu0 0.0
      %7496 = vmatprep.subr.mxu0 0.0
      %7497 = vmatpush1.msra.mxu0 0.0
      %7498 = vmatprep.subr.mxu0 0.0
      %7499 = vmatpush1.msra.mxu0 0.0
      %7500 = vmatprep.subr.mxu0 0.0
      %7501 = vmatpush1.msra.mxu0 0.0
      %7502 = vmatprep.subr.mxu0 0.0
      %7503 = vmatpush1.msra.mxu0 0.0
      %7504 = vmatprep.subr.mxu0 0.0
      %7505 = vmatpush1.msra.mxu0 0.0
      %7506 = vmatprep.subr.mxu0 0.0
      %7507 = vmatpush1.msra.mxu0 0.0
      %7508 = vmatprep.subr.mxu0 0.0
      %7509 = vmatpush1.msra.mxu0 0.0
      %7510 = vmatprep.subr.mxu0 0.0
      %7511 = vmatpush1.msra.mxu0 0.0
      %7512 = vmatprep.subr.mxu0 0.0
      %7513 = vmatpush1.msra.mxu0 0.0
      %7514 = vmatprep.subr.mxu0 0.0
      %7515 = vmatpush1.msra.mxu0 0.0
      %7516 = vmatprep.subr.mxu0 0.0
      %7517 = vmatpush1.msra.mxu0 0.0
      %7518 = vmatprep.subr.mxu0 0.0
      %7519 = vmatpush1.msra.mxu0 %v7478
      %7520 = vmatprep.subr.mxu0 0.0
      %7521 = vmatpush2.msra.mxu0 0.0
      %7522 = vmatprep.subr.mxu0 0.0
      %7523 = vmatpush2.msra.mxu0 0.0
      %7524 = vmatprep.subr.mxu0 0.0
      %7525 = vmatpush2.msra.mxu0 0.0
      %7526 = vmatprep.subr.mxu0 0.0
      %7527 = vmatpush2.msra.mxu0 0.0
      %7528 = vmatprep.subr.mxu0 0.0
      %7529 = vmatpush2.msra.mxu0 0.0
      %7530 = vmatprep.subr.mxu0 0.0
      %7531 = vmatpush2.msra.mxu0 0.0
      %7532 = vmatprep.subr.mxu0 0.0
      %7533 = vmatpush2.msra.mxu0 0.0
      %7534 = vmatprep.subr.mxu0 0.0
      %7535 = vmatpush2.msra.mxu0 0.0
      %7536 = vmatprep.subr.mxu0 0.0
      %7537 = vmatpush2.msra.mxu0 0.0
      %7538 = vmatprep.subr.mxu0 0.0
      %7539 = vmatpush2.msra.mxu0 0.0
      %7540 = vmatprep.subr.mxu0 0.0
      %7541 = vmatpush2.msra.mxu0 0.0
      %7542 = vmatprep.subr.mxu0 0.0
      %7543 = vmatpush2.msra.mxu0 0.0
      %7544 = vmatprep.subr.mxu0 0.0
      %7545 = vmatpush2.msra.mxu0 0.0
      %7546 = vmatprep.subr.mxu0 0.0
      %7547 = vmatpush2.msra.mxu0 0.0
      %7548 = vmatprep.subr.mxu0 0.0
      %7549 = vmatpush2.msra.mxu0 0.0
      %7550 = vmatprep.subr.mxu0 0.0
      %7551 = vmatpush2.msra.mxu0 0.0
      %7552 = vmatprep.mubr.f32.mxu0 0.0
      %7553 = vmatmul.mubr.f32.gmra.mxu0 %v6103
      %v7554 = vpop.f32.mrf.mxu0
      %v7555 = vadd.f32 0.0, %v7554
      %v7556 = vpop.f32.mrf.mxu0
      %7557 = vmatprep.mubr.f32.mxu0 0.0
      %7558 = vmatmul.mubr.f32.gmra.mxu0 %v6105
      %v7559 = vpop.f32.mrf.mxu0
      %v7560 = vadd.f32 0.0, %v7559
      %v7561 = vpop.f32.mrf.mxu0
      %7562 = vmatprep.mubr.f32.mxu0 0.0
      %7563 = vmatmul.mubr.f32.gmra.mxu0 %v6107
      %v7564 = vpop.f32.mrf.mxu0
      %v7565 = vadd.f32 0.0, %v7564
      %v7566 = vpop.f32.mrf.mxu0
      %7567 = vmatprep.mubr.f32.mxu0 0.0
      %7568 = vmatmul.mubr.f32.gmra.mxu0 %v6109
      %v7569 = vpop.f32.mrf.mxu0
      %v7570 = vadd.f32 0.0, %v7569
      %v7571 = vpop.f32.mrf.mxu0
      %7572 = vmatprep.mubr.f32.mxu0 0.0
      %7573 = vmatmul.mubr.f32.gmra.mxu0 %v6111
      %v7574 = vpop.f32.mrf.mxu0
      %v7575 = vadd.f32 0.0, %v7574
      %v7576 = vpop.f32.mrf.mxu0
      %7577 = vmatprep.mubr.f32.mxu0 0.0
      %7578 = vmatmul.mubr.f32.gmra.mxu0 %v6113
      %v7579 = vpop.f32.mrf.mxu0
      %v7580 = vadd.f32 0.0, %v7579
      %v7581 = vpop.f32.mrf.mxu0
      %7582 = vmatprep.mubr.f32.mxu0 0.0
      %7583 = vmatmul.mubr.f32.gmra.mxu0 %v6115
      %v7584 = vpop.f32.mrf.mxu0
      %v7585 = vadd.f32 0.0, %v7584
      %v7586 = vpop.f32.mrf.mxu0
      %7587 = vmatprep.mubr.f32.mxu0 0.0
      %7588 = vmatmul.mubr.f32.gmra.mxu0 %v6117
      %v7589 = vpop.f32.mrf.mxu0
      %v7590 = vadd.f32 0.0, %v7589
      %v7591 = vpop.f32.mrf.mxu0
      %7592 = vmatprep.mubr.f32.mxu0 0.0
      %7593 = vmatmul.mubr.f32.gmra.mxu0 %v6119
      %v7594 = vpop.f32.mrf.mxu0
      %v7595 = vadd.f32 0.0, %v7594
      %v7596 = vpop.f32.mrf.mxu0
      %7597 = vmatprep.mubr.f32.mxu0 0.0
      %7598 = vmatmul.mubr.f32.gmra.mxu0 %v6121
      %v7599 = vpop.f32.mrf.mxu0
      %v7600 = vadd.f32 0.0, %v7599
      %v7601 = vpop.f32.mrf.mxu0
      %7602 = vmatprep.mubr.f32.mxu0 0.0
      %7603 = vmatmul.mubr.f32.gmra.mxu0 %v6123
      %v7604 = vpop.f32.mrf.mxu0
      %v7605 = vadd.f32 0.0, %v7604
      %v7606 = vpop.f32.mrf.mxu0
      %7607 = vmatprep.mubr.f32.mxu0 0.0
      %7608 = vmatmul.mubr.f32.gmra.mxu0 %v6125
      %v7609 = vpop.f32.mrf.mxu0
      %v7610 = vadd.f32 0.0, %v7609
      %v7611 = vpop.f32.mrf.mxu0
      %7612 = vmatprep.mubr.f32.mxu0 0.0
      %7613 = vmatmul.mubr.f32.gmra.mxu0 %v6127
      %v7614 = vpop.f32.mrf.mxu0
      %v7615 = vadd.f32 0.0, %v7614
      %v7616 = vpop.f32.mrf.mxu0
      %7617 = vmatprep.mubr.f32.mxu0 0.0
      %7618 = vmatmul.mubr.f32.gmra.mxu0 %v6129
      %v7619 = vpop.f32.mrf.mxu0
      %v7620 = vadd.f32 0.0, %v7619
      %v7621 = vpop.f32.mrf.mxu0
      %7622 = vmatprep.mubr.f32.mxu0 0.0
      %7623 = vmatmul.mubr.f32.gmra.mxu0 %v6131
      %v7624 = vpop.f32.mrf.mxu0
      %v7625 = vadd.f32 0.0, %v7624
      %v7626 = vpop.f32.mrf.mxu0
      %7627 = vmatprep.mubr.f32.mxu0 0.0
      %7628 = vmatmul.mubr.f32.gmra.mxu0 %v6133
      %v7629 = vpop.f32.mrf.mxu0
      %v7630 = vadd.f32 0.0, %v7629
      %v7631 = vpop.f32.mrf.mxu0
      %7632 = vmatprep.mubr.f32.mxu0 0.0
      %7633 = vmatmul.mubr.f32.gmra.mxu0 %v6135
      %v7634 = vpop.f32.mrf.mxu0
      %v7635 = vadd.f32 0.0, %v7634
      %v7636 = vpop.f32.mrf.mxu0
      %7637 = vmatprep.mubr.f32.mxu0 0.0
      %7638 = vmatmul.mubr.f32.gmra.mxu0 %v6137
      %v7639 = vpop.f32.mrf.mxu0
      %v7640 = vadd.f32 0.0, %v7639
      %v7641 = vpop.f32.mrf.mxu0
      %7642 = vmatprep.mubr.f32.mxu0 0.0
      %7643 = vmatmul.mubr.f32.gmra.mxu0 %v6139
      %v7644 = vpop.f32.mrf.mxu0
      %v7645 = vadd.f32 0.0, %v7644
      %v7646 = vpop.f32.mrf.mxu0
      %7647 = vmatprep.mubr.f32.mxu0 0.0
      %7648 = vmatmul.mubr.f32.gmra.mxu0 %v6141
      %v7649 = vpop.f32.mrf.mxu0
      %v7650 = vadd.f32 0.0, %v7649
      %v7651 = vpop.f32.mrf.mxu0
      %7652 = vmatprep.mubr.f32.mxu0 0.0
      %7653 = vmatmul.mubr.f32.gmra.mxu0 %v6143
      %v7654 = vpop.f32.mrf.mxu0
      %v7655 = vadd.f32 0.0, %v7654
      %v7656 = vpop.f32.mrf.mxu0
      %7657 = vmatprep.mubr.f32.mxu0 0.0
      %7658 = vmatmul.mubr.f32.gmra.mxu0 %v6145
      %v7659 = vpop.f32.mrf.mxu0
      %v7660 = vadd.f32 0.0, %v7659
      %v7661 = vpop.f32.mrf.mxu0
      %7662 = vmatprep.mubr.f32.mxu0 0.0
      %7663 = vmatmul.mubr.f32.gmra.mxu0 %v6147
      %v7664 = vpop.f32.mrf.mxu0
      %v7665 = vadd.f32 0.0, %v7664
      %v7666 = vpop.f32.mrf.mxu0
      %7667 = vmatprep.mubr.f32.mxu0 0.0
      %7668 = vmatmul.mubr.f32.gmra.mxu0 %v6149
      %v7669 = vpop.f32.mrf.mxu0
      %v7670 = vadd.f32 0.0, %v7669
      %v7671 = vpop.f32.mrf.mxu0
      %7672 = vmatprep.mubr.f32.mxu0 0.0
      %7673 = vmatmul.mubr.f32.gmra.mxu0 %v6151
      %v7674 = vpop.f32.mrf.mxu0
      %v7675 = vadd.f32 0.0, %v7674
      %v7676 = vpop.f32.mrf.mxu0
      %7677 = vmatprep.mubr.f32.mxu0 0.0
      %7678 = vmatmul.mubr.f32.gmra.mxu0 %v6153
      %v7679 = vpop.f32.mrf.mxu0
      %v7680 = vadd.f32 0.0, %v7679
      %v7681 = vpop.f32.mrf.mxu0
      %7682 = vmatprep.mubr.f32.mxu0 0.0
      %7683 = vmatmul.mubr.f32.gmra.mxu0 %v6155
      %v7684 = vpop.f32.mrf.mxu0
      %v7685 = vadd.f32 0.0, %v7684
      %v7686 = vpop.f32.mrf.mxu0
      %7687 = vmatprep.mubr.f32.mxu0 0.0
      %7688 = vmatmul.mubr.f32.gmra.mxu0 %v6157
      %v7689 = vpop.f32.mrf.mxu0
      %v7690 = vadd.f32 0.0, %v7689
      %v7691 = vpop.f32.mrf.mxu0
      %7692 = vmatprep.mubr.f32.mxu0 0.0
      %7693 = vmatmul.mubr.f32.gmra.mxu0 %v6159
      %v7694 = vpop.f32.mrf.mxu0
      %v7695 = vadd.f32 0.0, %v7694
      %v7696 = vpop.f32.mrf.mxu0
      %7697 = vmatprep.mubr.f32.mxu0 0.0
      %7698 = vmatmul.mubr.f32.gmra.mxu0 %v6161
      %v7699 = vpop.f32.mrf.mxu0
      %v7700 = vadd.f32 0.0, %v7699
      %v7701 = vpop.f32.mrf.mxu0
      %7702 = vmatprep.mubr.f32.mxu0 0.0
      %7703 = vmatmul.mubr.f32.gmra.mxu0 %v6163
      %v7704 = vpop.f32.mrf.mxu0
      %v7705 = vadd.f32 0.0, %v7704
      %v7706 = vpop.f32.mrf.mxu0
      %7707 = vmatprep.mubr.f32.mxu0 0.0
      %7708 = vmatmul.mubr.f32.gmra.mxu0 %v6165
      %v7709 = vpop.f32.mrf.mxu0
      %v7710 = vadd.f32 0.0, %v7709
      %v7711 = vpop.f32.mrf.mxu0
      %7712 = vmatprep.mubr.f32.mxu0 0.0
      %7713 = vmatmul.mubr.f32.gmra.mxu0 %v6167
      %v7714 = vpop.f32.mrf.mxu0
      %v7715 = vadd.f32 0.0, %v7714
      %v7716 = vpop.f32.mrf.mxu0
      %7717 = vmatprep.mubr.f32.mxu0 0.0
      %7718 = vmatmul.mubr.f32.gmra.mxu0 %v6169
      %v7719 = vpop.f32.mrf.mxu0
      %v7720 = vadd.f32 0.0, %v7719
      %v7721 = vpop.f32.mrf.mxu0
      %7722 = vmatprep.mubr.f32.mxu0 0.0
      %7723 = vmatmul.mubr.f32.gmra.mxu0 %v6171
      %v7724 = vpop.f32.mrf.mxu0
      %v7725 = vadd.f32 0.0, %v7724
      %v7726 = vpop.f32.mrf.mxu0
      %7727 = vmatprep.mubr.f32.mxu0 0.0
      %7728 = vmatmul.mubr.f32.gmra.mxu0 %v6173
      %v7729 = vpop.f32.mrf.mxu0
      %v7730 = vadd.f32 0.0, %v7729
      %v7731 = vpop.f32.mrf.mxu0
      %7732 = vmatprep.mubr.f32.mxu0 0.0
      %7733 = vmatmul.mubr.f32.gmra.mxu0 %v6175
      %v7734 = vpop.f32.mrf.mxu0
      %v7735 = vadd.f32 0.0, %v7734
      %v7736 = vpop.f32.mrf.mxu0
      %7737 = vmatprep.mubr.f32.mxu0 0.0
      %7738 = vmatmul.mubr.f32.gmra.mxu0 %v6177
      %v7739 = vpop.f32.mrf.mxu0
      %v7740 = vadd.f32 0.0, %v7739
      %v7741 = vpop.f32.mrf.mxu0
      %7742 = vmatprep.mubr.f32.mxu0 0.0
      %7743 = vmatmul.mubr.f32.gmra.mxu0 %v6179
      %v7744 = vpop.f32.mrf.mxu0
      %v7745 = vadd.f32 0.0, %v7744
      %v7746 = vpop.f32.mrf.mxu0
      %7747 = vmatprep.mubr.f32.mxu0 0.0
      %7748 = vmatmul.mubr.f32.gmra.mxu0 %v6181
      %v7749 = vpop.f32.mrf.mxu0
      %v7750 = vadd.f32 0.0, %v7749
      %v7751 = vpop.f32.mrf.mxu0
      %7752 = vmatprep.mubr.f32.mxu0 0.0
      %7753 = vmatmul.mubr.f32.gmra.mxu0 %v6183
      %v7754 = vpop.f32.mrf.mxu0
      %v7755 = vadd.f32 0.0, %v7754
      %v7756 = vpop.f32.mrf.mxu0
      %7757 = vmatprep.mubr.f32.mxu0 0.0
      %7758 = vmatmul.mubr.f32.gmra.mxu0 %v6185
      %v7759 = vpop.f32.mrf.mxu0
      %v7760 = vadd.f32 0.0, %v7759
      %v7761 = vpop.f32.mrf.mxu0
      %7762 = vmatprep.mubr.f32.mxu0 0.0
      %7763 = vmatmul.mubr.f32.gmra.mxu0 %v6187
      %v7764 = vpop.f32.mrf.mxu0
      %v7765 = vadd.f32 0.0, %v7764
      %v7766 = vpop.f32.mrf.mxu0
      %7767 = vmatprep.mubr.f32.mxu0 0.0
      %7768 = vmatmul.mubr.f32.gmra.mxu0 %v6189
      %v7769 = vpop.f32.mrf.mxu0
      %v7770 = vadd.f32 0.0, %v7769
      %v7771 = vpop.f32.mrf.mxu0
      %7772 = vmatprep.mubr.f32.mxu0 0.0
      %7773 = vmatmul.mubr.f32.gmra.mxu0 %v6191
      %v7774 = vpop.f32.mrf.mxu0
      %v7775 = vadd.f32 0.0, %v7774
      %v7776 = vpop.f32.mrf.mxu0
      %7777 = vmatprep.mubr.f32.mxu0 0.0
      %7778 = vmatmul.mubr.f32.gmra.mxu0 %v6193
      %v7779 = vpop.f32.mrf.mxu0
      %v7780 = vadd.f32 0.0, %v7779
      %v7781 = vpop.f32.mrf.mxu0
      %7782 = vmatprep.mubr.f32.mxu0 0.0
      %7783 = vmatmul.mubr.f32.gmra.mxu0 %v6195
      %v7784 = vpop.f32.mrf.mxu0
      %v7785 = vadd.f32 0.0, %v7784
      %v7786 = vpop.f32.mrf.mxu0
      %7787 = vmatprep.mubr.f32.mxu0 0.0
      %7788 = vmatmul.mubr.f32.gmra.mxu0 %v6197
      %v7789 = vpop.f32.mrf.mxu0
      %v7790 = vadd.f32 0.0, %v7789
      %v7791 = vpop.f32.mrf.mxu0
      %7792 = vmatprep.mubr.f32.mxu0 0.0
      %7793 = vmatmul.mubr.f32.gmra.mxu0 %v6199
      %v7794 = vpop.f32.mrf.mxu0
      %v7795 = vadd.f32 0.0, %v7794
      %v7796 = vpop.f32.mrf.mxu0
      %7797 = vmatprep.mubr.f32.mxu0 0.0
      %7798 = vmatmul.mubr.f32.gmra.mxu0 %v6201
      %v7799 = vpop.f32.mrf.mxu0
      %v7800 = vadd.f32 0.0, %v7799
      %v7801 = vpop.f32.mrf.mxu0
      %7802 = vmatprep.mubr.f32.mxu0 0.0
      %7803 = vmatmul.mubr.f32.gmra.mxu0 %v6203
      %v7804 = vpop.f32.mrf.mxu0
      %v7805 = vadd.f32 0.0, %v7804
      %v7806 = vpop.f32.mrf.mxu0
      %7807 = vmatprep.mubr.f32.mxu0 0.0
      %7808 = vmatmul.mubr.f32.gmra.mxu0 %v6205
      %v7809 = vpop.f32.mrf.mxu0
      %v7810 = vadd.f32 0.0, %v7809
      %v7811 = vpop.f32.mrf.mxu0
      %7812 = vmatprep.mubr.f32.mxu0 0.0
      %7813 = vmatmul.mubr.f32.gmra.mxu0 %v6207
      %v7814 = vpop.f32.mrf.mxu0
      %v7815 = vadd.f32 0.0, %v7814
      %v7816 = vpop.f32.mrf.mxu0
      %7817 = vmatprep.mubr.f32.mxu0 0.0
      %7818 = vmatmul.mubr.f32.gmra.mxu0 %v6209
      %v7819 = vpop.f32.mrf.mxu0
      %v7820 = vadd.f32 0.0, %v7819
      %v7821 = vpop.f32.mrf.mxu0
      %7822 = vmatprep.mubr.f32.mxu0 0.0
      %7823 = vmatmul.mubr.f32.gmra.mxu0 %v6211
      %v7824 = vpop.f32.mrf.mxu0
      %v7825 = vadd.f32 0.0, %v7824
      %v7826 = vpop.f32.mrf.mxu0
      %7827 = vmatprep.mubr.f32.mxu0 0.0
      %7828 = vmatmul.mubr.f32.gmra.mxu0 %v6213
      %v7829 = vpop.f32.mrf.mxu0
      %v7830 = vadd.f32 0.0, %v7829
      %v7831 = vpop.f32.mrf.mxu0
      %7832 = vmatprep.mubr.f32.mxu0 0.0
      %7833 = vmatmul.mubr.f32.gmra.mxu0 %v6215
      %v7834 = vpop.f32.mrf.mxu0
      %v7835 = vadd.f32 0.0, %v7834
      %v7836 = vpop.f32.mrf.mxu0
      %7837 = vmatprep.mubr.f32.mxu0 0.0
      %7838 = vmatmul.mubr.f32.gmra.mxu0 %v6217
      %v7839 = vpop.f32.mrf.mxu0
      %v7840 = vadd.f32 0.0, %v7839
      %v7841 = vpop.f32.mrf.mxu0
      %7842 = vmatprep.mubr.f32.mxu0 0.0
      %7843 = vmatmul.mubr.f32.gmra.mxu0 %v6219
      %v7844 = vpop.f32.mrf.mxu0
      %v7845 = vadd.f32 0.0, %v7844
      %v7846 = vpop.f32.mrf.mxu0
      %7847 = vmatprep.mubr.f32.mxu0 0.0
      %7848 = vmatmul.mubr.f32.gmra.mxu0 %v6221
      %v7849 = vpop.f32.mrf.mxu0
      %v7850 = vadd.f32 0.0, %v7849
      %v7851 = vpop.f32.mrf.mxu0
      %7852 = vmatprep.mubr.f32.mxu0 0.0
      %7853 = vmatmul.mubr.f32.gmra.mxu0 %v6223
      %v7854 = vpop.f32.mrf.mxu0
      %v7855 = vadd.f32 0.0, %v7854
      %v7856 = vpop.f32.mrf.mxu0
      %7857 = vmatprep.mubr.f32.mxu0 0.0
      %7858 = vmatmul.mubr.f32.gmra.mxu0 %v6225
      %v7859 = vpop.f32.mrf.mxu0
      %v7860 = vadd.f32 0.0, %v7859
      %v7861 = vpop.f32.mrf.mxu0
      %7862 = vmatprep.mubr.f32.mxu0 0.0
      %7863 = vmatmul.mubr.f32.gmra.mxu0 %v6227
      %v7864 = vpop.f32.mrf.mxu0
      %v7865 = vadd.f32 0.0, %v7864
      %v7866 = vpop.f32.mrf.mxu0
      %7867 = vmatprep.mubr.f32.mxu0 0.0
      %7868 = vmatmul.mubr.f32.gmra.mxu0 %v6229
      %v7869 = vpop.f32.mrf.mxu0
      %v7870 = vadd.f32 0.0, %v7869
      %v7871 = vpop.f32.mrf.mxu0
      %7872 = vmatprep.mubr.f32.mxu0 0.0
      %7873 = vmatmul.mubr.f32.gmra.mxu0 %v6231
      %v7874 = vpop.f32.mrf.mxu0
      %v7875 = vadd.f32 0.0, %v7874
      %v7876 = vpop.f32.mrf.mxu0
      %7877 = vmatprep.mubr.f32.mxu0 0.0
      %7878 = vmatmul.mubr.f32.gmra.mxu0 %v6233
      %v7879 = vpop.f32.mrf.mxu0
      %v7880 = vadd.f32 0.0, %v7879
      %v7881 = vpop.f32.mrf.mxu0
      %7882 = vmatprep.mubr.f32.mxu0 0.0
      %7883 = vmatmul.mubr.f32.gmra.mxu0 %v6235
      %v7884 = vpop.f32.mrf.mxu0
      %v7885 = vadd.f32 0.0, %v7884
      %v7886 = vpop.f32.mrf.mxu0
      %7887 = vmatprep.mubr.f32.mxu0 0.0
      %7888 = vmatmul.mubr.f32.gmra.mxu0 %v6237
      %v7889 = vpop.f32.mrf.mxu0
      %v7890 = vadd.f32 0.0, %v7889
      %v7891 = vpop.f32.mrf.mxu0
      %7892 = vmatprep.mubr.f32.mxu0 0.0
      %7893 = vmatmul.mubr.f32.gmra.mxu0 %v6239
      %v7894 = vpop.f32.mrf.mxu0
      %v7895 = vadd.f32 0.0, %v7894
      %v7896 = vpop.f32.mrf.mxu0
      %7897 = vmatprep.mubr.f32.mxu0 0.0
      %7898 = vmatmul.mubr.f32.gmra.mxu0 %v7480
      %v7899 = vpop.f32.mrf.mxu0
      %v7900 = vadd.f32 0.0, %v7899
      %v7901 = vpop.f32.mrf.mxu0
      %7902 = vmatprep.mubr.f32.mxu0 0.0
      %7903 = vmatmul.mubr.f32.gmra.mxu0 %v7483
      %v7904 = vpop.f32.mrf.mxu0
      %v7905 = vadd.f32 0.0, %v7904
      %v7906 = vpop.f32.mrf.mxu0
      %7907 = vmatprep.mubr.f32.mxu0 0.0
      %7908 = vmatmul.mubr.f32.gmra.mxu0 %v7486
      %v7909 = vpop.f32.mrf.mxu0
      %v7910 = vadd.f32 0.0, %v7909
      %v7911 = vpop.f32.mrf.mxu0
      %7912 = vdwg.mxu0
      %v7913 = vadd.f32 %v7405, %v7555
      %v7914 = vadd.f32 %v7406, %v7560
      %v7915 = vadd.f32 %v7407, %v7565
      %v7916 = vadd.f32 %v7408, %v7570
      %v7917 = vadd.f32 %v7409, %v7575
      %v7918 = vadd.f32 %v7410, %v7580
      %v7919 = vadd.f32 %v7411, %v7585
      %v7920 = vadd.f32 %v7412, %v7590
      %v7921 = vadd.f32 %v7413, %v7595
      %v7922 = vadd.f32 %v7414, %v7600
      %v7923 = vadd.f32 %v7415, %v7605
      %v7924 = vadd.f32 %v7416, %v7610
      %v7925 = vadd.f32 %v7417, %v7615
      %v7926 = vadd.f32 %v7418, %v7620
      %v7927 = vadd.f32 %v7419, %v7625
      %v7928 = vadd.f32 %v7420, %v7630
      %v7929 = vadd.f32 %v7421, %v7635
      %v7930 = vadd.f32 %v7422, %v7640
      %v7931 = vadd.f32 %v7423, %v7645
      %v7932 = vadd.f32 %v7424, %v7650
      %v7933 = vadd.f32 %v7425, %v7655
      %v7934 = vadd.f32 %v7426, %v7660
      %v7935 = vadd.f32 %v7427, %v7665
      %v7936 = vadd.f32 %v7428, %v7670
      %v7937 = vadd.f32 %v7429, %v7675
      %v7938 = vadd.f32 %v7430, %v7680
      %v7939 = vadd.f32 %v7431, %v7685
      %v7940 = vadd.f32 %v7432, %v7690
      %v7941 = vadd.f32 %v7433, %v7695
      %v7942 = vadd.f32 %v7434, %v7700
      %v7943 = vadd.f32 %v7435, %v7705
      %v7944 = vadd.f32 %v7436, %v7710
      %v7945 = vadd.f32 %v7437, %v7715
      %v7946 = vadd.f32 %v7438, %v7720
      %v7947 = vadd.f32 %v7439, %v7725
      %v7948 = vadd.f32 %v7440, %v7730
      %v7949 = vadd.f32 %v7441, %v7735
      %v7950 = vadd.f32 %v7442, %v7740
      %v7951 = vadd.f32 %v7443, %v7745
      %v7952 = vadd.f32 %v7444, %v7750
      %v7953 = vadd.f32 %v7445, %v7755
      %v7954 = vadd.f32 %v7446, %v7760
      %v7955 = vadd.f32 %v7447, %v7765
      %v7956 = vadd.f32 %v7448, %v7770
      %v7957 = vadd.f32 %v7449, %v7775
      %v7958 = vadd.f32 %v7450, %v7780
      %v7959 = vadd.f32 %v7451, %v7785
      %v7960 = vadd.f32 %v7452, %v7790
      %v7961 = vadd.f32 %v7453, %v7795
      %v7962 = vadd.f32 %v7454, %v7800
      %v7963 = vadd.f32 %v7455, %v7805
      %v7964 = vadd.f32 %v7456, %v7810
      %v7965 = vadd.f32 %v7457, %v7815
      %v7966 = vadd.f32 %v7458, %v7820
      %v7967 = vadd.f32 %v7459, %v7825
      %v7968 = vadd.f32 %v7460, %v7830
      %v7969 = vadd.f32 %v7461, %v7835
      %v7970 = vadd.f32 %v7462, %v7840
      %v7971 = vadd.f32 %v7463, %v7845
      %v7972 = vadd.f32 %v7464, %v7850
      %v7973 = vadd.f32 %v7465, %v7855
      %v7974 = vadd.f32 %v7466, %v7860
      %v7975 = vadd.f32 %v7467, %v7865
      %v7976 = vadd.f32 %v7468, %v7870
      %v7977 = vadd.f32 %v7469, %v7875
      %v7978 = vadd.f32 %v7470, %v7880
      %v7979 = vadd.f32 %v7471, %v7885
      %v7980 = vadd.f32 %v7472, %v7890
      %v7981 = vadd.f32 %v7473, %v7895
      %v7982 = vadd.f32 %v7474, %v7900
      %v7983 = vadd.f32 %v7475, %v7905
      %v7984 = vadd.f32 %v7476, %v7910
      %v7986 = vrot.slane %v5252, 1
      %v7987 = vrot.slane %v5253, 1
      %v7988 = vsel %vm1179, %v7986, %v7987
      %v7989 = vrot.slane %v5254, 1
      %v7990 = vsel %vm1179, %v7987, %v7989
      %v7991 = vrot.slane %v5255, 1
      %v7992 = vsel %vm1179, %v7989, %v7991
      %s7993 = scalar_lea.vmem %s3, 32
      %v7994 = vld [vmem:[%s7993] sm:$0xff]
      %v7995 = vsel %vm5527, %v7988, 0
      %v7997 = vsel %vm5527, %v7990, 0
      %v7999 = vsel %vm5527, %v7992, 0
      %8001 = vmatprep.subr.mxu0 0.0
      %8002 = vmatpush1.msra.mxu0 0.0
      %8003 = vmatprep.subr.mxu0 0.0
      %8004 = vmatpush1.msra.mxu0 0.0
      %8005 = vmatprep.subr.mxu0 0.0
      %8006 = vmatpush1.msra.mxu0 0.0
      %8007 = vmatprep.subr.mxu0 0.0
      %8008 = vmatpush1.msra.mxu0 0.0
      %8009 = vmatprep.subr.mxu0 0.0
      %8010 = vmatpush1.msra.mxu0 0.0
      %8011 = vmatprep.subr.mxu0 0.0
      %8012 = vmatpush1.msra.mxu0 0.0
      %8013 = vmatprep.subr.mxu0 0.0
      %8014 = vmatpush1.msra.mxu0 0.0
      %8015 = vmatprep.subr.mxu0 0.0
      %8016 = vmatpush1.msra.mxu0 0.0
      %8017 = vmatprep.subr.mxu0 0.0
      %8018 = vmatpush1.msra.mxu0 0.0
      %8019 = vmatprep.subr.mxu0 0.0
      %8020 = vmatpush1.msra.mxu0 0.0
      %8021 = vmatprep.subr.mxu0 0.0
      %8022 = vmatpush1.msra.mxu0 0.0
      %8023 = vmatprep.subr.mxu0 0.0
      %8024 = vmatpush1.msra.mxu0 0.0
      %8025 = vmatprep.subr.mxu0 0.0
      %8026 = vmatpush1.msra.mxu0 0.0
      %8027 = vmatprep.subr.mxu0 0.0
      %8028 = vmatpush1.msra.mxu0 0.0
      %8029 = vmatprep.subr.mxu0 0.0
      %8030 = vmatpush1.msra.mxu0 0.0
      %8031 = vmatprep.subr.mxu0 0.0
      %8032 = vmatpush1.msra.mxu0 %v7994
      %8033 = vmatprep.subr.mxu0 0.0
      %8034 = vmatpush2.msra.mxu0 0.0
      %8035 = vmatprep.subr.mxu0 0.0
      %8036 = vmatpush2.msra.mxu0 0.0
      %8037 = vmatprep.subr.mxu0 0.0
      %8038 = vmatpush2.msra.mxu0 0.0
      %8039 = vmatprep.subr.mxu0 0.0
      %8040 = vmatpush2.msra.mxu0 0.0
      %8041 = vmatprep.subr.mxu0 0.0
      %8042 = vmatpush2.msra.mxu0 0.0
      %8043 = vmatprep.subr.mxu0 0.0
      %8044 = vmatpush2.msra.mxu0 0.0
      %8045 = vmatprep.subr.mxu0 0.0
      %8046 = vmatpush2.msra.mxu0 0.0
      %8047 = vmatprep.subr.mxu0 0.0
      %8048 = vmatpush2.msra.mxu0 0.0
      %8049 = vmatprep.subr.mxu0 0.0
      %8050 = vmatpush2.msra.mxu0 0.0
      %8051 = vmatprep.subr.mxu0 0.0
      %8052 = vmatpush2.msra.mxu0 0.0
      %8053 = vmatprep.subr.mxu0 0.0
      %8054 = vmatpush2.msra.mxu0 0.0
      %8055 = vmatprep.subr.mxu0 0.0
      %8056 = vmatpush2.msra.mxu0 0.0
      %8057 = vmatprep.subr.mxu0 0.0
      %8058 = vmatpush2.msra.mxu0 0.0
      %8059 = vmatprep.subr.mxu0 0.0
      %8060 = vmatpush2.msra.mxu0 0.0
      %8061 = vmatprep.subr.mxu0 0.0
      %8062 = vmatpush2.msra.mxu0 0.0
      %8063 = vmatprep.subr.mxu0 0.0
      %8064 = vmatpush2.msra.mxu0 0.0
      %8065 = vmatprep.mubr.f32.mxu0 0.0
      %8066 = vmatmul.mubr.f32.gmra.mxu0 %v5534
      %v8067 = vpop.f32.mrf.mxu0
      %v8068 = vadd.f32 0.0, %v8067
      %v8069 = vpop.f32.mrf.mxu0
      %8070 = vmatprep.mubr.f32.mxu0 0.0
      %8071 = vmatmul.mubr.f32.gmra.mxu0 %v5536
      %v8072 = vpop.f32.mrf.mxu0
      %v8073 = vadd.f32 0.0, %v8072
      %v8074 = vpop.f32.mrf.mxu0
      %8075 = vmatprep.mubr.f32.mxu0 0.0
      %8076 = vmatmul.mubr.f32.gmra.mxu0 %v5538
      %v8077 = vpop.f32.mrf.mxu0
      %v8078 = vadd.f32 0.0, %v8077
      %v8079 = vpop.f32.mrf.mxu0
      %8080 = vmatprep.mubr.f32.mxu0 0.0
      %8081 = vmatmul.mubr.f32.gmra.mxu0 %v5540
      %v8082 = vpop.f32.mrf.mxu0
      %v8083 = vadd.f32 0.0, %v8082
      %v8084 = vpop.f32.mrf.mxu0
      %8085 = vmatprep.mubr.f32.mxu0 0.0
      %8086 = vmatmul.mubr.f32.gmra.mxu0 %v5542
      %v8087 = vpop.f32.mrf.mxu0
      %v8088 = vadd.f32 0.0, %v8087
      %v8089 = vpop.f32.mrf.mxu0
      %8090 = vmatprep.mubr.f32.mxu0 0.0
      %8091 = vmatmul.mubr.f32.gmra.mxu0 %v5544
      %v8092 = vpop.f32.mrf.mxu0
      %v8093 = vadd.f32 0.0, %v8092
      %v8094 = vpop.f32.mrf.mxu0
      %8095 = vmatprep.mubr.f32.mxu0 0.0
      %8096 = vmatmul.mubr.f32.gmra.mxu0 %v5546
      %v8097 = vpop.f32.mrf.mxu0
      %v8098 = vadd.f32 0.0, %v8097
      %v8099 = vpop.f32.mrf.mxu0
      %8100 = vmatprep.mubr.f32.mxu0 0.0
      %8101 = vmatmul.mubr.f32.gmra.mxu0 %v5548
      %v8102 = vpop.f32.mrf.mxu0
      %v8103 = vadd.f32 0.0, %v8102
      %v8104 = vpop.f32.mrf.mxu0
      %8105 = vmatprep.mubr.f32.mxu0 0.0
      %8106 = vmatmul.mubr.f32.gmra.mxu0 %v5550
      %v8107 = vpop.f32.mrf.mxu0
      %v8108 = vadd.f32 0.0, %v8107
      %v8109 = vpop.f32.mrf.mxu0
      %8110 = vmatprep.mubr.f32.mxu0 0.0
      %8111 = vmatmul.mubr.f32.gmra.mxu0 %v5552
      %v8112 = vpop.f32.mrf.mxu0
      %v8113 = vadd.f32 0.0, %v8112
      %v8114 = vpop.f32.mrf.mxu0
      %8115 = vmatprep.mubr.f32.mxu0 0.0
      %8116 = vmatmul.mubr.f32.gmra.mxu0 %v5554
      %v8117 = vpop.f32.mrf.mxu0
      %v8118 = vadd.f32 0.0, %v8117
      %v8119 = vpop.f32.mrf.mxu0
      %8120 = vmatprep.mubr.f32.mxu0 0.0
      %8121 = vmatmul.mubr.f32.gmra.mxu0 %v5556
      %v8122 = vpop.f32.mrf.mxu0
      %v8123 = vadd.f32 0.0, %v8122
      %v8124 = vpop.f32.mrf.mxu0
      %8125 = vmatprep.mubr.f32.mxu0 0.0
      %8126 = vmatmul.mubr.f32.gmra.mxu0 %v5558
      %v8127 = vpop.f32.mrf.mxu0
      %v8128 = vadd.f32 0.0, %v8127
      %v8129 = vpop.f32.mrf.mxu0
      %8130 = vmatprep.mubr.f32.mxu0 0.0
      %8131 = vmatmul.mubr.f32.gmra.mxu0 %v5560
      %v8132 = vpop.f32.mrf.mxu0
      %v8133 = vadd.f32 0.0, %v8132
      %v8134 = vpop.f32.mrf.mxu0
      %8135 = vmatprep.mubr.f32.mxu0 0.0
      %8136 = vmatmul.mubr.f32.gmra.mxu0 %v5562
      %v8137 = vpop.f32.mrf.mxu0
      %v8138 = vadd.f32 0.0, %v8137
      %v8139 = vpop.f32.mrf.mxu0
      %8140 = vmatprep.mubr.f32.mxu0 0.0
      %8141 = vmatmul.mubr.f32.gmra.mxu0 %v5564
      %v8142 = vpop.f32.mrf.mxu0
      %v8143 = vadd.f32 0.0, %v8142
      %v8144 = vpop.f32.mrf.mxu0
      %8145 = vmatprep.mubr.f32.mxu0 0.0
      %8146 = vmatmul.mubr.f32.gmra.mxu0 %v5566
      %v8147 = vpop.f32.mrf.mxu0
      %v8148 = vadd.f32 0.0, %v8147
      %v8149 = vpop.f32.mrf.mxu0
      %8150 = vmatprep.mubr.f32.mxu0 0.0
      %8151 = vmatmul.mubr.f32.gmra.mxu0 %v5568
      %v8152 = vpop.f32.mrf.mxu0
      %v8153 = vadd.f32 0.0, %v8152
      %v8154 = vpop.f32.mrf.mxu0
      %8155 = vmatprep.mubr.f32.mxu0 0.0
      %8156 = vmatmul.mubr.f32.gmra.mxu0 %v5570
      %v8157 = vpop.f32.mrf.mxu0
      %v8158 = vadd.f32 0.0, %v8157
      %v8159 = vpop.f32.mrf.mxu0
      %8160 = vmatprep.mubr.f32.mxu0 0.0
      %8161 = vmatmul.mubr.f32.gmra.mxu0 %v5572
      %v8162 = vpop.f32.mrf.mxu0
      %v8163 = vadd.f32 0.0, %v8162
      %v8164 = vpop.f32.mrf.mxu0
      %8165 = vmatprep.mubr.f32.mxu0 0.0
      %8166 = vmatmul.mubr.f32.gmra.mxu0 %v5574
      %v8167 = vpop.f32.mrf.mxu0
      %v8168 = vadd.f32 0.0, %v8167
      %v8169 = vpop.f32.mrf.mxu0
      %8170 = vmatprep.mubr.f32.mxu0 0.0
      %8171 = vmatmul.mubr.f32.gmra.mxu0 %v5576
      %v8172 = vpop.f32.mrf.mxu0
      %v8173 = vadd.f32 0.0, %v8172
      %v8174 = vpop.f32.mrf.mxu0
      %8175 = vmatprep.mubr.f32.mxu0 0.0
      %8176 = vmatmul.mubr.f32.gmra.mxu0 %v5578
      %v8177 = vpop.f32.mrf.mxu0
      %v8178 = vadd.f32 0.0, %v8177
      %v8179 = vpop.f32.mrf.mxu0
      %8180 = vmatprep.mubr.f32.mxu0 0.0
      %8181 = vmatmul.mubr.f32.gmra.mxu0 %v5580
      %v8182 = vpop.f32.mrf.mxu0
      %v8183 = vadd.f32 0.0, %v8182
      %v8184 = vpop.f32.mrf.mxu0
      %8185 = vmatprep.mubr.f32.mxu0 0.0
      %8186 = vmatmul.mubr.f32.gmra.mxu0 %v5582
      %v8187 = vpop.f32.mrf.mxu0
      %v8188 = vadd.f32 0.0, %v8187
      %v8189 = vpop.f32.mrf.mxu0
      %8190 = vmatprep.mubr.f32.mxu0 0.0
      %8191 = vmatmul.mubr.f32.gmra.mxu0 %v5584
      %v8192 = vpop.f32.mrf.mxu0
      %v8193 = vadd.f32 0.0, %v8192
      %v8194 = vpop.f32.mrf.mxu0
      %8195 = vmatprep.mubr.f32.mxu0 0.0
      %8196 = vmatmul.mubr.f32.gmra.mxu0 %v5586
      %v8197 = vpop.f32.mrf.mxu0
      %v8198 = vadd.f32 0.0, %v8197
      %v8199 = vpop.f32.mrf.mxu0
      %8200 = vmatprep.mubr.f32.mxu0 0.0
      %8201 = vmatmul.mubr.f32.gmra.mxu0 %v5588
      %v8202 = vpop.f32.mrf.mxu0
      %v8203 = vadd.f32 0.0, %v8202
      %v8204 = vpop.f32.mrf.mxu0
      %8205 = vmatprep.mubr.f32.mxu0 0.0
      %8206 = vmatmul.mubr.f32.gmra.mxu0 %v5590
      %v8207 = vpop.f32.mrf.mxu0
      %v8208 = vadd.f32 0.0, %v8207
      %v8209 = vpop.f32.mrf.mxu0
      %8210 = vmatprep.mubr.f32.mxu0 0.0
      %8211 = vmatmul.mubr.f32.gmra.mxu0 %v5592
      %v8212 = vpop.f32.mrf.mxu0
      %v8213 = vadd.f32 0.0, %v8212
      %v8214 = vpop.f32.mrf.mxu0
      %8215 = vmatprep.mubr.f32.mxu0 0.0
      %8216 = vmatmul.mubr.f32.gmra.mxu0 %v5594
      %v8217 = vpop.f32.mrf.mxu0
      %v8218 = vadd.f32 0.0, %v8217
      %v8219 = vpop.f32.mrf.mxu0
      %8220 = vmatprep.mubr.f32.mxu0 0.0
      %8221 = vmatmul.mubr.f32.gmra.mxu0 %v5596
      %v8222 = vpop.f32.mrf.mxu0
      %v8223 = vadd.f32 0.0, %v8222
      %v8224 = vpop.f32.mrf.mxu0
      %8225 = vmatprep.mubr.f32.mxu0 0.0
      %8226 = vmatmul.mubr.f32.gmra.mxu0 %v5598
      %v8227 = vpop.f32.mrf.mxu0
      %v8228 = vadd.f32 0.0, %v8227
      %v8229 = vpop.f32.mrf.mxu0
      %8230 = vmatprep.mubr.f32.mxu0 0.0
      %8231 = vmatmul.mubr.f32.gmra.mxu0 %v5600
      %v8232 = vpop.f32.mrf.mxu0
      %v8233 = vadd.f32 0.0, %v8232
      %v8234 = vpop.f32.mrf.mxu0
      %8235 = vmatprep.mubr.f32.mxu0 0.0
      %8236 = vmatmul.mubr.f32.gmra.mxu0 %v5602
      %v8237 = vpop.f32.mrf.mxu0
      %v8238 = vadd.f32 0.0, %v8237
      %v8239 = vpop.f32.mrf.mxu0
      %8240 = vmatprep.mubr.f32.mxu0 0.0
      %8241 = vmatmul.mubr.f32.gmra.mxu0 %v5604
      %v8242 = vpop.f32.mrf.mxu0
      %v8243 = vadd.f32 0.0, %v8242
      %v8244 = vpop.f32.mrf.mxu0
      %8245 = vmatprep.mubr.f32.mxu0 0.0
      %8246 = vmatmul.mubr.f32.gmra.mxu0 %v5606
      %v8247 = vpop.f32.mrf.mxu0
      %v8248 = vadd.f32 0.0, %v8247
      %v8249 = vpop.f32.mrf.mxu0
      %8250 = vmatprep.mubr.f32.mxu0 0.0
      %8251 = vmatmul.mubr.f32.gmra.mxu0 %v5608
      %v8252 = vpop.f32.mrf.mxu0
      %v8253 = vadd.f32 0.0, %v8252
      %v8254 = vpop.f32.mrf.mxu0
      %8255 = vmatprep.mubr.f32.mxu0 0.0
      %8256 = vmatmul.mubr.f32.gmra.mxu0 %v5610
      %v8257 = vpop.f32.mrf.mxu0
      %v8258 = vadd.f32 0.0, %v8257
      %v8259 = vpop.f32.mrf.mxu0
      %8260 = vmatprep.mubr.f32.mxu0 0.0
      %8261 = vmatmul.mubr.f32.gmra.mxu0 %v5612
      %v8262 = vpop.f32.mrf.mxu0
      %v8263 = vadd.f32 0.0, %v8262
      %v8264 = vpop.f32.mrf.mxu0
      %8265 = vmatprep.mubr.f32.mxu0 0.0
      %8266 = vmatmul.mubr.f32.gmra.mxu0 %v5614
      %v8267 = vpop.f32.mrf.mxu0
      %v8268 = vadd.f32 0.0, %v8267
      %v8269 = vpop.f32.mrf.mxu0
      %8270 = vmatprep.mubr.f32.mxu0 0.0
      %8271 = vmatmul.mubr.f32.gmra.mxu0 %v5616
      %v8272 = vpop.f32.mrf.mxu0
      %v8273 = vadd.f32 0.0, %v8272
      %v8274 = vpop.f32.mrf.mxu0
      %8275 = vmatprep.mubr.f32.mxu0 0.0
      %8276 = vmatmul.mubr.f32.gmra.mxu0 %v5618
      %v8277 = vpop.f32.mrf.mxu0
      %v8278 = vadd.f32 0.0, %v8277
      %v8279 = vpop.f32.mrf.mxu0
      %8280 = vmatprep.mubr.f32.mxu0 0.0
      %8281 = vmatmul.mubr.f32.gmra.mxu0 %v5620
      %v8282 = vpop.f32.mrf.mxu0
      %v8283 = vadd.f32 0.0, %v8282
      %v8284 = vpop.f32.mrf.mxu0
      %8285 = vmatprep.mubr.f32.mxu0 0.0
      %8286 = vmatmul.mubr.f32.gmra.mxu0 %v5622
      %v8287 = vpop.f32.mrf.mxu0
      %v8288 = vadd.f32 0.0, %v8287
      %v8289 = vpop.f32.mrf.mxu0
      %8290 = vmatprep.mubr.f32.mxu0 0.0
      %8291 = vmatmul.mubr.f32.gmra.mxu0 %v5624
      %v8292 = vpop.f32.mrf.mxu0
      %v8293 = vadd.f32 0.0, %v8292
      %v8294 = vpop.f32.mrf.mxu0
      %8295 = vmatprep.mubr.f32.mxu0 0.0
      %8296 = vmatmul.mubr.f32.gmra.mxu0 %v5626
      %v8297 = vpop.f32.mrf.mxu0
      %v8298 = vadd.f32 0.0, %v8297
      %v8299 = vpop.f32.mrf.mxu0
      %8300 = vmatprep.mubr.f32.mxu0 0.0
      %8301 = vmatmul.mubr.f32.gmra.mxu0 %v5628
      %v8302 = vpop.f32.mrf.mxu0
      %v8303 = vadd.f32 0.0, %v8302
      %v8304 = vpop.f32.mrf.mxu0
      %8305 = vmatprep.mubr.f32.mxu0 0.0
      %8306 = vmatmul.mubr.f32.gmra.mxu0 %v5630
      %v8307 = vpop.f32.mrf.mxu0
      %v8308 = vadd.f32 0.0, %v8307
      %v8309 = vpop.f32.mrf.mxu0
      %8310 = vmatprep.mubr.f32.mxu0 0.0
      %8311 = vmatmul.mubr.f32.gmra.mxu0 %v5632
      %v8312 = vpop.f32.mrf.mxu0
      %v8313 = vadd.f32 0.0, %v8312
      %v8314 = vpop.f32.mrf.mxu0
      %8315 = vmatprep.mubr.f32.mxu0 0.0
      %8316 = vmatmul.mubr.f32.gmra.mxu0 %v5634
      %v8317 = vpop.f32.mrf.mxu0
      %v8318 = vadd.f32 0.0, %v8317
      %v8319 = vpop.f32.mrf.mxu0
      %8320 = vmatprep.mubr.f32.mxu0 0.0
      %8321 = vmatmul.mubr.f32.gmra.mxu0 %v5636
      %v8322 = vpop.f32.mrf.mxu0
      %v8323 = vadd.f32 0.0, %v8322
      %v8324 = vpop.f32.mrf.mxu0
      %8325 = vmatprep.mubr.f32.mxu0 0.0
      %8326 = vmatmul.mubr.f32.gmra.mxu0 %v5638
      %v8327 = vpop.f32.mrf.mxu0
      %v8328 = vadd.f32 0.0, %v8327
      %v8329 = vpop.f32.mrf.mxu0
      %8330 = vmatprep.mubr.f32.mxu0 0.0
      %8331 = vmatmul.mubr.f32.gmra.mxu0 %v5640
      %v8332 = vpop.f32.mrf.mxu0
      %v8333 = vadd.f32 0.0, %v8332
      %v8334 = vpop.f32.mrf.mxu0
      %8335 = vmatprep.mubr.f32.mxu0 0.0
      %8336 = vmatmul.mubr.f32.gmra.mxu0 %v5642
      %v8337 = vpop.f32.mrf.mxu0
      %v8338 = vadd.f32 0.0, %v8337
      %v8339 = vpop.f32.mrf.mxu0
      %8340 = vmatprep.mubr.f32.mxu0 0.0
      %8341 = vmatmul.mubr.f32.gmra.mxu0 %v5644
      %v8342 = vpop.f32.mrf.mxu0
      %v8343 = vadd.f32 0.0, %v8342
      %v8344 = vpop.f32.mrf.mxu0
      %8345 = vmatprep.mubr.f32.mxu0 0.0
      %8346 = vmatmul.mubr.f32.gmra.mxu0 %v5646
      %v8347 = vpop.f32.mrf.mxu0
      %v8348 = vadd.f32 0.0, %v8347
      %v8349 = vpop.f32.mrf.mxu0
      %8350 = vmatprep.mubr.f32.mxu0 0.0
      %8351 = vmatmul.mubr.f32.gmra.mxu0 %v5648
      %v8352 = vpop.f32.mrf.mxu0
      %v8353 = vadd.f32 0.0, %v8352
      %v8354 = vpop.f32.mrf.mxu0
      %8355 = vmatprep.mubr.f32.mxu0 0.0
      %8356 = vmatmul.mubr.f32.gmra.mxu0 %v5650
      %v8357 = vpop.f32.mrf.mxu0
      %v8358 = vadd.f32 0.0, %v8357
      %v8359 = vpop.f32.mrf.mxu0
      %8360 = vmatprep.mubr.f32.mxu0 0.0
      %8361 = vmatmul.mubr.f32.gmra.mxu0 %v5652
      %v8362 = vpop.f32.mrf.mxu0
      %v8363 = vadd.f32 0.0, %v8362
      %v8364 = vpop.f32.mrf.mxu0
      %8365 = vmatprep.mubr.f32.mxu0 0.0
      %8366 = vmatmul.mubr.f32.gmra.mxu0 %v5654
      %v8367 = vpop.f32.mrf.mxu0
      %v8368 = vadd.f32 0.0, %v8367
      %v8369 = vpop.f32.mrf.mxu0
      %8370 = vmatprep.mubr.f32.mxu0 0.0
      %8371 = vmatmul.mubr.f32.gmra.mxu0 %v5656
      %v8372 = vpop.f32.mrf.mxu0
      %v8373 = vadd.f32 0.0, %v8372
      %v8374 = vpop.f32.mrf.mxu0
      %8375 = vmatprep.mubr.f32.mxu0 0.0
      %8376 = vmatmul.mubr.f32.gmra.mxu0 %v5658
      %v8377 = vpop.f32.mrf.mxu0
      %v8378 = vadd.f32 0.0, %v8377
      %v8379 = vpop.f32.mrf.mxu0
      %8380 = vmatprep.mubr.f32.mxu0 0.0
      %8381 = vmatmul.mubr.f32.gmra.mxu0 %v5660
      %v8382 = vpop.f32.mrf.mxu0
      %v8383 = vadd.f32 0.0, %v8382
      %v8384 = vpop.f32.mrf.mxu0
      %8385 = vmatprep.mubr.f32.mxu0 0.0
      %8386 = vmatmul.mubr.f32.gmra.mxu0 %v5662
      %v8387 = vpop.f32.mrf.mxu0
      %v8388 = vadd.f32 0.0, %v8387
      %v8389 = vpop.f32.mrf.mxu0
      %8390 = vmatprep.mubr.f32.mxu0 0.0
      %8391 = vmatmul.mubr.f32.gmra.mxu0 %v5664
      %v8392 = vpop.f32.mrf.mxu0
      %v8393 = vadd.f32 0.0, %v8392
      %v8394 = vpop.f32.mrf.mxu0
      %8395 = vmatprep.mubr.f32.mxu0 0.0
      %8396 = vmatmul.mubr.f32.gmra.mxu0 %v5666
      %v8397 = vpop.f32.mrf.mxu0
      %v8398 = vadd.f32 0.0, %v8397
      %v8399 = vpop.f32.mrf.mxu0
      %8400 = vmatprep.mubr.f32.mxu0 0.0
      %8401 = vmatmul.mubr.f32.gmra.mxu0 %v5668
      %v8402 = vpop.f32.mrf.mxu0
      %v8403 = vadd.f32 0.0, %v8402
      %v8404 = vpop.f32.mrf.mxu0
      %8405 = vmatprep.mubr.f32.mxu0 0.0
      %8406 = vmatmul.mubr.f32.gmra.mxu0 %v5670
      %v8407 = vpop.f32.mrf.mxu0
      %v8408 = vadd.f32 0.0, %v8407
      %v8409 = vpop.f32.mrf.mxu0
      %8410 = vmatprep.mubr.f32.mxu0 0.0
      %8411 = vmatmul.mubr.f32.gmra.mxu0 %v7995
      %v8412 = vpop.f32.mrf.mxu0
      %v8413 = vadd.f32 0.0, %v8412
      %v8414 = vpop.f32.mrf.mxu0
      %8415 = vmatprep.mubr.f32.mxu0 0.0
      %8416 = vmatmul.mubr.f32.gmra.mxu0 %v7997
      %v8417 = vpop.f32.mrf.mxu0
      %v8418 = vadd.f32 0.0, %v8417
      %v8419 = vpop.f32.mrf.mxu0
      %8420 = vmatprep.mubr.f32.mxu0 0.0
      %8421 = vmatmul.mubr.f32.gmra.mxu0 %v7999
      %v8422 = vpop.f32.mrf.mxu0
      %v8423 = vadd.f32 0.0, %v8422
      %v8424 = vpop.f32.mrf.mxu0
      %8425 = vdwg.mxu0
      %v8426 = vadd.f32 %v7913, %v8068
      %v8427 = vadd.f32 %v7914, %v8073
      %v8428 = vadd.f32 %v7915, %v8078
      %v8429 = vadd.f32 %v7916, %v8083
      %v8430 = vadd.f32 %v7917, %v8088
      %v8431 = vadd.f32 %v7918, %v8093
      %v8432 = vadd.f32 %v7919, %v8098
      %v8433 = vadd.f32 %v7920, %v8103
      %v8434 = vadd.f32 %v7921, %v8108
      %v8435 = vadd.f32 %v7922, %v8113
      %v8436 = vadd.f32 %v7923, %v8118
      %v8437 = vadd.f32 %v7924, %v8123
      %v8438 = vadd.f32 %v7925, %v8128
      %v8439 = vadd.f32 %v7926, %v8133
      %v8440 = vadd.f32 %v7927, %v8138
      %v8441 = vadd.f32 %v7928, %v8143
      %v8442 = vadd.f32 %v7929, %v8148
      %v8443 = vadd.f32 %v7930, %v8153
      %v8444 = vadd.f32 %v7931, %v8158
      %v8445 = vadd.f32 %v7932, %v8163
      %v8446 = vadd.f32 %v7933, %v8168
      %v8447 = vadd.f32 %v7934, %v8173
      %v8448 = vadd.f32 %v7935, %v8178
      %v8449 = vadd.f32 %v7936, %v8183
      %v8450 = vadd.f32 %v7937, %v8188
      %v8451 = vadd.f32 %v7938, %v8193
      %v8452 = vadd.f32 %v7939, %v8198
      %v8453 = vadd.f32 %v7940, %v8203
      %v8454 = vadd.f32 %v7941, %v8208
      %v8455 = vadd.f32 %v7942, %v8213
      %v8456 = vadd.f32 %v7943, %v8218
      %v8457 = vadd.f32 %v7944, %v8223
      %v8458 = vadd.f32 %v7945, %v8228
      %v8459 = vadd.f32 %v7946, %v8233
      %v8460 = vadd.f32 %v7947, %v8238
      %v8461 = vadd.f32 %v7948, %v8243
      %v8462 = vadd.f32 %v7949, %v8248
      %v8463 = vadd.f32 %v7950, %v8253
      %v8464 = vadd.f32 %v7951, %v8258
      %v8465 = vadd.f32 %v7952, %v8263
      %v8466 = vadd.f32 %v7953, %v8268
      %v8467 = vadd.f32 %v7954, %v8273
      %v8468 = vadd.f32 %v7955, %v8278
      %v8469 = vadd.f32 %v7956, %v8283
      %v8470 = vadd.f32 %v7957, %v8288
      %v8471 = vadd.f32 %v7958, %v8293
      %v8472 = vadd.f32 %v7959, %v8298
      %v8473 = vadd.f32 %v7960, %v8303
      %v8474 = vadd.f32 %v7961, %v8308
      %v8475 = vadd.f32 %v7962, %v8313
      %v8476 = vadd.f32 %v7963, %v8318
      %v8477 = vadd.f32 %v7964, %v8323
      %v8478 = vadd.f32 %v7965, %v8328
      %v8479 = vadd.f32 %v7966, %v8333
      %v8480 = vadd.f32 %v7967, %v8338
      %v8481 = vadd.f32 %v7968, %v8343
      %v8482 = vadd.f32 %v7969, %v8348
      %v8483 = vadd.f32 %v7970, %v8353
      %v8484 = vadd.f32 %v7971, %v8358
      %v8485 = vadd.f32 %v7972, %v8363
      %v8486 = vadd.f32 %v7973, %v8368
      %v8487 = vadd.f32 %v7974, %v8373
      %v8488 = vadd.f32 %v7975, %v8378
      %v8489 = vadd.f32 %v7976, %v8383
      %v8490 = vadd.f32 %v7977, %v8388
      %v8491 = vadd.f32 %v7978, %v8393
      %v8492 = vadd.f32 %v7979, %v8398
      %v8493 = vadd.f32 %v7980, %v8403
      %v8494 = vadd.f32 %v7981, %v8408
      %v8495 = vadd.f32 %v7982, %v8413
      %v8496 = vadd.f32 %v7983, %v8418
      %v8497 = vadd.f32 %v7984, %v8423
      %v8498 = vrot.slane %v5252, 2
      %v8499 = vrot.slane %v5253, 2
      %v8500 = vsel %vm1782, %v8498, %v8499
      %v8501 = vrot.slane %v5254, 2
      %v8502 = vsel %vm1782, %v8499, %v8501
      %v8503 = vrot.slane %v5255, 2
      %v8504 = vsel %vm1782, %v8501, %v8503
      %s8505 = scalar_lea.vmem %s3, 40
      %v8506 = vld [vmem:[%s8505] sm:$0xff]
      %v8507 = vsel %vm5527, %v8500, 0
      %v8509 = vsel %vm5527, %v8502, 0
      %v8511 = vsel %vm5527, %v8504, 0
      %8513 = vmatprep.subr.mxu0 0.0
      %8514 = vmatpush1.msra.mxu0 0.0
      %8515 = vmatprep.subr.mxu0 0.0
      %8516 = vmatpush1.msra.mxu0 0.0
      %8517 = vmatprep.subr.mxu0 0.0
      %8518 = vmatpush1.msra.mxu0 0.0
      %8519 = vmatprep.subr.mxu0 0.0
      %8520 = vmatpush1.msra.mxu0 0.0
      %8521 = vmatprep.subr.mxu0 0.0
      %8522 = vmatpush1.msra.mxu0 0.0
      %8523 = vmatprep.subr.mxu0 0.0
      %8524 = vmatpush1.msra.mxu0 0.0
      %8525 = vmatprep.subr.mxu0 0.0
      %8526 = vmatpush1.msra.mxu0 0.0
      %8527 = vmatprep.subr.mxu0 0.0
      %8528 = vmatpush1.msra.mxu0 0.0
      %8529 = vmatprep.subr.mxu0 0.0
      %8530 = vmatpush1.msra.mxu0 0.0
      %8531 = vmatprep.subr.mxu0 0.0
      %8532 = vmatpush1.msra.mxu0 0.0
      %8533 = vmatprep.subr.mxu0 0.0
      %8534 = vmatpush1.msra.mxu0 0.0
      %8535 = vmatprep.subr.mxu0 0.0
      %8536 = vmatpush1.msra.mxu0 0.0
      %8537 = vmatprep.subr.mxu0 0.0
      %8538 = vmatpush1.msra.mxu0 0.0
      %8539 = vmatprep.subr.mxu0 0.0
      %8540 = vmatpush1.msra.mxu0 0.0
      %8541 = vmatprep.subr.mxu0 0.0
      %8542 = vmatpush1.msra.mxu0 0.0
      %8543 = vmatprep.subr.mxu0 0.0
      %8544 = vmatpush1.msra.mxu0 %v8506
      %8545 = vmatprep.subr.mxu0 0.0
      %8546 = vmatpush2.msra.mxu0 0.0
      %8547 = vmatprep.subr.mxu0 0.0
      %8548 = vmatpush2.msra.mxu0 0.0
      %8549 = vmatprep.subr.mxu0 0.0
      %8550 = vmatpush2.msra.mxu0 0.0
      %8551 = vmatprep.subr.mxu0 0.0
      %8552 = vmatpush2.msra.mxu0 0.0
      %8553 = vmatprep.subr.mxu0 0.0
      %8554 = vmatpush2.msra.mxu0 0.0
      %8555 = vmatprep.subr.mxu0 0.0
      %8556 = vmatpush2.msra.mxu0 0.0
      %8557 = vmatprep.subr.mxu0 0.0
      %8558 = vmatpush2.msra.mxu0 0.0
      %8559 = vmatprep.subr.mxu0 0.0
      %8560 = vmatpush2.msra.mxu0 0.0
      %8561 = vmatprep.subr.mxu0 0.0
      %8562 = vmatpush2.msra.mxu0 0.0
      %8563 = vmatprep.subr.mxu0 0.0
      %8564 = vmatpush2.msra.mxu0 0.0
      %8565 = vmatprep.subr.mxu0 0.0
      %8566 = vmatpush2.msra.mxu0 0.0
      %8567 = vmatprep.subr.mxu0 0.0
      %8568 = vmatpush2.msra.mxu0 0.0
      %8569 = vmatprep.subr.mxu0 0.0
      %8570 = vmatpush2.msra.mxu0 0.0
      %8571 = vmatprep.subr.mxu0 0.0
      %8572 = vmatpush2.msra.mxu0 0.0
      %8573 = vmatprep.subr.mxu0 0.0
      %8574 = vmatpush2.msra.mxu0 0.0
      %8575 = vmatprep.subr.mxu0 0.0
      %8576 = vmatpush2.msra.mxu0 0.0
      %8577 = vmatprep.mubr.f32.mxu0 0.0
      %8578 = vmatmul.mubr.f32.gmra.mxu0 %v6842
      %v8579 = vpop.f32.mrf.mxu0
      %v8580 = vadd.f32 0.0, %v8579
      %v8581 = vpop.f32.mrf.mxu0
      %8582 = vmatprep.mubr.f32.mxu0 0.0
      %8583 = vmatmul.mubr.f32.gmra.mxu0 %v6844
      %v8584 = vpop.f32.mrf.mxu0
      %v8585 = vadd.f32 0.0, %v8584
      %v8586 = vpop.f32.mrf.mxu0
      %8587 = vmatprep.mubr.f32.mxu0 0.0
      %8588 = vmatmul.mubr.f32.gmra.mxu0 %v6846
      %v8589 = vpop.f32.mrf.mxu0
      %v8590 = vadd.f32 0.0, %v8589
      %v8591 = vpop.f32.mrf.mxu0
      %8592 = vmatprep.mubr.f32.mxu0 0.0
      %8593 = vmatmul.mubr.f32.gmra.mxu0 %v6848
      %v8594 = vpop.f32.mrf.mxu0
      %v8595 = vadd.f32 0.0, %v8594
      %v8596 = vpop.f32.mrf.mxu0
      %8597 = vmatprep.mubr.f32.mxu0 0.0
      %8598 = vmatmul.mubr.f32.gmra.mxu0 %v6850
      %v8599 = vpop.f32.mrf.mxu0
      %v8600 = vadd.f32 0.0, %v8599
      %v8601 = vpop.f32.mrf.mxu0
      %8602 = vmatprep.mubr.f32.mxu0 0.0
      %8603 = vmatmul.mubr.f32.gmra.mxu0 %v6852
      %v8604 = vpop.f32.mrf.mxu0
      %v8605 = vadd.f32 0.0, %v8604
      %v8606 = vpop.f32.mrf.mxu0
      %8607 = vmatprep.mubr.f32.mxu0 0.0
      %8608 = vmatmul.mubr.f32.gmra.mxu0 %v6854
      %v8609 = vpop.f32.mrf.mxu0
      %v8610 = vadd.f32 0.0, %v8609
      %v8611 = vpop.f32.mrf.mxu0
      %8612 = vmatprep.mubr.f32.mxu0 0.0
      %8613 = vmatmul.mubr.f32.gmra.mxu0 %v6856
      %v8614 = vpop.f32.mrf.mxu0
      %v8615 = vadd.f32 0.0, %v8614
      %v8616 = vpop.f32.mrf.mxu0
      %8617 = vmatprep.mubr.f32.mxu0 0.0
      %8618 = vmatmul.mubr.f32.gmra.mxu0 %v6858
      %v8619 = vpop.f32.mrf.mxu0
      %v8620 = vadd.f32 0.0, %v8619
      %v8621 = vpop.f32.mrf.mxu0
      %8622 = vmatprep.mubr.f32.mxu0 0.0
      %8623 = vmatmul.mubr.f32.gmra.mxu0 %v6860
      %v8624 = vpop.f32.mrf.mxu0
      %v8625 = vadd.f32 0.0, %v8624
      %v8626 = vpop.f32.mrf.mxu0
      %8627 = vmatprep.mubr.f32.mxu0 0.0
      %8628 = vmatmul.mubr.f32.gmra.mxu0 %v6862
      %v8629 = vpop.f32.mrf.mxu0
      %v8630 = vadd.f32 0.0, %v8629
      %v8631 = vpop.f32.mrf.mxu0
      %8632 = vmatprep.mubr.f32.mxu0 0.0
      %8633 = vmatmul.mubr.f32.gmra.mxu0 %v6864
      %v8634 = vpop.f32.mrf.mxu0
      %v8635 = vadd.f32 0.0, %v8634
      %v8636 = vpop.f32.mrf.mxu0
      %8637 = vmatprep.mubr.f32.mxu0 0.0
      %8638 = vmatmul.mubr.f32.gmra.mxu0 %v6866
      %v8639 = vpop.f32.mrf.mxu0
      %v8640 = vadd.f32 0.0, %v8639
      %v8641 = vpop.f32.mrf.mxu0
      %8642 = vmatprep.mubr.f32.mxu0 0.0
      %8643 = vmatmul.mubr.f32.gmra.mxu0 %v6868
      %v8644 = vpop.f32.mrf.mxu0
      %v8645 = vadd.f32 0.0, %v8644
      %v8646 = vpop.f32.mrf.mxu0
      %8647 = vmatprep.mubr.f32.mxu0 0.0
      %8648 = vmatmul.mubr.f32.gmra.mxu0 %v6870
      %v8649 = vpop.f32.mrf.mxu0
      %v8650 = vadd.f32 0.0, %v8649
      %v8651 = vpop.f32.mrf.mxu0
      %8652 = vmatprep.mubr.f32.mxu0 0.0
      %8653 = vmatmul.mubr.f32.gmra.mxu0 %v6872
      %v8654 = vpop.f32.mrf.mxu0
      %v8655 = vadd.f32 0.0, %v8654
      %v8656 = vpop.f32.mrf.mxu0
      %8657 = vmatprep.mubr.f32.mxu0 0.0
      %8658 = vmatmul.mubr.f32.gmra.mxu0 %v6874
      %v8659 = vpop.f32.mrf.mxu0
      %v8660 = vadd.f32 0.0, %v8659
      %v8661 = vpop.f32.mrf.mxu0
      %8662 = vmatprep.mubr.f32.mxu0 0.0
      %8663 = vmatmul.mubr.f32.gmra.mxu0 %v6876
      %v8664 = vpop.f32.mrf.mxu0
      %v8665 = vadd.f32 0.0, %v8664
      %v8666 = vpop.f32.mrf.mxu0
      %8667 = vmatprep.mubr.f32.mxu0 0.0
      %8668 = vmatmul.mubr.f32.gmra.mxu0 %v6878
      %v8669 = vpop.f32.mrf.mxu0
      %v8670 = vadd.f32 0.0, %v8669
      %v8671 = vpop.f32.mrf.mxu0
      %8672 = vmatprep.mubr.f32.mxu0 0.0
      %8673 = vmatmul.mubr.f32.gmra.mxu0 %v6880
      %v8674 = vpop.f32.mrf.mxu0
      %v8675 = vadd.f32 0.0, %v8674
      %v8676 = vpop.f32.mrf.mxu0
      %8677 = vmatprep.mubr.f32.mxu0 0.0
      %8678 = vmatmul.mubr.f32.gmra.mxu0 %v6882
      %v8679 = vpop.f32.mrf.mxu0
      %v8680 = vadd.f32 0.0, %v8679
      %v8681 = vpop.f32.mrf.mxu0
      %8682 = vmatprep.mubr.f32.mxu0 0.0
      %8683 = vmatmul.mubr.f32.gmra.mxu0 %v6884
      %v8684 = vpop.f32.mrf.mxu0
      %v8685 = vadd.f32 0.0, %v8684
      %v8686 = vpop.f32.mrf.mxu0
      %8687 = vmatprep.mubr.f32.mxu0 0.0
      %8688 = vmatmul.mubr.f32.gmra.mxu0 %v6886
      %v8689 = vpop.f32.mrf.mxu0
      %v8690 = vadd.f32 0.0, %v8689
      %v8691 = vpop.f32.mrf.mxu0
      %8692 = vmatprep.mubr.f32.mxu0 0.0
      %8693 = vmatmul.mubr.f32.gmra.mxu0 %v6888
      %v8694 = vpop.f32.mrf.mxu0
      %v8695 = vadd.f32 0.0, %v8694
      %v8696 = vpop.f32.mrf.mxu0
      %8697 = vmatprep.mubr.f32.mxu0 0.0
      %8698 = vmatmul.mubr.f32.gmra.mxu0 %v6890
      %v8699 = vpop.f32.mrf.mxu0
      %v8700 = vadd.f32 0.0, %v8699
      %v8701 = vpop.f32.mrf.mxu0
      %8702 = vmatprep.mubr.f32.mxu0 0.0
      %8703 = vmatmul.mubr.f32.gmra.mxu0 %v6892
      %v8704 = vpop.f32.mrf.mxu0
      %v8705 = vadd.f32 0.0, %v8704
      %v8706 = vpop.f32.mrf.mxu0
      %8707 = vmatprep.mubr.f32.mxu0 0.0
      %8708 = vmatmul.mubr.f32.gmra.mxu0 %v6894
      %v8709 = vpop.f32.mrf.mxu0
      %v8710 = vadd.f32 0.0, %v8709
      %v8711 = vpop.f32.mrf.mxu0
      %8712 = vmatprep.mubr.f32.mxu0 0.0
      %8713 = vmatmul.mubr.f32.gmra.mxu0 %v6896
      %v8714 = vpop.f32.mrf.mxu0
      %v8715 = vadd.f32 0.0, %v8714
      %v8716 = vpop.f32.mrf.mxu0
      %8717 = vmatprep.mubr.f32.mxu0 0.0
      %8718 = vmatmul.mubr.f32.gmra.mxu0 %v6898
      %v8719 = vpop.f32.mrf.mxu0
      %v8720 = vadd.f32 0.0, %v8719
      %v8721 = vpop.f32.mrf.mxu0
      %8722 = vmatprep.mubr.f32.mxu0 0.0
      %8723 = vmatmul.mubr.f32.gmra.mxu0 %v6900
      %v8724 = vpop.f32.mrf.mxu0
      %v8725 = vadd.f32 0.0, %v8724
      %v8726 = vpop.f32.mrf.mxu0
      %8727 = vmatprep.mubr.f32.mxu0 0.0
      %8728 = vmatmul.mubr.f32.gmra.mxu0 %v6902
      %v8729 = vpop.f32.mrf.mxu0
      %v8730 = vadd.f32 0.0, %v8729
      %v8731 = vpop.f32.mrf.mxu0
      %8732 = vmatprep.mubr.f32.mxu0 0.0
      %8733 = vmatmul.mubr.f32.gmra.mxu0 %v6904
      %v8734 = vpop.f32.mrf.mxu0
      %v8735 = vadd.f32 0.0, %v8734
      %v8736 = vpop.f32.mrf.mxu0
      %8737 = vmatprep.mubr.f32.mxu0 0.0
      %8738 = vmatmul.mubr.f32.gmra.mxu0 %v6906
      %v8739 = vpop.f32.mrf.mxu0
      %v8740 = vadd.f32 0.0, %v8739
      %v8741 = vpop.f32.mrf.mxu0
      %8742 = vmatprep.mubr.f32.mxu0 0.0
      %8743 = vmatmul.mubr.f32.gmra.mxu0 %v6908
      %v8744 = vpop.f32.mrf.mxu0
      %v8745 = vadd.f32 0.0, %v8744
      %v8746 = vpop.f32.mrf.mxu0
      %8747 = vmatprep.mubr.f32.mxu0 0.0
      %8748 = vmatmul.mubr.f32.gmra.mxu0 %v6910
      %v8749 = vpop.f32.mrf.mxu0
      %v8750 = vadd.f32 0.0, %v8749
      %v8751 = vpop.f32.mrf.mxu0
      %8752 = vmatprep.mubr.f32.mxu0 0.0
      %8753 = vmatmul.mubr.f32.gmra.mxu0 %v6912
      %v8754 = vpop.f32.mrf.mxu0
      %v8755 = vadd.f32 0.0, %v8754
      %v8756 = vpop.f32.mrf.mxu0
      %8757 = vmatprep.mubr.f32.mxu0 0.0
      %8758 = vmatmul.mubr.f32.gmra.mxu0 %v6914
      %v8759 = vpop.f32.mrf.mxu0
      %v8760 = vadd.f32 0.0, %v8759
      %v8761 = vpop.f32.mrf.mxu0
      %8762 = vmatprep.mubr.f32.mxu0 0.0
      %8763 = vmatmul.mubr.f32.gmra.mxu0 %v6916
      %v8764 = vpop.f32.mrf.mxu0
      %v8765 = vadd.f32 0.0, %v8764
      %v8766 = vpop.f32.mrf.mxu0
      %8767 = vmatprep.mubr.f32.mxu0 0.0
      %8768 = vmatmul.mubr.f32.gmra.mxu0 %v6918
      %v8769 = vpop.f32.mrf.mxu0
      %v8770 = vadd.f32 0.0, %v8769
      %v8771 = vpop.f32.mrf.mxu0
      %8772 = vmatprep.mubr.f32.mxu0 0.0
      %8773 = vmatmul.mubr.f32.gmra.mxu0 %v6920
      %v8774 = vpop.f32.mrf.mxu0
      %v8775 = vadd.f32 0.0, %v8774
      %v8776 = vpop.f32.mrf.mxu0
      %8777 = vmatprep.mubr.f32.mxu0 0.0
      %8778 = vmatmul.mubr.f32.gmra.mxu0 %v6922
      %v8779 = vpop.f32.mrf.mxu0
      %v8780 = vadd.f32 0.0, %v8779
      %v8781 = vpop.f32.mrf.mxu0
      %8782 = vmatprep.mubr.f32.mxu0 0.0
      %8783 = vmatmul.mubr.f32.gmra.mxu0 %v6924
      %v8784 = vpop.f32.mrf.mxu0
      %v8785 = vadd.f32 0.0, %v8784
      %v8786 = vpop.f32.mrf.mxu0
      %8787 = vmatprep.mubr.f32.mxu0 0.0
      %8788 = vmatmul.mubr.f32.gmra.mxu0 %v6926
      %v8789 = vpop.f32.mrf.mxu0
      %v8790 = vadd.f32 0.0, %v8789
      %v8791 = vpop.f32.mrf.mxu0
      %8792 = vmatprep.mubr.f32.mxu0 0.0
      %8793 = vmatmul.mubr.f32.gmra.mxu0 %v6928
      %v8794 = vpop.f32.mrf.mxu0
      %v8795 = vadd.f32 0.0, %v8794
      %v8796 = vpop.f32.mrf.mxu0
      %8797 = vmatprep.mubr.f32.mxu0 0.0
      %8798 = vmatmul.mubr.f32.gmra.mxu0 %v6930
      %v8799 = vpop.f32.mrf.mxu0
      %v8800 = vadd.f32 0.0, %v8799
      %v8801 = vpop.f32.mrf.mxu0
      %8802 = vmatprep.mubr.f32.mxu0 0.0
      %8803 = vmatmul.mubr.f32.gmra.mxu0 %v6932
      %v8804 = vpop.f32.mrf.mxu0
      %v8805 = vadd.f32 0.0, %v8804
      %v8806 = vpop.f32.mrf.mxu0
      %8807 = vmatprep.mubr.f32.mxu0 0.0
      %8808 = vmatmul.mubr.f32.gmra.mxu0 %v6934
      %v8809 = vpop.f32.mrf.mxu0
      %v8810 = vadd.f32 0.0, %v8809
      %v8811 = vpop.f32.mrf.mxu0
      %8812 = vmatprep.mubr.f32.mxu0 0.0
      %8813 = vmatmul.mubr.f32.gmra.mxu0 %v6936
      %v8814 = vpop.f32.mrf.mxu0
      %v8815 = vadd.f32 0.0, %v8814
      %v8816 = vpop.f32.mrf.mxu0
      %8817 = vmatprep.mubr.f32.mxu0 0.0
      %8818 = vmatmul.mubr.f32.gmra.mxu0 %v6938
      %v8819 = vpop.f32.mrf.mxu0
      %v8820 = vadd.f32 0.0, %v8819
      %v8821 = vpop.f32.mrf.mxu0
      %8822 = vmatprep.mubr.f32.mxu0 0.0
      %8823 = vmatmul.mubr.f32.gmra.mxu0 %v6940
      %v8824 = vpop.f32.mrf.mxu0
      %v8825 = vadd.f32 0.0, %v8824
      %v8826 = vpop.f32.mrf.mxu0
      %8827 = vmatprep.mubr.f32.mxu0 0.0
      %8828 = vmatmul.mubr.f32.gmra.mxu0 %v6942
      %v8829 = vpop.f32.mrf.mxu0
      %v8830 = vadd.f32 0.0, %v8829
      %v8831 = vpop.f32.mrf.mxu0
      %8832 = vmatprep.mubr.f32.mxu0 0.0
      %8833 = vmatmul.mubr.f32.gmra.mxu0 %v6944
      %v8834 = vpop.f32.mrf.mxu0
      %v8835 = vadd.f32 0.0, %v8834
      %v8836 = vpop.f32.mrf.mxu0
      %8837 = vmatprep.mubr.f32.mxu0 0.0
      %8838 = vmatmul.mubr.f32.gmra.mxu0 %v6946
      %v8839 = vpop.f32.mrf.mxu0
      %v8840 = vadd.f32 0.0, %v8839
      %v8841 = vpop.f32.mrf.mxu0
      %8842 = vmatprep.mubr.f32.mxu0 0.0
      %8843 = vmatmul.mubr.f32.gmra.mxu0 %v6948
      %v8844 = vpop.f32.mrf.mxu0
      %v8845 = vadd.f32 0.0, %v8844
      %v8846 = vpop.f32.mrf.mxu0
      %8847 = vmatprep.mubr.f32.mxu0 0.0
      %8848 = vmatmul.mubr.f32.gmra.mxu0 %v6950
      %v8849 = vpop.f32.mrf.mxu0
      %v8850 = vadd.f32 0.0, %v8849
      %v8851 = vpop.f32.mrf.mxu0
      %8852 = vmatprep.mubr.f32.mxu0 0.0
      %8853 = vmatmul.mubr.f32.gmra.mxu0 %v6952
      %v8854 = vpop.f32.mrf.mxu0
      %v8855 = vadd.f32 0.0, %v8854
      %v8856 = vpop.f32.mrf.mxu0
      %8857 = vmatprep.mubr.f32.mxu0 0.0
      %8858 = vmatmul.mubr.f32.gmra.mxu0 %v6954
      %v8859 = vpop.f32.mrf.mxu0
      %v8860 = vadd.f32 0.0, %v8859
      %v8861 = vpop.f32.mrf.mxu0
      %8862 = vmatprep.mubr.f32.mxu0 0.0
      %8863 = vmatmul.mubr.f32.gmra.mxu0 %v6956
      %v8864 = vpop.f32.mrf.mxu0
      %v8865 = vadd.f32 0.0, %v8864
      %v8866 = vpop.f32.mrf.mxu0
      %8867 = vmatprep.mubr.f32.mxu0 0.0
      %8868 = vmatmul.mubr.f32.gmra.mxu0 %v6958
      %v8869 = vpop.f32.mrf.mxu0
      %v8870 = vadd.f32 0.0, %v8869
      %v8871 = vpop.f32.mrf.mxu0
      %8872 = vmatprep.mubr.f32.mxu0 0.0
      %8873 = vmatmul.mubr.f32.gmra.mxu0 %v6960
      %v8874 = vpop.f32.mrf.mxu0
      %v8875 = vadd.f32 0.0, %v8874
      %v8876 = vpop.f32.mrf.mxu0
      %8877 = vmatprep.mubr.f32.mxu0 0.0
      %8878 = vmatmul.mubr.f32.gmra.mxu0 %v6962
      %v8879 = vpop.f32.mrf.mxu0
      %v8880 = vadd.f32 0.0, %v8879
      %v8881 = vpop.f32.mrf.mxu0
      %8882 = vmatprep.mubr.f32.mxu0 0.0
      %8883 = vmatmul.mubr.f32.gmra.mxu0 %v6964
      %v8884 = vpop.f32.mrf.mxu0
      %v8885 = vadd.f32 0.0, %v8884
      %v8886 = vpop.f32.mrf.mxu0
      %8887 = vmatprep.mubr.f32.mxu0 0.0
      %8888 = vmatmul.mubr.f32.gmra.mxu0 %v6966
      %v8889 = vpop.f32.mrf.mxu0
      %v8890 = vadd.f32 0.0, %v8889
      %v8891 = vpop.f32.mrf.mxu0
      %8892 = vmatprep.mubr.f32.mxu0 0.0
      %8893 = vmatmul.mubr.f32.gmra.mxu0 %v6968
      %v8894 = vpop.f32.mrf.mxu0
      %v8895 = vadd.f32 0.0, %v8894
      %v8896 = vpop.f32.mrf.mxu0
      %8897 = vmatprep.mubr.f32.mxu0 0.0
      %8898 = vmatmul.mubr.f32.gmra.mxu0 %v6970
      %v8899 = vpop.f32.mrf.mxu0
      %v8900 = vadd.f32 0.0, %v8899
      %v8901 = vpop.f32.mrf.mxu0
      %8902 = vmatprep.mubr.f32.mxu0 0.0
      %8903 = vmatmul.mubr.f32.gmra.mxu0 %v6972
      %v8904 = vpop.f32.mrf.mxu0
      %v8905 = vadd.f32 0.0, %v8904
      %v8906 = vpop.f32.mrf.mxu0
      %8907 = vmatprep.mubr.f32.mxu0 0.0
      %8908 = vmatmul.mubr.f32.gmra.mxu0 %v6974
      %v8909 = vpop.f32.mrf.mxu0
      %v8910 = vadd.f32 0.0, %v8909
      %v8911 = vpop.f32.mrf.mxu0
      %8912 = vmatprep.mubr.f32.mxu0 0.0
      %8913 = vmatmul.mubr.f32.gmra.mxu0 %v6976
      %v8914 = vpop.f32.mrf.mxu0
      %v8915 = vadd.f32 0.0, %v8914
      %v8916 = vpop.f32.mrf.mxu0
      %8917 = vmatprep.mubr.f32.mxu0 0.0
      %8918 = vmatmul.mubr.f32.gmra.mxu0 %v6978
      %v8919 = vpop.f32.mrf.mxu0
      %v8920 = vadd.f32 0.0, %v8919
      %v8921 = vpop.f32.mrf.mxu0
      %8922 = vmatprep.mubr.f32.mxu0 0.0
      %8923 = vmatmul.mubr.f32.gmra.mxu0 %v8507
      %v8924 = vpop.f32.mrf.mxu0
      %v8925 = vadd.f32 0.0, %v8924
      %v8926 = vpop.f32.mrf.mxu0
      %8927 = vmatprep.mubr.f32.mxu0 0.0
      %8928 = vmatmul.mubr.f32.gmra.mxu0 %v8509
      %v8929 = vpop.f32.mrf.mxu0
      %v8930 = vadd.f32 0.0, %v8929
      %v8931 = vpop.f32.mrf.mxu0
      %8932 = vmatprep.mubr.f32.mxu0 0.0
      %8933 = vmatmul.mubr.f32.gmra.mxu0 %v8511
      %v8934 = vpop.f32.mrf.mxu0
      %v8935 = vadd.f32 0.0, %v8934
      %v8936 = vpop.f32.mrf.mxu0
      %8937 = vdwg.mxu0
      %v8938 = vadd.f32 %v8426, %v8580
      %v8939 = vadd.f32 %v8427, %v8585
      %v8940 = vadd.f32 %v8428, %v8590
      %v8941 = vadd.f32 %v8429, %v8595
      %v8942 = vadd.f32 %v8430, %v8600
      %v8943 = vadd.f32 %v8431, %v8605
      %v8944 = vadd.f32 %v8432, %v8610
      %v8945 = vadd.f32 %v8433, %v8615
      %v8946 = vadd.f32 %v8434, %v8620
      %v8947 = vadd.f32 %v8435, %v8625
      %v8948 = vadd.f32 %v8436, %v8630
      %v8949 = vadd.f32 %v8437, %v8635
      %v8950 = vadd.f32 %v8438, %v8640
      %v8951 = vadd.f32 %v8439, %v8645
      %v8952 = vadd.f32 %v8440, %v8650
      %v8953 = vadd.f32 %v8441, %v8655
      %v8954 = vadd.f32 %v8442, %v8660
      %v8955 = vadd.f32 %v8443, %v8665
      %v8956 = vadd.f32 %v8444, %v8670
      %v8957 = vadd.f32 %v8445, %v8675
      %v8958 = vadd.f32 %v8446, %v8680
      %v8959 = vadd.f32 %v8447, %v8685
      %v8960 = vadd.f32 %v8448, %v8690
      %v8961 = vadd.f32 %v8449, %v8695
      %v8962 = vadd.f32 %v8450, %v8700
      %v8963 = vadd.f32 %v8451, %v8705
      %v8964 = vadd.f32 %v8452, %v8710
      %v8965 = vadd.f32 %v8453, %v8715
      %v8966 = vadd.f32 %v8454, %v8720
      %v8967 = vadd.f32 %v8455, %v8725
      %v8968 = vadd.f32 %v8456, %v8730
      %v8969 = vadd.f32 %v8457, %v8735
      %v8970 = vadd.f32 %v8458, %v8740
      %v8971 = vadd.f32 %v8459, %v8745
      %v8972 = vadd.f32 %v8460, %v8750
      %v8973 = vadd.f32 %v8461, %v8755
      %v8974 = vadd.f32 %v8462, %v8760
      %v8975 = vadd.f32 %v8463, %v8765
      %v8976 = vadd.f32 %v8464, %v8770
      %v8977 = vadd.f32 %v8465, %v8775
      %v8978 = vadd.f32 %v8466, %v8780
      %v8979 = vadd.f32 %v8467, %v8785
      %v8980 = vadd.f32 %v8468, %v8790
      %v8981 = vadd.f32 %v8469, %v8795
      %v8982 = vadd.f32 %v8470, %v8800
      %v8983 = vadd.f32 %v8471, %v8805
      %v8984 = vadd.f32 %v8472, %v8810
      %v8985 = vadd.f32 %v8473, %v8815
      %v8986 = vadd.f32 %v8474, %v8820
      %v8987 = vadd.f32 %v8475, %v8825
      %v8988 = vadd.f32 %v8476, %v8830
      %v8989 = vadd.f32 %v8477, %v8835
      %v8990 = vadd.f32 %v8478, %v8840
      %v8991 = vadd.f32 %v8479, %v8845
      %v8992 = vadd.f32 %v8480, %v8850
      %v8993 = vadd.f32 %v8481, %v8855
      %v8994 = vadd.f32 %v8482, %v8860
      %v8995 = vadd.f32 %v8483, %v8865
      %v8996 = vadd.f32 %v8484, %v8870
      %v8997 = vadd.f32 %v8485, %v8875
      %v8998 = vadd.f32 %v8486, %v8880
      %v8999 = vadd.f32 %v8487, %v8885
      %v9000 = vadd.f32 %v8488, %v8890
      %v9001 = vadd.f32 %v8489, %v8895
      %v9002 = vadd.f32 %v8490, %v8900
      %v9003 = vadd.f32 %v8491, %v8905
      %v9004 = vadd.f32 %v8492, %v8910
      %v9005 = vadd.f32 %v8493, %v8915
      %v9006 = vadd.f32 %v8494, %v8920
      %v9007 = vadd.f32 %v8495, %v8925
      %v9008 = vadd.f32 %v8496, %v8930
      %v9009 = vadd.f32 %v8497, %v8935
      %s9010 = scalar_lea.vmem %s3, 48
      %v9011 = vld [vmem:[%s9010] sm:$0xff]
      %v9013 = vsel %vm5527, %v5256, 0
      %v9016 = vsel %vm5527, %v5257, 0
      %v9019 = vsel %vm5527, %v5258, 0
      %9021 = vmatprep.subr.mxu0 0.0
      %9022 = vmatpush1.msra.mxu0 0.0
      %9023 = vmatprep.subr.mxu0 0.0
      %9024 = vmatpush1.msra.mxu0 0.0
      %9025 = vmatprep.subr.mxu0 0.0
      %9026 = vmatpush1.msra.mxu0 0.0
      %9027 = vmatprep.subr.mxu0 0.0
      %9028 = vmatpush1.msra.mxu0 0.0
      %9029 = vmatprep.subr.mxu0 0.0
      %9030 = vmatpush1.msra.mxu0 0.0
      %9031 = vmatprep.subr.mxu0 0.0
      %9032 = vmatpush1.msra.mxu0 0.0
      %9033 = vmatprep.subr.mxu0 0.0
      %9034 = vmatpush1.msra.mxu0 0.0
      %9035 = vmatprep.subr.mxu0 0.0
      %9036 = vmatpush1.msra.mxu0 0.0
      %9037 = vmatprep.subr.mxu0 0.0
      %9038 = vmatpush1.msra.mxu0 0.0
      %9039 = vmatprep.subr.mxu0 0.0
      %9040 = vmatpush1.msra.mxu0 0.0
      %9041 = vmatprep.subr.mxu0 0.0
      %9042 = vmatpush1.msra.mxu0 0.0
      %9043 = vmatprep.subr.mxu0 0.0
      %9044 = vmatpush1.msra.mxu0 0.0
      %9045 = vmatprep.subr.mxu0 0.0
      %9046 = vmatpush1.msra.mxu0 0.0
      %9047 = vmatprep.subr.mxu0 0.0
      %9048 = vmatpush1.msra.mxu0 0.0
      %9049 = vmatprep.subr.mxu0 0.0
      %9050 = vmatpush1.msra.mxu0 0.0
      %9051 = vmatprep.subr.mxu0 0.0
      %9052 = vmatpush1.msra.mxu0 %v9011
      %9053 = vmatprep.subr.mxu0 0.0
      %9054 = vmatpush2.msra.mxu0 0.0
      %9055 = vmatprep.subr.mxu0 0.0
      %9056 = vmatpush2.msra.mxu0 0.0
      %9057 = vmatprep.subr.mxu0 0.0
      %9058 = vmatpush2.msra.mxu0 0.0
      %9059 = vmatprep.subr.mxu0 0.0
      %9060 = vmatpush2.msra.mxu0 0.0
      %9061 = vmatprep.subr.mxu0 0.0
      %9062 = vmatpush2.msra.mxu0 0.0
      %9063 = vmatprep.subr.mxu0 0.0
      %9064 = vmatpush2.msra.mxu0 0.0
      %9065 = vmatprep.subr.mxu0 0.0
      %9066 = vmatpush2.msra.mxu0 0.0
      %9067 = vmatprep.subr.mxu0 0.0
      %9068 = vmatpush2.msra.mxu0 0.0
      %9069 = vmatprep.subr.mxu0 0.0
      %9070 = vmatpush2.msra.mxu0 0.0
      %9071 = vmatprep.subr.mxu0 0.0
      %9072 = vmatpush2.msra.mxu0 0.0
      %9073 = vmatprep.subr.mxu0 0.0
      %9074 = vmatpush2.msra.mxu0 0.0
      %9075 = vmatprep.subr.mxu0 0.0
      %9076 = vmatpush2.msra.mxu0 0.0
      %9077 = vmatprep.subr.mxu0 0.0
      %9078 = vmatpush2.msra.mxu0 0.0
      %9079 = vmatprep.subr.mxu0 0.0
      %9080 = vmatpush2.msra.mxu0 0.0
      %9081 = vmatprep.subr.mxu0 0.0
      %9082 = vmatpush2.msra.mxu0 0.0
      %9083 = vmatprep.subr.mxu0 0.0
      %9084 = vmatpush2.msra.mxu0 0.0
      %9085 = vmatprep.mubr.f32.mxu0 0.0
      %9086 = vmatmul.mubr.f32.gmra.mxu0 %v6109
      %v9087 = vpop.f32.mrf.mxu0
      %v9088 = vadd.f32 0.0, %v9087
      %v9089 = vpop.f32.mrf.mxu0
      %9090 = vmatprep.mubr.f32.mxu0 0.0
      %9091 = vmatmul.mubr.f32.gmra.mxu0 %v6111
      %v9092 = vpop.f32.mrf.mxu0
      %v9093 = vadd.f32 0.0, %v9092
      %v9094 = vpop.f32.mrf.mxu0
      %9095 = vmatprep.mubr.f32.mxu0 0.0
      %9096 = vmatmul.mubr.f32.gmra.mxu0 %v6113
      %v9097 = vpop.f32.mrf.mxu0
      %v9098 = vadd.f32 0.0, %v9097
      %v9099 = vpop.f32.mrf.mxu0
      %9100 = vmatprep.mubr.f32.mxu0 0.0
      %9101 = vmatmul.mubr.f32.gmra.mxu0 %v6115
      %v9102 = vpop.f32.mrf.mxu0
      %v9103 = vadd.f32 0.0, %v9102
      %v9104 = vpop.f32.mrf.mxu0
      %9105 = vmatprep.mubr.f32.mxu0 0.0
      %9106 = vmatmul.mubr.f32.gmra.mxu0 %v6117
      %v9107 = vpop.f32.mrf.mxu0
      %v9108 = vadd.f32 0.0, %v9107
      %v9109 = vpop.f32.mrf.mxu0
      %9110 = vmatprep.mubr.f32.mxu0 0.0
      %9111 = vmatmul.mubr.f32.gmra.mxu0 %v6119
      %v9112 = vpop.f32.mrf.mxu0
      %v9113 = vadd.f32 0.0, %v9112
      %v9114 = vpop.f32.mrf.mxu0
      %9115 = vmatprep.mubr.f32.mxu0 0.0
      %9116 = vmatmul.mubr.f32.gmra.mxu0 %v6121
      %v9117 = vpop.f32.mrf.mxu0
      %v9118 = vadd.f32 0.0, %v9117
      %v9119 = vpop.f32.mrf.mxu0
      %9120 = vmatprep.mubr.f32.mxu0 0.0
      %9121 = vmatmul.mubr.f32.gmra.mxu0 %v6123
      %v9122 = vpop.f32.mrf.mxu0
      %v9123 = vadd.f32 0.0, %v9122
      %v9124 = vpop.f32.mrf.mxu0
      %9125 = vmatprep.mubr.f32.mxu0 0.0
      %9126 = vmatmul.mubr.f32.gmra.mxu0 %v6125
      %v9127 = vpop.f32.mrf.mxu0
      %v9128 = vadd.f32 0.0, %v9127
      %v9129 = vpop.f32.mrf.mxu0
      %9130 = vmatprep.mubr.f32.mxu0 0.0
      %9131 = vmatmul.mubr.f32.gmra.mxu0 %v6127
      %v9132 = vpop.f32.mrf.mxu0
      %v9133 = vadd.f32 0.0, %v9132
      %v9134 = vpop.f32.mrf.mxu0
      %9135 = vmatprep.mubr.f32.mxu0 0.0
      %9136 = vmatmul.mubr.f32.gmra.mxu0 %v6129
      %v9137 = vpop.f32.mrf.mxu0
      %v9138 = vadd.f32 0.0, %v9137
      %v9139 = vpop.f32.mrf.mxu0
      %9140 = vmatprep.mubr.f32.mxu0 0.0
      %9141 = vmatmul.mubr.f32.gmra.mxu0 %v6131
      %v9142 = vpop.f32.mrf.mxu0
      %v9143 = vadd.f32 0.0, %v9142
      %v9144 = vpop.f32.mrf.mxu0
      %9145 = vmatprep.mubr.f32.mxu0 0.0
      %9146 = vmatmul.mubr.f32.gmra.mxu0 %v6133
      %v9147 = vpop.f32.mrf.mxu0
      %v9148 = vadd.f32 0.0, %v9147
      %v9149 = vpop.f32.mrf.mxu0
      %9150 = vmatprep.mubr.f32.mxu0 0.0
      %9151 = vmatmul.mubr.f32.gmra.mxu0 %v6135
      %v9152 = vpop.f32.mrf.mxu0
      %v9153 = vadd.f32 0.0, %v9152
      %v9154 = vpop.f32.mrf.mxu0
      %9155 = vmatprep.mubr.f32.mxu0 0.0
      %9156 = vmatmul.mubr.f32.gmra.mxu0 %v6137
      %v9157 = vpop.f32.mrf.mxu0
      %v9158 = vadd.f32 0.0, %v9157
      %v9159 = vpop.f32.mrf.mxu0
      %9160 = vmatprep.mubr.f32.mxu0 0.0
      %9161 = vmatmul.mubr.f32.gmra.mxu0 %v6139
      %v9162 = vpop.f32.mrf.mxu0
      %v9163 = vadd.f32 0.0, %v9162
      %v9164 = vpop.f32.mrf.mxu0
      %9165 = vmatprep.mubr.f32.mxu0 0.0
      %9166 = vmatmul.mubr.f32.gmra.mxu0 %v6141
      %v9167 = vpop.f32.mrf.mxu0
      %v9168 = vadd.f32 0.0, %v9167
      %v9169 = vpop.f32.mrf.mxu0
      %9170 = vmatprep.mubr.f32.mxu0 0.0
      %9171 = vmatmul.mubr.f32.gmra.mxu0 %v6143
      %v9172 = vpop.f32.mrf.mxu0
      %v9173 = vadd.f32 0.0, %v9172
      %v9174 = vpop.f32.mrf.mxu0
      %9175 = vmatprep.mubr.f32.mxu0 0.0
      %9176 = vmatmul.mubr.f32.gmra.mxu0 %v6145
      %v9177 = vpop.f32.mrf.mxu0
      %v9178 = vadd.f32 0.0, %v9177
      %v9179 = vpop.f32.mrf.mxu0
      %9180 = vmatprep.mubr.f32.mxu0 0.0
      %9181 = vmatmul.mubr.f32.gmra.mxu0 %v6147
      %v9182 = vpop.f32.mrf.mxu0
      %v9183 = vadd.f32 0.0, %v9182
      %v9184 = vpop.f32.mrf.mxu0
      %9185 = vmatprep.mubr.f32.mxu0 0.0
      %9186 = vmatmul.mubr.f32.gmra.mxu0 %v6149
      %v9187 = vpop.f32.mrf.mxu0
      %v9188 = vadd.f32 0.0, %v9187
      %v9189 = vpop.f32.mrf.mxu0
      %9190 = vmatprep.mubr.f32.mxu0 0.0
      %9191 = vmatmul.mubr.f32.gmra.mxu0 %v6151
      %v9192 = vpop.f32.mrf.mxu0
      %v9193 = vadd.f32 0.0, %v9192
      %v9194 = vpop.f32.mrf.mxu0
      %9195 = vmatprep.mubr.f32.mxu0 0.0
      %9196 = vmatmul.mubr.f32.gmra.mxu0 %v6153
      %v9197 = vpop.f32.mrf.mxu0
      %v9198 = vadd.f32 0.0, %v9197
      %v9199 = vpop.f32.mrf.mxu0
      %9200 = vmatprep.mubr.f32.mxu0 0.0
      %9201 = vmatmul.mubr.f32.gmra.mxu0 %v6155
      %v9202 = vpop.f32.mrf.mxu0
      %v9203 = vadd.f32 0.0, %v9202
      %v9204 = vpop.f32.mrf.mxu0
      %9205 = vmatprep.mubr.f32.mxu0 0.0
      %9206 = vmatmul.mubr.f32.gmra.mxu0 %v6157
      %v9207 = vpop.f32.mrf.mxu0
      %v9208 = vadd.f32 0.0, %v9207
      %v9209 = vpop.f32.mrf.mxu0
      %9210 = vmatprep.mubr.f32.mxu0 0.0
      %9211 = vmatmul.mubr.f32.gmra.mxu0 %v6159
      %v9212 = vpop.f32.mrf.mxu0
      %v9213 = vadd.f32 0.0, %v9212
      %v9214 = vpop.f32.mrf.mxu0
      %9215 = vmatprep.mubr.f32.mxu0 0.0
      %9216 = vmatmul.mubr.f32.gmra.mxu0 %v6161
      %v9217 = vpop.f32.mrf.mxu0
      %v9218 = vadd.f32 0.0, %v9217
      %v9219 = vpop.f32.mrf.mxu0
      %9220 = vmatprep.mubr.f32.mxu0 0.0
      %9221 = vmatmul.mubr.f32.gmra.mxu0 %v6163
      %v9222 = vpop.f32.mrf.mxu0
      %v9223 = vadd.f32 0.0, %v9222
      %v9224 = vpop.f32.mrf.mxu0
      %9225 = vmatprep.mubr.f32.mxu0 0.0
      %9226 = vmatmul.mubr.f32.gmra.mxu0 %v6165
      %v9227 = vpop.f32.mrf.mxu0
      %v9228 = vadd.f32 0.0, %v9227
      %v9229 = vpop.f32.mrf.mxu0
      %9230 = vmatprep.mubr.f32.mxu0 0.0
      %9231 = vmatmul.mubr.f32.gmra.mxu0 %v6167
      %v9232 = vpop.f32.mrf.mxu0
      %v9233 = vadd.f32 0.0, %v9232
      %v9234 = vpop.f32.mrf.mxu0
      %9235 = vmatprep.mubr.f32.mxu0 0.0
      %9236 = vmatmul.mubr.f32.gmra.mxu0 %v6169
      %v9237 = vpop.f32.mrf.mxu0
      %v9238 = vadd.f32 0.0, %v9237
      %v9239 = vpop.f32.mrf.mxu0
      %9240 = vmatprep.mubr.f32.mxu0 0.0
      %9241 = vmatmul.mubr.f32.gmra.mxu0 %v6171
      %v9242 = vpop.f32.mrf.mxu0
      %v9243 = vadd.f32 0.0, %v9242
      %v9244 = vpop.f32.mrf.mxu0
      %9245 = vmatprep.mubr.f32.mxu0 0.0
      %9246 = vmatmul.mubr.f32.gmra.mxu0 %v6173
      %v9247 = vpop.f32.mrf.mxu0
      %v9248 = vadd.f32 0.0, %v9247
      %v9249 = vpop.f32.mrf.mxu0
      %9250 = vmatprep.mubr.f32.mxu0 0.0
      %9251 = vmatmul.mubr.f32.gmra.mxu0 %v6175
      %v9252 = vpop.f32.mrf.mxu0
      %v9253 = vadd.f32 0.0, %v9252
      %v9254 = vpop.f32.mrf.mxu0
      %9255 = vmatprep.mubr.f32.mxu0 0.0
      %9256 = vmatmul.mubr.f32.gmra.mxu0 %v6177
      %v9257 = vpop.f32.mrf.mxu0
      %v9258 = vadd.f32 0.0, %v9257
      %v9259 = vpop.f32.mrf.mxu0
      %9260 = vmatprep.mubr.f32.mxu0 0.0
      %9261 = vmatmul.mubr.f32.gmra.mxu0 %v6179
      %v9262 = vpop.f32.mrf.mxu0
      %v9263 = vadd.f32 0.0, %v9262
      %v9264 = vpop.f32.mrf.mxu0
      %9265 = vmatprep.mubr.f32.mxu0 0.0
      %9266 = vmatmul.mubr.f32.gmra.mxu0 %v6181
      %v9267 = vpop.f32.mrf.mxu0
      %v9268 = vadd.f32 0.0, %v9267
      %v9269 = vpop.f32.mrf.mxu0
      %9270 = vmatprep.mubr.f32.mxu0 0.0
      %9271 = vmatmul.mubr.f32.gmra.mxu0 %v6183
      %v9272 = vpop.f32.mrf.mxu0
      %v9273 = vadd.f32 0.0, %v9272
      %v9274 = vpop.f32.mrf.mxu0
      %9275 = vmatprep.mubr.f32.mxu0 0.0
      %9276 = vmatmul.mubr.f32.gmra.mxu0 %v6185
      %v9277 = vpop.f32.mrf.mxu0
      %v9278 = vadd.f32 0.0, %v9277
      %v9279 = vpop.f32.mrf.mxu0
      %9280 = vmatprep.mubr.f32.mxu0 0.0
      %9281 = vmatmul.mubr.f32.gmra.mxu0 %v6187
      %v9282 = vpop.f32.mrf.mxu0
      %v9283 = vadd.f32 0.0, %v9282
      %v9284 = vpop.f32.mrf.mxu0
      %9285 = vmatprep.mubr.f32.mxu0 0.0
      %9286 = vmatmul.mubr.f32.gmra.mxu0 %v6189
      %v9287 = vpop.f32.mrf.mxu0
      %v9288 = vadd.f32 0.0, %v9287
      %v9289 = vpop.f32.mrf.mxu0
      %9290 = vmatprep.mubr.f32.mxu0 0.0
      %9291 = vmatmul.mubr.f32.gmra.mxu0 %v6191
      %v9292 = vpop.f32.mrf.mxu0
      %v9293 = vadd.f32 0.0, %v9292
      %v9294 = vpop.f32.mrf.mxu0
      %9295 = vmatprep.mubr.f32.mxu0 0.0
      %9296 = vmatmul.mubr.f32.gmra.mxu0 %v6193
      %v9297 = vpop.f32.mrf.mxu0
      %v9298 = vadd.f32 0.0, %v9297
      %v9299 = vpop.f32.mrf.mxu0
      %9300 = vmatprep.mubr.f32.mxu0 0.0
      %9301 = vmatmul.mubr.f32.gmra.mxu0 %v6195
      %v9302 = vpop.f32.mrf.mxu0
      %v9303 = vadd.f32 0.0, %v9302
      %v9304 = vpop.f32.mrf.mxu0
      %9305 = vmatprep.mubr.f32.mxu0 0.0
      %9306 = vmatmul.mubr.f32.gmra.mxu0 %v6197
      %v9307 = vpop.f32.mrf.mxu0
      %v9308 = vadd.f32 0.0, %v9307
      %v9309 = vpop.f32.mrf.mxu0
      %9310 = vmatprep.mubr.f32.mxu0 0.0
      %9311 = vmatmul.mubr.f32.gmra.mxu0 %v6199
      %v9312 = vpop.f32.mrf.mxu0
      %v9313 = vadd.f32 0.0, %v9312
      %v9314 = vpop.f32.mrf.mxu0
      %9315 = vmatprep.mubr.f32.mxu0 0.0
      %9316 = vmatmul.mubr.f32.gmra.mxu0 %v6201
      %v9317 = vpop.f32.mrf.mxu0
      %v9318 = vadd.f32 0.0, %v9317
      %v9319 = vpop.f32.mrf.mxu0
      %9320 = vmatprep.mubr.f32.mxu0 0.0
      %9321 = vmatmul.mubr.f32.gmra.mxu0 %v6203
      %v9322 = vpop.f32.mrf.mxu0
      %v9323 = vadd.f32 0.0, %v9322
      %v9324 = vpop.f32.mrf.mxu0
      %9325 = vmatprep.mubr.f32.mxu0 0.0
      %9326 = vmatmul.mubr.f32.gmra.mxu0 %v6205
      %v9327 = vpop.f32.mrf.mxu0
      %v9328 = vadd.f32 0.0, %v9327
      %v9329 = vpop.f32.mrf.mxu0
      %9330 = vmatprep.mubr.f32.mxu0 0.0
      %9331 = vmatmul.mubr.f32.gmra.mxu0 %v6207
      %v9332 = vpop.f32.mrf.mxu0
      %v9333 = vadd.f32 0.0, %v9332
      %v9334 = vpop.f32.mrf.mxu0
      %9335 = vmatprep.mubr.f32.mxu0 0.0
      %9336 = vmatmul.mubr.f32.gmra.mxu0 %v6209
      %v9337 = vpop.f32.mrf.mxu0
      %v9338 = vadd.f32 0.0, %v9337
      %v9339 = vpop.f32.mrf.mxu0
      %9340 = vmatprep.mubr.f32.mxu0 0.0
      %9341 = vmatmul.mubr.f32.gmra.mxu0 %v6211
      %v9342 = vpop.f32.mrf.mxu0
      %v9343 = vadd.f32 0.0, %v9342
      %v9344 = vpop.f32.mrf.mxu0
      %9345 = vmatprep.mubr.f32.mxu0 0.0
      %9346 = vmatmul.mubr.f32.gmra.mxu0 %v6213
      %v9347 = vpop.f32.mrf.mxu0
      %v9348 = vadd.f32 0.0, %v9347
      %v9349 = vpop.f32.mrf.mxu0
      %9350 = vmatprep.mubr.f32.mxu0 0.0
      %9351 = vmatmul.mubr.f32.gmra.mxu0 %v6215
      %v9352 = vpop.f32.mrf.mxu0
      %v9353 = vadd.f32 0.0, %v9352
      %v9354 = vpop.f32.mrf.mxu0
      %9355 = vmatprep.mubr.f32.mxu0 0.0
      %9356 = vmatmul.mubr.f32.gmra.mxu0 %v6217
      %v9357 = vpop.f32.mrf.mxu0
      %v9358 = vadd.f32 0.0, %v9357
      %v9359 = vpop.f32.mrf.mxu0
      %9360 = vmatprep.mubr.f32.mxu0 0.0
      %9361 = vmatmul.mubr.f32.gmra.mxu0 %v6219
      %v9362 = vpop.f32.mrf.mxu0
      %v9363 = vadd.f32 0.0, %v9362
      %v9364 = vpop.f32.mrf.mxu0
      %9365 = vmatprep.mubr.f32.mxu0 0.0
      %9366 = vmatmul.mubr.f32.gmra.mxu0 %v6221
      %v9367 = vpop.f32.mrf.mxu0
      %v9368 = vadd.f32 0.0, %v9367
      %v9369 = vpop.f32.mrf.mxu0
      %9370 = vmatprep.mubr.f32.mxu0 0.0
      %9371 = vmatmul.mubr.f32.gmra.mxu0 %v6223
      %v9372 = vpop.f32.mrf.mxu0
      %v9373 = vadd.f32 0.0, %v9372
      %v9374 = vpop.f32.mrf.mxu0
      %9375 = vmatprep.mubr.f32.mxu0 0.0
      %9376 = vmatmul.mubr.f32.gmra.mxu0 %v6225
      %v9377 = vpop.f32.mrf.mxu0
      %v9378 = vadd.f32 0.0, %v9377
      %v9379 = vpop.f32.mrf.mxu0
      %9380 = vmatprep.mubr.f32.mxu0 0.0
      %9381 = vmatmul.mubr.f32.gmra.mxu0 %v6227
      %v9382 = vpop.f32.mrf.mxu0
      %v9383 = vadd.f32 0.0, %v9382
      %v9384 = vpop.f32.mrf.mxu0
      %9385 = vmatprep.mubr.f32.mxu0 0.0
      %9386 = vmatmul.mubr.f32.gmra.mxu0 %v6229
      %v9387 = vpop.f32.mrf.mxu0
      %v9388 = vadd.f32 0.0, %v9387
      %v9389 = vpop.f32.mrf.mxu0
      %9390 = vmatprep.mubr.f32.mxu0 0.0
      %9391 = vmatmul.mubr.f32.gmra.mxu0 %v6231
      %v9392 = vpop.f32.mrf.mxu0
      %v9393 = vadd.f32 0.0, %v9392
      %v9394 = vpop.f32.mrf.mxu0
      %9395 = vmatprep.mubr.f32.mxu0 0.0
      %9396 = vmatmul.mubr.f32.gmra.mxu0 %v6233
      %v9397 = vpop.f32.mrf.mxu0
      %v9398 = vadd.f32 0.0, %v9397
      %v9399 = vpop.f32.mrf.mxu0
      %9400 = vmatprep.mubr.f32.mxu0 0.0
      %9401 = vmatmul.mubr.f32.gmra.mxu0 %v6235
      %v9402 = vpop.f32.mrf.mxu0
      %v9403 = vadd.f32 0.0, %v9402
      %v9404 = vpop.f32.mrf.mxu0
      %9405 = vmatprep.mubr.f32.mxu0 0.0
      %9406 = vmatmul.mubr.f32.gmra.mxu0 %v6237
      %v9407 = vpop.f32.mrf.mxu0
      %v9408 = vadd.f32 0.0, %v9407
      %v9409 = vpop.f32.mrf.mxu0
      %9410 = vmatprep.mubr.f32.mxu0 0.0
      %9411 = vmatmul.mubr.f32.gmra.mxu0 %v6239
      %v9412 = vpop.f32.mrf.mxu0
      %v9413 = vadd.f32 0.0, %v9412
      %v9414 = vpop.f32.mrf.mxu0
      %9415 = vmatprep.mubr.f32.mxu0 0.0
      %9416 = vmatmul.mubr.f32.gmra.mxu0 %v7480
      %v9417 = vpop.f32.mrf.mxu0
      %v9418 = vadd.f32 0.0, %v9417
      %v9419 = vpop.f32.mrf.mxu0
      %9420 = vmatprep.mubr.f32.mxu0 0.0
      %9421 = vmatmul.mubr.f32.gmra.mxu0 %v7483
      %v9422 = vpop.f32.mrf.mxu0
      %v9423 = vadd.f32 0.0, %v9422
      %v9424 = vpop.f32.mrf.mxu0
      %9425 = vmatprep.mubr.f32.mxu0 0.0
      %9426 = vmatmul.mubr.f32.gmra.mxu0 %v7486
      %v9427 = vpop.f32.mrf.mxu0
      %v9428 = vadd.f32 0.0, %v9427
      %v9429 = vpop.f32.mrf.mxu0
      %9430 = vmatprep.mubr.f32.mxu0 0.0
      %9431 = vmatmul.mubr.f32.gmra.mxu0 %v9013
      %v9432 = vpop.f32.mrf.mxu0
      %v9433 = vadd.f32 0.0, %v9432
      %v9434 = vpop.f32.mrf.mxu0
      %9435 = vmatprep.mubr.f32.mxu0 0.0
      %9436 = vmatmul.mubr.f32.gmra.mxu0 %v9016
      %v9437 = vpop.f32.mrf.mxu0
      %v9438 = vadd.f32 0.0, %v9437
      %v9439 = vpop.f32.mrf.mxu0
      %9440 = vmatprep.mubr.f32.mxu0 0.0
      %9441 = vmatmul.mubr.f32.gmra.mxu0 %v9019
      %v9442 = vpop.f32.mrf.mxu0
      %v9443 = vadd.f32 0.0, %v9442
      %v9444 = vpop.f32.mrf.mxu0
      %9445 = vdwg.mxu0
      %v9446 = vadd.f32 %v8938, %v9088
      %v9447 = vadd.f32 %v8939, %v9093
      %v9448 = vadd.f32 %v8940, %v9098
      %v9449 = vadd.f32 %v8941, %v9103
      %v9450 = vadd.f32 %v8942, %v9108
      %v9451 = vadd.f32 %v8943, %v9113
      %v9452 = vadd.f32 %v8944, %v9118
      %v9453 = vadd.f32 %v8945, %v9123
      %v9454 = vadd.f32 %v8946, %v9128
      %v9455 = vadd.f32 %v8947, %v9133
      %v9456 = vadd.f32 %v8948, %v9138
      %v9457 = vadd.f32 %v8949, %v9143
      %v9458 = vadd.f32 %v8950, %v9148
      %v9459 = vadd.f32 %v8951, %v9153
      %v9460 = vadd.f32 %v8952, %v9158
      %v9461 = vadd.f32 %v8953, %v9163
      %v9462 = vadd.f32 %v8954, %v9168
      %v9463 = vadd.f32 %v8955, %v9173
      %v9464 = vadd.f32 %v8956, %v9178
      %v9465 = vadd.f32 %v8957, %v9183
      %v9466 = vadd.f32 %v8958, %v9188
      %v9467 = vadd.f32 %v8959, %v9193
      %v9468 = vadd.f32 %v8960, %v9198
      %v9469 = vadd.f32 %v8961, %v9203
      %v9470 = vadd.f32 %v8962, %v9208
      %v9471 = vadd.f32 %v8963, %v9213
      %v9472 = vadd.f32 %v8964, %v9218
      %v9473 = vadd.f32 %v8965, %v9223
      %v9474 = vadd.f32 %v8966, %v9228
      %v9475 = vadd.f32 %v8967, %v9233
      %v9476 = vadd.f32 %v8968, %v9238
      %v9477 = vadd.f32 %v8969, %v9243
      %v9478 = vadd.f32 %v8970, %v9248
      %v9479 = vadd.f32 %v8971, %v9253
      %v9480 = vadd.f32 %v8972, %v9258
      %v9481 = vadd.f32 %v8973, %v9263
      %v9482 = vadd.f32 %v8974, %v9268
      %v9483 = vadd.f32 %v8975, %v9273
      %v9484 = vadd.f32 %v8976, %v9278
      %v9485 = vadd.f32 %v8977, %v9283
      %v9486 = vadd.f32 %v8978, %v9288
      %v9487 = vadd.f32 %v8979, %v9293
      %v9488 = vadd.f32 %v8980, %v9298
      %v9489 = vadd.f32 %v8981, %v9303
      %v9490 = vadd.f32 %v8982, %v9308
      %v9491 = vadd.f32 %v8983, %v9313
      %v9492 = vadd.f32 %v8984, %v9318
      %v9493 = vadd.f32 %v8985, %v9323
      %v9494 = vadd.f32 %v8986, %v9328
      %v9495 = vadd.f32 %v8987, %v9333
      %v9496 = vadd.f32 %v8988, %v9338
      %v9497 = vadd.f32 %v8989, %v9343
      %v9498 = vadd.f32 %v8990, %v9348
      %v9499 = vadd.f32 %v8991, %v9353
      %v9500 = vadd.f32 %v8992, %v9358
      %v9501 = vadd.f32 %v8993, %v9363
      %v9502 = vadd.f32 %v8994, %v9368
      %v9503 = vadd.f32 %v8995, %v9373
      %v9504 = vadd.f32 %v8996, %v9378
      %v9505 = vadd.f32 %v8997, %v9383
      %v9506 = vadd.f32 %v8998, %v9388
      %v9507 = vadd.f32 %v8999, %v9393
      %v9508 = vadd.f32 %v9000, %v9398
      %v9509 = vadd.f32 %v9001, %v9403
      %v9510 = vadd.f32 %v9002, %v9408
      %v9511 = vadd.f32 %v9003, %v9413
      %v9512 = vadd.f32 %v9004, %v9418
      %v9513 = vadd.f32 %v9005, %v9423
      %v9514 = vadd.f32 %v9006, %v9428
      %v9515 = vadd.f32 %v9007, %v9433
      %v9516 = vadd.f32 %v9008, %v9438
      %v9517 = vadd.f32 %v9009, %v9443
      %v9519 = vrot.slane %v5256, 1
      %v9520 = vrot.slane %v5257, 1
      %v9521 = vsel %vm1179, %v9519, %v9520
      %v9522 = vrot.slane %v5258, 1
      %v9523 = vsel %vm1179, %v9520, %v9522
      %v9524 = vrot.slane %v5259, 1
      %v9525 = vsel %vm1179, %v9522, %v9524
      %s9526 = scalar_lea.vmem %s3, 56
      %v9527 = vld [vmem:[%s9526] sm:$0xff]
      %v9528 = vsel %vm5527, %v9521, 0
      %v9530 = vsel %vm5527, %v9523, 0
      %v9532 = vsel %vm5527, %v9525, 0
      %9534 = vmatprep.subr.mxu0 0.0
      %9535 = vmatpush1.msra.mxu0 0.0
      %9536 = vmatprep.subr.mxu0 0.0
      %9537 = vmatpush1.msra.mxu0 0.0
      %9538 = vmatprep.subr.mxu0 0.0
      %9539 = vmatpush1.msra.mxu0 0.0
      %9540 = vmatprep.subr.mxu0 0.0
      %9541 = vmatpush1.msra.mxu0 0.0
      %9542 = vmatprep.subr.mxu0 0.0
      %9543 = vmatpush1.msra.mxu0 0.0
      %9544 = vmatprep.subr.mxu0 0.0
      %9545 = vmatpush1.msra.mxu0 0.0
      %9546 = vmatprep.subr.mxu0 0.0
      %9547 = vmatpush1.msra.mxu0 0.0
      %9548 = vmatprep.subr.mxu0 0.0
      %9549 = vmatpush1.msra.mxu0 0.0
      %9550 = vmatprep.subr.mxu0 0.0
      %9551 = vmatpush1.msra.mxu0 0.0
      %9552 = vmatprep.subr.mxu0 0.0
      %9553 = vmatpush1.msra.mxu0 0.0
      %9554 = vmatprep.subr.mxu0 0.0
      %9555 = vmatpush1.msra.mxu0 0.0
      %9556 = vmatprep.subr.mxu0 0.0
      %9557 = vmatpush1.msra.mxu0 0.0
      %9558 = vmatprep.subr.mxu0 0.0
      %9559 = vmatpush1.msra.mxu0 0.0
      %9560 = vmatprep.subr.mxu0 0.0
      %9561 = vmatpush1.msra.mxu0 0.0
      %9562 = vmatprep.subr.mxu0 0.0
      %9563 = vmatpush1.msra.mxu0 0.0
      %9564 = vmatprep.subr.mxu0 0.0
      %9565 = vmatpush1.msra.mxu0 %v9527
      %9566 = vmatprep.subr.mxu0 0.0
      %9567 = vmatpush2.msra.mxu0 0.0
      %9568 = vmatprep.subr.mxu0 0.0
      %9569 = vmatpush2.msra.mxu0 0.0
      %9570 = vmatprep.subr.mxu0 0.0
      %9571 = vmatpush2.msra.mxu0 0.0
      %9572 = vmatprep.subr.mxu0 0.0
      %9573 = vmatpush2.msra.mxu0 0.0
      %9574 = vmatprep.subr.mxu0 0.0
      %9575 = vmatpush2.msra.mxu0 0.0
      %9576 = vmatprep.subr.mxu0 0.0
      %9577 = vmatpush2.msra.mxu0 0.0
      %9578 = vmatprep.subr.mxu0 0.0
      %9579 = vmatpush2.msra.mxu0 0.0
      %9580 = vmatprep.subr.mxu0 0.0
      %9581 = vmatpush2.msra.mxu0 0.0
      %9582 = vmatprep.subr.mxu0 0.0
      %9583 = vmatpush2.msra.mxu0 0.0
      %9584 = vmatprep.subr.mxu0 0.0
      %9585 = vmatpush2.msra.mxu0 0.0
      %9586 = vmatprep.subr.mxu0 0.0
      %9587 = vmatpush2.msra.mxu0 0.0
      %9588 = vmatprep.subr.mxu0 0.0
      %9589 = vmatpush2.msra.mxu0 0.0
      %9590 = vmatprep.subr.mxu0 0.0
      %9591 = vmatpush2.msra.mxu0 0.0
      %9592 = vmatprep.subr.mxu0 0.0
      %9593 = vmatpush2.msra.mxu0 0.0
      %9594 = vmatprep.subr.mxu0 0.0
      %9595 = vmatpush2.msra.mxu0 0.0
      %9596 = vmatprep.subr.mxu0 0.0
      %9597 = vmatpush2.msra.mxu0 0.0
      %9598 = vmatprep.mubr.f32.mxu0 0.0
      %9599 = vmatmul.mubr.f32.gmra.mxu0 %v5540
      %v9600 = vpop.f32.mrf.mxu0
      %v9601 = vadd.f32 0.0, %v9600
      %v9602 = vpop.f32.mrf.mxu0
      %9603 = vmatprep.mubr.f32.mxu0 0.0
      %9604 = vmatmul.mubr.f32.gmra.mxu0 %v5542
      %v9605 = vpop.f32.mrf.mxu0
      %v9606 = vadd.f32 0.0, %v9605
      %v9607 = vpop.f32.mrf.mxu0
      %9608 = vmatprep.mubr.f32.mxu0 0.0
      %9609 = vmatmul.mubr.f32.gmra.mxu0 %v5544
      %v9610 = vpop.f32.mrf.mxu0
      %v9611 = vadd.f32 0.0, %v9610
      %v9612 = vpop.f32.mrf.mxu0
      %9613 = vmatprep.mubr.f32.mxu0 0.0
      %9614 = vmatmul.mubr.f32.gmra.mxu0 %v5546
      %v9615 = vpop.f32.mrf.mxu0
      %v9616 = vadd.f32 0.0, %v9615
      %v9617 = vpop.f32.mrf.mxu0
      %9618 = vmatprep.mubr.f32.mxu0 0.0
      %9619 = vmatmul.mubr.f32.gmra.mxu0 %v5548
      %v9620 = vpop.f32.mrf.mxu0
      %v9621 = vadd.f32 0.0, %v9620
      %v9622 = vpop.f32.mrf.mxu0
      %9623 = vmatprep.mubr.f32.mxu0 0.0
      %9624 = vmatmul.mubr.f32.gmra.mxu0 %v5550
      %v9625 = vpop.f32.mrf.mxu0
      %v9626 = vadd.f32 0.0, %v9625
      %v9627 = vpop.f32.mrf.mxu0
      %9628 = vmatprep.mubr.f32.mxu0 0.0
      %9629 = vmatmul.mubr.f32.gmra.mxu0 %v5552
      %v9630 = vpop.f32.mrf.mxu0
      %v9631 = vadd.f32 0.0, %v9630
      %v9632 = vpop.f32.mrf.mxu0
      %9633 = vmatprep.mubr.f32.mxu0 0.0
      %9634 = vmatmul.mubr.f32.gmra.mxu0 %v5554
      %v9635 = vpop.f32.mrf.mxu0
      %v9636 = vadd.f32 0.0, %v9635
      %v9637 = vpop.f32.mrf.mxu0
      %9638 = vmatprep.mubr.f32.mxu0 0.0
      %9639 = vmatmul.mubr.f32.gmra.mxu0 %v5556
      %v9640 = vpop.f32.mrf.mxu0
      %v9641 = vadd.f32 0.0, %v9640
      %v9642 = vpop.f32.mrf.mxu0
      %9643 = vmatprep.mubr.f32.mxu0 0.0
      %9644 = vmatmul.mubr.f32.gmra.mxu0 %v5558
      %v9645 = vpop.f32.mrf.mxu0
      %v9646 = vadd.f32 0.0, %v9645
      %v9647 = vpop.f32.mrf.mxu0
      %9648 = vmatprep.mubr.f32.mxu0 0.0
      %9649 = vmatmul.mubr.f32.gmra.mxu0 %v5560
      %v9650 = vpop.f32.mrf.mxu0
      %v9651 = vadd.f32 0.0, %v9650
      %v9652 = vpop.f32.mrf.mxu0
      %9653 = vmatprep.mubr.f32.mxu0 0.0
      %9654 = vmatmul.mubr.f32.gmra.mxu0 %v5562
      %v9655 = vpop.f32.mrf.mxu0
      %v9656 = vadd.f32 0.0, %v9655
      %v9657 = vpop.f32.mrf.mxu0
      %9658 = vmatprep.mubr.f32.mxu0 0.0
      %9659 = vmatmul.mubr.f32.gmra.mxu0 %v5564
      %v9660 = vpop.f32.mrf.mxu0
      %v9661 = vadd.f32 0.0, %v9660
      %v9662 = vpop.f32.mrf.mxu0
      %9663 = vmatprep.mubr.f32.mxu0 0.0
      %9664 = vmatmul.mubr.f32.gmra.mxu0 %v5566
      %v9665 = vpop.f32.mrf.mxu0
      %v9666 = vadd.f32 0.0, %v9665
      %v9667 = vpop.f32.mrf.mxu0
      %9668 = vmatprep.mubr.f32.mxu0 0.0
      %9669 = vmatmul.mubr.f32.gmra.mxu0 %v5568
      %v9670 = vpop.f32.mrf.mxu0
      %v9671 = vadd.f32 0.0, %v9670
      %v9672 = vpop.f32.mrf.mxu0
      %9673 = vmatprep.mubr.f32.mxu0 0.0
      %9674 = vmatmul.mubr.f32.gmra.mxu0 %v5570
      %v9675 = vpop.f32.mrf.mxu0
      %v9676 = vadd.f32 0.0, %v9675
      %v9677 = vpop.f32.mrf.mxu0
      %9678 = vmatprep.mubr.f32.mxu0 0.0
      %9679 = vmatmul.mubr.f32.gmra.mxu0 %v5572
      %v9680 = vpop.f32.mrf.mxu0
      %v9681 = vadd.f32 0.0, %v9680
      %v9682 = vpop.f32.mrf.mxu0
      %9683 = vmatprep.mubr.f32.mxu0 0.0
      %9684 = vmatmul.mubr.f32.gmra.mxu0 %v5574
      %v9685 = vpop.f32.mrf.mxu0
      %v9686 = vadd.f32 0.0, %v9685
      %v9687 = vpop.f32.mrf.mxu0
      %9688 = vmatprep.mubr.f32.mxu0 0.0
      %9689 = vmatmul.mubr.f32.gmra.mxu0 %v5576
      %v9690 = vpop.f32.mrf.mxu0
      %v9691 = vadd.f32 0.0, %v9690
      %v9692 = vpop.f32.mrf.mxu0
      %9693 = vmatprep.mubr.f32.mxu0 0.0
      %9694 = vmatmul.mubr.f32.gmra.mxu0 %v5578
      %v9695 = vpop.f32.mrf.mxu0
      %v9696 = vadd.f32 0.0, %v9695
      %v9697 = vpop.f32.mrf.mxu0
      %9698 = vmatprep.mubr.f32.mxu0 0.0
      %9699 = vmatmul.mubr.f32.gmra.mxu0 %v5580
      %v9700 = vpop.f32.mrf.mxu0
      %v9701 = vadd.f32 0.0, %v9700
      %v9702 = vpop.f32.mrf.mxu0
      %9703 = vmatprep.mubr.f32.mxu0 0.0
      %9704 = vmatmul.mubr.f32.gmra.mxu0 %v5582
      %v9705 = vpop.f32.mrf.mxu0
      %v9706 = vadd.f32 0.0, %v9705
      %v9707 = vpop.f32.mrf.mxu0
      %9708 = vmatprep.mubr.f32.mxu0 0.0
      %9709 = vmatmul.mubr.f32.gmra.mxu0 %v5584
      %v9710 = vpop.f32.mrf.mxu0
      %v9711 = vadd.f32 0.0, %v9710
      %v9712 = vpop.f32.mrf.mxu0
      %9713 = vmatprep.mubr.f32.mxu0 0.0
      %9714 = vmatmul.mubr.f32.gmra.mxu0 %v5586
      %v9715 = vpop.f32.mrf.mxu0
      %v9716 = vadd.f32 0.0, %v9715
      %v9717 = vpop.f32.mrf.mxu0
      %9718 = vmatprep.mubr.f32.mxu0 0.0
      %9719 = vmatmul.mubr.f32.gmra.mxu0 %v5588
      %v9720 = vpop.f32.mrf.mxu0
      %v9721 = vadd.f32 0.0, %v9720
      %v9722 = vpop.f32.mrf.mxu0
      %9723 = vmatprep.mubr.f32.mxu0 0.0
      %9724 = vmatmul.mubr.f32.gmra.mxu0 %v5590
      %v9725 = vpop.f32.mrf.mxu0
      %v9726 = vadd.f32 0.0, %v9725
      %v9727 = vpop.f32.mrf.mxu0
      %9728 = vmatprep.mubr.f32.mxu0 0.0
      %9729 = vmatmul.mubr.f32.gmra.mxu0 %v5592
      %v9730 = vpop.f32.mrf.mxu0
      %v9731 = vadd.f32 0.0, %v9730
      %v9732 = vpop.f32.mrf.mxu0
      %9733 = vmatprep.mubr.f32.mxu0 0.0
      %9734 = vmatmul.mubr.f32.gmra.mxu0 %v5594
      %v9735 = vpop.f32.mrf.mxu0
      %v9736 = vadd.f32 0.0, %v9735
      %v9737 = vpop.f32.mrf.mxu0
      %9738 = vmatprep.mubr.f32.mxu0 0.0
      %9739 = vmatmul.mubr.f32.gmra.mxu0 %v5596
      %v9740 = vpop.f32.mrf.mxu0
      %v9741 = vadd.f32 0.0, %v9740
      %v9742 = vpop.f32.mrf.mxu0
      %9743 = vmatprep.mubr.f32.mxu0 0.0
      %9744 = vmatmul.mubr.f32.gmra.mxu0 %v5598
      %v9745 = vpop.f32.mrf.mxu0
      %v9746 = vadd.f32 0.0, %v9745
      %v9747 = vpop.f32.mrf.mxu0
      %9748 = vmatprep.mubr.f32.mxu0 0.0
      %9749 = vmatmul.mubr.f32.gmra.mxu0 %v5600
      %v9750 = vpop.f32.mrf.mxu0
      %v9751 = vadd.f32 0.0, %v9750
      %v9752 = vpop.f32.mrf.mxu0
      %9753 = vmatprep.mubr.f32.mxu0 0.0
      %9754 = vmatmul.mubr.f32.gmra.mxu0 %v5602
      %v9755 = vpop.f32.mrf.mxu0
      %v9756 = vadd.f32 0.0, %v9755
      %v9757 = vpop.f32.mrf.mxu0
      %9758 = vmatprep.mubr.f32.mxu0 0.0
      %9759 = vmatmul.mubr.f32.gmra.mxu0 %v5604
      %v9760 = vpop.f32.mrf.mxu0
      %v9761 = vadd.f32 0.0, %v9760
      %v9762 = vpop.f32.mrf.mxu0
      %9763 = vmatprep.mubr.f32.mxu0 0.0
      %9764 = vmatmul.mubr.f32.gmra.mxu0 %v5606
      %v9765 = vpop.f32.mrf.mxu0
      %v9766 = vadd.f32 0.0, %v9765
      %v9767 = vpop.f32.mrf.mxu0
      %9768 = vmatprep.mubr.f32.mxu0 0.0
      %9769 = vmatmul.mubr.f32.gmra.mxu0 %v5608
      %v9770 = vpop.f32.mrf.mxu0
      %v9771 = vadd.f32 0.0, %v9770
      %v9772 = vpop.f32.mrf.mxu0
      %9773 = vmatprep.mubr.f32.mxu0 0.0
      %9774 = vmatmul.mubr.f32.gmra.mxu0 %v5610
      %v9775 = vpop.f32.mrf.mxu0
      %v9776 = vadd.f32 0.0, %v9775
      %v9777 = vpop.f32.mrf.mxu0
      %9778 = vmatprep.mubr.f32.mxu0 0.0
      %9779 = vmatmul.mubr.f32.gmra.mxu0 %v5612
      %v9780 = vpop.f32.mrf.mxu0
      %v9781 = vadd.f32 0.0, %v9780
      %v9782 = vpop.f32.mrf.mxu0
      %9783 = vmatprep.mubr.f32.mxu0 0.0
      %9784 = vmatmul.mubr.f32.gmra.mxu0 %v5614
      %v9785 = vpop.f32.mrf.mxu0
      %v9786 = vadd.f32 0.0, %v9785
      %v9787 = vpop.f32.mrf.mxu0
      %9788 = vmatprep.mubr.f32.mxu0 0.0
      %9789 = vmatmul.mubr.f32.gmra.mxu0 %v5616
      %v9790 = vpop.f32.mrf.mxu0
      %v9791 = vadd.f32 0.0, %v9790
      %v9792 = vpop.f32.mrf.mxu0
      %9793 = vmatprep.mubr.f32.mxu0 0.0
      %9794 = vmatmul.mubr.f32.gmra.mxu0 %v5618
      %v9795 = vpop.f32.mrf.mxu0
      %v9796 = vadd.f32 0.0, %v9795
      %v9797 = vpop.f32.mrf.mxu0
      %9798 = vmatprep.mubr.f32.mxu0 0.0
      %9799 = vmatmul.mubr.f32.gmra.mxu0 %v5620
      %v9800 = vpop.f32.mrf.mxu0
      %v9801 = vadd.f32 0.0, %v9800
      %v9802 = vpop.f32.mrf.mxu0
      %9803 = vmatprep.mubr.f32.mxu0 0.0
      %9804 = vmatmul.mubr.f32.gmra.mxu0 %v5622
      %v9805 = vpop.f32.mrf.mxu0
      %v9806 = vadd.f32 0.0, %v9805
      %v9807 = vpop.f32.mrf.mxu0
      %9808 = vmatprep.mubr.f32.mxu0 0.0
      %9809 = vmatmul.mubr.f32.gmra.mxu0 %v5624
      %v9810 = vpop.f32.mrf.mxu0
      %v9811 = vadd.f32 0.0, %v9810
      %v9812 = vpop.f32.mrf.mxu0
      %9813 = vmatprep.mubr.f32.mxu0 0.0
      %9814 = vmatmul.mubr.f32.gmra.mxu0 %v5626
      %v9815 = vpop.f32.mrf.mxu0
      %v9816 = vadd.f32 0.0, %v9815
      %v9817 = vpop.f32.mrf.mxu0
      %9818 = vmatprep.mubr.f32.mxu0 0.0
      %9819 = vmatmul.mubr.f32.gmra.mxu0 %v5628
      %v9820 = vpop.f32.mrf.mxu0
      %v9821 = vadd.f32 0.0, %v9820
      %v9822 = vpop.f32.mrf.mxu0
      %9823 = vmatprep.mubr.f32.mxu0 0.0
      %9824 = vmatmul.mubr.f32.gmra.mxu0 %v5630
      %v9825 = vpop.f32.mrf.mxu0
      %v9826 = vadd.f32 0.0, %v9825
      %v9827 = vpop.f32.mrf.mxu0
      %9828 = vmatprep.mubr.f32.mxu0 0.0
      %9829 = vmatmul.mubr.f32.gmra.mxu0 %v5632
      %v9830 = vpop.f32.mrf.mxu0
      %v9831 = vadd.f32 0.0, %v9830
      %v9832 = vpop.f32.mrf.mxu0
      %9833 = vmatprep.mubr.f32.mxu0 0.0
      %9834 = vmatmul.mubr.f32.gmra.mxu0 %v5634
      %v9835 = vpop.f32.mrf.mxu0
      %v9836 = vadd.f32 0.0, %v9835
      %v9837 = vpop.f32.mrf.mxu0
      %9838 = vmatprep.mubr.f32.mxu0 0.0
      %9839 = vmatmul.mubr.f32.gmra.mxu0 %v5636
      %v9840 = vpop.f32.mrf.mxu0
      %v9841 = vadd.f32 0.0, %v9840
      %v9842 = vpop.f32.mrf.mxu0
      %9843 = vmatprep.mubr.f32.mxu0 0.0
      %9844 = vmatmul.mubr.f32.gmra.mxu0 %v5638
      %v9845 = vpop.f32.mrf.mxu0
      %v9846 = vadd.f32 0.0, %v9845
      %v9847 = vpop.f32.mrf.mxu0
      %9848 = vmatprep.mubr.f32.mxu0 0.0
      %9849 = vmatmul.mubr.f32.gmra.mxu0 %v5640
      %v9850 = vpop.f32.mrf.mxu0
      %v9851 = vadd.f32 0.0, %v9850
      %v9852 = vpop.f32.mrf.mxu0
      %9853 = vmatprep.mubr.f32.mxu0 0.0
      %9854 = vmatmul.mubr.f32.gmra.mxu0 %v5642
      %v9855 = vpop.f32.mrf.mxu0
      %v9856 = vadd.f32 0.0, %v9855
      %v9857 = vpop.f32.mrf.mxu0
      %9858 = vmatprep.mubr.f32.mxu0 0.0
      %9859 = vmatmul.mubr.f32.gmra.mxu0 %v5644
      %v9860 = vpop.f32.mrf.mxu0
      %v9861 = vadd.f32 0.0, %v9860
      %v9862 = vpop.f32.mrf.mxu0
      %9863 = vmatprep.mubr.f32.mxu0 0.0
      %9864 = vmatmul.mubr.f32.gmra.mxu0 %v5646
      %v9865 = vpop.f32.mrf.mxu0
      %v9866 = vadd.f32 0.0, %v9865
      %v9867 = vpop.f32.mrf.mxu0
      %9868 = vmatprep.mubr.f32.mxu0 0.0
      %9869 = vmatmul.mubr.f32.gmra.mxu0 %v5648
      %v9870 = vpop.f32.mrf.mxu0
      %v9871 = vadd.f32 0.0, %v9870
      %v9872 = vpop.f32.mrf.mxu0
      %9873 = vmatprep.mubr.f32.mxu0 0.0
      %9874 = vmatmul.mubr.f32.gmra.mxu0 %v5650
      %v9875 = vpop.f32.mrf.mxu0
      %v9876 = vadd.f32 0.0, %v9875
      %v9877 = vpop.f32.mrf.mxu0
      %9878 = vmatprep.mubr.f32.mxu0 0.0
      %9879 = vmatmul.mubr.f32.gmra.mxu0 %v5652
      %v9880 = vpop.f32.mrf.mxu0
      %v9881 = vadd.f32 0.0, %v9880
      %v9882 = vpop.f32.mrf.mxu0
      %9883 = vmatprep.mubr.f32.mxu0 0.0
      %9884 = vmatmul.mubr.f32.gmra.mxu0 %v5654
      %v9885 = vpop.f32.mrf.mxu0
      %v9886 = vadd.f32 0.0, %v9885
      %v9887 = vpop.f32.mrf.mxu0
      %9888 = vmatprep.mubr.f32.mxu0 0.0
      %9889 = vmatmul.mubr.f32.gmra.mxu0 %v5656
      %v9890 = vpop.f32.mrf.mxu0
      %v9891 = vadd.f32 0.0, %v9890
      %v9892 = vpop.f32.mrf.mxu0
      %9893 = vmatprep.mubr.f32.mxu0 0.0
      %9894 = vmatmul.mubr.f32.gmra.mxu0 %v5658
      %v9895 = vpop.f32.mrf.mxu0
      %v9896 = vadd.f32 0.0, %v9895
      %v9897 = vpop.f32.mrf.mxu0
      %9898 = vmatprep.mubr.f32.mxu0 0.0
      %9899 = vmatmul.mubr.f32.gmra.mxu0 %v5660
      %v9900 = vpop.f32.mrf.mxu0
      %v9901 = vadd.f32 0.0, %v9900
      %v9902 = vpop.f32.mrf.mxu0
      %9903 = vmatprep.mubr.f32.mxu0 0.0
      %9904 = vmatmul.mubr.f32.gmra.mxu0 %v5662
      %v9905 = vpop.f32.mrf.mxu0
      %v9906 = vadd.f32 0.0, %v9905
      %v9907 = vpop.f32.mrf.mxu0
      %9908 = vmatprep.mubr.f32.mxu0 0.0
      %9909 = vmatmul.mubr.f32.gmra.mxu0 %v5664
      %v9910 = vpop.f32.mrf.mxu0
      %v9911 = vadd.f32 0.0, %v9910
      %v9912 = vpop.f32.mrf.mxu0
      %9913 = vmatprep.mubr.f32.mxu0 0.0
      %9914 = vmatmul.mubr.f32.gmra.mxu0 %v5666
      %v9915 = vpop.f32.mrf.mxu0
      %v9916 = vadd.f32 0.0, %v9915
      %v9917 = vpop.f32.mrf.mxu0
      %9918 = vmatprep.mubr.f32.mxu0 0.0
      %9919 = vmatmul.mubr.f32.gmra.mxu0 %v5668
      %v9920 = vpop.f32.mrf.mxu0
      %v9921 = vadd.f32 0.0, %v9920
      %v9922 = vpop.f32.mrf.mxu0
      %9923 = vmatprep.mubr.f32.mxu0 0.0
      %9924 = vmatmul.mubr.f32.gmra.mxu0 %v5670
      %v9925 = vpop.f32.mrf.mxu0
      %v9926 = vadd.f32 0.0, %v9925
      %v9927 = vpop.f32.mrf.mxu0
      %9928 = vmatprep.mubr.f32.mxu0 0.0
      %9929 = vmatmul.mubr.f32.gmra.mxu0 %v7995
      %v9930 = vpop.f32.mrf.mxu0
      %v9931 = vadd.f32 0.0, %v9930
      %v9932 = vpop.f32.mrf.mxu0
      %9933 = vmatprep.mubr.f32.mxu0 0.0
      %9934 = vmatmul.mubr.f32.gmra.mxu0 %v7997
      %v9935 = vpop.f32.mrf.mxu0
      %v9936 = vadd.f32 0.0, %v9935
      %v9937 = vpop.f32.mrf.mxu0
      %9938 = vmatprep.mubr.f32.mxu0 0.0
      %9939 = vmatmul.mubr.f32.gmra.mxu0 %v7999
      %v9940 = vpop.f32.mrf.mxu0
      %v9941 = vadd.f32 0.0, %v9940
      %v9942 = vpop.f32.mrf.mxu0
      %9943 = vmatprep.mubr.f32.mxu0 0.0
      %9944 = vmatmul.mubr.f32.gmra.mxu0 %v9528
      %v9945 = vpop.f32.mrf.mxu0
      %v9946 = vadd.f32 0.0, %v9945
      %v9947 = vpop.f32.mrf.mxu0
      %9948 = vmatprep.mubr.f32.mxu0 0.0
      %9949 = vmatmul.mubr.f32.gmra.mxu0 %v9530
      %v9950 = vpop.f32.mrf.mxu0
      %v9951 = vadd.f32 0.0, %v9950
      %v9952 = vpop.f32.mrf.mxu0
      %9953 = vmatprep.mubr.f32.mxu0 0.0
      %9954 = vmatmul.mubr.f32.gmra.mxu0 %v9532
      %v9955 = vpop.f32.mrf.mxu0
      %v9956 = vadd.f32 0.0, %v9955
      %v9957 = vpop.f32.mrf.mxu0
      %9958 = vdwg.mxu0
      %v9959 = vadd.f32 %v9446, %v9601
      %v9960 = vadd.f32 %v9447, %v9606
      %v9961 = vadd.f32 %v9448, %v9611
      %v9962 = vadd.f32 %v9449, %v9616
      %v9963 = vadd.f32 %v9450, %v9621
      %v9964 = vadd.f32 %v9451, %v9626
      %v9965 = vadd.f32 %v9452, %v9631
      %v9966 = vadd.f32 %v9453, %v9636
      %v9967 = vadd.f32 %v9454, %v9641
      %v9968 = vadd.f32 %v9455, %v9646
      %v9969 = vadd.f32 %v9456, %v9651
      %v9970 = vadd.f32 %v9457, %v9656
      %v9971 = vadd.f32 %v9458, %v9661
      %v9972 = vadd.f32 %v9459, %v9666
      %v9973 = vadd.f32 %v9460, %v9671
      %v9974 = vadd.f32 %v9461, %v9676
      %v9975 = vadd.f32 %v9462, %v9681
      %v9976 = vadd.f32 %v9463, %v9686
      %v9977 = vadd.f32 %v9464, %v9691
      %v9978 = vadd.f32 %v9465, %v9696
      %v9979 = vadd.f32 %v9466, %v9701
      %v9980 = vadd.f32 %v9467, %v9706
      %v9981 = vadd.f32 %v9468, %v9711
      %v9982 = vadd.f32 %v9469, %v9716
      %v9983 = vadd.f32 %v9470, %v9721
      %v9984 = vadd.f32 %v9471, %v9726
      %v9985 = vadd.f32 %v9472, %v9731
      %v9986 = vadd.f32 %v9473, %v9736
      %v9987 = vadd.f32 %v9474, %v9741
      %v9988 = vadd.f32 %v9475, %v9746
      %v9989 = vadd.f32 %v9476, %v9751
      %v9990 = vadd.f32 %v9477, %v9756
      %v9991 = vadd.f32 %v9478, %v9761
      %v9992 = vadd.f32 %v9479, %v9766
      %v9993 = vadd.f32 %v9480, %v9771
      %v9994 = vadd.f32 %v9481, %v9776
      %v9995 = vadd.f32 %v9482, %v9781
      %v9996 = vadd.f32 %v9483, %v9786
      %v9997 = vadd.f32 %v9484, %v9791
      %v9998 = vadd.f32 %v9485, %v9796
      %v9999 = vadd.f32 %v9486, %v9801
      %v10000 = vadd.f32 %v9487, %v9806
      %v10001 = vadd.f32 %v9488, %v9811
      %v10002 = vadd.f32 %v9489, %v9816
      %v10003 = vadd.f32 %v9490, %v9821
      %v10004 = vadd.f32 %v9491, %v9826
      %v10005 = vadd.f32 %v9492, %v9831
      %v10006 = vadd.f32 %v9493, %v9836
      %v10007 = vadd.f32 %v9494, %v9841
      %v10008 = vadd.f32 %v9495, %v9846
      %v10009 = vadd.f32 %v9496, %v9851
      %v10010 = vadd.f32 %v9497, %v9856
      %v10011 = vadd.f32 %v9498, %v9861
      %v10012 = vadd.f32 %v9499, %v9866
      %v10013 = vadd.f32 %v9500, %v9871
      %v10014 = vadd.f32 %v9501, %v9876
      %v10015 = vadd.f32 %v9502, %v9881
      %v10016 = vadd.f32 %v9503, %v9886
      %v10017 = vadd.f32 %v9504, %v9891
      %v10018 = vadd.f32 %v9505, %v9896
      %v10019 = vadd.f32 %v9506, %v9901
      %v10020 = vadd.f32 %v9507, %v9906
      %v10021 = vadd.f32 %v9508, %v9911
      %v10022 = vadd.f32 %v9509, %v9916
      %v10023 = vadd.f32 %v9510, %v9921
      %v10024 = vadd.f32 %v9511, %v9926
      %v10025 = vadd.f32 %v9512, %v9931
      %v10026 = vadd.f32 %v9513, %v9936
      %v10027 = vadd.f32 %v9514, %v9941
      %v10028 = vadd.f32 %v9515, %v9946
      %v10029 = vadd.f32 %v9516, %v9951
      %v10030 = vadd.f32 %v9517, %v9956
      %v10031 = vrot.slane %v5256, 2
      %v10032 = vrot.slane %v5257, 2
      %v10033 = vsel %vm1782, %v10031, %v10032
      %v10034 = vrot.slane %v5258, 2
      %v10035 = vsel %vm1782, %v10032, %v10034
      %v10036 = vrot.slane %v5259, 2
      %v10037 = vsel %vm1782, %v10034, %v10036
      %s10038 = scalar_lea.vmem %s3, 64
      %v10039 = vld [vmem:[%s10038] sm:$0xff]
      %v10040 = vsel %vm5527, %v10033, 0
      %v10042 = vsel %vm5527, %v10035, 0
      %v10044 = vsel %vm5527, %v10037, 0
      %10046 = vmatprep.subr.mxu0 0.0
      %10047 = vmatpush1.msra.mxu0 0.0
      %10048 = vmatprep.subr.mxu0 0.0
      %10049 = vmatpush1.msra.mxu0 0.0
      %10050 = vmatprep.subr.mxu0 0.0
      %10051 = vmatpush1.msra.mxu0 0.0
      %10052 = vmatprep.subr.mxu0 0.0
      %10053 = vmatpush1.msra.mxu0 0.0
      %10054 = vmatprep.subr.mxu0 0.0
      %10055 = vmatpush1.msra.mxu0 0.0
      %10056 = vmatprep.subr.mxu0 0.0
      %10057 = vmatpush1.msra.mxu0 0.0
      %10058 = vmatprep.subr.mxu0 0.0
      %10059 = vmatpush1.msra.mxu0 0.0
      %10060 = vmatprep.subr.mxu0 0.0
      %10061 = vmatpush1.msra.mxu0 0.0
      %10062 = vmatprep.subr.mxu0 0.0
      %10063 = vmatpush1.msra.mxu0 0.0
      %10064 = vmatprep.subr.mxu0 0.0
      %10065 = vmatpush1.msra.mxu0 0.0
      %10066 = vmatprep.subr.mxu0 0.0
      %10067 = vmatpush1.msra.mxu0 0.0
      %10068 = vmatprep.subr.mxu0 0.0
      %10069 = vmatpush1.msra.mxu0 0.0
      %10070 = vmatprep.subr.mxu0 0.0
      %10071 = vmatpush1.msra.mxu0 0.0
      %10072 = vmatprep.subr.mxu0 0.0
      %10073 = vmatpush1.msra.mxu0 0.0
      %10074 = vmatprep.subr.mxu0 0.0
      %10075 = vmatpush1.msra.mxu0 0.0
      %10076 = vmatprep.subr.mxu0 0.0
      %10077 = vmatpush1.msra.mxu0 %v10039
      %10078 = vmatprep.subr.mxu0 0.0
      %10079 = vmatpush2.msra.mxu0 0.0
      %10080 = vmatprep.subr.mxu0 0.0
      %10081 = vmatpush2.msra.mxu0 0.0
      %10082 = vmatprep.subr.mxu0 0.0
      %10083 = vmatpush2.msra.mxu0 0.0
      %10084 = vmatprep.subr.mxu0 0.0
      %10085 = vmatpush2.msra.mxu0 0.0
      %10086 = vmatprep.subr.mxu0 0.0
      %10087 = vmatpush2.msra.mxu0 0.0
      %10088 = vmatprep.subr.mxu0 0.0
      %10089 = vmatpush2.msra.mxu0 0.0
      %10090 = vmatprep.subr.mxu0 0.0
      %10091 = vmatpush2.msra.mxu0 0.0
      %10092 = vmatprep.subr.mxu0 0.0
      %10093 = vmatpush2.msra.mxu0 0.0
      %10094 = vmatprep.subr.mxu0 0.0
      %10095 = vmatpush2.msra.mxu0 0.0
      %10096 = vmatprep.subr.mxu0 0.0
      %10097 = vmatpush2.msra.mxu0 0.0
      %10098 = vmatprep.subr.mxu0 0.0
      %10099 = vmatpush2.msra.mxu0 0.0
      %10100 = vmatprep.subr.mxu0 0.0
      %10101 = vmatpush2.msra.mxu0 0.0
      %10102 = vmatprep.subr.mxu0 0.0
      %10103 = vmatpush2.msra.mxu0 0.0
      %10104 = vmatprep.subr.mxu0 0.0
      %10105 = vmatpush2.msra.mxu0 0.0
      %10106 = vmatprep.subr.mxu0 0.0
      %10107 = vmatpush2.msra.mxu0 0.0
      %10108 = vmatprep.subr.mxu0 0.0
      %10109 = vmatpush2.msra.mxu0 0.0
      %10110 = vmatprep.mubr.f32.mxu0 0.0
      %10111 = vmatmul.mubr.f32.gmra.mxu0 %v6848
      %v10112 = vpop.f32.mrf.mxu0
      %v10113 = vadd.f32 0.0, %v10112
      %v10114 = vpop.f32.mrf.mxu0
      %10115 = vmatprep.mubr.f32.mxu0 0.0
      %10116 = vmatmul.mubr.f32.gmra.mxu0 %v6850
      %v10117 = vpop.f32.mrf.mxu0
      %v10118 = vadd.f32 0.0, %v10117
      %v10119 = vpop.f32.mrf.mxu0
      %10120 = vmatprep.mubr.f32.mxu0 0.0
      %10121 = vmatmul.mubr.f32.gmra.mxu0 %v6852
      %v10122 = vpop.f32.mrf.mxu0
      %v10123 = vadd.f32 0.0, %v10122
      %v10124 = vpop.f32.mrf.mxu0
      %10125 = vmatprep.mubr.f32.mxu0 0.0
      %10126 = vmatmul.mubr.f32.gmra.mxu0 %v6854
      %v10127 = vpop.f32.mrf.mxu0
      %v10128 = vadd.f32 0.0, %v10127
      %v10129 = vpop.f32.mrf.mxu0
      %10130 = vmatprep.mubr.f32.mxu0 0.0
      %10131 = vmatmul.mubr.f32.gmra.mxu0 %v6856
      %v10132 = vpop.f32.mrf.mxu0
      %v10133 = vadd.f32 0.0, %v10132
      %v10134 = vpop.f32.mrf.mxu0
      %10135 = vmatprep.mubr.f32.mxu0 0.0
      %10136 = vmatmul.mubr.f32.gmra.mxu0 %v6858
      %v10137 = vpop.f32.mrf.mxu0
      %v10138 = vadd.f32 0.0, %v10137
      %v10139 = vpop.f32.mrf.mxu0
      %10140 = vmatprep.mubr.f32.mxu0 0.0
      %10141 = vmatmul.mubr.f32.gmra.mxu0 %v6860
      %v10142 = vpop.f32.mrf.mxu0
      %v10143 = vadd.f32 0.0, %v10142
      %v10144 = vpop.f32.mrf.mxu0
      %10145 = vmatprep.mubr.f32.mxu0 0.0
      %10146 = vmatmul.mubr.f32.gmra.mxu0 %v6862
      %v10147 = vpop.f32.mrf.mxu0
      %v10148 = vadd.f32 0.0, %v10147
      %v10149 = vpop.f32.mrf.mxu0
      %10150 = vmatprep.mubr.f32.mxu0 0.0
      %10151 = vmatmul.mubr.f32.gmra.mxu0 %v6864
      %v10152 = vpop.f32.mrf.mxu0
      %v10153 = vadd.f32 0.0, %v10152
      %v10154 = vpop.f32.mrf.mxu0
      %10155 = vmatprep.mubr.f32.mxu0 0.0
      %10156 = vmatmul.mubr.f32.gmra.mxu0 %v6866
      %v10157 = vpop.f32.mrf.mxu0
      %v10158 = vadd.f32 0.0, %v10157
      %v10159 = vpop.f32.mrf.mxu0
      %10160 = vmatprep.mubr.f32.mxu0 0.0
      %10161 = vmatmul.mubr.f32.gmra.mxu0 %v6868
      %v10162 = vpop.f32.mrf.mxu0
      %v10163 = vadd.f32 0.0, %v10162
      %v10164 = vpop.f32.mrf.mxu0
      %10165 = vmatprep.mubr.f32.mxu0 0.0
      %10166 = vmatmul.mubr.f32.gmra.mxu0 %v6870
      %v10167 = vpop.f32.mrf.mxu0
      %v10168 = vadd.f32 0.0, %v10167
      %v10169 = vpop.f32.mrf.mxu0
      %10170 = vmatprep.mubr.f32.mxu0 0.0
      %10171 = vmatmul.mubr.f32.gmra.mxu0 %v6872
      %v10172 = vpop.f32.mrf.mxu0
      %v10173 = vadd.f32 0.0, %v10172
      %v10174 = vpop.f32.mrf.mxu0
      %10175 = vmatprep.mubr.f32.mxu0 0.0
      %10176 = vmatmul.mubr.f32.gmra.mxu0 %v6874
      %v10177 = vpop.f32.mrf.mxu0
      %v10178 = vadd.f32 0.0, %v10177
      %v10179 = vpop.f32.mrf.mxu0
      %10180 = vmatprep.mubr.f32.mxu0 0.0
      %10181 = vmatmul.mubr.f32.gmra.mxu0 %v6876
      %v10182 = vpop.f32.mrf.mxu0
      %v10183 = vadd.f32 0.0, %v10182
      %v10184 = vpop.f32.mrf.mxu0
      %10185 = vmatprep.mubr.f32.mxu0 0.0
      %10186 = vmatmul.mubr.f32.gmra.mxu0 %v6878
      %v10187 = vpop.f32.mrf.mxu0
      %v10188 = vadd.f32 0.0, %v10187
      %v10189 = vpop.f32.mrf.mxu0
      %10190 = vmatprep.mubr.f32.mxu0 0.0
      %10191 = vmatmul.mubr.f32.gmra.mxu0 %v6880
      %v10192 = vpop.f32.mrf.mxu0
      %v10193 = vadd.f32 0.0, %v10192
      %v10194 = vpop.f32.mrf.mxu0
      %10195 = vmatprep.mubr.f32.mxu0 0.0
      %10196 = vmatmul.mubr.f32.gmra.mxu0 %v6882
      %v10197 = vpop.f32.mrf.mxu0
      %v10198 = vadd.f32 0.0, %v10197
      %v10199 = vpop.f32.mrf.mxu0
      %10200 = vmatprep.mubr.f32.mxu0 0.0
      %10201 = vmatmul.mubr.f32.gmra.mxu0 %v6884
      %v10202 = vpop.f32.mrf.mxu0
      %v10203 = vadd.f32 0.0, %v10202
      %v10204 = vpop.f32.mrf.mxu0
      %10205 = vmatprep.mubr.f32.mxu0 0.0
      %10206 = vmatmul.mubr.f32.gmra.mxu0 %v6886
      %v10207 = vpop.f32.mrf.mxu0
      %v10208 = vadd.f32 0.0, %v10207
      %v10209 = vpop.f32.mrf.mxu0
      %10210 = vmatprep.mubr.f32.mxu0 0.0
      %10211 = vmatmul.mubr.f32.gmra.mxu0 %v6888
      %v10212 = vpop.f32.mrf.mxu0
      %v10213 = vadd.f32 0.0, %v10212
      %v10214 = vpop.f32.mrf.mxu0
      %10215 = vmatprep.mubr.f32.mxu0 0.0
      %10216 = vmatmul.mubr.f32.gmra.mxu0 %v6890
      %v10217 = vpop.f32.mrf.mxu0
      %v10218 = vadd.f32 0.0, %v10217
      %v10219 = vpop.f32.mrf.mxu0
      %10220 = vmatprep.mubr.f32.mxu0 0.0
      %10221 = vmatmul.mubr.f32.gmra.mxu0 %v6892
      %v10222 = vpop.f32.mrf.mxu0
      %v10223 = vadd.f32 0.0, %v10222
      %v10224 = vpop.f32.mrf.mxu0
      %10225 = vmatprep.mubr.f32.mxu0 0.0
      %10226 = vmatmul.mubr.f32.gmra.mxu0 %v6894
      %v10227 = vpop.f32.mrf.mxu0
      %v10228 = vadd.f32 0.0, %v10227
      %v10229 = vpop.f32.mrf.mxu0
      %10230 = vmatprep.mubr.f32.mxu0 0.0
      %10231 = vmatmul.mubr.f32.gmra.mxu0 %v6896
      %v10232 = vpop.f32.mrf.mxu0
      %v10233 = vadd.f32 0.0, %v10232
      %v10234 = vpop.f32.mrf.mxu0
      %10235 = vmatprep.mubr.f32.mxu0 0.0
      %10236 = vmatmul.mubr.f32.gmra.mxu0 %v6898
      %v10237 = vpop.f32.mrf.mxu0
      %v10238 = vadd.f32 0.0, %v10237
      %v10239 = vpop.f32.mrf.mxu0
      %10240 = vmatprep.mubr.f32.mxu0 0.0
      %10241 = vmatmul.mubr.f32.gmra.mxu0 %v6900
      %v10242 = vpop.f32.mrf.mxu0
      %v10243 = vadd.f32 0.0, %v10242
      %v10244 = vpop.f32.mrf.mxu0
      %10245 = vmatprep.mubr.f32.mxu0 0.0
      %10246 = vmatmul.mubr.f32.gmra.mxu0 %v6902
      %v10247 = vpop.f32.mrf.mxu0
      %v10248 = vadd.f32 0.0, %v10247
      %v10249 = vpop.f32.mrf.mxu0
      %10250 = vmatprep.mubr.f32.mxu0 0.0
      %10251 = vmatmul.mubr.f32.gmra.mxu0 %v6904
      %v10252 = vpop.f32.mrf.mxu0
      %v10253 = vadd.f32 0.0, %v10252
      %v10254 = vpop.f32.mrf.mxu0
      %10255 = vmatprep.mubr.f32.mxu0 0.0
      %10256 = vmatmul.mubr.f32.gmra.mxu0 %v6906
      %v10257 = vpop.f32.mrf.mxu0
      %v10258 = vadd.f32 0.0, %v10257
      %v10259 = vpop.f32.mrf.mxu0
      %10260 = vmatprep.mubr.f32.mxu0 0.0
      %10261 = vmatmul.mubr.f32.gmra.mxu0 %v6908
      %v10262 = vpop.f32.mrf.mxu0
      %v10263 = vadd.f32 0.0, %v10262
      %v10264 = vpop.f32.mrf.mxu0
      %10265 = vmatprep.mubr.f32.mxu0 0.0
      %10266 = vmatmul.mubr.f32.gmra.mxu0 %v6910
      %v10267 = vpop.f32.mrf.mxu0
      %v10268 = vadd.f32 0.0, %v10267
      %v10269 = vpop.f32.mrf.mxu0
      %10270 = vmatprep.mubr.f32.mxu0 0.0
      %10271 = vmatmul.mubr.f32.gmra.mxu0 %v6912
      %v10272 = vpop.f32.mrf.mxu0
      %v10273 = vadd.f32 0.0, %v10272
      %v10274 = vpop.f32.mrf.mxu0
      %10275 = vmatprep.mubr.f32.mxu0 0.0
      %10276 = vmatmul.mubr.f32.gmra.mxu0 %v6914
      %v10277 = vpop.f32.mrf.mxu0
      %v10278 = vadd.f32 0.0, %v10277
      %v10279 = vpop.f32.mrf.mxu0
      %10280 = vmatprep.mubr.f32.mxu0 0.0
      %10281 = vmatmul.mubr.f32.gmra.mxu0 %v6916
      %v10282 = vpop.f32.mrf.mxu0
      %v10283 = vadd.f32 0.0, %v10282
      %v10284 = vpop.f32.mrf.mxu0
      %10285 = vmatprep.mubr.f32.mxu0 0.0
      %10286 = vmatmul.mubr.f32.gmra.mxu0 %v6918
      %v10287 = vpop.f32.mrf.mxu0
      %v10288 = vadd.f32 0.0, %v10287
      %v10289 = vpop.f32.mrf.mxu0
      %10290 = vmatprep.mubr.f32.mxu0 0.0
      %10291 = vmatmul.mubr.f32.gmra.mxu0 %v6920
      %v10292 = vpop.f32.mrf.mxu0
      %v10293 = vadd.f32 0.0, %v10292
      %v10294 = vpop.f32.mrf.mxu0
      %10295 = vmatprep.mubr.f32.mxu0 0.0
      %10296 = vmatmul.mubr.f32.gmra.mxu0 %v6922
      %v10297 = vpop.f32.mrf.mxu0
      %v10298 = vadd.f32 0.0, %v10297
      %v10299 = vpop.f32.mrf.mxu0
      %10300 = vmatprep.mubr.f32.mxu0 0.0
      %10301 = vmatmul.mubr.f32.gmra.mxu0 %v6924
      %v10302 = vpop.f32.mrf.mxu0
      %v10303 = vadd.f32 0.0, %v10302
      %v10304 = vpop.f32.mrf.mxu0
      %10305 = vmatprep.mubr.f32.mxu0 0.0
      %10306 = vmatmul.mubr.f32.gmra.mxu0 %v6926
      %v10307 = vpop.f32.mrf.mxu0
      %v10308 = vadd.f32 0.0, %v10307
      %v10309 = vpop.f32.mrf.mxu0
      %10310 = vmatprep.mubr.f32.mxu0 0.0
      %10311 = vmatmul.mubr.f32.gmra.mxu0 %v6928
      %v10312 = vpop.f32.mrf.mxu0
      %v10313 = vadd.f32 0.0, %v10312
      %v10314 = vpop.f32.mrf.mxu0
      %10315 = vmatprep.mubr.f32.mxu0 0.0
      %10316 = vmatmul.mubr.f32.gmra.mxu0 %v6930
      %v10317 = vpop.f32.mrf.mxu0
      %v10318 = vadd.f32 0.0, %v10317
      %v10319 = vpop.f32.mrf.mxu0
      %10320 = vmatprep.mubr.f32.mxu0 0.0
      %10321 = vmatmul.mubr.f32.gmra.mxu0 %v6932
      %v10322 = vpop.f32.mrf.mxu0
      %v10323 = vadd.f32 0.0, %v10322
      %v10324 = vpop.f32.mrf.mxu0
      %10325 = vmatprep.mubr.f32.mxu0 0.0
      %10326 = vmatmul.mubr.f32.gmra.mxu0 %v6934
      %v10327 = vpop.f32.mrf.mxu0
      %v10328 = vadd.f32 0.0, %v10327
      %v10329 = vpop.f32.mrf.mxu0
      %10330 = vmatprep.mubr.f32.mxu0 0.0
      %10331 = vmatmul.mubr.f32.gmra.mxu0 %v6936
      %v10332 = vpop.f32.mrf.mxu0
      %v10333 = vadd.f32 0.0, %v10332
      %v10334 = vpop.f32.mrf.mxu0
      %10335 = vmatprep.mubr.f32.mxu0 0.0
      %10336 = vmatmul.mubr.f32.gmra.mxu0 %v6938
      %v10337 = vpop.f32.mrf.mxu0
      %v10338 = vadd.f32 0.0, %v10337
      %v10339 = vpop.f32.mrf.mxu0
      %10340 = vmatprep.mubr.f32.mxu0 0.0
      %10341 = vmatmul.mubr.f32.gmra.mxu0 %v6940
      %v10342 = vpop.f32.mrf.mxu0
      %v10343 = vadd.f32 0.0, %v10342
      %v10344 = vpop.f32.mrf.mxu0
      %10345 = vmatprep.mubr.f32.mxu0 0.0
      %10346 = vmatmul.mubr.f32.gmra.mxu0 %v6942
      %v10347 = vpop.f32.mrf.mxu0
      %v10348 = vadd.f32 0.0, %v10347
      %v10349 = vpop.f32.mrf.mxu0
      %10350 = vmatprep.mubr.f32.mxu0 0.0
      %10351 = vmatmul.mubr.f32.gmra.mxu0 %v6944
      %v10352 = vpop.f32.mrf.mxu0
      %v10353 = vadd.f32 0.0, %v10352
      %v10354 = vpop.f32.mrf.mxu0
      %10355 = vmatprep.mubr.f32.mxu0 0.0
      %10356 = vmatmul.mubr.f32.gmra.mxu0 %v6946
      %v10357 = vpop.f32.mrf.mxu0
      %v10358 = vadd.f32 0.0, %v10357
      %v10359 = vpop.f32.mrf.mxu0
      %10360 = vmatprep.mubr.f32.mxu0 0.0
      %10361 = vmatmul.mubr.f32.gmra.mxu0 %v6948
      %v10362 = vpop.f32.mrf.mxu0
      %v10363 = vadd.f32 0.0, %v10362
      %v10364 = vpop.f32.mrf.mxu0
      %10365 = vmatprep.mubr.f32.mxu0 0.0
      %10366 = vmatmul.mubr.f32.gmra.mxu0 %v6950
      %v10367 = vpop.f32.mrf.mxu0
      %v10368 = vadd.f32 0.0, %v10367
      %v10369 = vpop.f32.mrf.mxu0
      %10370 = vmatprep.mubr.f32.mxu0 0.0
      %10371 = vmatmul.mubr.f32.gmra.mxu0 %v6952
      %v10372 = vpop.f32.mrf.mxu0
      %v10373 = vadd.f32 0.0, %v10372
      %v10374 = vpop.f32.mrf.mxu0
      %10375 = vmatprep.mubr.f32.mxu0 0.0
      %10376 = vmatmul.mubr.f32.gmra.mxu0 %v6954
      %v10377 = vpop.f32.mrf.mxu0
      %v10378 = vadd.f32 0.0, %v10377
      %v10379 = vpop.f32.mrf.mxu0
      %10380 = vmatprep.mubr.f32.mxu0 0.0
      %10381 = vmatmul.mubr.f32.gmra.mxu0 %v6956
      %v10382 = vpop.f32.mrf.mxu0
      %v10383 = vadd.f32 0.0, %v10382
      %v10384 = vpop.f32.mrf.mxu0
      %10385 = vmatprep.mubr.f32.mxu0 0.0
      %10386 = vmatmul.mubr.f32.gmra.mxu0 %v6958
      %v10387 = vpop.f32.mrf.mxu0
      %v10388 = vadd.f32 0.0, %v10387
      %v10389 = vpop.f32.mrf.mxu0
      %10390 = vmatprep.mubr.f32.mxu0 0.0
      %10391 = vmatmul.mubr.f32.gmra.mxu0 %v6960
      %v10392 = vpop.f32.mrf.mxu0
      %v10393 = vadd.f32 0.0, %v10392
      %v10394 = vpop.f32.mrf.mxu0
      %10395 = vmatprep.mubr.f32.mxu0 0.0
      %10396 = vmatmul.mubr.f32.gmra.mxu0 %v6962
      %v10397 = vpop.f32.mrf.mxu0
      %v10398 = vadd.f32 0.0, %v10397
      %v10399 = vpop.f32.mrf.mxu0
      %10400 = vmatprep.mubr.f32.mxu0 0.0
      %10401 = vmatmul.mubr.f32.gmra.mxu0 %v6964
      %v10402 = vpop.f32.mrf.mxu0
      %v10403 = vadd.f32 0.0, %v10402
      %v10404 = vpop.f32.mrf.mxu0
      %10405 = vmatprep.mubr.f32.mxu0 0.0
      %10406 = vmatmul.mubr.f32.gmra.mxu0 %v6966
      %v10407 = vpop.f32.mrf.mxu0
      %v10408 = vadd.f32 0.0, %v10407
      %v10409 = vpop.f32.mrf.mxu0
      %10410 = vmatprep.mubr.f32.mxu0 0.0
      %10411 = vmatmul.mubr.f32.gmra.mxu0 %v6968
      %v10412 = vpop.f32.mrf.mxu0
      %v10413 = vadd.f32 0.0, %v10412
      %v10414 = vpop.f32.mrf.mxu0
      %10415 = vmatprep.mubr.f32.mxu0 0.0
      %10416 = vmatmul.mubr.f32.gmra.mxu0 %v6970
      %v10417 = vpop.f32.mrf.mxu0
      %v10418 = vadd.f32 0.0, %v10417
      %v10419 = vpop.f32.mrf.mxu0
      %10420 = vmatprep.mubr.f32.mxu0 0.0
      %10421 = vmatmul.mubr.f32.gmra.mxu0 %v6972
      %v10422 = vpop.f32.mrf.mxu0
      %v10423 = vadd.f32 0.0, %v10422
      %v10424 = vpop.f32.mrf.mxu0
      %10425 = vmatprep.mubr.f32.mxu0 0.0
      %10426 = vmatmul.mubr.f32.gmra.mxu0 %v6974
      %v10427 = vpop.f32.mrf.mxu0
      %v10428 = vadd.f32 0.0, %v10427
      %v10429 = vpop.f32.mrf.mxu0
      %10430 = vmatprep.mubr.f32.mxu0 0.0
      %10431 = vmatmul.mubr.f32.gmra.mxu0 %v6976
      %v10432 = vpop.f32.mrf.mxu0
      %v10433 = vadd.f32 0.0, %v10432
      %v10434 = vpop.f32.mrf.mxu0
      %10435 = vmatprep.mubr.f32.mxu0 0.0
      %10436 = vmatmul.mubr.f32.gmra.mxu0 %v6978
      %v10437 = vpop.f32.mrf.mxu0
      %v10438 = vadd.f32 0.0, %v10437
      %v10439 = vpop.f32.mrf.mxu0
      %10440 = vmatprep.mubr.f32.mxu0 0.0
      %10441 = vmatmul.mubr.f32.gmra.mxu0 %v8507
      %v10442 = vpop.f32.mrf.mxu0
      %v10443 = vadd.f32 0.0, %v10442
      %v10444 = vpop.f32.mrf.mxu0
      %10445 = vmatprep.mubr.f32.mxu0 0.0
      %10446 = vmatmul.mubr.f32.gmra.mxu0 %v8509
      %v10447 = vpop.f32.mrf.mxu0
      %v10448 = vadd.f32 0.0, %v10447
      %v10449 = vpop.f32.mrf.mxu0
      %10450 = vmatprep.mubr.f32.mxu0 0.0
      %10451 = vmatmul.mubr.f32.gmra.mxu0 %v8511
      %v10452 = vpop.f32.mrf.mxu0
      %v10453 = vadd.f32 0.0, %v10452
      %v10454 = vpop.f32.mrf.mxu0
      %10455 = vmatprep.mubr.f32.mxu0 0.0
      %10456 = vmatmul.mubr.f32.gmra.mxu0 %v10040
      %v10457 = vpop.f32.mrf.mxu0
      %v10458 = vadd.f32 0.0, %v10457
      %v10459 = vpop.f32.mrf.mxu0
      %10460 = vmatprep.mubr.f32.mxu0 0.0
      %10461 = vmatmul.mubr.f32.gmra.mxu0 %v10042
      %v10462 = vpop.f32.mrf.mxu0
      %v10463 = vadd.f32 0.0, %v10462
      %v10464 = vpop.f32.mrf.mxu0
      %10465 = vmatprep.mubr.f32.mxu0 0.0
      %10466 = vmatmul.mubr.f32.gmra.mxu0 %v10044
      %v10467 = vpop.f32.mrf.mxu0
      %v10468 = vadd.f32 0.0, %v10467
      %v10469 = vpop.f32.mrf.mxu0
      %10470 = vdwg.mxu0
      %v10471 = vadd.f32 %v9959, %v10113
      %v10472 = vadd.f32 %v9960, %v10118
      %v10473 = vadd.f32 %v9961, %v10123
      %v10474 = vadd.f32 %v9962, %v10128
      %v10475 = vadd.f32 %v9963, %v10133
      %v10476 = vadd.f32 %v9964, %v10138
      %v10477 = vadd.f32 %v9965, %v10143
      %v10478 = vadd.f32 %v9966, %v10148
      %v10479 = vadd.f32 %v9967, %v10153
      %v10480 = vadd.f32 %v9968, %v10158
      %v10481 = vadd.f32 %v9969, %v10163
      %v10482 = vadd.f32 %v9970, %v10168
      %v10483 = vadd.f32 %v9971, %v10173
      %v10484 = vadd.f32 %v9972, %v10178
      %v10485 = vadd.f32 %v9973, %v10183
      %v10486 = vadd.f32 %v9974, %v10188
      %v10487 = vadd.f32 %v9975, %v10193
      %v10488 = vadd.f32 %v9976, %v10198
      %v10489 = vadd.f32 %v9977, %v10203
      %v10490 = vadd.f32 %v9978, %v10208
      %v10491 = vadd.f32 %v9979, %v10213
      %v10492 = vadd.f32 %v9980, %v10218
      %v10493 = vadd.f32 %v9981, %v10223
      %v10494 = vadd.f32 %v9982, %v10228
      %v10495 = vadd.f32 %v9983, %v10233
      %v10496 = vadd.f32 %v9984, %v10238
      %v10497 = vadd.f32 %v9985, %v10243
      %v10498 = vadd.f32 %v9986, %v10248
      %v10499 = vadd.f32 %v9987, %v10253
      %v10500 = vadd.f32 %v9988, %v10258
      %v10501 = vadd.f32 %v9989, %v10263
      %v10502 = vadd.f32 %v9990, %v10268
      %v10503 = vadd.f32 %v9991, %v10273
      %v10504 = vadd.f32 %v9992, %v10278
      %v10505 = vadd.f32 %v9993, %v10283
      %v10506 = vadd.f32 %v9994, %v10288
      %v10507 = vadd.f32 %v9995, %v10293
      %v10508 = vadd.f32 %v9996, %v10298
      %v10509 = vadd.f32 %v9997, %v10303
      %v10510 = vadd.f32 %v9998, %v10308
      %v10511 = vadd.f32 %v9999, %v10313
      %v10512 = vadd.f32 %v10000, %v10318
      %v10513 = vadd.f32 %v10001, %v10323
      %v10514 = vadd.f32 %v10002, %v10328
      %v10515 = vadd.f32 %v10003, %v10333
      %v10516 = vadd.f32 %v10004, %v10338
      %v10517 = vadd.f32 %v10005, %v10343
      %v10518 = vadd.f32 %v10006, %v10348
      %v10519 = vadd.f32 %v10007, %v10353
      %v10520 = vadd.f32 %v10008, %v10358
      %v10521 = vadd.f32 %v10009, %v10363
      %v10522 = vadd.f32 %v10010, %v10368
      %v10523 = vadd.f32 %v10011, %v10373
      %v10524 = vadd.f32 %v10012, %v10378
      %v10525 = vadd.f32 %v10013, %v10383
      %v10526 = vadd.f32 %v10014, %v10388
      %v10527 = vadd.f32 %v10015, %v10393
      %v10528 = vadd.f32 %v10016, %v10398
      %v10529 = vadd.f32 %v10017, %v10403
      %v10530 = vadd.f32 %v10018, %v10408
      %v10531 = vadd.f32 %v10019, %v10413
      %v10532 = vadd.f32 %v10020, %v10418
      %v10533 = vadd.f32 %v10021, %v10423
      %v10534 = vadd.f32 %v10022, %v10428
      %v10535 = vadd.f32 %v10023, %v10433
      %v10536 = vadd.f32 %v10024, %v10438
      %v10537 = vadd.f32 %v10025, %v10443
      %v10538 = vadd.f32 %v10026, %v10448
      %v10539 = vadd.f32 %v10027, %v10453
      %v10540 = vadd.f32 %v10028, %v10458
      %v10541 = vadd.f32 %v10029, %v10463
      %v10542 = vadd.f32 %v10030, %v10468
      %v10543 = vld [vmem:[%s4] sm:$0x1]
      %v10545 = vlaneseq
      %v10546 = vshrl.u32 %v10545, 7
      %v10547 = vsub.s32 0, %v10546
      %v10548 = vrot.slane %v10543, %v10547
      %v10550 = vadd.f32 %v10471, %v10548
      %v10551 = vadd.f32 %v10472, %v10548
      %v10552 = vadd.f32 %v10473, %v10548
      %v10553 = vadd.f32 %v10474, %v10548
      %v10554 = vadd.f32 %v10475, %v10548
      %v10555 = vadd.f32 %v10476, %v10548
      %v10556 = vadd.f32 %v10477, %v10548
      %v10557 = vadd.f32 %v10478, %v10548
      %v10558 = vadd.f32 %v10479, %v10548
      %v10559 = vadd.f32 %v10480, %v10548
      %v10560 = vadd.f32 %v10481, %v10548
      %v10561 = vadd.f32 %v10482, %v10548
      %v10562 = vadd.f32 %v10483, %v10548
      %v10563 = vadd.f32 %v10484, %v10548
      %v10564 = vadd.f32 %v10485, %v10548
      %v10565 = vadd.f32 %v10486, %v10548
      %v10566 = vadd.f32 %v10487, %v10548
      %v10567 = vadd.f32 %v10488, %v10548
      %v10568 = vadd.f32 %v10489, %v10548
      %v10569 = vadd.f32 %v10490, %v10548
      %v10570 = vadd.f32 %v10491, %v10548
      %v10571 = vadd.f32 %v10492, %v10548
      %v10572 = vadd.f32 %v10493, %v10548
      %v10573 = vadd.f32 %v10494, %v10548
      %v10574 = vadd.f32 %v10495, %v10548
      %v10575 = vadd.f32 %v10496, %v10548
      %v10576 = vadd.f32 %v10497, %v10548
      %v10577 = vadd.f32 %v10498, %v10548
      %v10578 = vadd.f32 %v10499, %v10548
      %v10579 = vadd.f32 %v10500, %v10548
      %v10580 = vadd.f32 %v10501, %v10548
      %v10581 = vadd.f32 %v10502, %v10548
      %v10582 = vadd.f32 %v10503, %v10548
      %v10583 = vadd.f32 %v10504, %v10548
      %v10584 = vadd.f32 %v10505, %v10548
      %v10585 = vadd.f32 %v10506, %v10548
      %v10586 = vadd.f32 %v10507, %v10548
      %v10587 = vadd.f32 %v10508, %v10548
      %v10588 = vadd.f32 %v10509, %v10548
      %v10589 = vadd.f32 %v10510, %v10548
      %v10590 = vadd.f32 %v10511, %v10548
      %v10591 = vadd.f32 %v10512, %v10548
      %v10592 = vadd.f32 %v10513, %v10548
      %v10593 = vadd.f32 %v10514, %v10548
      %v10594 = vadd.f32 %v10515, %v10548
      %v10595 = vadd.f32 %v10516, %v10548
      %v10596 = vadd.f32 %v10517, %v10548
      %v10597 = vadd.f32 %v10518, %v10548
      %v10598 = vadd.f32 %v10519, %v10548
      %v10599 = vadd.f32 %v10520, %v10548
      %v10600 = vadd.f32 %v10521, %v10548
      %v10601 = vadd.f32 %v10522, %v10548
      %v10602 = vadd.f32 %v10523, %v10548
      %v10603 = vadd.f32 %v10524, %v10548
      %v10604 = vadd.f32 %v10525, %v10548
      %v10605 = vadd.f32 %v10526, %v10548
      %v10606 = vadd.f32 %v10527, %v10548
      %v10607 = vadd.f32 %v10528, %v10548
      %v10608 = vadd.f32 %v10529, %v10548
      %v10609 = vadd.f32 %v10530, %v10548
      %v10610 = vadd.f32 %v10531, %v10548
      %v10611 = vadd.f32 %v10532, %v10548
      %v10612 = vadd.f32 %v10533, %v10548
      %v10613 = vadd.f32 %v10534, %v10548
      %v10614 = vadd.f32 %v10535, %v10548
      %v10615 = vadd.f32 %v10536, %v10548
      %v10616 = vadd.f32 %v10537, %v10548
      %v10617 = vadd.f32 %v10538, %v10548
      %v10618 = vadd.f32 %v10539, %v10548
      %v10619 = vadd.f32 %v10540, %v10548
      %v10620 = vadd.f32 %v10541, %v10548
      %v10621 = vadd.f32 %v10542, %v10548
      %v10622 = vmax.f32 %v10550, 0.0
      %v10623 = vmax.f32 %v10551, 0.0
      %v10624 = vmax.f32 %v10552, 0.0
      %v10625 = vmax.f32 %v10553, 0.0
      %v10626 = vmax.f32 %v10554, 0.0
      %v10627 = vmax.f32 %v10555, 0.0
      %v10628 = vmax.f32 %v10556, 0.0
      %v10629 = vmax.f32 %v10557, 0.0
      %v10630 = vmax.f32 %v10558, 0.0
      %v10631 = vmax.f32 %v10559, 0.0
      %v10632 = vmax.f32 %v10560, 0.0
      %v10633 = vmax.f32 %v10561, 0.0
      %v10634 = vmax.f32 %v10562, 0.0
      %v10635 = vmax.f32 %v10563, 0.0
      %v10636 = vmax.f32 %v10564, 0.0
      %v10637 = vmax.f32 %v10565, 0.0
      %v10638 = vmax.f32 %v10566, 0.0
      %v10639 = vmax.f32 %v10567, 0.0
      %v10640 = vmax.f32 %v10568, 0.0
      %v10641 = vmax.f32 %v10569, 0.0
      %v10642 = vmax.f32 %v10570, 0.0
      %v10643 = vmax.f32 %v10571, 0.0
      %v10644 = vmax.f32 %v10572, 0.0
      %v10645 = vmax.f32 %v10573, 0.0
      %v10646 = vmax.f32 %v10574, 0.0
      %v10647 = vmax.f32 %v10575, 0.0
      %v10648 = vmax.f32 %v10576, 0.0
      %v10649 = vmax.f32 %v10577, 0.0
      %v10650 = vmax.f32 %v10578, 0.0
      %v10651 = vmax.f32 %v10579, 0.0
      %v10652 = vmax.f32 %v10580, 0.0
      %v10653 = vmax.f32 %v10581, 0.0
      %v10654 = vmax.f32 %v10582, 0.0
      %v10655 = vmax.f32 %v10583, 0.0
      %v10656 = vmax.f32 %v10584, 0.0
      %v10657 = vmax.f32 %v10585, 0.0
      %v10658 = vmax.f32 %v10586, 0.0
      %v10659 = vmax.f32 %v10587, 0.0
      %v10660 = vmax.f32 %v10588, 0.0
      %v10661 = vmax.f32 %v10589, 0.0
      %v10662 = vmax.f32 %v10590, 0.0
      %v10663 = vmax.f32 %v10591, 0.0
      %v10664 = vmax.f32 %v10592, 0.0
      %v10665 = vmax.f32 %v10593, 0.0
      %v10666 = vmax.f32 %v10594, 0.0
      %v10667 = vmax.f32 %v10595, 0.0
      %v10668 = vmax.f32 %v10596, 0.0
      %v10669 = vmax.f32 %v10597, 0.0
      %v10670 = vmax.f32 %v10598, 0.0
      %v10671 = vmax.f32 %v10599, 0.0
      %v10672 = vmax.f32 %v10600, 0.0
      %v10673 = vmax.f32 %v10601, 0.0
      %v10674 = vmax.f32 %v10602, 0.0
      %v10675 = vmax.f32 %v10603, 0.0
      %v10676 = vmax.f32 %v10604, 0.0
      %v10677 = vmax.f32 %v10605, 0.0
      %v10678 = vmax.f32 %v10606, 0.0
      %v10679 = vmax.f32 %v10607, 0.0
      %v10680 = vmax.f32 %v10608, 0.0
      %v10681 = vmax.f32 %v10609, 0.0
      %v10682 = vmax.f32 %v10610, 0.0
      %v10683 = vmax.f32 %v10611, 0.0
      %v10684 = vmax.f32 %v10612, 0.0
      %v10685 = vmax.f32 %v10613, 0.0
      %v10686 = vmax.f32 %v10614, 0.0
      %v10687 = vmax.f32 %v10615, 0.0
      %v10688 = vmax.f32 %v10616, 0.0
      %v10689 = vmax.f32 %v10617, 0.0
      %v10690 = vmax.f32 %v10618, 0.0
      %v10691 = vmax.f32 %v10619, 0.0
      %v10692 = vmax.f32 %v10620, 0.0
      %v10693 = vmax.f32 %v10621, 0.0
      %v10694 = vmax.f32 %v10622, %v10625
      %v10695 = vmax.f32 %v10623, %v10626
      %v10696 = vmax.f32 %v10624, %v10627
      %v10697 = vmax.f32 %v10628, %v10631
      %v10698 = vmax.f32 %v10629, %v10632
      %v10699 = vmax.f32 %v10630, %v10633
      %v10700 = vmax.f32 %v10634, %v10637
      %v10701 = vmax.f32 %v10635, %v10638
      %v10702 = vmax.f32 %v10636, %v10639
      %v10703 = vmax.f32 %v10640, %v10643
      %v10704 = vmax.f32 %v10641, %v10644
      %v10705 = vmax.f32 %v10642, %v10645
      %v10706 = vmax.f32 %v10646, %v10649
      %v10707 = vmax.f32 %v10647, %v10650
      %v10708 = vmax.f32 %v10648, %v10651
      %v10709 = vmax.f32 %v10652, %v10655
      %v10710 = vmax.f32 %v10653, %v10656
      %v10711 = vmax.f32 %v10654, %v10657
      %v10712 = vmax.f32 %v10658, %v10661
      %v10713 = vmax.f32 %v10659, %v10662
      %v10714 = vmax.f32 %v10660, %v10663
      %v10715 = vmax.f32 %v10664, %v10667
      %v10716 = vmax.f32 %v10665, %v10668
      %v10717 = vmax.f32 %v10666, %v10669
      %v10718 = vmax.f32 %v10670, %v10673
      %v10719 = vmax.f32 %v10671, %v10674
      %v10720 = vmax.f32 %v10672, %v10675
      %v10721 = vmax.f32 %v10676, %v10679
      %v10722 = vmax.f32 %v10677, %v10680
      %v10723 = vmax.f32 %v10678, %v10681
      %v10724 = vmax.f32 %v10682, %v10685
      %v10725 = vmax.f32 %v10683, %v10686
      %v10726 = vmax.f32 %v10684, %v10687
      %v10727 = vmax.f32 %v10688, %v10691
      %v10728 = vmax.f32 %v10689, %v10692
      %v10729 = vmax.f32 %v10690, %v10693
      %10730 = vxpose.xlu0.b32.start [1/16] %v10694, 128
      %10731 = vxpose.xlu0.b32.cont [2/16] %v10695, 128
      %10732 = vxpose.xlu0.b32.cont [3/16] %v10696, 128
      %10733 = vxpose.xlu0.b32.cont [4/16] 0.0, 128
      %10734 = vxpose.xlu0.b32.cont [5/16] 0.0, 128
      %10735 = vxpose.xlu0.b32.cont [6/16] 0.0, 128
      %10736 = vxpose.xlu0.b32.cont [7/16] 0.0, 128
      %10737 = vxpose.xlu0.b32.cont [8/16] 0.0, 128
      %10738 = vxpose.xlu0.b32.cont [9/16] 0.0, 128
      %10739 = vxpose.xlu0.b32.cont [10/16] 0.0, 128
      %10740 = vxpose.xlu0.b32.cont [11/16] 0.0, 128
      %10741 = vxpose.xlu0.b32.cont [12/16] 0.0, 128
      %10742 = vxpose.xlu0.b32.cont [13/16] 0.0, 128
      %10743 = vxpose.xlu0.b32.cont [14/16] 0.0, 128
      %10744 = vxpose.xlu0.b32.cont [15/16] 0.0, 128
      %10745 = vxpose.xlu0.b32.end [16/16] 0.0, 128
      %v10746 = vpop.trf.xlu0
      %v10747 = vpop.trf.xlu0
      %v10748 = vpop.trf.xlu0
      %v10749 = vpop.trf.xlu0
      %v10750 = vpop.trf.xlu0
      %v10751 = vpop.trf.xlu0
      %v10752 = vpop.trf.xlu0
      %v10753 = vpop.trf.xlu0
      %v10754 = vpop.trf.xlu0
      %v10755 = vpop.trf.xlu0
      %v10756 = vpop.trf.xlu0
      %v10757 = vpop.trf.xlu0
      %v10758 = vpop.trf.xlu0
      %v10759 = vpop.trf.xlu0
      %v10760 = vpop.trf.xlu0
      %v10761 = vpop.trf.xlu0
      %10762 = vxpose.xlu0.b32.start [1/16] %v10697, 128
      %10763 = vxpose.xlu0.b32.cont [2/16] %v10698, 128
      %10764 = vxpose.xlu0.b32.cont [3/16] %v10699, 128
      %10765 = vxpose.xlu0.b32.cont [4/16] 0.0, 128
      %10766 = vxpose.xlu0.b32.cont [5/16] 0.0, 128
      %10767 = vxpose.xlu0.b32.cont [6/16] 0.0, 128
      %10768 = vxpose.xlu0.b32.cont [7/16] 0.0, 128
      %10769 = vxpose.xlu0.b32.cont [8/16] 0.0, 128
      %10770 = vxpose.xlu0.b32.cont [9/16] 0.0, 128
      %10771 = vxpose.xlu0.b32.cont [10/16] 0.0, 128
      %10772 = vxpose.xlu0.b32.cont [11/16] 0.0, 128
      %10773 = vxpose.xlu0.b32.cont [12/16] 0.0, 128
      %10774 = vxpose.xlu0.b32.cont [13/16] 0.0, 128
      %10775 = vxpose.xlu0.b32.cont [14/16] 0.0, 128
      %10776 = vxpose.xlu0.b32.cont [15/16] 0.0, 128
      %10777 = vxpose.xlu0.b32.end [16/16] 0.0, 128
      %v10778 = vpop.trf.xlu0
      %v10779 = vpop.trf.xlu0
      %v10780 = vpop.trf.xlu0
      %v10781 = vpop.trf.xlu0
      %v10782 = vpop.trf.xlu0
      %v10783 = vpop.trf.xlu0
      %v10784 = vpop.trf.xlu0
      %v10785 = vpop.trf.xlu0
      %v10786 = vpop.trf.xlu0
      %v10787 = vpop.trf.xlu0
      %v10788 = vpop.trf.xlu0
      %v10789 = vpop.trf.xlu0
      %v10790 = vpop.trf.xlu0
      %v10791 = vpop.trf.xlu0
      %v10792 = vpop.trf.xlu0
      %v10793 = vpop.trf.xlu0
      %10794 = vxpose.xlu0.b32.start [1/16] %v10700, 128
      %10795 = vxpose.xlu0.b32.cont [2/16] %v10701, 128
      %10796 = vxpose.xlu0.b32.cont [3/16] %v10702, 128
      %10797 = vxpose.xlu0.b32.cont [4/16] 0.0, 128
      %10798 = vxpose.xlu0.b32.cont [5/16] 0.0, 128
      %10799 = vxpose.xlu0.b32.cont [6/16] 0.0, 128
      %10800 = vxpose.xlu0.b32.cont [7/16] 0.0, 128
      %10801 = vxpose.xlu0.b32.cont [8/16] 0.0, 128
      %10802 = vxpose.xlu0.b32.cont [9/16] 0.0, 128
      %10803 = vxpose.xlu0.b32.cont [10/16] 0.0, 128
      %10804 = vxpose.xlu0.b32.cont [11/16] 0.0, 128
      %10805 = vxpose.xlu0.b32.cont [12/16] 0.0, 128
      %10806 = vxpose.xlu0.b32.cont [13/16] 0.0, 128
      %10807 = vxpose.xlu0.b32.cont [14/16] 0.0, 128
      %10808 = vxpose.xlu0.b32.cont [15/16] 0.0, 128
      %10809 = vxpose.xlu0.b32.end [16/16] 0.0, 128
      %v10810 = vpop.trf.xlu0
      %v10811 = vpop.trf.xlu0
      %v10812 = vpop.trf.xlu0
      %v10813 = vpop.trf.xlu0
      %v10814 = vpop.trf.xlu0
      %v10815 = vpop.trf.xlu0
      %v10816 = vpop.trf.xlu0
      %v10817 = vpop.trf.xlu0
      %v10818 = vpop.trf.xlu0
      %v10819 = vpop.trf.xlu0
      %v10820 = vpop.trf.xlu0
      %v10821 = vpop.trf.xlu0
      %v10822 = vpop.trf.xlu0
      %v10823 = vpop.trf.xlu0
      %v10824 = vpop.trf.xlu0
      %v10825 = vpop.trf.xlu0
      %10826 = vxpose.xlu0.b32.start [1/16] %v10703, 128
      %10827 = vxpose.xlu0.b32.cont [2/16] %v10704, 128
      %10828 = vxpose.xlu0.b32.cont [3/16] %v10705, 128
      %10829 = vxpose.xlu0.b32.cont [4/16] 0.0, 128
      %10830 = vxpose.xlu0.b32.cont [5/16] 0.0, 128
      %10831 = vxpose.xlu0.b32.cont [6/16] 0.0, 128
      %10832 = vxpose.xlu0.b32.cont [7/16] 0.0, 128
      %10833 = vxpose.xlu0.b32.cont [8/16] 0.0, 128
      %10834 = vxpose.xlu0.b32.cont [9/16] 0.0, 128
      %10835 = vxpose.xlu0.b32.cont [10/16] 0.0, 128
      %10836 = vxpose.xlu0.b32.cont [11/16] 0.0, 128
      %10837 = vxpose.xlu0.b32.cont [12/16] 0.0, 128
      %10838 = vxpose.xlu0.b32.cont [13/16] 0.0, 128
      %10839 = vxpose.xlu0.b32.cont [14/16] 0.0, 128
      %10840 = vxpose.xlu0.b32.cont [15/16] 0.0, 128
      %10841 = vxpose.xlu0.b32.end [16/16] 0.0, 128
      %v10842 = vpop.trf.xlu0
      %v10843 = vpop.trf.xlu0
      %v10844 = vpop.trf.xlu0
      %v10845 = vpop.trf.xlu0
      %v10846 = vpop.trf.xlu0
      %v10847 = vpop.trf.xlu0
      %v10848 = vpop.trf.xlu0
      %v10849 = vpop.trf.xlu0
      %v10850 = vpop.trf.xlu0
      %v10851 = vpop.trf.xlu0
      %v10852 = vpop.trf.xlu0
      %v10853 = vpop.trf.xlu0
      %v10854 = vpop.trf.xlu0
      %v10855 = vpop.trf.xlu0
      %v10856 = vpop.trf.xlu0
      %v10857 = vpop.trf.xlu0
      %10858 = vxpose.xlu0.b32.start [1/16] %v10706, 128
      %10859 = vxpose.xlu0.b32.cont [2/16] %v10707, 128
      %10860 = vxpose.xlu0.b32.cont [3/16] %v10708, 128
      %10861 = vxpose.xlu0.b32.cont [4/16] 0.0, 128
      %10862 = vxpose.xlu0.b32.cont [5/16] 0.0, 128
      %10863 = vxpose.xlu0.b32.cont [6/16] 0.0, 128
      %10864 = vxpose.xlu0.b32.cont [7/16] 0.0, 128
      %10865 = vxpose.xlu0.b32.cont [8/16] 0.0, 128
      %10866 = vxpose.xlu0.b32.cont [9/16] 0.0, 128
      %10867 = vxpose.xlu0.b32.cont [10/16] 0.0, 128
      %10868 = vxpose.xlu0.b32.cont [11/16] 0.0, 128
      %10869 = vxpose.xlu0.b32.cont [12/16] 0.0, 128
      %10870 = vxpose.xlu0.b32.cont [13/16] 0.0, 128
      %10871 = vxpose.xlu0.b32.cont [14/16] 0.0, 128
      %10872 = vxpose.xlu0.b32.cont [15/16] 0.0, 128
      %10873 = vxpose.xlu0.b32.end [16/16] 0.0, 128
      %v10874 = vpop.trf.xlu0
      %v10875 = vpop.trf.xlu0
      %v10876 = vpop.trf.xlu0
      %v10877 = vpop.trf.xlu0
      %v10878 = vpop.trf.xlu0
      %v10879 = vpop.trf.xlu0
      %v10880 = vpop.trf.xlu0
      %v10881 = vpop.trf.xlu0
      %v10882 = vpop.trf.xlu0
      %v10883 = vpop.trf.xlu0
      %v10884 = vpop.trf.xlu0
      %v10885 = vpop.trf.xlu0
      %v10886 = vpop.trf.xlu0
      %v10887 = vpop.trf.xlu0
      %v10888 = vpop.trf.xlu0
      %v10889 = vpop.trf.xlu0
      %10890 = vxpose.xlu0.b32.start [1/16] %v10709, 128
      %10891 = vxpose.xlu0.b32.cont [2/16] %v10710, 128
      %10892 = vxpose.xlu0.b32.cont [3/16] %v10711, 128
      %10893 = vxpose.xlu0.b32.cont [4/16] 0.0, 128
      %10894 = vxpose.xlu0.b32.cont [5/16] 0.0, 128
      %10895 = vxpose.xlu0.b32.cont [6/16] 0.0, 128
      %10896 = vxpose.xlu0.b32.cont [7/16] 0.0, 128
      %10897 = vxpose.xlu0.b32.cont [8/16] 0.0, 128
      %10898 = vxpose.xlu0.b32.cont [9/16] 0.0, 128
      %10899 = vxpose.xlu0.b32.cont [10/16] 0.0, 128
      %10900 = vxpose.xlu0.b32.cont [11/16] 0.0, 128
      %10901 = vxpose.xlu0.b32.cont [12/16] 0.0, 128
      %10902 = vxpose.xlu0.b32.cont [13/16] 0.0, 128
      %10903 = vxpose.xlu0.b32.cont [14/16] 0.0, 128
      %10904 = vxpose.xlu0.b32.cont [15/16] 0.0, 128
      %10905 = vxpose.xlu0.b32.end [16/16] 0.0, 128
      %v10906 = vpop.trf.xlu0
      %v10907 = vpop.trf.xlu0
      %v10908 = vpop.trf.xlu0
      %v10909 = vpop.trf.xlu0
      %v10910 = vpop.trf.xlu0
      %v10911 = vpop.trf.xlu0
      %v10912 = vpop.trf.xlu0
      %v10913 = vpop.trf.xlu0
      %v10914 = vpop.trf.xlu0
      %v10915 = vpop.trf.xlu0
      %v10916 = vpop.trf.xlu0
      %v10917 = vpop.trf.xlu0
      %v10918 = vpop.trf.xlu0
      %v10919 = vpop.trf.xlu0
      %v10920 = vpop.trf.xlu0
      %v10921 = vpop.trf.xlu0
      %10922 = vxpose.xlu0.b32.start [1/16] %v10712, 128
      %10923 = vxpose.xlu0.b32.cont [2/16] %v10713, 128
      %10924 = vxpose.xlu0.b32.cont [3/16] %v10714, 128
      %10925 = vxpose.xlu0.b32.cont [4/16] 0.0, 128
      %10926 = vxpose.xlu0.b32.cont [5/16] 0.0, 128
      %10927 = vxpose.xlu0.b32.cont [6/16] 0.0, 128
      %10928 = vxpose.xlu0.b32.cont [7/16] 0.0, 128
      %10929 = vxpose.xlu0.b32.cont [8/16] 0.0, 128
      %10930 = vxpose.xlu0.b32.cont [9/16] 0.0, 128
      %10931 = vxpose.xlu0.b32.cont [10/16] 0.0, 128
      %10932 = vxpose.xlu0.b32.cont [11/16] 0.0, 128
      %10933 = vxpose.xlu0.b32.cont [12/16] 0.0, 128
      %10934 = vxpose.xlu0.b32.cont [13/16] 0.0, 128
      %10935 = vxpose.xlu0.b32.cont [14/16] 0.0, 128
      %10936 = vxpose.xlu0.b32.cont [15/16] 0.0, 128
      %10937 = vxpose.xlu0.b32.end [16/16] 0.0, 128
      %v10938 = vpop.trf.xlu0
      %v10939 = vpop.trf.xlu0
      %v10940 = vpop.trf.xlu0
      %v10941 = vpop.trf.xlu0
      %v10942 = vpop.trf.xlu0
      %v10943 = vpop.trf.xlu0
      %v10944 = vpop.trf.xlu0
      %v10945 = vpop.trf.xlu0
      %v10946 = vpop.trf.xlu0
      %v10947 = vpop.trf.xlu0
      %v10948 = vpop.trf.xlu0
      %v10949 = vpop.trf.xlu0
      %v10950 = vpop.trf.xlu0
      %v10951 = vpop.trf.xlu0
      %v10952 = vpop.trf.xlu0
      %v10953 = vpop.trf.xlu0
      %10954 = vxpose.xlu0.b32.start [1/16] %v10715, 128
      %10955 = vxpose.xlu0.b32.cont [2/16] %v10716, 128
      %10956 = vxpose.xlu0.b32.cont [3/16] %v10717, 128
      %10957 = vxpose.xlu0.b32.cont [4/16] 0.0, 128
      %10958 = vxpose.xlu0.b32.cont [5/16] 0.0, 128
      %10959 = vxpose.xlu0.b32.cont [6/16] 0.0, 128
      %10960 = vxpose.xlu0.b32.cont [7/16] 0.0, 128
      %10961 = vxpose.xlu0.b32.cont [8/16] 0.0, 128
      %10962 = vxpose.xlu0.b32.cont [9/16] 0.0, 128
      %10963 = vxpose.xlu0.b32.cont [10/16] 0.0, 128
      %10964 = vxpose.xlu0.b32.cont [11/16] 0.0, 128
      %10965 = vxpose.xlu0.b32.cont [12/16] 0.0, 128
      %10966 = vxpose.xlu0.b32.cont [13/16] 0.0, 128
      %10967 = vxpose.xlu0.b32.cont [14/16] 0.0, 128
      %10968 = vxpose.xlu0.b32.cont [15/16] 0.0, 128
      %10969 = vxpose.xlu0.b32.end [16/16] 0.0, 128
      %v10970 = vpop.trf.xlu0
      %v10971 = vpop.trf.xlu0
      %v10972 = vpop.trf.xlu0
      %v10973 = vpop.trf.xlu0
      %v10974 = vpop.trf.xlu0
      %v10975 = vpop.trf.xlu0
      %v10976 = vpop.trf.xlu0
      %v10977 = vpop.trf.xlu0
      %v10978 = vpop.trf.xlu0
      %v10979 = vpop.trf.xlu0
      %v10980 = vpop.trf.xlu0
      %v10981 = vpop.trf.xlu0
      %v10982 = vpop.trf.xlu0
      %v10983 = vpop.trf.xlu0
      %v10984 = vpop.trf.xlu0
      %v10985 = vpop.trf.xlu0
      %10986 = vxpose.xlu0.b32.start [1/16] %v10718, 128
      %10987 = vxpose.xlu0.b32.cont [2/16] %v10719, 128
      %10988 = vxpose.xlu0.b32.cont [3/16] %v10720, 128
      %10989 = vxpose.xlu0.b32.cont [4/16] 0.0, 128
      %10990 = vxpose.xlu0.b32.cont [5/16] 0.0, 128
      %10991 = vxpose.xlu0.b32.cont [6/16] 0.0, 128
      %10992 = vxpose.xlu0.b32.cont [7/16] 0.0, 128
      %10993 = vxpose.xlu0.b32.cont [8/16] 0.0, 128
      %10994 = vxpose.xlu0.b32.cont [9/16] 0.0, 128
      %10995 = vxpose.xlu0.b32.cont [10/16] 0.0, 128
      %10996 = vxpose.xlu0.b32.cont [11/16] 0.0, 128
      %10997 = vxpose.xlu0.b32.cont [12/16] 0.0, 128
      %10998 = vxpose.xlu0.b32.cont [13/16] 0.0, 128
      %10999 = vxpose.xlu0.b32.cont [14/16] 0.0, 128
      %11000 = vxpose.xlu0.b32.cont [15/16] 0.0, 128
      %11001 = vxpose.xlu0.b32.end [16/16] 0.0, 128
      %v11002 = vpop.trf.xlu0
      %v11003 = vpop.trf.xlu0
      %v11004 = vpop.trf.xlu0
      %v11005 = vpop.trf.xlu0
      %v11006 = vpop.trf.xlu0
      %v11007 = vpop.trf.xlu0
      %v11008 = vpop.trf.xlu0
      %v11009 = vpop.trf.xlu0
      %v11010 = vpop.trf.xlu0
      %v11011 = vpop.trf.xlu0
      %v11012 = vpop.trf.xlu0
      %v11013 = vpop.trf.xlu0
      %v11014 = vpop.trf.xlu0
      %v11015 = vpop.trf.xlu0
      %v11016 = vpop.trf.xlu0
      %v11017 = vpop.trf.xlu0
      %11018 = vxpose.xlu0.b32.start [1/16] %v10721, 128
      %11019 = vxpose.xlu0.b32.cont [2/16] %v10722, 128
      %11020 = vxpose.xlu0.b32.cont [3/16] %v10723, 128
      %11021 = vxpose.xlu0.b32.cont [4/16] 0.0, 128
      %11022 = vxpose.xlu0.b32.cont [5/16] 0.0, 128
      %11023 = vxpose.xlu0.b32.cont [6/16] 0.0, 128
      %11024 = vxpose.xlu0.b32.cont [7/16] 0.0, 128
      %11025 = vxpose.xlu0.b32.cont [8/16] 0.0, 128
      %11026 = vxpose.xlu0.b32.cont [9/16] 0.0, 128
      %11027 = vxpose.xlu0.b32.cont [10/16] 0.0, 128
      %11028 = vxpose.xlu0.b32.cont [11/16] 0.0, 128
      %11029 = vxpose.xlu0.b32.cont [12/16] 0.0, 128
      %11030 = vxpose.xlu0.b32.cont [13/16] 0.0, 128
      %11031 = vxpose.xlu0.b32.cont [14/16] 0.0, 128
      %11032 = vxpose.xlu0.b32.cont [15/16] 0.0, 128
      %11033 = vxpose.xlu0.b32.end [16/16] 0.0, 128
      %v11034 = vpop.trf.xlu0
      %v11035 = vpop.trf.xlu0
      %v11036 = vpop.trf.xlu0
      %v11037 = vpop.trf.xlu0
      %v11038 = vpop.trf.xlu0
      %v11039 = vpop.trf.xlu0
      %v11040 = vpop.trf.xlu0
      %v11041 = vpop.trf.xlu0
      %v11042 = vpop.trf.xlu0
      %v11043 = vpop.trf.xlu0
      %v11044 = vpop.trf.xlu0
      %v11045 = vpop.trf.xlu0
      %v11046 = vpop.trf.xlu0
      %v11047 = vpop.trf.xlu0
      %v11048 = vpop.trf.xlu0
      %v11049 = vpop.trf.xlu0
      %11050 = vxpose.xlu0.b32.start [1/16] %v10724, 128
      %11051 = vxpose.xlu0.b32.cont [2/16] %v10725, 128
      %11052 = vxpose.xlu0.b32.cont [3/16] %v10726, 128
      %11053 = vxpose.xlu0.b32.cont [4/16] 0.0, 128
      %11054 = vxpose.xlu0.b32.cont [5/16] 0.0, 128
      %11055 = vxpose.xlu0.b32.cont [6/16] 0.0, 128
      %11056 = vxpose.xlu0.b32.cont [7/16] 0.0, 128
      %11057 = vxpose.xlu0.b32.cont [8/16] 0.0, 128
      %11058 = vxpose.xlu0.b32.cont [9/16] 0.0, 128
      %11059 = vxpose.xlu0.b32.cont [10/16] 0.0, 128
      %11060 = vxpose.xlu0.b32.cont [11/16] 0.0, 128
      %11061 = vxpose.xlu0.b32.cont [12/16] 0.0, 128
      %11062 = vxpose.xlu0.b32.cont [13/16] 0.0, 128
      %11063 = vxpose.xlu0.b32.cont [14/16] 0.0, 128
      %11064 = vxpose.xlu0.b32.cont [15/16] 0.0, 128
      %11065 = vxpose.xlu0.b32.end [16/16] 0.0, 128
      %v11066 = vpop.trf.xlu0
      %v11067 = vpop.trf.xlu0
      %v11068 = vpop.trf.xlu0
      %v11069 = vpop.trf.xlu0
      %v11070 = vpop.trf.xlu0
      %v11071 = vpop.trf.xlu0
      %v11072 = vpop.trf.xlu0
      %v11073 = vpop.trf.xlu0
      %v11074 = vpop.trf.xlu0
      %v11075 = vpop.trf.xlu0
      %v11076 = vpop.trf.xlu0
      %v11077 = vpop.trf.xlu0
      %v11078 = vpop.trf.xlu0
      %v11079 = vpop.trf.xlu0
      %v11080 = vpop.trf.xlu0
      %v11081 = vpop.trf.xlu0
      %11082 = vxpose.xlu0.b32.start [1/16] %v10727, 128
      %11083 = vxpose.xlu0.b32.cont [2/16] %v10728, 128
      %11084 = vxpose.xlu0.b32.cont [3/16] %v10729, 128
      %11085 = vxpose.xlu0.b32.cont [4/16] 0.0, 128
      %11086 = vxpose.xlu0.b32.cont [5/16] 0.0, 128
      %11087 = vxpose.xlu0.b32.cont [6/16] 0.0, 128
      %11088 = vxpose.xlu0.b32.cont [7/16] 0.0, 128
      %11089 = vxpose.xlu0.b32.cont [8/16] 0.0, 128
      %11090 = vxpose.xlu0.b32.cont [9/16] 0.0, 128
      %11091 = vxpose.xlu0.b32.cont [10/16] 0.0, 128
      %11092 = vxpose.xlu0.b32.cont [11/16] 0.0, 128
      %11093 = vxpose.xlu0.b32.cont [12/16] 0.0, 128
      %11094 = vxpose.xlu0.b32.cont [13/16] 0.0, 128
      %11095 = vxpose.xlu0.b32.cont [14/16] 0.0, 128
      %11096 = vxpose.xlu0.b32.cont [15/16] 0.0, 128
      %11097 = vxpose.xlu0.b32.end [16/16] 0.0, 128
      %v11098 = vpop.trf.xlu0
      %v11099 = vpop.trf.xlu0
      %v11100 = vpop.trf.xlu0
      %v11101 = vpop.trf.xlu0
      %v11102 = vpop.trf.xlu0
      %v11103 = vpop.trf.xlu0
      %v11104 = vpop.trf.xlu0
      %v11105 = vpop.trf.xlu0
      %v11106 = vpop.trf.xlu0
      %v11107 = vpop.trf.xlu0
      %v11108 = vpop.trf.xlu0
      %v11109 = vpop.trf.xlu0
      %v11110 = vpop.trf.xlu0
      %v11111 = vpop.trf.xlu0
      %v11112 = vpop.trf.xlu0
      %v11113 = vpop.trf.xlu0
      %v11114 = vlaneseq
      %v11115 = vshrl.u32 %v11114, 7
      %v11116 = vadd.s32 %v11115, 8
      %v11117 = vadd.s32 %v11115, 16
      %v11118 = vlaneseq
      %v11119 = vand.u32 %v11118, 127
      %v11120 = vmul.u32 %v11119, 2
      %vm11121 = vcmp.eq.s32.totalorder %v11115, %v11120
      %vm11122 = vcmp.eq.s32.totalorder %v11116, %v11120
      %vm11123 = vcmp.eq.s32.totalorder %v11117, %v11120
      %v11124 = vsel %vm11121, 1, 0
      %v11125 = vsel %vm11122, 1, 0
      %v11126 = vsel %vm11123, 1, 0
      %v11127 = vcvt.s32.f32 %v11124
      %v11128 = vcvt.s32.f32 %v11125
      %v11129 = vcvt.s32.f32 %v11126
      %v11130 = vadd.s32 %v11120, 1
      %vm11131 = vcmp.eq.s32.totalorder %v11115, %v11130
      %vm11132 = vcmp.eq.s32.totalorder %v11116, %v11130
      %vm11133 = vcmp.eq.s32.totalorder %v11117, %v11130
      %v11134 = vsel %vm11131, 1, 0
      %v11135 = vsel %vm11132, 1, 0
      %v11136 = vsel %vm11133, 1, 0
      %v11137 = vcvt.s32.f32 %v11134
      %v11138 = vcvt.s32.f32 %v11135
      %v11139 = vcvt.s32.f32 %v11136
      %vm11140 = vcmask 195584
      %v11142 = vsel %vm11140, %v10746, 0
      %v11145 = vsel %vm11140, %v10747, 0
      %v11148 = vsel %vm11140, %v10778, 0
      %v11151 = vsel %vm11140, %v10779, 0
      %v11154 = vsel %vm11140, %v10810, 0
      %v11157 = vsel %vm11140, %v10811, 0
      %v11160 = vsel %vm11140, %v10842, 0
      %v11163 = vsel %vm11140, %v10843, 0
      %v11166 = vsel %vm11140, %v10874, 0
      %v11169 = vsel %vm11140, %v10875, 0
      %v11172 = vsel %vm11140, %v10906, 0
      %v11175 = vsel %vm11140, %v10907, 0
      %v11178 = vsel %vm11140, %v10938, 0
      %v11181 = vsel %vm11140, %v10939, 0
      %v11184 = vsel %vm11140, %v10970, 0
      %v11187 = vsel %vm11140, %v10971, 0
      %v11190 = vsel %vm11140, %v11002, 0
      %v11193 = vsel %vm11140, %v11003, 0
      %v11196 = vsel %vm11140, %v11034, 0
      %v11199 = vsel %vm11140, %v11035, 0
      %v11202 = vsel %vm11140, %v11066, 0
      %v11205 = vsel %vm11140, %v11067, 0
      %v11208 = vsel %vm11140, %v11098, 0
      %v11211 = vsel %vm11140, %v11099, 0
      %11213 = vmatprep.subr.mxu0 0.0
      %11214 = vmatpush1.msra.mxu0 0.0
      %11215 = vmatprep.subr.mxu0 0.0
      %11216 = vmatpush1.msra.mxu0 0.0
      %11217 = vmatprep.subr.mxu0 0.0
      %11218 = vmatpush1.msra.mxu0 0.0
      %11219 = vmatprep.subr.mxu0 0.0
      %11220 = vmatpush1.msra.mxu0 0.0
      %11221 = vmatprep.subr.mxu0 0.0
      %11222 = vmatpush1.msra.mxu0 0.0
      %11223 = vmatprep.subr.mxu0 0.0
      %11224 = vmatpush1.msra.mxu0 0.0
      %11225 = vmatprep.subr.mxu0 0.0
      %11226 = vmatpush1.msra.mxu0 0.0
      %11227 = vmatprep.subr.mxu0 0.0
      %11228 = vmatpush1.msra.mxu0 0.0
      %11229 = vmatprep.subr.mxu0 0.0
      %11230 = vmatpush1.msra.mxu0 0.0
      %11231 = vmatprep.subr.mxu0 0.0
      %11232 = vmatpush1.msra.mxu0 0.0
      %11233 = vmatprep.subr.mxu0 0.0
      %11234 = vmatpush1.msra.mxu0 0.0
      %11235 = vmatprep.subr.mxu0 0.0
      %11236 = vmatpush1.msra.mxu0 0.0
      %11237 = vmatprep.subr.mxu0 0.0
      %11238 = vmatpush1.msra.mxu0 0.0
      %11239 = vmatprep.subr.mxu0 0.0
      %11240 = vmatpush1.msra.mxu0 %v11129
      %11241 = vmatprep.subr.mxu0 0.0
      %11242 = vmatpush1.msra.mxu0 %v11128
      %11243 = vmatprep.subr.mxu0 0.0
      %11244 = vmatpush1.msra.mxu0 %v11127
      %11245 = vmatprep.subr.mxu0 0.0
      %11246 = vmatpush2.msra.mxu0 0.0
      %11247 = vmatprep.subr.mxu0 0.0
      %11248 = vmatpush2.msra.mxu0 0.0
      %11249 = vmatprep.subr.mxu0 0.0
      %11250 = vmatpush2.msra.mxu0 0.0
      %11251 = vmatprep.subr.mxu0 0.0
      %11252 = vmatpush2.msra.mxu0 0.0
      %11253 = vmatprep.subr.mxu0 0.0
      %11254 = vmatpush2.msra.mxu0 0.0
      %11255 = vmatprep.subr.mxu0 0.0
      %11256 = vmatpush2.msra.mxu0 0.0
      %11257 = vmatprep.subr.mxu0 0.0
      %11258 = vmatpush2.msra.mxu0 0.0
      %11259 = vmatprep.subr.mxu0 0.0
      %11260 = vmatpush2.msra.mxu0 0.0
      %11261 = vmatprep.subr.mxu0 0.0
      %11262 = vmatpush2.msra.mxu0 0.0
      %11263 = vmatprep.subr.mxu0 0.0
      %11264 = vmatpush2.msra.mxu0 0.0
      %11265 = vmatprep.subr.mxu0 0.0
      %11266 = vmatpush2.msra.mxu0 0.0
      %11267 = vmatprep.subr.mxu0 0.0
      %11268 = vmatpush2.msra.mxu0 0.0
      %11269 = vmatprep.subr.mxu0 0.0
      %11270 = vmatpush2.msra.mxu0 0.0
      %11271 = vmatprep.subr.mxu0 0.0
      %11272 = vmatpush2.msra.mxu0 0.0
      %11273 = vmatprep.subr.mxu0 0.0
      %11274 = vmatpush2.msra.mxu0 0.0
      %11275 = vmatprep.subr.mxu0 0.0
      %11276 = vmatpush2.msra.mxu0 0.0
      %11277 = vmatprep.mubr.f32.mxu0 0.0
      %11278 = vmatmul.mubr.f32.gmra.mxu0 %v11142
      %v11279 = vpop.f32.mrf.mxu0
      %v11280 = vadd.f32 0.0, %v11279
      %v11281 = vpop.f32.mrf.mxu0
      %11282 = vmatprep.mubr.f32.mxu0 0.0
      %11283 = vmatmul.mubr.f32.gmra.mxu0 %v11145
      %v11284 = vpop.f32.mrf.mxu0
      %v11285 = vadd.f32 0.0, %v11284
      %v11286 = vpop.f32.mrf.mxu0
      %11287 = vmatprep.mubr.f32.mxu0 0.0
      %11288 = vmatmul.mubr.f32.gmra.mxu0 %v11148
      %v11289 = vpop.f32.mrf.mxu0
      %v11290 = vadd.f32 0.0, %v11289
      %v11291 = vpop.f32.mrf.mxu0
      %11292 = vmatprep.mubr.f32.mxu0 0.0
      %11293 = vmatmul.mubr.f32.gmra.mxu0 %v11151
      %v11294 = vpop.f32.mrf.mxu0
      %v11295 = vadd.f32 0.0, %v11294
      %v11296 = vpop.f32.mrf.mxu0
      %11297 = vmatprep.mubr.f32.mxu0 0.0
      %11298 = vmatmul.mubr.f32.gmra.mxu0 %v11154
      %v11299 = vpop.f32.mrf.mxu0
      %v11300 = vadd.f32 0.0, %v11299
      %v11301 = vpop.f32.mrf.mxu0
      %11302 = vmatprep.mubr.f32.mxu0 0.0
      %11303 = vmatmul.mubr.f32.gmra.mxu0 %v11157
      %v11304 = vpop.f32.mrf.mxu0
      %v11305 = vadd.f32 0.0, %v11304
      %v11306 = vpop.f32.mrf.mxu0
      %11307 = vmatprep.mubr.f32.mxu0 0.0
      %11308 = vmatmul.mubr.f32.gmra.mxu0 %v11160
      %v11309 = vpop.f32.mrf.mxu0
      %v11310 = vadd.f32 0.0, %v11309
      %v11311 = vpop.f32.mrf.mxu0
      %11312 = vmatprep.mubr.f32.mxu0 0.0
      %11313 = vmatmul.mubr.f32.gmra.mxu0 %v11163
      %v11314 = vpop.f32.mrf.mxu0
      %v11315 = vadd.f32 0.0, %v11314
      %v11316 = vpop.f32.mrf.mxu0
      %11317 = vmatprep.mubr.f32.mxu0 0.0
      %11318 = vmatmul.mubr.f32.gmra.mxu0 %v11166
      %v11319 = vpop.f32.mrf.mxu0
      %v11320 = vadd.f32 0.0, %v11319
      %v11321 = vpop.f32.mrf.mxu0
      %11322 = vmatprep.mubr.f32.mxu0 0.0
      %11323 = vmatmul.mubr.f32.gmra.mxu0 %v11169
      %v11324 = vpop.f32.mrf.mxu0
      %v11325 = vadd.f32 0.0, %v11324
      %v11326 = vpop.f32.mrf.mxu0
      %11327 = vmatprep.mubr.f32.mxu0 0.0
      %11328 = vmatmul.mubr.f32.gmra.mxu0 %v11172
      %v11329 = vpop.f32.mrf.mxu0
      %v11330 = vadd.f32 0.0, %v11329
      %v11331 = vpop.f32.mrf.mxu0
      %11332 = vmatprep.mubr.f32.mxu0 0.0
      %11333 = vmatmul.mubr.f32.gmra.mxu0 %v11175
      %v11334 = vpop.f32.mrf.mxu0
      %v11335 = vadd.f32 0.0, %v11334
      %v11336 = vpop.f32.mrf.mxu0
      %11337 = vmatprep.mubr.f32.mxu0 0.0
      %11338 = vmatmul.mubr.f32.gmra.mxu0 %v11178
      %v11339 = vpop.f32.mrf.mxu0
      %v11340 = vadd.f32 0.0, %v11339
      %v11341 = vpop.f32.mrf.mxu0
      %11342 = vmatprep.mubr.f32.mxu0 0.0
      %11343 = vmatmul.mubr.f32.gmra.mxu0 %v11181
      %v11344 = vpop.f32.mrf.mxu0
      %v11345 = vadd.f32 0.0, %v11344
      %v11346 = vpop.f32.mrf.mxu0
      %11347 = vmatprep.mubr.f32.mxu0 0.0
      %11348 = vmatmul.mubr.f32.gmra.mxu0 %v11184
      %v11349 = vpop.f32.mrf.mxu0
      %v11350 = vadd.f32 0.0, %v11349
      %v11351 = vpop.f32.mrf.mxu0
      %11352 = vmatprep.mubr.f32.mxu0 0.0
      %11353 = vmatmul.mubr.f32.gmra.mxu0 %v11187
      %v11354 = vpop.f32.mrf.mxu0
      %v11355 = vadd.f32 0.0, %v11354
      %v11356 = vpop.f32.mrf.mxu0
      %11357 = vmatprep.mubr.f32.mxu0 0.0
      %11358 = vmatmul.mubr.f32.gmra.mxu0 %v11190
      %v11359 = vpop.f32.mrf.mxu0
      %v11360 = vadd.f32 0.0, %v11359
      %v11361 = vpop.f32.mrf.mxu0
      %11362 = vmatprep.mubr.f32.mxu0 0.0
      %11363 = vmatmul.mubr.f32.gmra.mxu0 %v11193
      %v11364 = vpop.f32.mrf.mxu0
      %v11365 = vadd.f32 0.0, %v11364
      %v11366 = vpop.f32.mrf.mxu0
      %11367 = vmatprep.mubr.f32.mxu0 0.0
      %11368 = vmatmul.mubr.f32.gmra.mxu0 %v11196
      %v11369 = vpop.f32.mrf.mxu0
      %v11370 = vadd.f32 0.0, %v11369
      %v11371 = vpop.f32.mrf.mxu0
      %11372 = vmatprep.mubr.f32.mxu0 0.0
      %11373 = vmatmul.mubr.f32.gmra.mxu0 %v11199
      %v11374 = vpop.f32.mrf.mxu0
      %v11375 = vadd.f32 0.0, %v11374
      %v11376 = vpop.f32.mrf.mxu0
      %11377 = vmatprep.mubr.f32.mxu0 0.0
      %11378 = vmatmul.mubr.f32.gmra.mxu0 %v11202
      %v11379 = vpop.f32.mrf.mxu0
      %v11380 = vadd.f32 0.0, %v11379
      %v11381 = vpop.f32.mrf.mxu0
      %11382 = vmatprep.mubr.f32.mxu0 0.0
      %11383 = vmatmul.mubr.f32.gmra.mxu0 %v11205
      %v11384 = vpop.f32.mrf.mxu0
      %v11385 = vadd.f32 0.0, %v11384
      %v11386 = vpop.f32.mrf.mxu0
      %11387 = vmatprep.mubr.f32.mxu0 0.0
      %11388 = vmatmul.mubr.f32.gmra.mxu0 %v11208
      %v11389 = vpop.f32.mrf.mxu0
      %v11390 = vadd.f32 0.0, %v11389
      %v11391 = vpop.f32.mrf.mxu0
      %11392 = vmatprep.mubr.f32.mxu0 0.0
      %11393 = vmatmul.mubr.f32.gmra.mxu0 %v11211
      %v11394 = vpop.f32.mrf.mxu0
      %v11395 = vadd.f32 0.0, %v11394
      %v11396 = vpop.f32.mrf.mxu0
      %11397 = vdwg.mxu0
      %11398 = vmatprep.subr.mxu0 0.0
      %11399 = vmatpush1.msra.mxu0 0.0
      %11400 = vmatprep.subr.mxu0 0.0
      %11401 = vmatpush1.msra.mxu0 0.0
      %11402 = vmatprep.subr.mxu0 0.0
      %11403 = vmatpush1.msra.mxu0 0.0
      %11404 = vmatprep.subr.mxu0 0.0
      %11405 = vmatpush1.msra.mxu0 0.0
      %11406 = vmatprep.subr.mxu0 0.0
      %11407 = vmatpush1.msra.mxu0 0.0
      %11408 = vmatprep.subr.mxu0 0.0
      %11409 = vmatpush1.msra.mxu0 0.0
      %11410 = vmatprep.subr.mxu0 0.0
      %11411 = vmatpush1.msra.mxu0 0.0
      %11412 = vmatprep.subr.mxu0 0.0
      %11413 = vmatpush1.msra.mxu0 0.0
      %11414 = vmatprep.subr.mxu0 0.0
      %11415 = vmatpush1.msra.mxu0 0.0
      %11416 = vmatprep.subr.mxu0 0.0
      %11417 = vmatpush1.msra.mxu0 0.0
      %11418 = vmatprep.subr.mxu0 0.0
      %11419 = vmatpush1.msra.mxu0 0.0
      %11420 = vmatprep.subr.mxu0 0.0
      %11421 = vmatpush1.msra.mxu0 0.0
      %11422 = vmatprep.subr.mxu0 0.0
      %11423 = vmatpush1.msra.mxu0 0.0
      %11424 = vmatprep.subr.mxu0 0.0
      %11425 = vmatpush1.msra.mxu0 %v11139
      %11426 = vmatprep.subr.mxu0 0.0
      %11427 = vmatpush1.msra.mxu0 %v11138
      %11428 = vmatprep.subr.mxu0 0.0
      %11429 = vmatpush1.msra.mxu0 %v11137
      %11430 = vmatprep.subr.mxu0 0.0
      %11431 = vmatpush2.msra.mxu0 0.0
      %11432 = vmatprep.subr.mxu0 0.0
      %11433 = vmatpush2.msra.mxu0 0.0
      %11434 = vmatprep.subr.mxu0 0.0
      %11435 = vmatpush2.msra.mxu0 0.0
      %11436 = vmatprep.subr.mxu0 0.0
      %11437 = vmatpush2.msra.mxu0 0.0
      %11438 = vmatprep.subr.mxu0 0.0
      %11439 = vmatpush2.msra.mxu0 0.0
      %11440 = vmatprep.subr.mxu0 0.0
      %11441 = vmatpush2.msra.mxu0 0.0
      %11442 = vmatprep.subr.mxu0 0.0
      %11443 = vmatpush2.msra.mxu0 0.0
      %11444 = vmatprep.subr.mxu0 0.0
      %11445 = vmatpush2.msra.mxu0 0.0
      %11446 = vmatprep.subr.mxu0 0.0
      %11447 = vmatpush2.msra.mxu0 0.0
      %11448 = vmatprep.subr.mxu0 0.0
      %11449 = vmatpush2.msra.mxu0 0.0
      %11450 = vmatprep.subr.mxu0 0.0
      %11451 = vmatpush2.msra.mxu0 0.0
      %11452 = vmatprep.subr.mxu0 0.0
      %11453 = vmatpush2.msra.mxu0 0.0
      %11454 = vmatprep.subr.mxu0 0.0
      %11455 = vmatpush2.msra.mxu0 0.0
      %11456 = vmatprep.subr.mxu0 0.0
      %11457 = vmatpush2.msra.mxu0 0.0
      %11458 = vmatprep.subr.mxu0 0.0
      %11459 = vmatpush2.msra.mxu0 0.0
      %11460 = vmatprep.subr.mxu0 0.0
      %11461 = vmatpush2.msra.mxu0 0.0
      %11462 = vmatprep.mubr.f32.mxu0 0.0
      %11463 = vmatmul.mubr.f32.gmra.mxu0 %v11142
      %v11464 = vpop.f32.mrf.mxu0
      %v11465 = vadd.f32 0.0, %v11464
      %v11466 = vpop.f32.mrf.mxu0
      %11467 = vmatprep.mubr.f32.mxu0 0.0
      %11468 = vmatmul.mubr.f32.gmra.mxu0 %v11145
      %v11469 = vpop.f32.mrf.mxu0
      %v11470 = vadd.f32 0.0, %v11469
      %v11471 = vpop.f32.mrf.mxu0
      %11472 = vmatprep.mubr.f32.mxu0 0.0
      %11473 = vmatmul.mubr.f32.gmra.mxu0 %v11148
      %v11474 = vpop.f32.mrf.mxu0
      %v11475 = vadd.f32 0.0, %v11474
      %v11476 = vpop.f32.mrf.mxu0
      %11477 = vmatprep.mubr.f32.mxu0 0.0
      %11478 = vmatmul.mubr.f32.gmra.mxu0 %v11151
      %v11479 = vpop.f32.mrf.mxu0
      %v11480 = vadd.f32 0.0, %v11479
      %v11481 = vpop.f32.mrf.mxu0
      %11482 = vmatprep.mubr.f32.mxu0 0.0
      %11483 = vmatmul.mubr.f32.gmra.mxu0 %v11154
      %v11484 = vpop.f32.mrf.mxu0
      %v11485 = vadd.f32 0.0, %v11484
      %v11486 = vpop.f32.mrf.mxu0
      %11487 = vmatprep.mubr.f32.mxu0 0.0
      %11488 = vmatmul.mubr.f32.gmra.mxu0 %v11157
      %v11489 = vpop.f32.mrf.mxu0
      %v11490 = vadd.f32 0.0, %v11489
      %v11491 = vpop.f32.mrf.mxu0
      %11492 = vmatprep.mubr.f32.mxu0 0.0
      %11493 = vmatmul.mubr.f32.gmra.mxu0 %v11160
      %v11494 = vpop.f32.mrf.mxu0
      %v11495 = vadd.f32 0.0, %v11494
      %v11496 = vpop.f32.mrf.mxu0
      %11497 = vmatprep.mubr.f32.mxu0 0.0
      %11498 = vmatmul.mubr.f32.gmra.mxu0 %v11163
      %v11499 = vpop.f32.mrf.mxu0
      %v11500 = vadd.f32 0.0, %v11499
      %v11501 = vpop.f32.mrf.mxu0
      %11502 = vmatprep.mubr.f32.mxu0 0.0
      %11503 = vmatmul.mubr.f32.gmra.mxu0 %v11166
      %v11504 = vpop.f32.mrf.mxu0
      %v11505 = vadd.f32 0.0, %v11504
      %v11506 = vpop.f32.mrf.mxu0
      %11507 = vmatprep.mubr.f32.mxu0 0.0
      %11508 = vmatmul.mubr.f32.gmra.mxu0 %v11169
      %v11509 = vpop.f32.mrf.mxu0
      %v11510 = vadd.f32 0.0, %v11509
      %v11511 = vpop.f32.mrf.mxu0
      %11512 = vmatprep.mubr.f32.mxu0 0.0
      %11513 = vmatmul.mubr.f32.gmra.mxu0 %v11172
      %v11514 = vpop.f32.mrf.mxu0
      %v11515 = vadd.f32 0.0, %v11514
      %v11516 = vpop.f32.mrf.mxu0
      %11517 = vmatprep.mubr.f32.mxu0 0.0
      %11518 = vmatmul.mubr.f32.gmra.mxu0 %v11175
      %v11519 = vpop.f32.mrf.mxu0
      %v11520 = vadd.f32 0.0, %v11519
      %v11521 = vpop.f32.mrf.mxu0
      %11522 = vmatprep.mubr.f32.mxu0 0.0
      %11523 = vmatmul.mubr.f32.gmra.mxu0 %v11178
      %v11524 = vpop.f32.mrf.mxu0
      %v11525 = vadd.f32 0.0, %v11524
      %v11526 = vpop.f32.mrf.mxu0
      %11527 = vmatprep.mubr.f32.mxu0 0.0
      %11528 = vmatmul.mubr.f32.gmra.mxu0 %v11181
      %v11529 = vpop.f32.mrf.mxu0
      %v11530 = vadd.f32 0.0, %v11529
      %v11531 = vpop.f32.mrf.mxu0
      %11532 = vmatprep.mubr.f32.mxu0 0.0
      %11533 = vmatmul.mubr.f32.gmra.mxu0 %v11184
      %v11534 = vpop.f32.mrf.mxu0
      %v11535 = vadd.f32 0.0, %v11534
      %v11536 = vpop.f32.mrf.mxu0
      %11537 = vmatprep.mubr.f32.mxu0 0.0
      %11538 = vmatmul.mubr.f32.gmra.mxu0 %v11187
      %v11539 = vpop.f32.mrf.mxu0
      %v11540 = vadd.f32 0.0, %v11539
      %v11541 = vpop.f32.mrf.mxu0
      %11542 = vmatprep.mubr.f32.mxu0 0.0
      %11543 = vmatmul.mubr.f32.gmra.mxu0 %v11190
      %v11544 = vpop.f32.mrf.mxu0
      %v11545 = vadd.f32 0.0, %v11544
      %v11546 = vpop.f32.mrf.mxu0
      %11547 = vmatprep.mubr.f32.mxu0 0.0
      %11548 = vmatmul.mubr.f32.gmra.mxu0 %v11193
      %v11549 = vpop.f32.mrf.mxu0
      %v11550 = vadd.f32 0.0, %v11549
      %v11551 = vpop.f32.mrf.mxu0
      %11552 = vmatprep.mubr.f32.mxu0 0.0
      %11553 = vmatmul.mubr.f32.gmra.mxu0 %v11196
      %v11554 = vpop.f32.mrf.mxu0
      %v11555 = vadd.f32 0.0, %v11554
      %v11556 = vpop.f32.mrf.mxu0
      %11557 = vmatprep.mubr.f32.mxu0 0.0
      %11558 = vmatmul.mubr.f32.gmra.mxu0 %v11199
      %v11559 = vpop.f32.mrf.mxu0
      %v11560 = vadd.f32 0.0, %v11559
      %v11561 = vpop.f32.mrf.mxu0
      %11562 = vmatprep.mubr.f32.mxu0 0.0
      %11563 = vmatmul.mubr.f32.gmra.mxu0 %v11202
      %v11564 = vpop.f32.mrf.mxu0
      %v11565 = vadd.f32 0.0, %v11564
      %v11566 = vpop.f32.mrf.mxu0
      %11567 = vmatprep.mubr.f32.mxu0 0.0
      %11568 = vmatmul.mubr.f32.gmra.mxu0 %v11205
      %v11569 = vpop.f32.mrf.mxu0
      %v11570 = vadd.f32 0.0, %v11569
      %v11571 = vpop.f32.mrf.mxu0
      %11572 = vmatprep.mubr.f32.mxu0 0.0
      %11573 = vmatmul.mubr.f32.gmra.mxu0 %v11208
      %v11574 = vpop.f32.mrf.mxu0
      %v11575 = vadd.f32 0.0, %v11574
      %v11576 = vpop.f32.mrf.mxu0
      %11577 = vmatprep.mubr.f32.mxu0 0.0
      %11578 = vmatmul.mubr.f32.gmra.mxu0 %v11211
      %v11579 = vpop.f32.mrf.mxu0
      %v11580 = vadd.f32 0.0, %v11579
      %v11581 = vpop.f32.mrf.mxu0
      %11582 = vdwg.mxu0
      %v11583 = vmax.f32 %v11280, %v11465
      %v11584 = vmax.f32 %v11285, %v11470
      %v11585 = vmax.f32 %v11290, %v11475
      %v11586 = vmax.f32 %v11295, %v11480
      %v11587 = vmax.f32 %v11300, %v11485
      %v11588 = vmax.f32 %v11305, %v11490
      %v11589 = vmax.f32 %v11310, %v11495
      %v11590 = vmax.f32 %v11315, %v11500
      %v11591 = vmax.f32 %v11320, %v11505
      %v11592 = vmax.f32 %v11325, %v11510
      %v11593 = vmax.f32 %v11330, %v11515
      %v11594 = vmax.f32 %v11335, %v11520
      %v11595 = vmax.f32 %v11340, %v11525
      %v11596 = vmax.f32 %v11345, %v11530
      %v11597 = vmax.f32 %v11350, %v11535
      %v11598 = vmax.f32 %v11355, %v11540
      %v11599 = vmax.f32 %v11360, %v11545
      %v11600 = vmax.f32 %v11365, %v11550
      %v11601 = vmax.f32 %v11370, %v11555
      %v11602 = vmax.f32 %v11375, %v11560
      %v11603 = vmax.f32 %v11380, %v11565
      %v11604 = vmax.f32 %v11385, %v11570
      %v11605 = vmax.f32 %v11390, %v11575
      %v11606 = vmax.f32 %v11395, %v11580
      %vm11607 = vcmask 97280
      %11608 = vst.msk [vmem:[%s224] sm:$0xff] %vm11607, %v11583
      %11609 = vst.msk [vmem:[%s224 + $0x8] sm:$0xff] %vm11607, %v11584
      %11610 = vst.msk [vmem:[%s224 + $0x10] sm:$0xff] %vm11607, %v11585
      %11611 = vst.msk [vmem:[%s224 + $0x18] sm:$0xff] %vm11607, %v11586
      %11612 = vst.msk [vmem:[%s224 + $0x20] sm:$0xff] %vm11607, %v11587
      %11613 = vst.msk [vmem:[%s224 + $0x28] sm:$0xff] %vm11607, %v11588
      %11614 = vst.msk [vmem:[%s224 + $0x30] sm:$0xff] %vm11607, %v11589
      %11615 = vst.msk [vmem:[%s224 + $0x38] sm:$0xff] %vm11607, %v11590
      %11616 = vst.msk [vmem:[%s224 + $0x40] sm:$0xff] %vm11607, %v11591
      %11617 = vst.msk [vmem:[%s224 + $0x48] sm:$0xff] %vm11607, %v11592
      %11618 = vst.msk [vmem:[%s224 + $0x50] sm:$0xff] %vm11607, %v11593
      %11619 = vst.msk [vmem:[%s224 + $0x58] sm:$0xff] %vm11607, %v11594
      %11620 = vst.msk [vmem:[%s224 + $0x60] sm:$0xff] %vm11607, %v11595
      %11621 = vst.msk [vmem:[%s224 + $0x68] sm:$0xff] %vm11607, %v11596
      %11622 = vst.msk [vmem:[%s224 + $0x70] sm:$0xff] %vm11607, %v11597
      %11623 = vst.msk [vmem:[%s224 + $0x78] sm:$0xff] %vm11607, %v11598
      %11624 = vst.msk [vmem:[%s224 + $0x80] sm:$0xff] %vm11607, %v11599
      %11625 = vst.msk [vmem:[%s224 + $0x88] sm:$0xff] %vm11607, %v11600
      %11626 = vst.msk [vmem:[%s224 + $0x90] sm:$0xff] %vm11607, %v11601
      %11627 = vst.msk [vmem:[%s224 + $0x98] sm:$0xff] %vm11607, %v11602
      %11628 = vst.msk [vmem:[%s224 + $0xa0] sm:$0xff] %vm11607, %v11603
      %11629 = vst.msk [vmem:[%s224 + $0xa8] sm:$0xff] %vm11607, %v11604
      %11630 = vst.msk [vmem:[%s224 + $0xb0] sm:$0xff] %vm11607, %v11605
      %11631 = vst.msk [vmem:[%s224 + $0xb8] sm:$0xff] %vm11607, %v11606
      %p11632 = scmp.lt.s32.totalorder %s16, 1
      %s11633 = scalar_select %p11632, %s16, 1
      %s11634 = smul.addr %s11633, 24
      %s11635 = smul.addr %s11634, 8
      %s11636 = scalar_lea.vmem %s5, %s11635
      // Predicated region
      $region41: #{tpu_custom_call.1} parent=39 // pred_check
        %p11637 = pneg %p144
      $region42: #{tpu_custom_call.1} parent=39 // pred_check_branch
        %11639 = sbr.rel (%p11637) target = $region44
      $region43: #{tpu_custom_call.1} parent=39 // pred_region
        _
      $region44: #{tpu_custom_call.1} parent=39 // pred_fallthru
        _
    $region40: #{tpu_custom_call.1} parent=5 // pred_fallthru
      _
    %p11640 = scmp.le.s32.totalorder 2, %s11
    // Predicated region
    $region45: #{tpu_custom_call.1} parent=5 // pred_check
      %p11641 = pneg %p11640
    $region46: #{tpu_custom_call.1} parent=5 // pred_check_branch
      %11643 = sbr.rel (%p11641) target = $region48
    $region47: #{tpu_custom_call.1} parent=5 // pred_region
      %s11644 = ssub.s32 %s11, 2
      // Predicated region
      $region49: #{tpu_custom_call.1} parent=47 // pred_check
        %p11645 = pneg %p150
      $region50: #{tpu_custom_call.1} parent=47 // pred_check_branch
        %11647 = sbr.rel (%p11645) target = $region52
      $region51: #{tpu_custom_call.1} parent=47 // pred_region
        %p11648 = scmp.lt.s32.totalorder %s17, 1
        %s11649 = scalar_select %p11648, %s17, 1
        %s11650 = smul.addr %s11649, 24
        %s11651 = smul.addr %s11650, 8
        %s11652 = scalar_lea.vmem %s5, %s11651
      $region52: #{tpu_custom_call.1} parent=47 // pred_fallthru
        _
    $region48: #{tpu_custom_call.1} parent=5 // pred_fallthru
      _
  $region6: #{tpu_custom_call.1} parent=0 // loop_footer
    %s15 = sadd.s32 1, %s11
  $region7: #{tpu_custom_call.1} parent=0 // loop_footer_branch
    %10 = sbr.rel target = $region3
  $region8: #{tpu_custom_call.1} parent=0 // loop_exit
    _

</llo_original>
